<compile_context>
chip_gen: v6e
topology: v6e:2x2x1
jax: 0.10.0
libtpu: 0.0.40
codegen_flags: <defaults>
</compile_context>

<pallas_src>
import functools

import jax
import jax.numpy as jnp
from jax import lax
from jax.experimental import pallas as pl
from jax.experimental.pallas import tpu as pltpu

LANE = 128


def _round_up(x, m):
    return (x + m - 1) // m * m


@functools.lru_cache(maxsize=None)
def _vmem_limit_bytes():
    """Per-generation VMEM budget: ~75% of physical (96 MiB v5e/v6e, 48 MiB v7x)."""
    try:
        cap = int(pltpu.get_tpu_info().vmem_capacity_bytes)
    except Exception:
        cap = 64 * 1024 * 1024          # conservative fallback (v7x-sized)
    return max(32 * 1024 * 1024, min(cap * 3 // 4, 112 * 1024 * 1024))


def _layer_vmem_estimate(BT, T, din, H, label, Gp):
    """Rough upper bound on VMEM bytes for one bilstm layer call at batch tile BT."""
    bf, f32 = 2, 4
    est = 0
    est += 2 * T * BT * din * bf                        # input block(s), double-buffered
    est += 2 * T * BT * max(2 * H * bf, label * f32)    # output block(s)
    est += 2 * T * BT * label * f32                     # residual block (fused last layer)
    est += 2 * T * BT * Gp * bf                         # gx_f + gx_r scratch (bf16)
    est += 2 * T * BT * H * bf                          # hid_f + hid_r scratch (fused layer)
    est += 2 * (2 * (din + H) * Gp * bf + 2 * Gp * f32 + 2 * H * label * bf)  # weights
    est += 2 * 1024 * 1024                              # slack for Mosaic internals
    return est


def _choose_batch_tile(B, T, din_max, H, label, Gp, vmem_limit):
    """Largest batch tile that fits the VMEM budget; keep >=2 grid steps when possible."""
    budget = int(0.75 * vmem_limit)
    b16 = _round_up(max(B, 1), 16)
    for bt in (256, 128, 64, 32, 16):
        if bt > b16:
            continue
        bp = _round_up(B, bt)
        if b16 >= 32 and bp // bt < 2:
            continue            # keep both v7x TensorCores busy when batch allows
        if _layer_vmem_estimate(bt, T, din_max, H, label, Gp) <= budget:
            return bt, bp
    return 16, b16


def _sigmoid(x):
    # One EUP op (tanh) instead of exp + reciprocal.
    return 0.5 * (1.0 + jnp.tanh(0.5 * x))


# ----------------------- shared in-kernel building blocks ---------------------
def _input_projection(x_refs, wih_f_ref, wih_r_ref, gx_f, gx_r, *, T, BT, H):
    """Hoisted x @ W_ih for both directions as big MXU GEMMs; results stored bf16."""
    if len(x_refs) == 1:
        x2 = x_refs[0][...].reshape(T * BT, x_refs[0].shape[-1])
        gx_f[...] = jnp.dot(x2, wih_f_ref[...],
                            preferred_element_type=jnp.float32).astype(jnp.bfloat16)
        gx_r[...] = jnp.dot(x2, wih_r_ref[...],
                            preferred_element_type=jnp.float32).astype(jnp.bfloat16)
    else:
        # Previous layer's forward / reverse halves arrive as two arrays; the
        # input weight rows [0:H] / [H:2H] multiply them respectively.
        xf2 = x_refs[0][...].reshape(T * BT, H)
        xr2 = x_refs[1][...].reshape(T * BT, H)
        gx_f[...] = (
            jnp.dot(xf2, wih_f_ref[pl.ds(0, H), :], preferred_element_type=jnp.float32)
            + jnp.dot(xr2, wih_f_ref[pl.ds(H, H), :], preferred_element_type=jnp.float32)
        ).astype(jnp.bfloat16)
        gx_r[...] = (
            jnp.dot(xf2, wih_r_ref[pl.ds(0, H), :], preferred_element_type=jnp.float32)
            + jnp.dot(xr2, wih_r_ref[pl.ds(H, H), :], preferred_element_type=jnp.float32)
        ).astype(jnp.bfloat16)


def _bilstm_recurrence(gx_f, gx_r, whh_f_ref, whh_r_ref, b_f_ref, b_r_ref,
                       store_f, store_r, *, T, BT, H, unroll):
    """Fused fwd/rev recurrence.  h/c live in the fori_loop carry (vregs)."""
    Gp = whh_f_ref.shape[-1]
    whh_f = whh_f_ref[...]
    whh_r = whh_r_ref[...]
    # Hoisted broadcasts (JAX does not CSE broadcast_in_dim inside loops).
    bias_f = jnp.broadcast_to(b_f_ref[...], (BT, Gp))
    bias_r = jnp.broadcast_to(b_r_ref[...], (BT, Gp))

    def cell(gates, c_prev):                 # gates: (BT, Gp) f32, only 4H cols used
        i = _sigmoid(gates[:, 0 * H:1 * H])
        f = _sigmoid(gates[:, 1 * H:2 * H])
        g = jnp.tanh(gates[:, 2 * H:3 * H])
        o = _sigmoid(gates[:, 3 * H:4 * H])
        c_new = f * c_prev + i * g
        h_new = o * jnp.tanh(c_new)
        return h_new, c_new

    def step(t, carry):
        hf, cf, hr, cr = carry               # h: bf16, c: f32
        # forward direction, time t
        rf = pl.multiple_of(t * BT, BT)
        gates_f = (jnp.dot(hf, whh_f, preferred_element_type=jnp.float32)
                   + gx_f[pl.ds(rf, BT), :] + bias_f)
        hf32, cf = cell(gates_f, cf)
        hf = hf32.astype(jnp.bfloat16)
        store_f(t, hf)
        # reverse direction, time T-1-t
        tr = T - 1 - t
        rr = pl.multiple_of(tr * BT, BT)
        gates_r = (jnp.dot(hr, whh_r, preferred_element_type=jnp.float32)
                   + gx_r[pl.ds(rr, BT), :] + bias_r)
        hr32, cr = cell(gates_r, cr)
        hr = hr32.astype(jnp.bfloat16)
        store_r(tr, hr)
        return hf, cf, hr, cr

    carry0 = (jnp.zeros((BT, H), jnp.bfloat16), jnp.zeros((BT, H), jnp.float32),
              jnp.zeros((BT, H), jnp.bfloat16), jnp.zeros((BT, H), jnp.float32))
    lax.fori_loop(0, T, step, carry0, unroll=unroll)


# --------------------------- intermediate-layer kernel ------------------------
def _bilstm_mid_kernel(*args, T, BT, H, nx, unroll):
    x_refs = args[:nx]
    (wih_f_ref, whh_f_ref, b_f_ref,
     wih_r_ref, whh_r_ref, b_r_ref) = args[nx:nx + 6]
    out_f_ref, out_r_ref = args[nx + 6], args[nx + 7]
    gx_f, gx_r = args[nx + 8], args[nx + 9]

    _input_projection(x_refs, wih_f_ref, wih_r_ref, gx_f, gx_r, T=T, BT=BT, H=H)

    def store_f(t, h):
        out_f_ref[t] = h

    def store_r(t, h):
        out_r_ref[t] = h

    _bilstm_recurrence(gx_f, gx_r, whh_f_ref, whh_r_ref, b_f_ref, b_r_ref,
                       store_f, store_r, T=T, BT=BT, H=H, unroll=unroll)


# -------------------- last-layer kernel (fused FC + residual) -----------------
def _bilstm_fc_kernel(*args, T, BT, H, nx, unroll):
    x_refs = args[:nx]
    (wih_f_ref, whh_f_ref, b_f_ref,
     wih_r_ref, whh_r_ref, b_r_ref,
     fcw_f_ref, fcw_r_ref, fcb_ref, xres_ref) = args[nx:nx + 10]
    out_ref = args[nx + 10]
    gx_f, gx_r, hid_f, hid_r = args[nx + 11:nx + 15]

    _input_projection(x_refs, wih_f_ref, wih_r_ref, gx_f, gx_r, T=T, BT=BT, H=H)

    def store_f(t, h):
        hid_f[t] = h

    def store_r(t, h):
        hid_r[t] = h

    _bilstm_recurrence(gx_f, gx_r, whh_f_ref, whh_r_ref, b_f_ref, b_r_ref,
                       store_f, store_r, T=T, BT=BT, H=H, unroll=unroll)

    # FC + residual epilogue on the VMEM-resident hidden states (no HBM round trip).
    hf2 = hid_f[...].reshape(T * BT, H)
    hr2 = hid_r[...].reshape(T * BT, H)
    logits = (jnp.dot(hf2, fcw_f_ref[...], preferred_element_type=jnp.float32)
              + jnp.dot(hr2, fcw_r_ref[...], preferred_element_type=jnp.float32)
              + fcb_ref[...])
    out_ref[...] = logits.reshape(T, BT, -1) + xres_ref[...]


# -------------------------------- layer wrappers ------------------------------
def _bilstm_mid_layer(x_parts, wih_f, whh_f, b_f, wih_r, whh_r, b_r,
                      *, H, BT, unroll, vmem_limit):
    T, Bp = x_parts[0].shape[0], x_parts[0].shape[1]
    Gp = wih_f.shape[1]
    nx = len(x_parts)
    n_bt = Bp // BT
    kernel = functools.partial(_bilstm_mid_kernel, T=T, BT=BT, H=H, nx=nx, unroll=unroll)
    const = lambda i: (0, 0)
    batch = lambda i: (0, i, 0)
    x_specs = [pl.BlockSpec((T, BT, xp.shape[2]), batch) for xp in x_parts]
    w_specs = [pl.BlockSpec(w.shape, const)
               for w in (wih_f, whh_f, b_f, wih_r, whh_r, b_r)]
    return pl.pallas_call(
        kernel,
        out_shape=(jax.ShapeDtypeStruct((T, Bp, H), jnp.bfloat16),
                   jax.ShapeDtypeStruct((T, Bp, H), jnp.bfloat16)),
        grid=(n_bt,),
        in_specs=x_specs + w_specs,
        out_specs=(pl.BlockSpec((T, BT, H), batch),
                   pl.BlockSpec((T, BT, H), batch)),
        scratch_shapes=[pltpu.VMEM((T * BT, Gp), jnp.bfloat16),   # gx_f
                        pltpu.VMEM((T * BT, Gp), jnp.bfloat16)],  # gx_r
        compiler_params=pltpu.CompilerParams(
            dimension_semantics=("parallel",),
            vmem_limit_bytes=vmem_limit),
    )(*x_parts, wih_f, whh_f, b_f, wih_r, whh_r, b_r)


def _bilstm_fc_layer(x_parts, wih_f, whh_f, b_f, wih_r, whh_r, b_r,
                     fcw_f, fcw_r, fcb, xres,
                     *, H, BT, label, unroll, vmem_limit):
    T, Bp = x_parts[0].shape[0], x_parts[0].shape[1]
    Gp = wih_f.shape[1]
    nx = len(x_parts)
    n_bt = Bp // BT
    kernel = functools.partial(_bilstm_fc_kernel, T=T, BT=BT, H=H, nx=nx, unroll=unroll)
    const = lambda i: (0, 0)
    batch = lambda i: (0, i, 0)
    x_specs = [pl.BlockSpec((T, BT, xp.shape[2]), batch) for xp in x_parts]
    w_specs = [pl.BlockSpec(w.shape, const)
               for w in (wih_f, whh_f, b_f, wih_r, whh_r, b_r, fcw_f, fcw_r, fcb)]
    res_spec = pl.BlockSpec((T, BT, label), batch)
    return pl.pallas_call(
        kernel,
        out_shape=jax.ShapeDtypeStruct((T, Bp, label), jnp.float32),
        grid=(n_bt,),
        in_specs=x_specs + w_specs + [res_spec],
        out_specs=pl.BlockSpec((T, BT, label), batch),
        scratch_shapes=[pltpu.VMEM((T * BT, Gp), jnp.bfloat16),   # gx_f
                        pltpu.VMEM((T * BT, Gp), jnp.bfloat16),   # gx_r
                        pltpu.VMEM((T, BT, H), jnp.bfloat16),     # hid_f
                        pltpu.VMEM((T, BT, H), jnp.bfloat16)],    # hid_r
        compiler_params=pltpu.CompilerParams(
            dimension_semantics=("parallel",),
            vmem_limit_bytes=vmem_limit),
    )(*x_parts, wih_f, whh_f, b_f, wih_r, whh_r, b_r, fcw_f, fcw_r, fcb, xres)


# ----------------------- weight layout / padding helpers ----------------------
def _prep_direction(w_ih, w_hh, b_ih, b_hh, Gp):
    """PyTorch LSTM weights -> transposed, gate-packed (4H cols padded to Gp), bf16."""
    four_h = w_ih.shape[0]
    pad = Gp - four_h
    wih = jnp.pad(w_ih.astype(jnp.float32).T, ((0, 0), (0, pad))).astype(jnp.bfloat16)
    whh = jnp.pad(w_hh.astype(jnp.float32).T, ((0, 0), (0, pad))).astype(jnp.bfloat16)
    b = jnp.pad((b_ih + b_hh).astype(jnp.float32), (0, pad)).reshape(1, Gp)
    return wih, whh, b


# --------------------------------- forward -----------------------------------
def seq_model_forward(params, inputs):
    """Equivalent of SeqModel.forward.  inputs: (B, T, input_size) f32 -> (B, T, 7) f32."""
    B, T, in_size = inputs.shape
    H = params["lstm"][0]["w_hh"].shape[1]
    label = params["fc_b"].shape[0]
    assert in_size == label, "residual `output += inputs` needs input_size == label_size"

    vmem_limit = _vmem_limit_bytes()
    Gp = _round_up(4 * H, LANE)
    din_max = max(in_size, 2 * H)
    BT, Bp = _choose_batch_tile(B, T, din_max, H, label, Gp, vmem_limit)
    unroll = int(min(T, max(1, 128 // BT)))

    # time-major, batch padded to the tile size
    x_t = jnp.transpose(inputs, (1, 0, 2)).astype(jnp.float32)   # (T, B, D)
    x_t = jnp.pad(x_t, ((0, 0), (0, Bp - B), (0, 0)))            # (T, Bp, D)

    fc_wt = params["fc_w"].astype(jnp.float32).T                 # (2H, label)
    fcw_f = fc_wt[:H].astype(jnp.bfloat16)
    fcw_r = fc_wt[H:].astype(jnp.bfloat16)
    fcb = params["fc_b"].astype(jnp.float32).reshape(1, label)

    n_layers = len(params["lstm"])
    x_parts = (x_t.astype(jnp.bfloat16),)
    out_tbl = None
    for li, lp in enumerate(params["lstm"]):
        fwd = _prep_direction(lp["w_ih"], lp["w_hh"], lp["b_ih"], lp["b_hh"], Gp)
        rev = _prep_direction(lp["w_ih_r"], lp["w_hh_r"], lp["b_ih_r"], lp["b_hh_r"], Gp)
        if li < n_layers - 1:
            x_parts = _bilstm_mid_layer(x_parts, *fwd, *rev, H=H, BT=BT,
                                        unroll=unroll, vmem_limit=vmem_limit)
        else:
            out_tbl = _bilstm_fc_layer(x_parts, *fwd, *rev, fcw_f, fcw_r, fcb, x_t,
                                       H=H, BT=BT, label=label,
                                       unroll=unroll, vmem_limit=vmem_limit)

    out = out_tbl[:, :B, :]                    # (T, B, label)
    return jnp.transpose(out, (1, 0, 2))       # (B, T, label)


# ------------------------------ parameter init --------------------------------
def init_params(key, input_size, hidden_size, num_layers, label_size=7):
    """Deterministic init matching the PyTorch module's parameter shapes."""
    layers = []
    bound = hidden_size ** -0.5
    for layer in range(num_layers):
        d_in = input_size if layer == 0 else 2 * hidden_size
        lp = {}
        for suffix in ("", "_r"):  # forward / reverse direction
            key, k1, k2, k3, k4 = jax.random.split(key, 5)
            lp["w_ih" + suffix] = jax.random.uniform(
                k1, (4 * hidden_size, d_in), jnp.float32, -bound, bound)
            lp["w_hh" + suffix] = jax.random.uniform(
                k2, (4 * hidden_size, hidden_size), jnp.float32, -bound, bound)
            lp["b_ih" + suffix] = jax.random.uniform(
                k3, (4 * hidden_size,), jnp.float32, -bound, bound)
            lp["b_hh" + suffix] = jax.random.uniform(
                k4, (4 * hidden_size,), jnp.float32, -bound, bound)
        layers.append(lp)
    key, kw, kb = jax.random.split(key, 3)
    fc_bound = (2 * hidden_size) ** -0.5
    fc_w = jax.random.uniform(kw, (label_size, 2 * hidden_size),
                              jnp.float32, -fc_bound, fc_bound)
    fc_b = jax.random.uniform(kb, (label_size,), jnp.float32, -fc_bound, fc_bound)
    return {"lstm": layers, "fc_w": fc_w, "fc_b": fc_b}


# ------------------------- pure-JAX f32 reference ------------------------------
def _reference_forward(params, inputs):
    """Mirrors torch: bidirectional multi-layer LSTM -> fc -> residual add (f32)."""
    B, _, _ = inputs.shape
    H = params["lstm"][0]["w_hh"].shape[1]
    x = inputs.astype(jnp.float32)
    for lp in params["lstm"]:
        def run(w_ih, w_hh, b_ih, b_hh, xs, reverse):
            def step(carry, xt):
                h, c = carry
                g = xt @ w_ih.T + b_ih + h @ w_hh.T + b_hh
                i, f, gg, o = jnp.split(g, 4, axis=-1)
                i, f, o = jax.nn.sigmoid(i), jax.nn.sigmoid(f), jax.nn.sigmoid(o)
                gg = jnp.tanh(gg)
                c = f * c + i * gg
                h = o * jnp.tanh(c)
                return (h, c), h
            xs_t = jnp.swapaxes(xs, 0, 1)
            if reverse:
                xs_t = xs_t[::-1]
            carry0 = (jnp.zeros((B, H), jnp.float32), jnp.zeros((B, H), jnp.float32))
            _, hs = lax.scan(step, carry0, xs_t)
            if reverse:
                hs = hs[::-1]
            return jnp.swapaxes(hs, 0, 1)
        hf = run(lp["w_ih"], lp["w_hh"], lp["b_ih"], lp["b_hh"], x, False)
        hr = run(lp["w_ih_r"], lp["w_hh_r"], lp["b_ih_r"], lp["b_hh_r"], x, True)
        x = jnp.concatenate([hf, hr], axis=-1)
    out = x @ params["fc_w"].T + params["fc_b"]
    return out + inputs


# TODO(synk): the CRF branch (use_crf=False) and neg_log_likelihood_loss are not
# part of forward() and are intentionally not implemented.

if __name__ == "__main__":
    key = jax.random.PRNGKey(0)
    input_size = 7      # must equal label_size=7 for `output += inputs` to work
    hidden_size = 32
    num_layers = 2
    B, T = 2, 8

    kp, kx = jax.random.split(key)
    params = init_params(kp, input_size, hidden_size, num_layers)
    x = jax.random.normal(kx, (B, T, input_size), jnp.float32)

    out = jax.jit(seq_model_forward)(params, x)
    out = jax.block_until_ready(out)
    assert out.shape == (B, T, 7) and out.dtype == jnp.float32

    ref = _reference_forward(params, x)
    err = float(jnp.max(jnp.abs(out - ref)))
    assert err < 1e-1, f"max |err| vs f32 reference = {err}"
    print("KERNEL_OK")
</pallas_src>

<mosaic_0001>
module attributes {stable_mosaic.version = 11 : i64} {
  func.func @_bilstm_fc_kernel(%arg0: i32, %arg1: memref<8x16x32xbf16, #tpu.memory_space<vmem>>, %arg2: memref<8x16x32xbf16, #tpu.memory_space<vmem>>, %arg3: memref<64x128xbf16, #tpu.memory_space<vmem>>, %arg4: memref<32x128xbf16, #tpu.memory_space<vmem>>, %arg5: memref<1x128xf32, #tpu.memory_space<vmem>>, %arg6: memref<64x128xbf16, #tpu.memory_space<vmem>>, %arg7: memref<32x128xbf16, #tpu.memory_space<vmem>>, %arg8: memref<1x128xf32, #tpu.memory_space<vmem>>, %arg9: memref<32x7xbf16, #tpu.memory_space<vmem>>, %arg10: memref<32x7xbf16, #tpu.memory_space<vmem>>, %arg11: memref<1x7xf32, #tpu.memory_space<vmem>>, %arg12: memref<8x16x7xf32, #tpu.memory_space<vmem>>, %arg13: memref<8x16x7xf32, #tpu.memory_space<vmem>>, %arg14: memref<128x128xbf16, #tpu.memory_space<vmem>>, %arg15: memref<128x128xbf16, #tpu.memory_space<vmem>>, %arg16: memref<8x16x32xbf16, #tpu.memory_space<vmem>>, %arg17: memref<8x16x32xbf16, #tpu.memory_space<vmem>>) attributes {dimension_semantics = [#tpu.dimension_semantics<parallel>], iteration_bounds = array<i64: 1>, scalar_prefetch = 0 : i64, scratch_operands = 4 : i64, tpu.core_type = #tpu.core_type<tc>, window_params = [{transform_indices = @transform_0, window_bounds = array<i64: 8, 16, 32>}, {transform_indices = @transform_1, window_bounds = array<i64: 8, 16, 32>}, {pipeline_mode = #tpu.pipeline_mode<synchronous>, transform_indices = @transform_2, window_bounds = array<i64: 64, 128>}, {pipeline_mode = #tpu.pipeline_mode<synchronous>, transform_indices = @transform_3, window_bounds = array<i64: 32, 128>}, {pipeline_mode = #tpu.pipeline_mode<synchronous>, transform_indices = @transform_4, window_bounds = array<i64: 1, 128>}, {pipeline_mode = #tpu.pipeline_mode<synchronous>, transform_indices = @transform_5, window_bounds = array<i64: 64, 128>}, {pipeline_mode = #tpu.pipeline_mode<synchronous>, transform_indices = @transform_6, window_bounds = array<i64: 32, 128>}, {pipeline_mode = #tpu.pipeline_mode<synchronous>, transform_indices = @transform_7, window_bounds = array<i64: 1, 128>}, {pipeline_mode = #tpu.pipeline_mode<synchronous>, transform_indices = @transform_8, window_bounds = array<i64: 32, 7>}, {pipeline_mode = #tpu.pipeline_mode<synchronous>, transform_indices = @transform_9, window_bounds = array<i64: 32, 7>}, {pipeline_mode = #tpu.pipeline_mode<synchronous>, transform_indices = @transform_10, window_bounds = array<i64: 1, 7>}, {transform_indices = @transform_11, window_bounds = array<i64: 8, 16, 7>}, {transform_indices = @transform_12, window_bounds = array<i64: 8, 16, 7>}]} {
    %c0 = arith.constant 0 : index
    %c0_0 = arith.constant 0 : index
    %c0_1 = arith.constant 0 : index
    %0 = vector.load %arg1[%c0, %c0_0, %c0_1] : memref<8x16x32xbf16, #tpu.memory_space<vmem>>, vector<8x16x32xbf16>
    %1 = vector.shape_cast %0 : vector<8x16x32xbf16> to vector<128x32xbf16>
    %c0_2 = arith.constant 0 : index
    %c0_3 = arith.constant 0 : index
    %c0_4 = arith.constant 0 : index
    %2 = vector.load %arg2[%c0_2, %c0_3, %c0_4] : memref<8x16x32xbf16, #tpu.memory_space<vmem>>, vector<8x16x32xbf16>
    %3 = vector.shape_cast %2 : vector<8x16x32xbf16> to vector<128x32xbf16>
    %c0_5 = arith.constant 0 : index
    %c0_6 = arith.constant 0 : index
    %4 = vector.load %arg3[%c0_5, %c0_6] : memref<64x128xbf16, #tpu.memory_space<vmem>>, vector<32x128xbf16>
    %cst = arith.constant dense<0.000000e+00> : vector<128x128xf32>
    %5 = tpu.matmul %1, %4, %cst {dimension_numbers = #tpu.dot_dimension_numbers<[1], [0], [0], [1], [0, 0, 1, 1], [], []>} : vector<128x32xbf16>, vector<32x128xbf16>, vector<128x128xf32> -> vector<128x128xf32>
    %c32 = arith.constant 32 : index
    %c0_7 = arith.constant 0 : index
    %6 = vector.load %arg3[%c32, %c0_7] : memref<64x128xbf16, #tpu.memory_space<vmem>>, vector<32x128xbf16>
    %cst_8 = arith.constant dense<0.000000e+00> : vector<128x128xf32>
    %7 = tpu.matmul %3, %6, %cst_8 {dimension_numbers = #tpu.dot_dimension_numbers<[1], [0], [0], [1], [0, 0, 1, 1], [], []>} : vector<128x32xbf16>, vector<32x128xbf16>, vector<128x128xf32> -> vector<128x128xf32>
    %8 = arith.addf %5, %7 : vector<128x128xf32>
    %9 = arith.truncf %8 : vector<128x128xf32> to vector<128x128xbf16>
    %c0_9 = arith.constant 0 : index
    %c0_10 = arith.constant 0 : index
    %10 = vector.load %arg14[%c0_9, %c0_10] : memref<128x128xbf16, #tpu.memory_space<vmem>>, vector<128x128xbf16>
    tpu.vector_store %arg14[%c0_9, %c0_10], %9 {strides = array<i32>} : memref<128x128xbf16, #tpu.memory_space<vmem>>, vector<128x128xbf16>,
    %c0_11 = arith.constant 0 : index
    %c0_12 = arith.constant 0 : index
    %11 = vector.load %arg6[%c0_11, %c0_12] : memref<64x128xbf16, #tpu.memory_space<vmem>>, vector<32x128xbf16>
    %cst_13 = arith.constant dense<0.000000e+00> : vector<128x128xf32>
    %12 = tpu.matmul %1, %11, %cst_13 {dimension_numbers = #tpu.dot_dimension_numbers<[1], [0], [0], [1], [0, 0, 1, 1], [], []>} : vector<128x32xbf16>, vector<32x128xbf16>, vector<128x128xf32> -> vector<128x128xf32>
    %c32_14 = arith.constant 32 : index
    %c0_15 = arith.constant 0 : index
    %13 = vector.load %arg6[%c32_14, %c0_15] : memref<64x128xbf16, #tpu.memory_space<vmem>>, vector<32x128xbf16>
    %cst_16 = arith.constant dense<0.000000e+00> : vector<128x128xf32>
    %14 = tpu.matmul %3, %13, %cst_16 {dimension_numbers = #tpu.dot_dimension_numbers<[1], [0], [0], [1], [0, 0, 1, 1], [], []>} : vector<128x32xbf16>, vector<32x128xbf16>, vector<128x128xf32> -> vector<128x128xf32>
    %15 = arith.addf %12, %14 : vector<128x128xf32>
    %16 = arith.truncf %15 : vector<128x128xf32> to vector<128x128xbf16>
    %c0_17 = arith.constant 0 : index
    %c0_18 = arith.constant 0 : index
    %17 = vector.load %arg15[%c0_17, %c0_18] : memref<128x128xbf16, #tpu.memory_space<vmem>>, vector<128x128xbf16>
    tpu.vector_store %arg15[%c0_17, %c0_18], %16 {strides = array<i32>} : memref<128x128xbf16, #tpu.memory_space<vmem>>, vector<128x128xbf16>,
    %c0_19 = arith.constant 0 : index
    %c0_20 = arith.constant 0 : index
    %18 = vector.load %arg4[%c0_19, %c0_20] : memref<32x128xbf16, #tpu.memory_space<vmem>>, vector<32x128xbf16>
    %c0_21 = arith.constant 0 : index
    %c0_22 = arith.constant 0 : index
    %19 = vector.load %arg7[%c0_21, %c0_22] : memref<32x128xbf16, #tpu.memory_space<vmem>>, vector<32x128xbf16>
    %c0_23 = arith.constant 0 : index
    %c0_24 = arith.constant 0 : index
    %20 = vector.load %arg5[%c0_23, %c0_24] : memref<1x128xf32, #tpu.memory_space<vmem>>, vector<1x128xf32>
    %21 = vector.shape_cast %20 : vector<1x128xf32> to vector<1x128xf32>
    %22 = vector.broadcast %21 : vector<1x128xf32> to vector<16x128xf32>
    %c0_25 = arith.constant 0 : index
    %c0_26 = arith.constant 0 : index
    %23 = vector.load %arg8[%c0_25, %c0_26] : memref<1x128xf32, #tpu.memory_space<vmem>>, vector<1x128xf32>
    %24 = vector.shape_cast %23 : vector<1x128xf32> to vector<1x128xf32>
    %25 = vector.broadcast %24 : vector<1x128xf32> to vector<16x128xf32>
    %cst_27 = arith.constant 0.000000e+00 : bf16
    %26 = vector.broadcast %cst_27 : bf16 to vector<16x32xbf16>
    %cst_28 = arith.constant 0.000000e+00 : f32
    %27 = vector.broadcast %cst_28 : f32 to vector<16x32xf32>
    %cst_29 = arith.constant 0.000000e+00 : bf16
    %28 = vector.broadcast %cst_29 : bf16 to vector<16x32xbf16>
    %cst_30 = arith.constant 0.000000e+00 : f32
    %29 = vector.broadcast %cst_30 : f32 to vector<16x32xf32>
    %c0_i32 = arith.constant 0 : i32
    %c16_i32 = arith.constant 16 : i32
    %30 = arith.muli %c0_i32, %c16_i32 : i32
    %31 = tpu.assume_multiple %30, 16 : i32
    %cst_31 = arith.constant dense<0.000000e+00> : vector<16x128xf32>
    %32 = tpu.matmul %26, %18, %cst_31 {dimension_numbers = #tpu.dot_dimension_numbers<[1], [0], [0], [1], [0, 0, 1, 1], [], []>} : vector<16x32xbf16>, vector<32x128xbf16>, vector<16x128xf32> -> vector<16x128xf32>
    %33 = arith.index_cast %31 : i32 to index
    %c0_32 = arith.constant 0 : index
    %34 = vector.load %arg14[%33, %c0_32] : memref<128x128xbf16, #tpu.memory_space<vmem>>, vector<16x128xbf16>
    %35 = arith.extf %34 : vector<16x128xbf16> to vector<16x128xf32>
    %36 = arith.addf %32, %35 : vector<16x128xf32>
    %37 = arith.addf %36, %22 : vector<16x128xf32>
    %38 = vector.extract_strided_slice %37 {offsets = [0, 0], sizes = [16, 32], strides = [1, 1]} : vector<16x128xf32> to vector<16x32xf32>
    %cst_33 = arith.constant 5.000000e-01 : f32
    %39 = vector.broadcast %cst_33 : f32 to vector<16x32xf32>
    %40 = arith.mulf %39, %38 : vector<16x32xf32>
    %41 = math.tanh %40 : vector<16x32xf32>
    %cst_34 = arith.constant 1.000000e+00 : f32
    %42 = vector.broadcast %cst_34 : f32 to vector<16x32xf32>
    %43 = arith.addf %42, %41 : vector<16x32xf32>
    %cst_35 = arith.constant 5.000000e-01 : f32
    %44 = vector.broadcast %cst_35 : f32 to vector<16x32xf32>
    %45 = arith.mulf %44, %43 : vector<16x32xf32>
    %46 = vector.extract_strided_slice %37 {offsets = [0, 32], sizes = [16, 32], strides = [1, 1]} : vector<16x128xf32> to vector<16x32xf32>
    %cst_36 = arith.constant 5.000000e-01 : f32
    %47 = vector.broadcast %cst_36 : f32 to vector<16x32xf32>
    %48 = arith.mulf %47, %46 : vector<16x32xf32>
    %49 = math.tanh %48 : vector<16x32xf32>
    %cst_37 = arith.constant 1.000000e+00 : f32
    %50 = vector.broadcast %cst_37 : f32 to vector<16x32xf32>
    %51 = arith.addf %50, %49 : vector<16x32xf32>
    %cst_38 = arith.constant 5.000000e-01 : f32
    %52 = vector.broadcast %cst_38 : f32 to vector<16x32xf32>
    %53 = arith.mulf %52, %51 : vector<16x32xf32>
    %54 = vector.extract_strided_slice %37 {offsets = [0, 64], sizes = [16, 32], strides = [1, 1]} : vector<16x128xf32> to vector<16x32xf32>
    %55 = math.tanh %54 : vector<16x32xf32>
    %56 = vector.extract_strided_slice %37 {offsets = [0, 96], sizes = [16, 32], strides = [1, 1]} : vector<16x128xf32> to vector<16x32xf32>
    %cst_39 = arith.constant 5.000000e-01 : f32
    %57 = vector.broadcast %cst_39 : f32 to vector<16x32xf32>
    %58 = arith.mulf %57, %56 : vector<16x32xf32>
    %59 = math.tanh %58 : vector<16x32xf32>
    %cst_40 = arith.constant 1.000000e+00 : f32
    %60 = vector.broadcast %cst_40 : f32 to vector<16x32xf32>
    %61 = arith.addf %60, %59 : vector<16x32xf32>
    %cst_41 = arith.constant 5.000000e-01 : f32
    %62 = vector.broadcast %cst_41 : f32 to vector<16x32xf32>
    %63 = arith.mulf %62, %61 : vector<16x32xf32>
    %64 = arith.mulf %53, %27 : vector<16x32xf32>
    %65 = arith.mulf %45, %55 : vector<16x32xf32>
    %66 = arith.addf %64, %65 : vector<16x32xf32>
    %67 = math.tanh %66 : vector<16x32xf32>
    %68 = arith.mulf %63, %67 : vector<16x32xf32>
    %69 = arith.truncf %68 : vector<16x32xf32> to vector<16x32xbf16>
    %70 = arith.index_cast %c0_i32 : i32 to index
    %c0_42 = arith.constant 0 : index
    %c0_43 = arith.constant 0 : index
    %71 = vector.load %arg16[%70, %c0_42, %c0_43] : memref<8x16x32xbf16, #tpu.memory_space<vmem>>, vector<1x16x32xbf16>
    %72 = vector.shape_cast %71 : vector<1x16x32xbf16> to vector<16x32xbf16>
    %73 = vector.shape_cast %69 : vector<16x32xbf16> to vector<1x16x32xbf16>
    tpu.vector_store %arg16[%70, %c0_42, %c0_43], %73 {strides = array<i32>} : memref<8x16x32xbf16, #tpu.memory_space<vmem>>, vector<1x16x32xbf16>,
    %c7_i32 = arith.constant 7 : i32
    %74 = arith.subi %c7_i32, %c0_i32 : i32
    %c16_i32_44 = arith.constant 16 : i32
    %75 = arith.muli %74, %c16_i32_44 : i32
    %76 = tpu.assume_multiple %75, 16 : i32
    %cst_45 = arith.constant dense<0.000000e+00> : vector<16x128xf32>
    %77 = tpu.matmul %28, %19, %cst_45 {dimension_numbers = #tpu.dot_dimension_numbers<[1], [0], [0], [1], [0, 0, 1, 1], [], []>} : vector<16x32xbf16>, vector<32x128xbf16>, vector<16x128xf32> -> vector<16x128xf32>
    %78 = arith.index_cast %76 : i32 to index
    %c0_46 = arith.constant 0 : index
    %79 = vector.load %arg15[%78, %c0_46] : memref<128x128xbf16, #tpu.memory_space<vmem>>, vector<16x128xbf16>
    %80 = arith.extf %79 : vector<16x128xbf16> to vector<16x128xf32>
    %81 = arith.addf %77, %80 : vector<16x128xf32>
    %82 = arith.addf %81, %25 : vector<16x128xf32>
    %83 = vector.extract_strided_slice %82 {offsets = [0, 0], sizes = [16, 32], strides = [1, 1]} : vector<16x128xf32> to vector<16x32xf32>
    %cst_47 = arith.constant 5.000000e-01 : f32
    %84 = vector.broadcast %cst_47 : f32 to vector<16x32xf32>
    %85 = arith.mulf %84, %83 : vector<16x32xf32>
    %86 = math.tanh %85 : vector<16x32xf32>
    %cst_48 = arith.constant 1.000000e+00 : f32
    %87 = vector.broadcast %cst_48 : f32 to vector<16x32xf32>
    %88 = arith.addf %87, %86 : vector<16x32xf32>
    %cst_49 = arith.constant 5.000000e-01 : f32
    %89 = vector.broadcast %cst_49 : f32 to vector<16x32xf32>
    %90 = arith.mulf %89, %88 : vector<16x32xf32>
    %91 = vector.extract_strided_slice %82 {offsets = [0, 32], sizes = [16, 32], strides = [1, 1]} : vector<16x128xf32> to vector<16x32xf32>
    %cst_50 = arith.constant 5.000000e-01 : f32
    %92 = vector.broadcast %cst_50 : f32 to vector<16x32xf32>
    %93 = arith.mulf %92, %91 : vector<16x32xf32>
    %94 = math.tanh %93 : vector<16x32xf32>
    %cst_51 = arith.constant 1.000000e+00 : f32
    %95 = vector.broadcast %cst_51 : f32 to vector<16x32xf32>
    %96 = arith.addf %95, %94 : vector<16x32xf32>
    %cst_52 = arith.constant 5.000000e-01 : f32
    %97 = vector.broadcast %cst_52 : f32 to vector<16x32xf32>
    %98 = arith.mulf %97, %96 : vector<16x32xf32>
    %99 = vector.extract_strided_slice %82 {offsets = [0, 64], sizes = [16, 32], strides = [1, 1]} : vector<16x128xf32> to vector<16x32xf32>
    %100 = math.tanh %99 : vector<16x32xf32>
    %101 = vector.extract_strided_slice %82 {offsets = [0, 96], sizes = [16, 32], strides = [1, 1]} : vector<16x128xf32> to vector<16x32xf32>
    %cst_53 = arith.constant 5.000000e-01 : f32
    %102 = vector.broadcast %cst_53 : f32 to vector<16x32xf32>
    %103 = arith.mulf %102, %101 : vector<16x32xf32>
    %104 = math.tanh %103 : vector<16x32xf32>
    %cst_54 = arith.constant 1.000000e+00 : f32
    %105 = vector.broadcast %cst_54 : f32 to vector<16x32xf32>
    %106 = arith.addf %105, %104 : vector<16x32xf32>
    %cst_55 = arith.constant 5.000000e-01 : f32
    %107 = vector.broadcast %cst_55 : f32 to vector<16x32xf32>
    %108 = arith.mulf %107, %106 : vector<16x32xf32>
    %109 = arith.mulf %98, %29 : vector<16x32xf32>
    %110 = arith.mulf %90, %100 : vector<16x32xf32>
    %111 = arith.addf %109, %110 : vector<16x32xf32>
    %112 = math.tanh %111 : vector<16x32xf32>
    %113 = arith.mulf %108, %112 : vector<16x32xf32>
    %114 = arith.truncf %113 : vector<16x32xf32> to vector<16x32xbf16>
    %115 = arith.index_cast %74 : i32 to index
    %c0_56 = arith.constant 0 : index
    %c0_57 = arith.constant 0 : index
    %116 = vector.load %arg17[%115, %c0_56, %c0_57] : memref<8x16x32xbf16, #tpu.memory_space<vmem>>, vector<1x16x32xbf16>
    %117 = vector.shape_cast %116 : vector<1x16x32xbf16> to vector<16x32xbf16>
    %118 = vector.shape_cast %114 : vector<16x32xbf16> to vector<1x16x32xbf16>
    tpu.vector_store %arg17[%115, %c0_56, %c0_57], %118 {strides = array<i32>} : memref<8x16x32xbf16, #tpu.memory_space<vmem>>, vector<1x16x32xbf16>,
    %c1_i32 = arith.constant 1 : i32
    %c16_i32_58 = arith.constant 16 : i32
    %119 = arith.muli %c1_i32, %c16_i32_58 : i32
    %120 = tpu.assume_multiple %119, 16 : i32
    %cst_59 = arith.constant dense<0.000000e+00> : vector<16x128xf32>
    %121 = tpu.matmul %69, %18, %cst_59 {dimension_numbers = #tpu.dot_dimension_numbers<[1], [0], [0], [1], [0, 0, 1, 1], [], []>} : vector<16x32xbf16>, vector<32x128xbf16>, vector<16x128xf32> -> vector<16x128xf32>
    %122 = arith.index_cast %120 : i32 to index
    %c0_60 = arith.constant 0 : index
    %123 = vector.load %arg14[%122, %c0_60] : memref<128x128xbf16, #tpu.memory_space<vmem>>, vector<16x128xbf16>
    %124 = arith.extf %123 : vector<16x128xbf16> to vector<16x128xf32>
    %125 = arith.addf %121, %124 : vector<16x128xf32>
    %126 = arith.addf %125, %22 : vector<16x128xf32>
    %127 = vector.extract_strided_slice %126 {offsets = [0, 0], sizes = [16, 32], strides = [1, 1]} : vector<16x128xf32> to vector<16x32xf32>
    %cst_61 = arith.constant 5.000000e-01 : f32
    %128 = vector.broadcast %cst_61 : f32 to vector<16x32xf32>
    %129 = arith.mulf %128, %127 : vector<16x32xf32>
    %130 = math.tanh %129 : vector<16x32xf32>
    %cst_62 = arith.constant 1.000000e+00 : f32
    %131 = vector.broadcast %cst_62 : f32 to vector<16x32xf32>
    %132 = arith.addf %131, %130 : vector<16x32xf32>
    %cst_63 = arith.constant 5.000000e-01 : f32
    %133 = vector.broadcast %cst_63 : f32 to vector<16x32xf32>
    %134 = arith.mulf %133, %132 : vector<16x32xf32>
    %135 = vector.extract_strided_slice %126 {offsets = [0, 32], sizes = [16, 32], strides = [1, 1]} : vector<16x128xf32> to vector<16x32xf32>
    %cst_64 = arith.constant 5.000000e-01 : f32
    %136 = vector.broadcast %cst_64 : f32 to vector<16x32xf32>
    %137 = arith.mulf %136, %135 : vector<16x32xf32>
    %138 = math.tanh %137 : vector<16x32xf32>
    %cst_65 = arith.constant 1.000000e+00 : f32
    %139 = vector.broadcast %cst_65 : f32 to vector<16x32xf32>
    %140 = arith.addf %139, %138 : vector<16x32xf32>
    %cst_66 = arith.constant 5.000000e-01 : f32
    %141 = vector.broadcast %cst_66 : f32 to vector<16x32xf32>
    %142 = arith.mulf %141, %140 : vector<16x32xf32>
    %143 = vector.extract_strided_slice %126 {offsets = [0, 64], sizes = [16, 32], strides = [1, 1]} : vector<16x128xf32> to vector<16x32xf32>
    %144 = math.tanh %143 : vector<16x32xf32>
    %145 = vector.extract_strided_slice %126 {offsets = [0, 96], sizes = [16, 32], strides = [1, 1]} : vector<16x128xf32> to vector<16x32xf32>
    %cst_67 = arith.constant 5.000000e-01 : f32
    %146 = vector.broadcast %cst_67 : f32 to vector<16x32xf32>
    %147 = arith.mulf %146, %145 : vector<16x32xf32>
    %148 = math.tanh %147 : vector<16x32xf32>
    %cst_68 = arith.constant 1.000000e+00 : f32
    %149 = vector.broadcast %cst_68 : f32 to vector<16x32xf32>
    %150 = arith.addf %149, %148 : vector<16x32xf32>
    %cst_69 = arith.constant 5.000000e-01 : f32
    %151 = vector.broadcast %cst_69 : f32 to vector<16x32xf32>
    %152 = arith.mulf %151, %150 : vector<16x32xf32>
    %153 = arith.mulf %142, %66 : vector<16x32xf32>
    %154 = arith.mulf %134, %144 : vector<16x32xf32>
    %155 = arith.addf %153, %154 : vector<16x32xf32>
    %156 = math.tanh %155 : vector<16x32xf32>
    %157 = arith.mulf %152, %156 : vector<16x32xf32>
    %158 = arith.truncf %157 : vector<16x32xf32> to vector<16x32xbf16>
    %159 = arith.index_cast %c1_i32 : i32 to index
    %c0_70 = arith.constant 0 : index
    %c0_71 = arith.constant 0 : index
    %160 = vector.load %arg16[%159, %c0_70, %c0_71] : memref<8x16x32xbf16, #tpu.memory_space<vmem>>, vector<1x16x32xbf16>
    %161 = vector.shape_cast %160 : vector<1x16x32xbf16> to vector<16x32xbf16>
    %162 = vector.shape_cast %158 : vector<16x32xbf16> to vector<1x16x32xbf16>
    tpu.vector_store %arg16[%159, %c0_70, %c0_71], %162 {strides = array<i32>} : memref<8x16x32xbf16, #tpu.memory_space<vmem>>, vector<1x16x32xbf16>,
    %c7_i32_72 = arith.constant 7 : i32
    %163 = arith.subi %c7_i32_72, %c1_i32 : i32
    %c16_i32_73 = arith.constant 16 : i32
    %164 = arith.muli %163, %c16_i32_73 : i32
    %165 = tpu.assume_multiple %164, 16 : i32
    %cst_74 = arith.constant dense<0.000000e+00> : vector<16x128xf32>
    %166 = tpu.matmul %114, %19, %cst_74 {dimension_numbers = #tpu.dot_dimension_numbers<[1], [0], [0], [1], [0, 0, 1, 1], [], []>} : vector<16x32xbf16>, vector<32x128xbf16>, vector<16x128xf32> -> vector<16x128xf32>
    %167 = arith.index_cast %165 : i32 to index
    %c0_75 = arith.constant 0 : index
    %168 = vector.load %arg15[%167, %c0_75] : memref<128x128xbf16, #tpu.memory_space<vmem>>, vector<16x128xbf16>
    %169 = arith.extf %168 : vector<16x128xbf16> to vector<16x128xf32>
    %170 = arith.addf %166, %169 : vector<16x128xf32>
    %171 = arith.addf %170, %25 : vector<16x128xf32>
    %172 = vector.extract_strided_slice %171 {offsets = [0, 0], sizes = [16, 32], strides = [1, 1]} : vector<16x128xf32> to vector<16x32xf32>
    %cst_76 = arith.constant 5.000000e-01 : f32
    %173 = vector.broadcast %cst_76 : f32 to vector<16x32xf32>
    %174 = arith.mulf %173, %172 : vector<16x32xf32>
    %175 = math.tanh %174 : vector<16x32xf32>
    %cst_77 = arith.constant 1.000000e+00 : f32
    %176 = vector.broadcast %cst_77 : f32 to vector<16x32xf32>
    %177 = arith.addf %176, %175 : vector<16x32xf32>
    %cst_78 = arith.constant 5.000000e-01 : f32
    %178 = vector.broadcast %cst_78 : f32 to vector<16x32xf32>
    %179 = arith.mulf %178, %177 : vector<16x32xf32>
    %180 = vector.extract_strided_slice %171 {offsets = [0, 32], sizes = [16, 32], strides = [1, 1]} : vector<16x128xf32> to vector<16x32xf32>
    %cst_79 = arith.constant 5.000000e-01 : f32
    %181 = vector.broadcast %cst_79 : f32 to vector<16x32xf32>
    %182 = arith.mulf %181, %180 : vector<16x32xf32>
    %183 = math.tanh %182 : vector<16x32xf32>
    %cst_80 = arith.constant 1.000000e+00 : f32
    %184 = vector.broadcast %cst_80 : f32 to vector<16x32xf32>
    %185 = arith.addf %184, %183 : vector<16x32xf32>
    %cst_81 = arith.constant 5.000000e-01 : f32
    %186 = vector.broadcast %cst_81 : f32 to vector<16x32xf32>
    %187 = arith.mulf %186, %185 : vector<16x32xf32>
    %188 = vector.extract_strided_slice %171 {offsets = [0, 64], sizes = [16, 32], strides = [1, 1]} : vector<16x128xf32> to vector<16x32xf32>
    %189 = math.tanh %188 : vector<16x32xf32>
    %190 = vector.extract_strided_slice %171 {offsets = [0, 96], sizes = [16, 32], strides = [1, 1]} : vector<16x128xf32> to vector<16x32xf32>
    %cst_82 = arith.constant 5.000000e-01 : f32
    %191 = vector.broadcast %cst_82 : f32 to vector<16x32xf32>
    %192 = arith.mulf %191, %190 : vector<16x32xf32>
    %193 = math.tanh %192 : vector<16x32xf32>
    %cst_83 = arith.constant 1.000000e+00 : f32
    %194 = vector.broadcast %cst_83 : f32 to vector<16x32xf32>
    %195 = arith.addf %194, %193 : vector<16x32xf32>
    %cst_84 = arith.constant 5.000000e-01 : f32
    %196 = vector.broadcast %cst_84 : f32 to vector<16x32xf32>
    %197 = arith.mulf %196, %195 : vector<16x32xf32>
    %198 = arith.mulf %187, %111 : vector<16x32xf32>
    %199 = arith.mulf %179, %189 : vector<16x32xf32>
    %200 = arith.addf %198, %199 : vector<16x32xf32>
    %201 = math.tanh %200 : vector<16x32xf32>
    %202 = arith.mulf %197, %201 : vector<16x32xf32>
    %203 = arith.truncf %202 : vector<16x32xf32> to vector<16x32xbf16>
    %204 = arith.index_cast %163 : i32 to index
    %c0_85 = arith.constant 0 : index
    %c0_86 = arith.constant 0 : index
    %205 = vector.load %arg17[%204, %c0_85, %c0_86] : memref<8x16x32xbf16, #tpu.memory_space<vmem>>, vector<1x16x32xbf16>
    %206 = vector.shape_cast %205 : vector<1x16x32xbf16> to vector<16x32xbf16>
    %207 = vector.shape_cast %203 : vector<16x32xbf16> to vector<1x16x32xbf16>
    tpu.vector_store %arg17[%204, %c0_85, %c0_86], %207 {strides = array<i32>} : memref<8x16x32xbf16, #tpu.memory_space<vmem>>, vector<1x16x32xbf16>,
    %c2_i32 = arith.constant 2 : i32
    %c16_i32_87 = arith.constant 16 : i32
    %208 = arith.muli %c2_i32, %c16_i32_87 : i32
    %209 = tpu.assume_multiple %208, 16 : i32
    %cst_88 = arith.constant dense<0.000000e+00> : vector<16x128xf32>
    %210 = tpu.matmul %158, %18, %cst_88 {dimension_numbers = #tpu.dot_dimension_numbers<[1], [0], [0], [1], [0, 0, 1, 1], [], []>} : vector<16x32xbf16>, vector<32x128xbf16>, vector<16x128xf32> -> vector<16x128xf32>
    %211 = arith.index_cast %209 : i32 to index
    %c0_89 = arith.constant 0 : index
    %212 = vector.load %arg14[%211, %c0_89] : memref<128x128xbf16, #tpu.memory_space<vmem>>, vector<16x128xbf16>
    %213 = arith.extf %212 : vector<16x128xbf16> to vector<16x128xf32>
    %214 = arith.addf %210, %213 : vector<16x128xf32>
    %215 = arith.addf %214, %22 : vector<16x128xf32>
    %216 = vector.extract_strided_slice %215 {offsets = [0, 0], sizes = [16, 32], strides = [1, 1]} : vector<16x128xf32> to vector<16x32xf32>
    %cst_90 = arith.constant 5.000000e-01 : f32
    %217 = vector.broadcast %cst_90 : f32 to vector<16x32xf32>
    %218 = arith.mulf %217, %216 : vector<16x32xf32>
    %219 = math.tanh %218 : vector<16x32xf32>
    %cst_91 = arith.constant 1.000000e+00 : f32
    %220 = vector.broadcast %cst_91 : f32 to vector<16x32xf32>
    %221 = arith.addf %220, %219 : vector<16x32xf32>
    %cst_92 = arith.constant 5.000000e-01 : f32
    %222 = vector.broadcast %cst_92 : f32 to vector<16x32xf32>
    %223 = arith.mulf %222, %221 : vector<16x32xf32>
    %224 = vector.extract_strided_slice %215 {offsets = [0, 32], sizes = [16, 32], strides = [1, 1]} : vector<16x128xf32> to vector<16x32xf32>
    %cst_93 = arith.constant 5.000000e-01 : f32
    %225 = vector.broadcast %cst_93 : f32 to vector<16x32xf32>
    %226 = arith.mulf %225, %224 : vector<16x32xf32>
    %227 = math.tanh %226 : vector<16x32xf32>
    %cst_94 = arith.constant 1.000000e+00 : f32
    %228 = vector.broadcast %cst_94 : f32 to vector<16x32xf32>
    %229 = arith.addf %228, %227 : vector<16x32xf32>
    %cst_95 = arith.constant 5.000000e-01 : f32
    %230 = vector.broadcast %cst_95 : f32 to vector<16x32xf32>
    %231 = arith.mulf %230, %229 : vector<16x32xf32>
    %232 = vector.extract_strided_slice %215 {offsets = [0, 64], sizes = [16, 32], strides = [1, 1]} : vector<16x128xf32> to vector<16x32xf32>
    %233 = math.tanh %232 : vector<16x32xf32>
    %234 = vector.extract_strided_slice %215 {offsets = [0, 96], sizes = [16, 32], strides = [1, 1]} : vector<16x128xf32> to vector<16x32xf32>
    %cst_96 = arith.constant 5.000000e-01 : f32
    %235 = vector.broadcast %cst_96 : f32 to vector<16x32xf32>
    %236 = arith.mulf %235, %234 : vector<16x32xf32>
    %237 = math.tanh %236 : vector<16x32xf32>
    %cst_97 = arith.constant 1.000000e+00 : f32
    %238 = vector.broadcast %cst_97 : f32 to vector<16x32xf32>
    %239 = arith.addf %238, %237 : vector<16x32xf32>
    %cst_98 = arith.constant 5.000000e-01 : f32
    %240 = vector.broadcast %cst_98 : f32 to vector<16x32xf32>
    %241 = arith.mulf %240, %239 : vector<16x32xf32>
    %242 = arith.mulf %231, %155 : vector<16x32xf32>
    %243 = arith.mulf %223, %233 : vector<16x32xf32>
    %244 = arith.addf %242, %243 : vector<16x32xf32>
    %245 = math.tanh %244 : vector<16x32xf32>
    %246 = arith.mulf %241, %245 : vector<16x32xf32>
    %247 = arith.truncf %246 : vector<16x32xf32> to vector<16x32xbf16>
    %248 = arith.index_cast %c2_i32 : i32 to index
    %c0_99 = arith.constant 0 : index
    %c0_100 = arith.constant 0 : index
    %249 = vector.load %arg16[%248, %c0_99, %c0_100] : memref<8x16x32xbf16, #tpu.memory_space<vmem>>, vector<1x16x32xbf16>
    %250 = vector.shape_cast %249 : vector<1x16x32xbf16> to vector<16x32xbf16>
    %251 = vector.shape_cast %247 : vector<16x32xbf16> to vector<1x16x32xbf16>
    tpu.vector_store %arg16[%248, %c0_99, %c0_100], %251 {strides = array<i32>} : memref<8x16x32xbf16, #tpu.memory_space<vmem>>, vector<1x16x32xbf16>,
    %c7_i32_101 = arith.constant 7 : i32
    %252 = arith.subi %c7_i32_101, %c2_i32 : i32
    %c16_i32_102 = arith.constant 16 : i32
    %253 = arith.muli %252, %c16_i32_102 : i32
    %254 = tpu.assume_multiple %253, 16 : i32
    %cst_103 = arith.constant dense<0.000000e+00> : vector<16x128xf32>
    %255 = tpu.matmul %203, %19, %cst_103 {dimension_numbers = #tpu.dot_dimension_numbers<[1], [0], [0], [1], [0, 0, 1, 1], [], []>} : vector<16x32xbf16>, vector<32x128xbf16>, vector<16x128xf32> -> vector<16x128xf32>
    %256 = arith.index_cast %254 : i32 to index
    %c0_104 = arith.constant 0 : index
    %257 = vector.load %arg15[%256, %c0_104] : memref<128x128xbf16, #tpu.memory_space<vmem>>, vector<16x128xbf16>
    %258 = arith.extf %257 : vector<16x128xbf16> to vector<16x128xf32>
    %259 = arith.addf %255, %258 : vector<16x128xf32>
    %260 = arith.addf %259, %25 : vector<16x128xf32>
    %261 = vector.extract_strided_slice %260 {offsets = [0, 0], sizes = [16, 32], strides = [1, 1]} : vector<16x128xf32> to vector<16x32xf32>
    %cst_105 = arith.constant 5.000000e-01 : f32
    %262 = vector.broadcast %cst_105 : f32 to vector<16x32xf32>
    %263 = arith.mulf %262, %261 : vector<16x32xf32>
    %264 = math.tanh %263 : vector<16x32xf32>
    %cst_106 = arith.constant 1.000000e+00 : f32
    %265 = vector.broadcast %cst_106 : f32 to vector<16x32xf32>
    %266 = arith.addf %265, %264 : vector<16x32xf32>
    %cst_107 = arith.constant 5.000000e-01 : f32
    %267 = vector.broadcast %cst_107 : f32 to vector<16x32xf32>
    %268 = arith.mulf %267, %266 : vector<16x32xf32>
    %269 = vector.extract_strided_slice %260 {offsets = [0, 32], sizes = [16, 32], strides = [1, 1]} : vector<16x128xf32> to vector<16x32xf32>
    %cst_108 = arith.constant 5.000000e-01 : f32
    %270 = vector.broadcast %cst_108 : f32 to vector<16x32xf32>
    %271 = arith.mulf %270, %269 : vector<16x32xf32>
    %272 = math.tanh %271 : vector<16x32xf32>
    %cst_109 = arith.constant 1.000000e+00 : f32
    %273 = vector.broadcast %cst_109 : f32 to vector<16x32xf32>
    %274 = arith.addf %273, %272 : vector<16x32xf32>
    %cst_110 = arith.constant 5.000000e-01 : f32
    %275 = vector.broadcast %cst_110 : f32 to vector<16x32xf32>
    %276 = arith.mulf %275, %274 : vector<16x32xf32>
    %277 = vector.extract_strided_slice %260 {offsets = [0, 64], sizes = [16, 32], strides = [1, 1]} : vector<16x128xf32> to vector<16x32xf32>
    %278 = math.tanh %277 : vector<16x32xf32>
    %279 = vector.extract_strided_slice %260 {offsets = [0, 96], sizes = [16, 32], strides = [1, 1]} : vector<16x128xf32> to vector<16x32xf32>
    %cst_111 = arith.constant 5.000000e-01 : f32
    %280 = vector.broadcast %cst_111 : f32 to vector<16x32xf32>
    %281 = arith.mulf %280, %279 : vector<16x32xf32>
    %282 = math.tanh %281 : vector<16x32xf32>
    %cst_112 = arith.constant 1.000000e+00 : f32
    %283 = vector.broadcast %cst_112 : f32 to vector<16x32xf32>
    %284 = arith.addf %283, %282 : vector<16x32xf32>
    %cst_113 = arith.constant 5.000000e-01 : f32
    %285 = vector.broadcast %cst_113 : f32 to vector<16x32xf32>
    %286 = arith.mulf %285, %284 : vector<16x32xf32>
    %287 = arith.mulf %276, %200 : vector<16x32xf32>
    %288 = arith.mulf %268, %278 : vector<16x32xf32>
    %289 = arith.addf %287, %288 : vector<16x32xf32>
    %290 = math.tanh %289 : vector<16x32xf32>
    %291 = arith.mulf %286, %290 : vector<16x32xf32>
    %292 = arith.truncf %291 : vector<16x32xf32> to vector<16x32xbf16>
    %293 = arith.index_cast %252 : i32 to index
    %c0_114 = arith.constant 0 : index
    %c0_115 = arith.constant 0 : index
    %294 = vector.load %arg17[%293, %c0_114, %c0_115] : memref<8x16x32xbf16, #tpu.memory_space<vmem>>, vector<1x16x32xbf16>
    %295 = vector.shape_cast %294 : vector<1x16x32xbf16> to vector<16x32xbf16>
    %296 = vector.shape_cast %292 : vector<16x32xbf16> to vector<1x16x32xbf16>
    tpu.vector_store %arg17[%293, %c0_114, %c0_115], %296 {strides = array<i32>} : memref<8x16x32xbf16, #tpu.memory_space<vmem>>, vector<1x16x32xbf16>,
    %c3_i32 = arith.constant 3 : i32
    %c16_i32_116 = arith.constant 16 : i32
    %297 = arith.muli %c3_i32, %c16_i32_116 : i32
    %298 = tpu.assume_multiple %297, 16 : i32
    %cst_117 = arith.constant dense<0.000000e+00> : vector<16x128xf32>
    %299 = tpu.matmul %247, %18, %cst_117 {dimension_numbers = #tpu.dot_dimension_numbers<[1], [0], [0], [1], [0, 0, 1, 1], [], []>} : vector<16x32xbf16>, vector<32x128xbf16>, vector<16x128xf32> -> vector<16x128xf32>
    %300 = arith.index_cast %298 : i32 to index
    %c0_118 = arith.constant 0 : index
    %301 = vector.load %arg14[%300, %c0_118] : memref<128x128xbf16, #tpu.memory_space<vmem>>, vector<16x128xbf16>
    %302 = arith.extf %301 : vector<16x128xbf16> to vector<16x128xf32>
    %303 = arith.addf %299, %302 : vector<16x128xf32>
    %304 = arith.addf %303, %22 : vector<16x128xf32>
    %305 = vector.extract_strided_slice %304 {offsets = [0, 0], sizes = [16, 32], strides = [1, 1]} : vector<16x128xf32> to vector<16x32xf32>
    %cst_119 = arith.constant 5.000000e-01 : f32
    %306 = vector.broadcast %cst_119 : f32 to vector<16x32xf32>
    %307 = arith.mulf %306, %305 : vector<16x32xf32>
    %308 = math.tanh %307 : vector<16x32xf32>
    %cst_120 = arith.constant 1.000000e+00 : f32
    %309 = vector.broadcast %cst_120 : f32 to vector<16x32xf32>
    %310 = arith.addf %309, %308 : vector<16x32xf32>
    %cst_121 = arith.constant 5.000000e-01 : f32
    %311 = vector.broadcast %cst_121 : f32 to vector<16x32xf32>
    %312 = arith.mulf %311, %310 : vector<16x32xf32>
    %313 = vector.extract_strided_slice %304 {offsets = [0, 32], sizes = [16, 32], strides = [1, 1]} : vector<16x128xf32> to vector<16x32xf32>
    %cst_122 = arith.constant 5.000000e-01 : f32
    %314 = vector.broadcast %cst_122 : f32 to vector<16x32xf32>
    %315 = arith.mulf %314, %313 : vector<16x32xf32>
    %316 = math.tanh %315 : vector<16x32xf32>
    %cst_123 = arith.constant 1.000000e+00 : f32
    %317 = vector.broadcast %cst_123 : f32 to vector<16x32xf32>
    %318 = arith.addf %317, %316 : vector<16x32xf32>
    %cst_124 = arith.constant 5.000000e-01 : f32
    %319 = vector.broadcast %cst_124 : f32 to vector<16x32xf32>
    %320 = arith.mulf %319, %318 : vector<16x32xf32>
    %321 = vector.extract_strided_slice %304 {offsets = [0, 64], sizes = [16, 32], strides = [1, 1]} : vector<16x128xf32> to vector<16x32xf32>
    %322 = math.tanh %321 : vector<16x32xf32>
    %323 = vector.extract_strided_slice %304 {offsets = [0, 96], sizes = [16, 32], strides = [1, 1]} : vector<16x128xf32> to vector<16x32xf32>
    %cst_125 = arith.constant 5.000000e-01 : f32
    %324 = vector.broadcast %cst_125 : f32 to vector<16x32xf32>
    %325 = arith.mulf %324, %323 : vector<16x32xf32>
    %326 = math.tanh %325 : vector<16x32xf32>
    %cst_126 = arith.constant 1.000000e+00 : f32
    %327 = vector.broadcast %cst_126 : f32 to vector<16x32xf32>
    %328 = arith.addf %327, %326 : vector<16x32xf32>
    %cst_127 = arith.constant 5.000000e-01 : f32
    %329 = vector.broadcast %cst_127 : f32 to vector<16x32xf32>
    %330 = arith.mulf %329, %328 : vector<16x32xf32>
    %331 = arith.mulf %320, %244 : vector<16x32xf32>
    %332 = arith.mulf %312, %322 : vector<16x32xf32>
    %333 = arith.addf %331, %332 : vector<16x32xf32>
    %334 = math.tanh %333 : vector<16x32xf32>
    %335 = arith.mulf %330, %334 : vector<16x32xf32>
    %336 = arith.truncf %335 : vector<16x32xf32> to vector<16x32xbf16>
    %337 = arith.index_cast %c3_i32 : i32 to index
    %c0_128 = arith.constant 0 : index
    %c0_129 = arith.constant 0 : index
    %338 = vector.load %arg16[%337, %c0_128, %c0_129] : memref<8x16x32xbf16, #tpu.memory_space<vmem>>, vector<1x16x32xbf16>
    %339 = vector.shape_cast %338 : vector<1x16x32xbf16> to vector<16x32xbf16>
    %340 = vector.shape_cast %336 : vector<16x32xbf16> to vector<1x16x32xbf16>
    tpu.vector_store %arg16[%337, %c0_128, %c0_129], %340 {strides = array<i32>} : memref<8x16x32xbf16, #tpu.memory_space<vmem>>, vector<1x16x32xbf16>,
    %c7_i32_130 = arith.constant 7 : i32
    %341 = arith.subi %c7_i32_130, %c3_i32 : i32
    %c16_i32_131 = arith.constant 16 : i32
    %342 = arith.muli %341, %c16_i32_131 : i32
    %343 = tpu.assume_multiple %342, 16 : i32
    %cst_132 = arith.constant dense<0.000000e+00> : vector<16x128xf32>
    %344 = tpu.matmul %292, %19, %cst_132 {dimension_numbers = #tpu.dot_dimension_numbers<[1], [0], [0], [1], [0, 0, 1, 1], [], []>} : vector<16x32xbf16>, vector<32x128xbf16>, vector<16x128xf32> -> vector<16x128xf32>
    %345 = arith.index_cast %343 : i32 to index
    %c0_133 = arith.constant 0 : index
    %346 = vector.load %arg15[%345, %c0_133] : memref<128x128xbf16, #tpu.memory_space<vmem>>, vector<16x128xbf16>
    %347 = arith.extf %346 : vector<16x128xbf16> to vector<16x128xf32>
    %348 = arith.addf %344, %347 : vector<16x128xf32>
    %349 = arith.addf %348, %25 : vector<16x128xf32>
    %350 = vector.extract_strided_slice %349 {offsets = [0, 0], sizes = [16, 32], strides = [1, 1]} : vector<16x128xf32> to vector<16x32xf32>
    %cst_134 = arith.constant 5.000000e-01 : f32
    %351 = vector.broadcast %cst_134 : f32 to vector<16x32xf32>
    %352 = arith.mulf %351, %350 : vector<16x32xf32>
    %353 = math.tanh %352 : vector<16x32xf32>
    %cst_135 = arith.constant 1.000000e+00 : f32
    %354 = vector.broadcast %cst_135 : f32 to vector<16x32xf32>
    %355 = arith.addf %354, %353 : vector<16x32xf32>
    %cst_136 = arith.constant 5.000000e-01 : f32
    %356 = vector.broadcast %cst_136 : f32 to vector<16x32xf32>
    %357 = arith.mulf %356, %355 : vector<16x32xf32>
    %358 = vector.extract_strided_slice %349 {offsets = [0, 32], sizes = [16, 32], strides = [1, 1]} : vector<16x128xf32> to vector<16x32xf32>
    %cst_137 = arith.constant 5.000000e-01 : f32
    %359 = vector.broadcast %cst_137 : f32 to vector<16x32xf32>
    %360 = arith.mulf %359, %358 : vector<16x32xf32>
    %361 = math.tanh %360 : vector<16x32xf32>
    %cst_138 = arith.constant 1.000000e+00 : f32
    %362 = vector.broadcast %cst_138 : f32 to vector<16x32xf32>
    %363 = arith.addf %362, %361 : vector<16x32xf32>
    %cst_139 = arith.constant 5.000000e-01 : f32
    %364 = vector.broadcast %cst_139 : f32 to vector<16x32xf32>
    %365 = arith.mulf %364, %363 : vector<16x32xf32>
    %366 = vector.extract_strided_slice %349 {offsets = [0, 64], sizes = [16, 32], strides = [1, 1]} : vector<16x128xf32> to vector<16x32xf32>
    %367 = math.tanh %366 : vector<16x32xf32>
    %368 = vector.extract_strided_slice %349 {offsets = [0, 96], sizes = [16, 32], strides = [1, 1]} : vector<16x128xf32> to vector<16x32xf32>
    %cst_140 = arith.constant 5.000000e-01 : f32
    %369 = vector.broadcast %cst_140 : f32 to vector<16x32xf32>
    %370 = arith.mulf %369, %368 : vector<16x32xf32>
    %371 = math.tanh %370 : vector<16x32xf32>
    %cst_141 = arith.constant 1.000000e+00 : f32
    %372 = vector.broadcast %cst_141 : f32 to vector<16x32xf32>
    %373 = arith.addf %372, %371 : vector<16x32xf32>
    %cst_142 = arith.constant 5.000000e-01 : f32
    %374 = vector.broadcast %cst_142 : f32 to vector<16x32xf32>
    %375 = arith.mulf %374, %373 : vector<16x32xf32>
    %376 = arith.mulf %365, %289 : vector<16x32xf32>
    %377 = arith.mulf %357, %367 : vector<16x32xf32>
    %378 = arith.addf %376, %377 : vector<16x32xf32>
    %379 = math.tanh %378 : vector<16x32xf32>
    %380 = arith.mulf %375, %379 : vector<16x32xf32>
    %381 = arith.truncf %380 : vector<16x32xf32> to vector<16x32xbf16>
    %382 = arith.index_cast %341 : i32 to index
    %c0_143 = arith.constant 0 : index
    %c0_144 = arith.constant 0 : index
    %383 = vector.load %arg17[%382, %c0_143, %c0_144] : memref<8x16x32xbf16, #tpu.memory_space<vmem>>, vector<1x16x32xbf16>
    %384 = vector.shape_cast %383 : vector<1x16x32xbf16> to vector<16x32xbf16>
    %385 = vector.shape_cast %381 : vector<16x32xbf16> to vector<1x16x32xbf16>
    tpu.vector_store %arg17[%382, %c0_143, %c0_144], %385 {strides = array<i32>} : memref<8x16x32xbf16, #tpu.memory_space<vmem>>, vector<1x16x32xbf16>,
    %c4_i32 = arith.constant 4 : i32
    %c16_i32_145 = arith.constant 16 : i32
    %386 = arith.muli %c4_i32, %c16_i32_145 : i32
    %387 = tpu.assume_multiple %386, 16 : i32
    %cst_146 = arith.constant dense<0.000000e+00> : vector<16x128xf32>
    %388 = tpu.matmul %336, %18, %cst_146 {dimension_numbers = #tpu.dot_dimension_numbers<[1], [0], [0], [1], [0, 0, 1, 1], [], []>} : vector<16x32xbf16>, vector<32x128xbf16>, vector<16x128xf32> -> vector<16x128xf32>
    %389 = arith.index_cast %387 : i32 to index
    %c0_147 = arith.constant 0 : index
    %390 = vector.load %arg14[%389, %c0_147] : memref<128x128xbf16, #tpu.memory_space<vmem>>, vector<16x128xbf16>
    %391 = arith.extf %390 : vector<16x128xbf16> to vector<16x128xf32>
    %392 = arith.addf %388, %391 : vector<16x128xf32>
    %393 = arith.addf %392, %22 : vector<16x128xf32>
    %394 = vector.extract_strided_slice %393 {offsets = [0, 0], sizes = [16, 32], strides = [1, 1]} : vector<16x128xf32> to vector<16x32xf32>
    %cst_148 = arith.constant 5.000000e-01 : f32
    %395 = vector.broadcast %cst_148 : f32 to vector<16x32xf32>
    %396 = arith.mulf %395, %394 : vector<16x32xf32>
    %397 = math.tanh %396 : vector<16x32xf32>
    %cst_149 = arith.constant 1.000000e+00 : f32
    %398 = vector.broadcast %cst_149 : f32 to vector<16x32xf32>
    %399 = arith.addf %398, %397 : vector<16x32xf32>
    %cst_150 = arith.constant 5.000000e-01 : f32
    %400 = vector.broadcast %cst_150 : f32 to vector<16x32xf32>
    %401 = arith.mulf %400, %399 : vector<16x32xf32>
    %402 = vector.extract_strided_slice %393 {offsets = [0, 32], sizes = [16, 32], strides = [1, 1]} : vector<16x128xf32> to vector<16x32xf32>
    %cst_151 = arith.constant 5.000000e-01 : f32
    %403 = vector.broadcast %cst_151 : f32 to vector<16x32xf32>
    %404 = arith.mulf %403, %402 : vector<16x32xf32>
    %405 = math.tanh %404 : vector<16x32xf32>
    %cst_152 = arith.constant 1.000000e+00 : f32
    %406 = vector.broadcast %cst_152 : f32 to vector<16x32xf32>
    %407 = arith.addf %406, %405 : vector<16x32xf32>
    %cst_153 = arith.constant 5.000000e-01 : f32
    %408 = vector.broadcast %cst_153 : f32 to vector<16x32xf32>
    %409 = arith.mulf %408, %407 : vector<16x32xf32>
    %410 = vector.extract_strided_slice %393 {offsets = [0, 64], sizes = [16, 32], strides = [1, 1]} : vector<16x128xf32> to vector<16x32xf32>
    %411 = math.tanh %410 : vector<16x32xf32>
    %412 = vector.extract_strided_slice %393 {offsets = [0, 96], sizes = [16, 32], strides = [1, 1]} : vector<16x128xf32> to vector<16x32xf32>
    %cst_154 = arith.constant 5.000000e-01 : f32
    %413 = vector.broadcast %cst_154 : f32 to vector<16x32xf32>
    %414 = arith.mulf %413, %412 : vector<16x32xf32>
    %415 = math.tanh %414 : vector<16x32xf32>
    %cst_155 = arith.constant 1.000000e+00 : f32
    %416 = vector.broadcast %cst_155 : f32 to vector<16x32xf32>
    %417 = arith.addf %416, %415 : vector<16x32xf32>
    %cst_156 = arith.constant 5.000000e-01 : f32
    %418 = vector.broadcast %cst_156 : f32 to vector<16x32xf32>
    %419 = arith.mulf %418, %417 : vector<16x32xf32>
    %420 = arith.mulf %409, %333 : vector<16x32xf32>
    %421 = arith.mulf %401, %411 : vector<16x32xf32>
    %422 = arith.addf %420, %421 : vector<16x32xf32>
    %423 = math.tanh %422 : vector<16x32xf32>
    %424 = arith.mulf %419, %423 : vector<16x32xf32>
    %425 = arith.truncf %424 : vector<16x32xf32> to vector<16x32xbf16>
    %426 = arith.index_cast %c4_i32 : i32 to index
    %c0_157 = arith.constant 0 : index
    %c0_158 = arith.constant 0 : index
    %427 = vector.load %arg16[%426, %c0_157, %c0_158] : memref<8x16x32xbf16, #tpu.memory_space<vmem>>, vector<1x16x32xbf16>
    %428 = vector.shape_cast %427 : vector<1x16x32xbf16> to vector<16x32xbf16>
    %429 = vector.shape_cast %425 : vector<16x32xbf16> to vector<1x16x32xbf16>
    tpu.vector_store %arg16[%426, %c0_157, %c0_158], %429 {strides = array<i32>} : memref<8x16x32xbf16, #tpu.memory_space<vmem>>, vector<1x16x32xbf16>,
    %c7_i32_159 = arith.constant 7 : i32
    %430 = arith.subi %c7_i32_159, %c4_i32 : i32
    %c16_i32_160 = arith.constant 16 : i32
    %431 = arith.muli %430, %c16_i32_160 : i32
    %432 = tpu.assume_multiple %431, 16 : i32
    %cst_161 = arith.constant dense<0.000000e+00> : vector<16x128xf32>
    %433 = tpu.matmul %381, %19, %cst_161 {dimension_numbers = #tpu.dot_dimension_numbers<[1], [0], [0], [1], [0, 0, 1, 1], [], []>} : vector<16x32xbf16>, vector<32x128xbf16>, vector<16x128xf32> -> vector<16x128xf32>
    %434 = arith.index_cast %432 : i32 to index
    %c0_162 = arith.constant 0 : index
    %435 = vector.load %arg15[%434, %c0_162] : memref<128x128xbf16, #tpu.memory_space<vmem>>, vector<16x128xbf16>
    %436 = arith.extf %435 : vector<16x128xbf16> to vector<16x128xf32>
    %437 = arith.addf %433, %436 : vector<16x128xf32>
    %438 = arith.addf %437, %25 : vector<16x128xf32>
    %439 = vector.extract_strided_slice %438 {offsets = [0, 0], sizes = [16, 32], strides = [1, 1]} : vector<16x128xf32> to vector<16x32xf32>
    %cst_163 = arith.constant 5.000000e-01 : f32
    %440 = vector.broadcast %cst_163 : f32 to vector<16x32xf32>
    %441 = arith.mulf %440, %439 : vector<16x32xf32>
    %442 = math.tanh %441 : vector<16x32xf32>
    %cst_164 = arith.constant 1.000000e+00 : f32
    %443 = vector.broadcast %cst_164 : f32 to vector<16x32xf32>
    %444 = arith.addf %443, %442 : vector<16x32xf32>
    %cst_165 = arith.constant 5.000000e-01 : f32
    %445 = vector.broadcast %cst_165 : f32 to vector<16x32xf32>
    %446 = arith.mulf %445, %444 : vector<16x32xf32>
    %447 = vector.extract_strided_slice %438 {offsets = [0, 32], sizes = [16, 32], strides = [1, 1]} : vector<16x128xf32> to vector<16x32xf32>
    %cst_166 = arith.constant 5.000000e-01 : f32
    %448 = vector.broadcast %cst_166 : f32 to vector<16x32xf32>
    %449 = arith.mulf %448, %447 : vector<16x32xf32>
    %450 = math.tanh %449 : vector<16x32xf32>
    %cst_167 = arith.constant 1.000000e+00 : f32
    %451 = vector.broadcast %cst_167 : f32 to vector<16x32xf32>
    %452 = arith.addf %451, %450 : vector<16x32xf32>
    %cst_168 = arith.constant 5.000000e-01 : f32
    %453 = vector.broadcast %cst_168 : f32 to vector<16x32xf32>
    %454 = arith.mulf %453, %452 : vector<16x32xf32>
    %455 = vector.extract_strided_slice %438 {offsets = [0, 64], sizes = [16, 32], strides = [1, 1]} : vector<16x128xf32> to vector<16x32xf32>
    %456 = math.tanh %455 : vector<16x32xf32>
    %457 = vector.extract_strided_slice %438 {offsets = [0, 96], sizes = [16, 32], strides = [1, 1]} : vector<16x128xf32> to vector<16x32xf32>
    %cst_169 = arith.constant 5.000000e-01 : f32
    %458 = vector.broadcast %cst_169 : f32 to vector<16x32xf32>
    %459 = arith.mulf %458, %457 : vector<16x32xf32>
    %460 = math.tanh %459 : vector<16x32xf32>
    %cst_170 = arith.constant 1.000000e+00 : f32
    %461 = vector.broadcast %cst_170 : f32 to vector<16x32xf32>
    %462 = arith.addf %461, %460 : vector<16x32xf32>
    %cst_171 = arith.constant 5.000000e-01 : f32
    %463 = vector.broadcast %cst_171 : f32 to vector<16x32xf32>
    %464 = arith.mulf %463, %462 : vector<16x32xf32>
    %465 = arith.mulf %454, %378 : vector<16x32xf32>
    %466 = arith.mulf %446, %456 : vector<16x32xf32>
    %467 = arith.addf %465, %466 : vector<16x32xf32>
    %468 = math.tanh %467 : vector<16x32xf32>
    %469 = arith.mulf %464, %468 : vector<16x32xf32>
    %470 = arith.truncf %469 : vector<16x32xf32> to vector<16x32xbf16>
    %471 = arith.index_cast %430 : i32 to index
    %c0_172 = arith.constant 0 : index
    %c0_173 = arith.constant 0 : index
    %472 = vector.load %arg17[%471, %c0_172, %c0_173] : memref<8x16x32xbf16, #tpu.memory_space<vmem>>, vector<1x16x32xbf16>
    %473 = vector.shape_cast %472 : vector<1x16x32xbf16> to vector<16x32xbf16>
    %474 = vector.shape_cast %470 : vector<16x32xbf16> to vector<1x16x32xbf16>
    tpu.vector_store %arg17[%471, %c0_172, %c0_173], %474 {strides = array<i32>} : memref<8x16x32xbf16, #tpu.memory_space<vmem>>, vector<1x16x32xbf16>,
    %c5_i32 = arith.constant 5 : i32
    %c16_i32_174 = arith.constant 16 : i32
    %475 = arith.muli %c5_i32, %c16_i32_174 : i32
    %476 = tpu.assume_multiple %475, 16 : i32
    %cst_175 = arith.constant dense<0.000000e+00> : vector<16x128xf32>
    %477 = tpu.matmul %425, %18, %cst_175 {dimension_numbers = #tpu.dot_dimension_numbers<[1], [0], [0], [1], [0, 0, 1, 1], [], []>} : vector<16x32xbf16>, vector<32x128xbf16>, vector<16x128xf32> -> vector<16x128xf32>
    %478 = arith.index_cast %476 : i32 to index
    %c0_176 = arith.constant 0 : index
    %479 = vector.load %arg14[%478, %c0_176] : memref<128x128xbf16, #tpu.memory_space<vmem>>, vector<16x128xbf16>
    %480 = arith.extf %479 : vector<16x128xbf16> to vector<16x128xf32>
    %481 = arith.addf %477, %480 : vector<16x128xf32>
    %482 = arith.addf %481, %22 : vector<16x128xf32>
    %483 = vector.extract_strided_slice %482 {offsets = [0, 0], sizes = [16, 32], strides = [1, 1]} : vector<16x128xf32> to vector<16x32xf32>
    %cst_177 = arith.constant 5.000000e-01 : f32
    %484 = vector.broadcast %cst_177 : f32 to vector<16x32xf32>
    %485 = arith.mulf %484, %483 : vector<16x32xf32>
    %486 = math.tanh %485 : vector<16x32xf32>
    %cst_178 = arith.constant 1.000000e+00 : f32
    %487 = vector.broadcast %cst_178 : f32 to vector<16x32xf32>
    %488 = arith.addf %487, %486 : vector<16x32xf32>
    %cst_179 = arith.constant 5.000000e-01 : f32
    %489 = vector.broadcast %cst_179 : f32 to vector<16x32xf32>
    %490 = arith.mulf %489, %488 : vector<16x32xf32>
    %491 = vector.extract_strided_slice %482 {offsets = [0, 32], sizes = [16, 32], strides = [1, 1]} : vector<16x128xf32> to vector<16x32xf32>
    %cst_180 = arith.constant 5.000000e-01 : f32
    %492 = vector.broadcast %cst_180 : f32 to vector<16x32xf32>
    %493 = arith.mulf %492, %491 : vector<16x32xf32>
    %494 = math.tanh %493 : vector<16x32xf32>
    %cst_181 = arith.constant 1.000000e+00 : f32
    %495 = vector.broadcast %cst_181 : f32 to vector<16x32xf32>
    %496 = arith.addf %495, %494 : vector<16x32xf32>
    %cst_182 = arith.constant 5.000000e-01 : f32
    %497 = vector.broadcast %cst_182 : f32 to vector<16x32xf32>
    %498 = arith.mulf %497, %496 : vector<16x32xf32>
    %499 = vector.extract_strided_slice %482 {offsets = [0, 64], sizes = [16, 32], strides = [1, 1]} : vector<16x128xf32> to vector<16x32xf32>
    %500 = math.tanh %499 : vector<16x32xf32>
    %501 = vector.extract_strided_slice %482 {offsets = [0, 96], sizes = [16, 32], strides = [1, 1]} : vector<16x128xf32> to vector<16x32xf32>
    %cst_183 = arith.constant 5.000000e-01 : f32
    %502 = vector.broadcast %cst_183 : f32 to vector<16x32xf32>
    %503 = arith.mulf %502, %501 : vector<16x32xf32>
    %504 = math.tanh %503 : vector<16x32xf32>
    %cst_184 = arith.constant 1.000000e+00 : f32
    %505 = vector.broadcast %cst_184 : f32 to vector<16x32xf32>
    %506 = arith.addf %505, %504 : vector<16x32xf32>
    %cst_185 = arith.constant 5.000000e-01 : f32
    %507 = vector.broadcast %cst_185 : f32 to vector<16x32xf32>
    %508 = arith.mulf %507, %506 : vector<16x32xf32>
    %509 = arith.mulf %498, %422 : vector<16x32xf32>
    %510 = arith.mulf %490, %500 : vector<16x32xf32>
    %511 = arith.addf %509, %510 : vector<16x32xf32>
    %512 = math.tanh %511 : vector<16x32xf32>
    %513 = arith.mulf %508, %512 : vector<16x32xf32>
    %514 = arith.truncf %513 : vector<16x32xf32> to vector<16x32xbf16>
    %515 = arith.index_cast %c5_i32 : i32 to index
    %c0_186 = arith.constant 0 : index
    %c0_187 = arith.constant 0 : index
    %516 = vector.load %arg16[%515, %c0_186, %c0_187] : memref<8x16x32xbf16, #tpu.memory_space<vmem>>, vector<1x16x32xbf16>
    %517 = vector.shape_cast %516 : vector<1x16x32xbf16> to vector<16x32xbf16>
    %518 = vector.shape_cast %514 : vector<16x32xbf16> to vector<1x16x32xbf16>
    tpu.vector_store %arg16[%515, %c0_186, %c0_187], %518 {strides = array<i32>} : memref<8x16x32xbf16, #tpu.memory_space<vmem>>, vector<1x16x32xbf16>,
    %c7_i32_188 = arith.constant 7 : i32
    %519 = arith.subi %c7_i32_188, %c5_i32 : i32
    %c16_i32_189 = arith.constant 16 : i32
    %520 = arith.muli %519, %c16_i32_189 : i32
    %521 = tpu.assume_multiple %520, 16 : i32
    %cst_190 = arith.constant dense<0.000000e+00> : vector<16x128xf32>
    %522 = tpu.matmul %470, %19, %cst_190 {dimension_numbers = #tpu.dot_dimension_numbers<[1], [0], [0], [1], [0, 0, 1, 1], [], []>} : vector<16x32xbf16>, vector<32x128xbf16>, vector<16x128xf32> -> vector<16x128xf32>
    %523 = arith.index_cast %521 : i32 to index
    %c0_191 = arith.constant 0 : index
    %524 = vector.load %arg15[%523, %c0_191] : memref<128x128xbf16, #tpu.memory_space<vmem>>, vector<16x128xbf16>
    %525 = arith.extf %524 : vector<16x128xbf16> to vector<16x128xf32>
    %526 = arith.addf %522, %525 : vector<16x128xf32>
    %527 = arith.addf %526, %25 : vector<16x128xf32>
    %528 = vector.extract_strided_slice %527 {offsets = [0, 0], sizes = [16, 32], strides = [1, 1]} : vector<16x128xf32> to vector<16x32xf32>
    %cst_192 = arith.constant 5.000000e-01 : f32
    %529 = vector.broadcast %cst_192 : f32 to vector<16x32xf32>
    %530 = arith.mulf %529, %528 : vector<16x32xf32>
    %531 = math.tanh %530 : vector<16x32xf32>
    %cst_193 = arith.constant 1.000000e+00 : f32
    %532 = vector.broadcast %cst_193 : f32 to vector<16x32xf32>
    %533 = arith.addf %532, %531 : vector<16x32xf32>
    %cst_194 = arith.constant 5.000000e-01 : f32
    %534 = vector.broadcast %cst_194 : f32 to vector<16x32xf32>
    %535 = arith.mulf %534, %533 : vector<16x32xf32>
    %536 = vector.extract_strided_slice %527 {offsets = [0, 32], sizes = [16, 32], strides = [1, 1]} : vector<16x128xf32> to vector<16x32xf32>
    %cst_195 = arith.constant 5.000000e-01 : f32
    %537 = vector.broadcast %cst_195 : f32 to vector<16x32xf32>
    %538 = arith.mulf %537, %536 : vector<16x32xf32>
    %539 = math.tanh %538 : vector<16x32xf32>
    %cst_196 = arith.constant 1.000000e+00 : f32
    %540 = vector.broadcast %cst_196 : f32 to vector<16x32xf32>
    %541 = arith.addf %540, %539 : vector<16x32xf32>
    %cst_197 = arith.constant 5.000000e-01 : f32
    %542 = vector.broadcast %cst_197 : f32 to vector<16x32xf32>
    %543 = arith.mulf %542, %541 : vector<16x32xf32>
    %544 = vector.extract_strided_slice %527 {offsets = [0, 64], sizes = [16, 32], strides = [1, 1]} : vector<16x128xf32> to vector<16x32xf32>
    %545 = math.tanh %544 : vector<16x32xf32>
    %546 = vector.extract_strided_slice %527 {offsets = [0, 96], sizes = [16, 32], strides = [1, 1]} : vector<16x128xf32> to vector<16x32xf32>
    %cst_198 = arith.constant 5.000000e-01 : f32
    %547 = vector.broadcast %cst_198 : f32 to vector<16x32xf32>
    %548 = arith.mulf %547, %546 : vector<16x32xf32>
    %549 = math.tanh %548 : vector<16x32xf32>
    %cst_199 = arith.constant 1.000000e+00 : f32
    %550 = vector.broadcast %cst_199 : f32 to vector<16x32xf32>
    %551 = arith.addf %550, %549 : vector<16x32xf32>
    %cst_200 = arith.constant 5.000000e-01 : f32
    %552 = vector.broadcast %cst_200 : f32 to vector<16x32xf32>
    %553 = arith.mulf %552, %551 : vector<16x32xf32>
    %554 = arith.mulf %543, %467 : vector<16x32xf32>
    %555 = arith.mulf %535, %545 : vector<16x32xf32>
    %556 = arith.addf %554, %555 : vector<16x32xf32>
    %557 = math.tanh %556 : vector<16x32xf32>
    %558 = arith.mulf %553, %557 : vector<16x32xf32>
    %559 = arith.truncf %558 : vector<16x32xf32> to vector<16x32xbf16>
    %560 = arith.index_cast %519 : i32 to index
    %c0_201 = arith.constant 0 : index
    %c0_202 = arith.constant 0 : index
    %561 = vector.load %arg17[%560, %c0_201, %c0_202] : memref<8x16x32xbf16, #tpu.memory_space<vmem>>, vector<1x16x32xbf16>
    %562 = vector.shape_cast %561 : vector<1x16x32xbf16> to vector<16x32xbf16>
    %563 = vector.shape_cast %559 : vector<16x32xbf16> to vector<1x16x32xbf16>
    tpu.vector_store %arg17[%560, %c0_201, %c0_202], %563 {strides = array<i32>} : memref<8x16x32xbf16, #tpu.memory_space<vmem>>, vector<1x16x32xbf16>,
    %c6_i32 = arith.constant 6 : i32
    %c16_i32_203 = arith.constant 16 : i32
    %564 = arith.muli %c6_i32, %c16_i32_203 : i32
    %565 = tpu.assume_multiple %564, 16 : i32
    %cst_204 = arith.constant dense<0.000000e+00> : vector<16x128xf32>
    %566 = tpu.matmul %514, %18, %cst_204 {dimension_numbers = #tpu.dot_dimension_numbers<[1], [0], [0], [1], [0, 0, 1, 1], [], []>} : vector<16x32xbf16>, vector<32x128xbf16>, vector<16x128xf32> -> vector<16x128xf32>
    %567 = arith.index_cast %565 : i32 to index
    %c0_205 = arith.constant 0 : index
    %568 = vector.load %arg14[%567, %c0_205] : memref<128x128xbf16, #tpu.memory_space<vmem>>, vector<16x128xbf16>
    %569 = arith.extf %568 : vector<16x128xbf16> to vector<16x128xf32>
    %570 = arith.addf %566, %569 : vector<16x128xf32>
    %571 = arith.addf %570, %22 : vector<16x128xf32>
    %572 = vector.extract_strided_slice %571 {offsets = [0, 0], sizes = [16, 32], strides = [1, 1]} : vector<16x128xf32> to vector<16x32xf32>
    %cst_206 = arith.constant 5.000000e-01 : f32
    %573 = vector.broadcast %cst_206 : f32 to vector<16x32xf32>
    %574 = arith.mulf %573, %572 : vector<16x32xf32>
    %575 = math.tanh %574 : vector<16x32xf32>
    %cst_207 = arith.constant 1.000000e+00 : f32
    %576 = vector.broadcast %cst_207 : f32 to vector<16x32xf32>
    %577 = arith.addf %576, %575 : vector<16x32xf32>
    %cst_208 = arith.constant 5.000000e-01 : f32
    %578 = vector.broadcast %cst_208 : f32 to vector<16x32xf32>
    %579 = arith.mulf %578, %577 : vector<16x32xf32>
    %580 = vector.extract_strided_slice %571 {offsets = [0, 32], sizes = [16, 32], strides = [1, 1]} : vector<16x128xf32> to vector<16x32xf32>
    %cst_209 = arith.constant 5.000000e-01 : f32
    %581 = vector.broadcast %cst_209 : f32 to vector<16x32xf32>
    %582 = arith.mulf %581, %580 : vector<16x32xf32>
    %583 = math.tanh %582 : vector<16x32xf32>
    %cst_210 = arith.constant 1.000000e+00 : f32
    %584 = vector.broadcast %cst_210 : f32 to vector<16x32xf32>
    %585 = arith.addf %584, %583 : vector<16x32xf32>
    %cst_211 = arith.constant 5.000000e-01 : f32
    %586 = vector.broadcast %cst_211 : f32 to vector<16x32xf32>
    %587 = arith.mulf %586, %585 : vector<16x32xf32>
    %588 = vector.extract_strided_slice %571 {offsets = [0, 64], sizes = [16, 32], strides = [1, 1]} : vector<16x128xf32> to vector<16x32xf32>
    %589 = math.tanh %588 : vector<16x32xf32>
    %590 = vector.extract_strided_slice %571 {offsets = [0, 96], sizes = [16, 32], strides = [1, 1]} : vector<16x128xf32> to vector<16x32xf32>
    %cst_212 = arith.constant 5.000000e-01 : f32
    %591 = vector.broadcast %cst_212 : f32 to vector<16x32xf32>
    %592 = arith.mulf %591, %590 : vector<16x32xf32>
    %593 = math.tanh %592 : vector<16x32xf32>
    %cst_213 = arith.constant 1.000000e+00 : f32
    %594 = vector.broadcast %cst_213 : f32 to vector<16x32xf32>
    %595 = arith.addf %594, %593 : vector<16x32xf32>
    %cst_214 = arith.constant 5.000000e-01 : f32
    %596 = vector.broadcast %cst_214 : f32 to vector<16x32xf32>
    %597 = arith.mulf %596, %595 : vector<16x32xf32>
    %598 = arith.mulf %587, %511 : vector<16x32xf32>
    %599 = arith.mulf %579, %589 : vector<16x32xf32>
    %600 = arith.addf %598, %599 : vector<16x32xf32>
    %601 = math.tanh %600 : vector<16x32xf32>
    %602 = arith.mulf %597, %601 : vector<16x32xf32>
    %603 = arith.truncf %602 : vector<16x32xf32> to vector<16x32xbf16>
    %604 = arith.index_cast %c6_i32 : i32 to index
    %c0_215 = arith.constant 0 : index
    %c0_216 = arith.constant 0 : index
    %605 = vector.load %arg16[%604, %c0_215, %c0_216] : memref<8x16x32xbf16, #tpu.memory_space<vmem>>, vector<1x16x32xbf16>
    %606 = vector.shape_cast %605 : vector<1x16x32xbf16> to vector<16x32xbf16>
    %607 = vector.shape_cast %603 : vector<16x32xbf16> to vector<1x16x32xbf16>
    tpu.vector_store %arg16[%604, %c0_215, %c0_216], %607 {strides = array<i32>} : memref<8x16x32xbf16, #tpu.memory_space<vmem>>, vector<1x16x32xbf16>,
    %c7_i32_217 = arith.constant 7 : i32
    %608 = arith.subi %c7_i32_217, %c6_i32 : i32
    %c16_i32_218 = arith.constant 16 : i32
    %609 = arith.muli %608, %c16_i32_218 : i32
    %610 = tpu.assume_multiple %609, 16 : i32
    %cst_219 = arith.constant dense<0.000000e+00> : vector<16x128xf32>
    %611 = tpu.matmul %559, %19, %cst_219 {dimension_numbers = #tpu.dot_dimension_numbers<[1], [0], [0], [1], [0, 0, 1, 1], [], []>} : vector<16x32xbf16>, vector<32x128xbf16>, vector<16x128xf32> -> vector<16x128xf32>
    %612 = arith.index_cast %610 : i32 to index
    %c0_220 = arith.constant 0 : index
    %613 = vector.load %arg15[%612, %c0_220] : memref<128x128xbf16, #tpu.memory_space<vmem>>, vector<16x128xbf16>
    %614 = arith.extf %613 : vector<16x128xbf16> to vector<16x128xf32>
    %615 = arith.addf %611, %614 : vector<16x128xf32>
    %616 = arith.addf %615, %25 : vector<16x128xf32>
    %617 = vector.extract_strided_slice %616 {offsets = [0, 0], sizes = [16, 32], strides = [1, 1]} : vector<16x128xf32> to vector<16x32xf32>
    %cst_221 = arith.constant 5.000000e-01 : f32
    %618 = vector.broadcast %cst_221 : f32 to vector<16x32xf32>
    %619 = arith.mulf %618, %617 : vector<16x32xf32>
    %620 = math.tanh %619 : vector<16x32xf32>
    %cst_222 = arith.constant 1.000000e+00 : f32
    %621 = vector.broadcast %cst_222 : f32 to vector<16x32xf32>
    %622 = arith.addf %621, %620 : vector<16x32xf32>
    %cst_223 = arith.constant 5.000000e-01 : f32
    %623 = vector.broadcast %cst_223 : f32 to vector<16x32xf32>
    %624 = arith.mulf %623, %622 : vector<16x32xf32>
    %625 = vector.extract_strided_slice %616 {offsets = [0, 32], sizes = [16, 32], strides = [1, 1]} : vector<16x128xf32> to vector<16x32xf32>
    %cst_224 = arith.constant 5.000000e-01 : f32
    %626 = vector.broadcast %cst_224 : f32 to vector<16x32xf32>
    %627 = arith.mulf %626, %625 : vector<16x32xf32>
    %628 = math.tanh %627 : vector<16x32xf32>
    %cst_225 = arith.constant 1.000000e+00 : f32
    %629 = vector.broadcast %cst_225 : f32 to vector<16x32xf32>
    %630 = arith.addf %629, %628 : vector<16x32xf32>
    %cst_226 = arith.constant 5.000000e-01 : f32
    %631 = vector.broadcast %cst_226 : f32 to vector<16x32xf32>
    %632 = arith.mulf %631, %630 : vector<16x32xf32>
    %633 = vector.extract_strided_slice %616 {offsets = [0, 64], sizes = [16, 32], strides = [1, 1]} : vector<16x128xf32> to vector<16x32xf32>
    %634 = math.tanh %633 : vector<16x32xf32>
    %635 = vector.extract_strided_slice %616 {offsets = [0, 96], sizes = [16, 32], strides = [1, 1]} : vector<16x128xf32> to vector<16x32xf32>
    %cst_227 = arith.constant 5.000000e-01 : f32
    %636 = vector.broadcast %cst_227 : f32 to vector<16x32xf32>
    %637 = arith.mulf %636, %635 : vector<16x32xf32>
    %638 = math.tanh %637 : vector<16x32xf32>
    %cst_228 = arith.constant 1.000000e+00 : f32
    %639 = vector.broadcast %cst_228 : f32 to vector<16x32xf32>
    %640 = arith.addf %639, %638 : vector<16x32xf32>
    %cst_229 = arith.constant 5.000000e-01 : f32
    %641 = vector.broadcast %cst_229 : f32 to vector<16x32xf32>
    %642 = arith.mulf %641, %640 : vector<16x32xf32>
    %643 = arith.mulf %632, %556 : vector<16x32xf32>
    %644 = arith.mulf %624, %634 : vector<16x32xf32>
    %645 = arith.addf %643, %644 : vector<16x32xf32>
    %646 = math.tanh %645 : vector<16x32xf32>
    %647 = arith.mulf %642, %646 : vector<16x32xf32>
    %648 = arith.truncf %647 : vector<16x32xf32> to vector<16x32xbf16>
    %649 = arith.index_cast %608 : i32 to index
    %c0_230 = arith.constant 0 : index
    %c0_231 = arith.constant 0 : index
    %650 = vector.load %arg17[%649, %c0_230, %c0_231] : memref<8x16x32xbf16, #tpu.memory_space<vmem>>, vector<1x16x32xbf16>
    %651 = vector.shape_cast %650 : vector<1x16x32xbf16> to vector<16x32xbf16>
    %652 = vector.shape_cast %648 : vector<16x32xbf16> to vector<1x16x32xbf16>
    tpu.vector_store %arg17[%649, %c0_230, %c0_231], %652 {strides = array<i32>} : memref<8x16x32xbf16, #tpu.memory_space<vmem>>, vector<1x16x32xbf16>,
    %c7_i32_232 = arith.constant 7 : i32
    %c16_i32_233 = arith.constant 16 : i32
    %653 = arith.muli %c7_i32_232, %c16_i32_233 : i32
    %654 = tpu.assume_multiple %653, 16 : i32
    %cst_234 = arith.constant dense<0.000000e+00> : vector<16x128xf32>
    %655 = tpu.matmul %603, %18, %cst_234 {dimension_numbers = #tpu.dot_dimension_numbers<[1], [0], [0], [1], [0, 0, 1, 1], [], []>} : vector<16x32xbf16>, vector<32x128xbf16>, vector<16x128xf32> -> vector<16x128xf32>
    %656 = arith.index_cast %654 : i32 to index
    %c0_235 = arith.constant 0 : index
    %657 = vector.load %arg14[%656, %c0_235] : memref<128x128xbf16, #tpu.memory_space<vmem>>, vector<16x128xbf16>
    %658 = arith.extf %657 : vector<16x128xbf16> to vector<16x128xf32>
    %659 = arith.addf %655, %658 : vector<16x128xf32>
    %660 = arith.addf %659, %22 : vector<16x128xf32>
    %661 = vector.extract_strided_slice %660 {offsets = [0, 0], sizes = [16, 32], strides = [1, 1]} : vector<16x128xf32> to vector<16x32xf32>
    %cst_236 = arith.constant 5.000000e-01 : f32
    %662 = vector.broadcast %cst_236 : f32 to vector<16x32xf32>
    %663 = arith.mulf %662, %661 : vector<16x32xf32>
    %664 = math.tanh %663 : vector<16x32xf32>
    %cst_237 = arith.constant 1.000000e+00 : f32
    %665 = vector.broadcast %cst_237 : f32 to vector<16x32xf32>
    %666 = arith.addf %665, %664 : vector<16x32xf32>
    %cst_238 = arith.constant 5.000000e-01 : f32
    %667 = vector.broadcast %cst_238 : f32 to vector<16x32xf32>
    %668 = arith.mulf %667, %666 : vector<16x32xf32>
    %669 = vector.extract_strided_slice %660 {offsets = [0, 32], sizes = [16, 32], strides = [1, 1]} : vector<16x128xf32> to vector<16x32xf32>
    %cst_239 = arith.constant 5.000000e-01 : f32
    %670 = vector.broadcast %cst_239 : f32 to vector<16x32xf32>
    %671 = arith.mulf %670, %669 : vector<16x32xf32>
    %672 = math.tanh %671 : vector<16x32xf32>
    %cst_240 = arith.constant 1.000000e+00 : f32
    %673 = vector.broadcast %cst_240 : f32 to vector<16x32xf32>
    %674 = arith.addf %673, %672 : vector<16x32xf32>
    %cst_241 = arith.constant 5.000000e-01 : f32
    %675 = vector.broadcast %cst_241 : f32 to vector<16x32xf32>
    %676 = arith.mulf %675, %674 : vector<16x32xf32>
    %677 = vector.extract_strided_slice %660 {offsets = [0, 64], sizes = [16, 32], strides = [1, 1]} : vector<16x128xf32> to vector<16x32xf32>
    %678 = math.tanh %677 : vector<16x32xf32>
    %679 = vector.extract_strided_slice %660 {offsets = [0, 96], sizes = [16, 32], strides = [1, 1]} : vector<16x128xf32> to vector<16x32xf32>
    %cst_242 = arith.constant 5.000000e-01 : f32
    %680 = vector.broadcast %cst_242 : f32 to vector<16x32xf32>
    %681 = arith.mulf %680, %679 : vector<16x32xf32>
    %682 = math.tanh %681 : vector<16x32xf32>
    %cst_243 = arith.constant 1.000000e+00 : f32
    %683 = vector.broadcast %cst_243 : f32 to vector<16x32xf32>
    %684 = arith.addf %683, %682 : vector<16x32xf32>
    %cst_244 = arith.constant 5.000000e-01 : f32
    %685 = vector.broadcast %cst_244 : f32 to vector<16x32xf32>
    %686 = arith.mulf %685, %684 : vector<16x32xf32>
    %687 = arith.mulf %676, %600 : vector<16x32xf32>
    %688 = arith.mulf %668, %678 : vector<16x32xf32>
    %689 = arith.addf %687, %688 : vector<16x32xf32>
    %690 = math.tanh %689 : vector<16x32xf32>
    %691 = arith.mulf %686, %690 : vector<16x32xf32>
    %692 = arith.truncf %691 : vector<16x32xf32> to vector<16x32xbf16>
    %693 = arith.index_cast %c7_i32_232 : i32 to index
    %c0_245 = arith.constant 0 : index
    %c0_246 = arith.constant 0 : index
    %694 = vector.load %arg16[%693, %c0_245, %c0_246] : memref<8x16x32xbf16, #tpu.memory_space<vmem>>, vector<1x16x32xbf16>
    %695 = vector.shape_cast %694 : vector<1x16x32xbf16> to vector<16x32xbf16>
    %696 = vector.shape_cast %692 : vector<16x32xbf16> to vector<1x16x32xbf16>
    tpu.vector_store %arg16[%693, %c0_245, %c0_246], %696 {strides = array<i32>} : memref<8x16x32xbf16, #tpu.memory_space<vmem>>, vector<1x16x32xbf16>,
    %c7_i32_247 = arith.constant 7 : i32
    %697 = arith.subi %c7_i32_247, %c7_i32_232 : i32
    %c16_i32_248 = arith.constant 16 : i32
    %698 = arith.muli %697, %c16_i32_248 : i32
    %699 = tpu.assume_multiple %698, 16 : i32
    %cst_249 = arith.constant dense<0.000000e+00> : vector<16x128xf32>
    %700 = tpu.matmul %648, %19, %cst_249 {dimension_numbers = #tpu.dot_dimension_numbers<[1], [0], [0], [1], [0, 0, 1, 1], [], []>} : vector<16x32xbf16>, vector<32x128xbf16>, vector<16x128xf32> -> vector<16x128xf32>
    %701 = arith.index_cast %699 : i32 to index
    %c0_250 = arith.constant 0 : index
    %702 = vector.load %arg15[%701, %c0_250] : memref<128x128xbf16, #tpu.memory_space<vmem>>, vector<16x128xbf16>
    %703 = arith.extf %702 : vector<16x128xbf16> to vector<16x128xf32>
    %704 = arith.addf %700, %703 : vector<16x128xf32>
    %705 = arith.addf %704, %25 : vector<16x128xf32>
    %706 = vector.extract_strided_slice %705 {offsets = [0, 0], sizes = [16, 32], strides = [1, 1]} : vector<16x128xf32> to vector<16x32xf32>
    %cst_251 = arith.constant 5.000000e-01 : f32
    %707 = vector.broadcast %cst_251 : f32 to vector<16x32xf32>
    %708 = arith.mulf %707, %706 : vector<16x32xf32>
    %709 = math.tanh %708 : vector<16x32xf32>
    %cst_252 = arith.constant 1.000000e+00 : f32
    %710 = vector.broadcast %cst_252 : f32 to vector<16x32xf32>
    %711 = arith.addf %710, %709 : vector<16x32xf32>
    %cst_253 = arith.constant 5.000000e-01 : f32
    %712 = vector.broadcast %cst_253 : f32 to vector<16x32xf32>
    %713 = arith.mulf %712, %711 : vector<16x32xf32>
    %714 = vector.extract_strided_slice %705 {offsets = [0, 32], sizes = [16, 32], strides = [1, 1]} : vector<16x128xf32> to vector<16x32xf32>
    %cst_254 = arith.constant 5.000000e-01 : f32
    %715 = vector.broadcast %cst_254 : f32 to vector<16x32xf32>
    %716 = arith.mulf %715, %714 : vector<16x32xf32>
    %717 = math.tanh %716 : vector<16x32xf32>
    %cst_255 = arith.constant 1.000000e+00 : f32
    %718 = vector.broadcast %cst_255 : f32 to vector<16x32xf32>
    %719 = arith.addf %718, %717 : vector<16x32xf32>
    %cst_256 = arith.constant 5.000000e-01 : f32
    %720 = vector.broadcast %cst_256 : f32 to vector<16x32xf32>
    %721 = arith.mulf %720, %719 : vector<16x32xf32>
    %722 = vector.extract_strided_slice %705 {offsets = [0, 64], sizes = [16, 32], strides = [1, 1]} : vector<16x128xf32> to vector<16x32xf32>
    %723 = math.tanh %722 : vector<16x32xf32>
    %724 = vector.extract_strided_slice %705 {offsets = [0, 96], sizes = [16, 32], strides = [1, 1]} : vector<16x128xf32> to vector<16x32xf32>
    %cst_257 = arith.constant 5.000000e-01 : f32
    %725 = vector.broadcast %cst_257 : f32 to vector<16x32xf32>
    %726 = arith.mulf %725, %724 : vector<16x32xf32>
    %727 = math.tanh %726 : vector<16x32xf32>
    %cst_258 = arith.constant 1.000000e+00 : f32
    %728 = vector.broadcast %cst_258 : f32 to vector<16x32xf32>
    %729 = arith.addf %728, %727 : vector<16x32xf32>
    %cst_259 = arith.constant 5.000000e-01 : f32
    %730 = vector.broadcast %cst_259 : f32 to vector<16x32xf32>
    %731 = arith.mulf %730, %729 : vector<16x32xf32>
    %732 = arith.mulf %721, %645 : vector<16x32xf32>
    %733 = arith.mulf %713, %723 : vector<16x32xf32>
    %734 = arith.addf %732, %733 : vector<16x32xf32>
    %735 = math.tanh %734 : vector<16x32xf32>
    %736 = arith.mulf %731, %735 : vector<16x32xf32>
    %737 = arith.truncf %736 : vector<16x32xf32> to vector<16x32xbf16>
    %738 = arith.index_cast %697 : i32 to index
    %c0_260 = arith.constant 0 : index
    %c0_261 = arith.constant 0 : index
    %739 = vector.load %arg17[%738, %c0_260, %c0_261] : memref<8x16x32xbf16, #tpu.memory_space<vmem>>, vector<1x16x32xbf16>
    %740 = vector.shape_cast %739 : vector<1x16x32xbf16> to vector<16x32xbf16>
    %741 = vector.shape_cast %737 : vector<16x32xbf16> to vector<1x16x32xbf16>
    tpu.vector_store %arg17[%738, %c0_260, %c0_261], %741 {strides = array<i32>} : memref<8x16x32xbf16, #tpu.memory_space<vmem>>, vector<1x16x32xbf16>,
    %c8_i32 = arith.constant 8 : i32
    %c0_262 = arith.constant 0 : index
    %c0_263 = arith.constant 0 : index
    %c0_264 = arith.constant 0 : index
    %742 = vector.load %arg16[%c0_262, %c0_263, %c0_264] : memref<8x16x32xbf16, #tpu.memory_space<vmem>>, vector<8x16x32xbf16>
    %743 = vector.shape_cast %742 : vector<8x16x32xbf16> to vector<128x32xbf16>
    %c0_265 = arith.constant 0 : index
    %c0_266 = arith.constant 0 : index
    %c0_267 = arith.constant 0 : index
    %744 = vector.load %arg17[%c0_265, %c0_266, %c0_267] : memref<8x16x32xbf16, #tpu.memory_space<vmem>>, vector<8x16x32xbf16>
    %745 = vector.shape_cast %744 : vector<8x16x32xbf16> to vector<128x32xbf16>
    %c0_268 = arith.constant 0 : index
    %c0_269 = arith.constant 0 : index
    %746 = vector.load %arg9[%c0_268, %c0_269] : memref<32x7xbf16, #tpu.memory_space<vmem>>, vector<32x7xbf16>
    %cst_270 = arith.constant dense<0.000000e+00> : vector<128x7xf32>
    %747 = tpu.matmul %743, %746, %cst_270 {dimension_numbers = #tpu.dot_dimension_numbers<[1], [0], [0], [1], [0, 0, 1, 1], [], []>} : vector<128x32xbf16>, vector<32x7xbf16>, vector<128x7xf32> -> vector<128x7xf32>
    %c0_271 = arith.constant 0 : index
    %c0_272 = arith.constant 0 : index
    %748 = vector.load %arg10[%c0_271, %c0_272] : memref<32x7xbf16, #tpu.memory_space<vmem>>, vector<32x7xbf16>
    %cst_273 = arith.constant dense<0.000000e+00> : vector<128x7xf32>
    %749 = tpu.matmul %745, %748, %cst_273 {dimension_numbers = #tpu.dot_dimension_numbers<[1], [0], [0], [1], [0, 0, 1, 1], [], []>} : vector<128x32xbf16>, vector<32x7xbf16>, vector<128x7xf32> -> vector<128x7xf32>
    %750 = arith.addf %747, %749 : vector<128x7xf32>
    %c0_274 = arith.constant 0 : index
    %c0_275 = arith.constant 0 : index
    %751 = vector.load %arg11[%c0_274, %c0_275] : memref<1x7xf32, #tpu.memory_space<vmem>>, vector<1x7xf32>
    %752 = vector.broadcast %751 : vector<1x7xf32> to vector<128x7xf32>
    %753 = arith.addf %750, %752 : vector<128x7xf32>
    %754 = vector.shape_cast %753 : vector<128x7xf32> to vector<8x16x7xf32>
    %c0_276 = arith.constant 0 : index
    %c0_277 = arith.constant 0 : index
    %c0_278 = arith.constant 0 : index
    %755 = vector.load %arg12[%c0_276, %c0_277, %c0_278] : memref<8x16x7xf32, #tpu.memory_space<vmem>>, vector<8x16x7xf32>
    %756 = arith.addf %754, %755 : vector<8x16x7xf32>
    %c0_279 = arith.constant 0 : index
    %c0_280 = arith.constant 0 : index
    %c0_281 = arith.constant 0 : index
    %757 = vector.load %arg13[%c0_279, %c0_280, %c0_281] : memref<8x16x7xf32, #tpu.memory_space<vmem>>, vector<8x16x7xf32>
    tpu.vector_store %arg13[%c0_279, %c0_280, %c0_281], %756 {strides = array<i32>} : memref<8x16x7xf32, #tpu.memory_space<vmem>>, vector<8x16x7xf32>,
    return
  }
  func.func @transform_0(%arg0: i32) -> (i32, i32, i32) {
    %c0_i32 = arith.constant 0 : i32
    %c0_i32_0 = arith.constant 0 : i32
    %c0_i32_1 = arith.constant 0 : i32
    return %c0_i32, %arg0, %c0_i32_0 : i32, i32, i32
  }
  func.func @transform_1(%arg0: i32) -> (i32, i32, i32) {
    %c0_i32 = arith.constant 0 : i32
    %c0_i32_0 = arith.constant 0 : i32
    %c0_i32_1 = arith.constant 0 : i32
    return %c0_i32, %arg0, %c0_i32_0 : i32, i32, i32
  }
  func.func @transform_2(%arg0: i32) -> (i32, i32) {
    %c0_i32 = arith.constant 0 : i32
    %c0_i32_0 = arith.constant 0 : i32
    %c0_i32_1 = arith.constant 0 : i32
    return %c0_i32, %c0_i32_0 : i32, i32
  }
  func.func @transform_3(%arg0: i32) -> (i32, i32) {
    %c0_i32 = arith.constant 0 : i32
    %c0_i32_0 = arith.constant 0 : i32
    %c0_i32_1 = arith.constant 0 : i32
    return %c0_i32, %c0_i32_0 : i32, i32
  }
  func.func @transform_4(%arg0: i32) -> (i32, i32) {
    %c0_i32 = arith.constant 0 : i32
    %c0_i32_0 = arith.constant 0 : i32
    %c0_i32_1 = arith.constant 0 : i32
    return %c0_i32, %c0_i32_0 : i32, i32
  }
  func.func @transform_5(%arg0: i32) -> (i32, i32) {
    %c0_i32 = arith.constant 0 : i32
    %c0_i32_0 = arith.constant 0 : i32
    %c0_i32_1 = arith.constant 0 : i32
    return %c0_i32, %c0_i32_0 : i32, i32
  }
  func.func @transform_6(%arg0: i32) -> (i32, i32) {
    %c0_i32 = arith.constant 0 : i32
    %c0_i32_0 = arith.constant 0 : i32
    %c0_i32_1 = arith.constant 0 : i32
    return %c0_i32, %c0_i32_0 : i32, i32
  }
  func.func @transform_7(%arg0: i32) -> (i32, i32) {
    %c0_i32 = arith.constant 0 : i32
    %c0_i32_0 = arith.constant 0 : i32
    %c0_i32_1 = arith.constant 0 : i32
    return %c0_i32, %c0_i32_0 : i32, i32
  }
  func.func @transform_8(%arg0: i32) -> (i32, i32) {
    %c0_i32 = arith.constant 0 : i32
    %c0_i32_0 = arith.constant 0 : i32
    %c0_i32_1 = arith.constant 0 : i32
    return %c0_i32, %c0_i32_0 : i32, i32
  }
  func.func @transform_9(%arg0: i32) -> (i32, i32) {
    %c0_i32 = arith.constant 0 : i32
    %c0_i32_0 = arith.constant 0 : i32
    %c0_i32_1 = arith.constant 0 : i32
    return %c0_i32, %c0_i32_0 : i32, i32
  }
  func.func @transform_10(%arg0: i32) -> (i32, i32) {
    %c0_i32 = arith.constant 0 : i32
    %c0_i32_0 = arith.constant 0 : i32
    %c0_i32_1 = arith.constant 0 : i32
    return %c0_i32, %c0_i32_0 : i32, i32
  }
  func.func @transform_11(%arg0: i32) -> (i32, i32, i32) {
    %c0_i32 = arith.constant 0 : i32
    %c0_i32_0 = arith.constant 0 : i32
    %c0_i32_1 = arith.constant 0 : i32
    return %c0_i32, %arg0, %c0_i32_0 : i32, i32, i32
  }
  func.func @transform_12(%arg0: i32) -> (i32, i32, i32) {
    %c0_i32 = arith.constant 0 : i32
    %c0_i32_0 = arith.constant 0 : i32
    %c0_i32_1 = arith.constant 0 : i32
    return %c0_i32, %arg0, %c0_i32_0 : i32, i32, i32
  }
}

module attributes {stable_mosaic.version = 11 : i64} {
  func.func @_bilstm_mid_kernel(%arg0: i32, %arg1: memref<8x16x7xbf16, #tpu.memory_space<vmem>>, %arg2: memref<7x128xbf16, #tpu.memory_space<vmem>>, %arg3: memref<32x128xbf16, #tpu.memory_space<vmem>>, %arg4: memref<1x128xf32, #tpu.memory_space<vmem>>, %arg5: memref<7x128xbf16, #tpu.memory_space<vmem>>, %arg6: memref<32x128xbf16, #tpu.memory_space<vmem>>, %arg7: memref<1x128xf32, #tpu.memory_space<vmem>>, %arg8: memref<8x16x32xbf16, #tpu.memory_space<vmem>>, %arg9: memref<8x16x32xbf16, #tpu.memory_space<vmem>>, %arg10: memref<128x128xbf16, #tpu.memory_space<vmem>>, %arg11: memref<128x128xbf16, #tpu.memory_space<vmem>>) attributes {dimension_semantics = [#tpu.dimension_semantics<parallel>], iteration_bounds = array<i64: 1>, scalar_prefetch = 0 : i64, scratch_operands = 2 : i64, tpu.core_type = #tpu.core_type<tc>, window_params = [{transform_indices = @transform_0, window_bounds = array<i64: 8, 16, 7>}, {pipeline_mode = #tpu.pipeline_mode<synchronous>, transform_indices = @transform_1, window_bounds = array<i64: 7, 128>}, {pipeline_mode = #tpu.pipeline_mode<synchronous>, transform_indices = @transform_2, window_bounds = array<i64: 32, 128>}, {pipeline_mode = #tpu.pipeline_mode<synchronous>, transform_indices = @transform_3, window_bounds = array<i64: 1, 128>}, {pipeline_mode = #tpu.pipeline_mode<synchronous>, transform_indices = @transform_4, window_bounds = array<i64: 7, 128>}, {pipeline_mode = #tpu.pipeline_mode<synchronous>, transform_indices = @transform_5, window_bounds = array<i64: 32, 128>}, {pipeline_mode = #tpu.pipeline_mode<synchronous>, transform_indices = @transform_6, window_bounds = array<i64: 1, 128>}, {transform_indices = @transform_7, window_bounds = array<i64: 8, 16, 32>}, {transform_indices = @transform_8, window_bounds = array<i64: 8, 16, 32>}]} {
    %c0 = arith.constant 0 : index
    %c0_0 = arith.constant 0 : index
    %c0_1 = arith.constant 0 : index
    %0 = vector.load %arg1[%c0, %c0_0, %c0_1] : memref<8x16x7xbf16, #tpu.memory_space<vmem>>, vector<8x16x7xbf16>
    %1 = vector.shape_cast %0 : vector<8x16x7xbf16> to vector<128x7xbf16>
    %c0_2 = arith.constant 0 : index
    %c0_3 = arith.constant 0 : index
    %2 = vector.load %arg2[%c0_2, %c0_3] : memref<7x128xbf16, #tpu.memory_space<vmem>>, vector<7x128xbf16>
    %cst = arith.constant dense<0.000000e+00> : vector<128x128xf32>
    %3 = tpu.matmul %1, %2, %cst {dimension_numbers = #tpu.dot_dimension_numbers<[1], [0], [0], [1], [0, 0, 1, 1], [], []>} : vector<128x7xbf16>, vector<7x128xbf16>, vector<128x128xf32> -> vector<128x128xf32>
    %4 = arith.truncf %3 : vector<128x128xf32> to vector<128x128xbf16>
    %c0_4 = arith.constant 0 : index
    %c0_5 = arith.constant 0 : index
    %5 = vector.load %arg10[%c0_4, %c0_5] : memref<128x128xbf16, #tpu.memory_space<vmem>>, vector<128x128xbf16>
    tpu.vector_store %arg10[%c0_4, %c0_5], %4 {strides = array<i32>} : memref<128x128xbf16, #tpu.memory_space<vmem>>, vector<128x128xbf16>,
    %c0_6 = arith.constant 0 : index
    %c0_7 = arith.constant 0 : index
    %6 = vector.load %arg5[%c0_6, %c0_7] : memref<7x128xbf16, #tpu.memory_space<vmem>>, vector<7x128xbf16>
    %cst_8 = arith.constant dense<0.000000e+00> : vector<128x128xf32>
    %7 = tpu.matmul %1, %6, %cst_8 {dimension_numbers = #tpu.dot_dimension_numbers<[1], [0], [0], [1], [0, 0, 1, 1], [], []>} : vector<128x7xbf16>, vector<7x128xbf16>, vector<128x128xf32> -> vector<128x128xf32>
    %8 = arith.truncf %7 : vector<128x128xf32> to vector<128x128xbf16>
    %c0_9 = arith.constant 0 : index
    %c0_10 = arith.constant 0 : index
    %9 = vector.load %arg11[%c0_9, %c0_10] : memref<128x128xbf16, #tpu.memory_space<vmem>>, vector<128x128xbf16>
    tpu.vector_store %arg11[%c0_9, %c0_10], %8 {strides = array<i32>} : memref<128x128xbf16, #tpu.memory_space<vmem>>, vector<128x128xbf16>,
    %c0_11 = arith.constant 0 : index
    %c0_12 = arith.constant 0 : index
    %10 = vector.load %arg3[%c0_11, %c0_12] : memref<32x128xbf16, #tpu.memory_space<vmem>>, vector<32x128xbf16>
    %c0_13 = arith.constant 0 : index
    %c0_14 = arith.constant 0 : index
    %11 = vector.load %arg6[%c0_13, %c0_14] : memref<32x128xbf16, #tpu.memory_space<vmem>>, vector<32x128xbf16>
    %c0_15 = arith.constant 0 : index
    %c0_16 = arith.constant 0 : index
    %12 = vector.load %arg4[%c0_15, %c0_16] : memref<1x128xf32, #tpu.memory_space<vmem>>, vector<1x128xf32>
    %13 = vector.shape_cast %12 : vector<1x128xf32> to vector<1x128xf32>
    %14 = vector.broadcast %13 : vector<1x128xf32> to vector<16x128xf32>
    %c0_17 = arith.constant 0 : index
    %c0_18 = arith.constant 0 : index
    %15 = vector.load %arg7[%c0_17, %c0_18] : memref<1x128xf32, #tpu.memory_space<vmem>>, vector<1x128xf32>
    %16 = vector.shape_cast %15 : vector<1x128xf32> to vector<1x128xf32>
    %17 = vector.broadcast %16 : vector<1x128xf32> to vector<16x128xf32>
    %cst_19 = arith.constant 0.000000e+00 : bf16
    %18 = vector.broadcast %cst_19 : bf16 to vector<16x32xbf16>
    %cst_20 = arith.constant 0.000000e+00 : f32
    %19 = vector.broadcast %cst_20 : f32 to vector<16x32xf32>
    %cst_21 = arith.constant 0.000000e+00 : bf16
    %20 = vector.broadcast %cst_21 : bf16 to vector<16x32xbf16>
    %cst_22 = arith.constant 0.000000e+00 : f32
    %21 = vector.broadcast %cst_22 : f32 to vector<16x32xf32>
    %c0_i32 = arith.constant 0 : i32
    %c16_i32 = arith.constant 16 : i32
    %22 = arith.muli %c0_i32, %c16_i32 : i32
    %23 = tpu.assume_multiple %22, 16 : i32
    %cst_23 = arith.constant dense<0.000000e+00> : vector<16x128xf32>
    %24 = tpu.matmul %18, %10, %cst_23 {dimension_numbers = #tpu.dot_dimension_numbers<[1], [0], [0], [1], [0, 0, 1, 1], [], []>} : vector<16x32xbf16>, vector<32x128xbf16>, vector<16x128xf32> -> vector<16x128xf32>
    %25 = arith.index_cast %23 : i32 to index
    %c0_24 = arith.constant 0 : index
    %26 = vector.load %arg10[%25, %c0_24] : memref<128x128xbf16, #tpu.memory_space<vmem>>, vector<16x128xbf16>
    %27 = arith.extf %26 : vector<16x128xbf16> to vector<16x128xf32>
    %28 = arith.addf %24, %27 : vector<16x128xf32>
    %29 = arith.addf %28, %14 : vector<16x128xf32>
    %30 = vector.extract_strided_slice %29 {offsets = [0, 0], sizes = [16, 32], strides = [1, 1]} : vector<16x128xf32> to vector<16x32xf32>
    %cst_25 = arith.constant 5.000000e-01 : f32
    %31 = vector.broadcast %cst_25 : f32 to vector<16x32xf32>
    %32 = arith.mulf %31, %30 : vector<16x32xf32>
    %33 = math.tanh %32 : vector<16x32xf32>
    %cst_26 = arith.constant 1.000000e+00 : f32
    %34 = vector.broadcast %cst_26 : f32 to vector<16x32xf32>
    %35 = arith.addf %34, %33 : vector<16x32xf32>
    %cst_27 = arith.constant 5.000000e-01 : f32
    %36 = vector.broadcast %cst_27 : f32 to vector<16x32xf32>
    %37 = arith.mulf %36, %35 : vector<16x32xf32>
    %38 = vector.extract_strided_slice %29 {offsets = [0, 32], sizes = [16, 32], strides = [1, 1]} : vector<16x128xf32> to vector<16x32xf32>
    %cst_28 = arith.constant 5.000000e-01 : f32
    %39 = vector.broadcast %cst_28 : f32 to vector<16x32xf32>
    %40 = arith.mulf %39, %38 : vector<16x32xf32>
    %41 = math.tanh %40 : vector<16x32xf32>
    %cst_29 = arith.constant 1.000000e+00 : f32
    %42 = vector.broadcast %cst_29 : f32 to vector<16x32xf32>
    %43 = arith.addf %42, %41 : vector<16x32xf32>
    %cst_30 = arith.constant 5.000000e-01 : f32
    %44 = vector.broadcast %cst_30 : f32 to vector<16x32xf32>
    %45 = arith.mulf %44, %43 : vector<16x32xf32>
    %46 = vector.extract_strided_slice %29 {offsets = [0, 64], sizes = [16, 32], strides = [1, 1]} : vector<16x128xf32> to vector<16x32xf32>
    %47 = math.tanh %46 : vector<16x32xf32>
    %48 = vector.extract_strided_slice %29 {offsets = [0, 96], sizes = [16, 32], strides = [1, 1]} : vector<16x128xf32> to vector<16x32xf32>
    %cst_31 = arith.constant 5.000000e-01 : f32
    %49 = vector.broadcast %cst_31 : f32 to vector<16x32xf32>
    %50 = arith.mulf %49, %48 : vector<16x32xf32>
    %51 = math.tanh %50 : vector<16x32xf32>
    %cst_32 = arith.constant 1.000000e+00 : f32
    %52 = vector.broadcast %cst_32 : f32 to vector<16x32xf32>
    %53 = arith.addf %52, %51 : vector<16x32xf32>
    %cst_33 = arith.constant 5.000000e-01 : f32
    %54 = vector.broadcast %cst_33 : f32 to vector<16x32xf32>
    %55 = arith.mulf %54, %53 : vector<16x32xf32>
    %56 = arith.mulf %45, %19 : vector<16x32xf32>
    %57 = arith.mulf %37, %47 : vector<16x32xf32>
    %58 = arith.addf %56, %57 : vector<16x32xf32>
    %59 = math.tanh %58 : vector<16x32xf32>
    %60 = arith.mulf %55, %59 : vector<16x32xf32>
    %61 = arith.truncf %60 : vector<16x32xf32> to vector<16x32xbf16>
    %62 = arith.index_cast %c0_i32 : i32 to index
    %c0_34 = arith.constant 0 : index
    %c0_35 = arith.constant 0 : index
    %63 = vector.load %arg8[%62, %c0_34, %c0_35] : memref<8x16x32xbf16, #tpu.memory_space<vmem>>, vector<1x16x32xbf16>
    %64 = vector.shape_cast %63 : vector<1x16x32xbf16> to vector<16x32xbf16>
    %65 = vector.shape_cast %61 : vector<16x32xbf16> to vector<1x16x32xbf16>
    tpu.vector_store %arg8[%62, %c0_34, %c0_35], %65 {strides = array<i32>} : memref<8x16x32xbf16, #tpu.memory_space<vmem>>, vector<1x16x32xbf16>,
    %c7_i32 = arith.constant 7 : i32
    %66 = arith.subi %c7_i32, %c0_i32 : i32
    %c16_i32_36 = arith.constant 16 : i32
    %67 = arith.muli %66, %c16_i32_36 : i32
    %68 = tpu.assume_multiple %67, 16 : i32
    %cst_37 = arith.constant dense<0.000000e+00> : vector<16x128xf32>
    %69 = tpu.matmul %20, %11, %cst_37 {dimension_numbers = #tpu.dot_dimension_numbers<[1], [0], [0], [1], [0, 0, 1, 1], [], []>} : vector<16x32xbf16>, vector<32x128xbf16>, vector<16x128xf32> -> vector<16x128xf32>
    %70 = arith.index_cast %68 : i32 to index
    %c0_38 = arith.constant 0 : index
    %71 = vector.load %arg11[%70, %c0_38] : memref<128x128xbf16, #tpu.memory_space<vmem>>, vector<16x128xbf16>
    %72 = arith.extf %71 : vector<16x128xbf16> to vector<16x128xf32>
    %73 = arith.addf %69, %72 : vector<16x128xf32>
    %74 = arith.addf %73, %17 : vector<16x128xf32>
    %75 = vector.extract_strided_slice %74 {offsets = [0, 0], sizes = [16, 32], strides = [1, 1]} : vector<16x128xf32> to vector<16x32xf32>
    %cst_39 = arith.constant 5.000000e-01 : f32
    %76 = vector.broadcast %cst_39 : f32 to vector<16x32xf32>
    %77 = arith.mulf %76, %75 : vector<16x32xf32>
    %78 = math.tanh %77 : vector<16x32xf32>
    %cst_40 = arith.constant 1.000000e+00 : f32
    %79 = vector.broadcast %cst_40 : f32 to vector<16x32xf32>
    %80 = arith.addf %79, %78 : vector<16x32xf32>
    %cst_41 = arith.constant 5.000000e-01 : f32
    %81 = vector.broadcast %cst_41 : f32 to vector<16x32xf32>
    %82 = arith.mulf %81, %80 : vector<16x32xf32>
    %83 = vector.extract_strided_slice %74 {offsets = [0, 32], sizes = [16, 32], strides = [1, 1]} : vector<16x128xf32> to vector<16x32xf32>
    %cst_42 = arith.constant 5.000000e-01 : f32
    %84 = vector.broadcast %cst_42 : f32 to vector<16x32xf32>
    %85 = arith.mulf %84, %83 : vector<16x32xf32>
    %86 = math.tanh %85 : vector<16x32xf32>
    %cst_43 = arith.constant 1.000000e+00 : f32
    %87 = vector.broadcast %cst_43 : f32 to vector<16x32xf32>
    %88 = arith.addf %87, %86 : vector<16x32xf32>
    %cst_44 = arith.constant 5.000000e-01 : f32
    %89 = vector.broadcast %cst_44 : f32 to vector<16x32xf32>
    %90 = arith.mulf %89, %88 : vector<16x32xf32>
    %91 = vector.extract_strided_slice %74 {offsets = [0, 64], sizes = [16, 32], strides = [1, 1]} : vector<16x128xf32> to vector<16x32xf32>
    %92 = math.tanh %91 : vector<16x32xf32>
    %93 = vector.extract_strided_slice %74 {offsets = [0, 96], sizes = [16, 32], strides = [1, 1]} : vector<16x128xf32> to vector<16x32xf32>
    %cst_45 = arith.constant 5.000000e-01 : f32
    %94 = vector.broadcast %cst_45 : f32 to vector<16x32xf32>
    %95 = arith.mulf %94, %93 : vector<16x32xf32>
    %96 = math.tanh %95 : vector<16x32xf32>
    %cst_46 = arith.constant 1.000000e+00 : f32
    %97 = vector.broadcast %cst_46 : f32 to vector<16x32xf32>
    %98 = arith.addf %97, %96 : vector<16x32xf32>
    %cst_47 = arith.constant 5.000000e-01 : f32
    %99 = vector.broadcast %cst_47 : f32 to vector<16x32xf32>
    %100 = arith.mulf %99, %98 : vector<16x32xf32>
    %101 = arith.mulf %90, %21 : vector<16x32xf32>
    %102 = arith.mulf %82, %92 : vector<16x32xf32>
    %103 = arith.addf %101, %102 : vector<16x32xf32>
    %104 = math.tanh %103 : vector<16x32xf32>
    %105 = arith.mulf %100, %104 : vector<16x32xf32>
    %106 = arith.truncf %105 : vector<16x32xf32> to vector<16x32xbf16>
    %107 = arith.index_cast %66 : i32 to index
    %c0_48 = arith.constant 0 : index
    %c0_49 = arith.constant 0 : index
    %108 = vector.load %arg9[%107, %c0_48, %c0_49] : memref<8x16x32xbf16, #tpu.memory_space<vmem>>, vector<1x16x32xbf16>
    %109 = vector.shape_cast %108 : vector<1x16x32xbf16> to vector<16x32xbf16>
    %110 = vector.shape_cast %106 : vector<16x32xbf16> to vector<1x16x32xbf16>
    tpu.vector_store %arg9[%107, %c0_48, %c0_49], %110 {strides = array<i32>} : memref<8x16x32xbf16, #tpu.memory_space<vmem>>, vector<1x16x32xbf16>,
    %c1_i32 = arith.constant 1 : i32
    %c16_i32_50 = arith.constant 16 : i32
    %111 = arith.muli %c1_i32, %c16_i32_50 : i32
    %112 = tpu.assume_multiple %111, 16 : i32
    %cst_51 = arith.constant dense<0.000000e+00> : vector<16x128xf32>
    %113 = tpu.matmul %61, %10, %cst_51 {dimension_numbers = #tpu.dot_dimension_numbers<[1], [0], [0], [1], [0, 0, 1, 1], [], []>} : vector<16x32xbf16>, vector<32x128xbf16>, vector<16x128xf32> -> vector<16x128xf32>
    %114 = arith.index_cast %112 : i32 to index
    %c0_52 = arith.constant 0 : index
    %115 = vector.load %arg10[%114, %c0_52] : memref<128x128xbf16, #tpu.memory_space<vmem>>, vector<16x128xbf16>
    %116 = arith.extf %115 : vector<16x128xbf16> to vector<16x128xf32>
    %117 = arith.addf %113, %116 : vector<16x128xf32>
    %118 = arith.addf %117, %14 : vector<16x128xf32>
    %119 = vector.extract_strided_slice %118 {offsets = [0, 0], sizes = [16, 32], strides = [1, 1]} : vector<16x128xf32> to vector<16x32xf32>
    %cst_53 = arith.constant 5.000000e-01 : f32
    %120 = vector.broadcast %cst_53 : f32 to vector<16x32xf32>
    %121 = arith.mulf %120, %119 : vector<16x32xf32>
    %122 = math.tanh %121 : vector<16x32xf32>
    %cst_54 = arith.constant 1.000000e+00 : f32
    %123 = vector.broadcast %cst_54 : f32 to vector<16x32xf32>
    %124 = arith.addf %123, %122 : vector<16x32xf32>
    %cst_55 = arith.constant 5.000000e-01 : f32
    %125 = vector.broadcast %cst_55 : f32 to vector<16x32xf32>
    %126 = arith.mulf %125, %124 : vector<16x32xf32>
    %127 = vector.extract_strided_slice %118 {offsets = [0, 32], sizes = [16, 32], strides = [1, 1]} : vector<16x128xf32> to vector<16x32xf32>
    %cst_56 = arith.constant 5.000000e-01 : f32
    %128 = vector.broadcast %cst_56 : f32 to vector<16x32xf32>
    %129 = arith.mulf %128, %127 : vector<16x32xf32>
    %130 = math.tanh %129 : vector<16x32xf32>
    %cst_57 = arith.constant 1.000000e+00 : f32
    %131 = vector.broadcast %cst_57 : f32 to vector<16x32xf32>
    %132 = arith.addf %131, %130 : vector<16x32xf32>
    %cst_58 = arith.constant 5.000000e-01 : f32
    %133 = vector.broadcast %cst_58 : f32 to vector<16x32xf32>
    %134 = arith.mulf %133, %132 : vector<16x32xf32>
    %135 = vector.extract_strided_slice %118 {offsets = [0, 64], sizes = [16, 32], strides = [1, 1]} : vector<16x128xf32> to vector<16x32xf32>
    %136 = math.tanh %135 : vector<16x32xf32>
    %137 = vector.extract_strided_slice %118 {offsets = [0, 96], sizes = [16, 32], strides = [1, 1]} : vector<16x128xf32> to vector<16x32xf32>
    %cst_59 = arith.constant 5.000000e-01 : f32
    %138 = vector.broadcast %cst_59 : f32 to vector<16x32xf32>
    %139 = arith.mulf %138, %137 : vector<16x32xf32>
    %140 = math.tanh %139 : vector<16x32xf32>
    %cst_60 = arith.constant 1.000000e+00 : f32
    %141 = vector.broadcast %cst_60 : f32 to vector<16x32xf32>
    %142 = arith.addf %141, %140 : vector<16x32xf32>
    %cst_61 = arith.constant 5.000000e-01 : f32
    %143 = vector.broadcast %cst_61 : f32 to vector<16x32xf32>
    %144 = arith.mulf %143, %142 : vector<16x32xf32>
    %145 = arith.mulf %134, %58 : vector<16x32xf32>
    %146 = arith.mulf %126, %136 : vector<16x32xf32>
    %147 = arith.addf %145, %146 : vector<16x32xf32>
    %148 = math.tanh %147 : vector<16x32xf32>
    %149 = arith.mulf %144, %148 : vector<16x32xf32>
    %150 = arith.truncf %149 : vector<16x32xf32> to vector<16x32xbf16>
    %151 = arith.index_cast %c1_i32 : i32 to index
    %c0_62 = arith.constant 0 : index
    %c0_63 = arith.constant 0 : index
    %152 = vector.load %arg8[%151, %c0_62, %c0_63] : memref<8x16x32xbf16, #tpu.memory_space<vmem>>, vector<1x16x32xbf16>
    %153 = vector.shape_cast %152 : vector<1x16x32xbf16> to vector<16x32xbf16>
    %154 = vector.shape_cast %150 : vector<16x32xbf16> to vector<1x16x32xbf16>
    tpu.vector_store %arg8[%151, %c0_62, %c0_63], %154 {strides = array<i32>} : memref<8x16x32xbf16, #tpu.memory_space<vmem>>, vector<1x16x32xbf16>,
    %c7_i32_64 = arith.constant 7 : i32
    %155 = arith.subi %c7_i32_64, %c1_i32 : i32
    %c16_i32_65 = arith.constant 16 : i32
    %156 = arith.muli %155, %c16_i32_65 : i32
    %157 = tpu.assume_multiple %156, 16 : i32
    %cst_66 = arith.constant dense<0.000000e+00> : vector<16x128xf32>
    %158 = tpu.matmul %106, %11, %cst_66 {dimension_numbers = #tpu.dot_dimension_numbers<[1], [0], [0], [1], [0, 0, 1, 1], [], []>} : vector<16x32xbf16>, vector<32x128xbf16>, vector<16x128xf32> -> vector<16x128xf32>
    %159 = arith.index_cast %157 : i32 to index
    %c0_67 = arith.constant 0 : index
    %160 = vector.load %arg11[%159, %c0_67] : memref<128x128xbf16, #tpu.memory_space<vmem>>, vector<16x128xbf16>
    %161 = arith.extf %160 : vector<16x128xbf16> to vector<16x128xf32>
    %162 = arith.addf %158, %161 : vector<16x128xf32>
    %163 = arith.addf %162, %17 : vector<16x128xf32>
    %164 = vector.extract_strided_slice %163 {offsets = [0, 0], sizes = [16, 32], strides = [1, 1]} : vector<16x128xf32> to vector<16x32xf32>
    %cst_68 = arith.constant 5.000000e-01 : f32
    %165 = vector.broadcast %cst_68 : f32 to vector<16x32xf32>
    %166 = arith.mulf %165, %164 : vector<16x32xf32>
    %167 = math.tanh %166 : vector<16x32xf32>
    %cst_69 = arith.constant 1.000000e+00 : f32
    %168 = vector.broadcast %cst_69 : f32 to vector<16x32xf32>
    %169 = arith.addf %168, %167 : vector<16x32xf32>
    %cst_70 = arith.constant 5.000000e-01 : f32
    %170 = vector.broadcast %cst_70 : f32 to vector<16x32xf32>
    %171 = arith.mulf %170, %169 : vector<16x32xf32>
    %172 = vector.extract_strided_slice %163 {offsets = [0, 32], sizes = [16, 32], strides = [1, 1]} : vector<16x128xf32> to vector<16x32xf32>
    %cst_71 = arith.constant 5.000000e-01 : f32
    %173 = vector.broadcast %cst_71 : f32 to vector<16x32xf32>
    %174 = arith.mulf %173, %172 : vector<16x32xf32>
    %175 = math.tanh %174 : vector<16x32xf32>
    %cst_72 = arith.constant 1.000000e+00 : f32
    %176 = vector.broadcast %cst_72 : f32 to vector<16x32xf32>
    %177 = arith.addf %176, %175 : vector<16x32xf32>
    %cst_73 = arith.constant 5.000000e-01 : f32
    %178 = vector.broadcast %cst_73 : f32 to vector<16x32xf32>
    %179 = arith.mulf %178, %177 : vector<16x32xf32>
    %180 = vector.extract_strided_slice %163 {offsets = [0, 64], sizes = [16, 32], strides = [1, 1]} : vector<16x128xf32> to vector<16x32xf32>
    %181 = math.tanh %180 : vector<16x32xf32>
    %182 = vector.extract_strided_slice %163 {offsets = [0, 96], sizes = [16, 32], strides = [1, 1]} : vector<16x128xf32> to vector<16x32xf32>
    %cst_74 = arith.constant 5.000000e-01 : f32
    %183 = vector.broadcast %cst_74 : f32 to vector<16x32xf32>
    %184 = arith.mulf %183, %182 : vector<16x32xf32>
    %185 = math.tanh %184 : vector<16x32xf32>
    %cst_75 = arith.constant 1.000000e+00 : f32
    %186 = vector.broadcast %cst_75 : f32 to vector<16x32xf32>
    %187 = arith.addf %186, %185 : vector<16x32xf32>
    %cst_76 = arith.constant 5.000000e-01 : f32
    %188 = vector.broadcast %cst_76 : f32 to vector<16x32xf32>
    %189 = arith.mulf %188, %187 : vector<16x32xf32>
    %190 = arith.mulf %179, %103 : vector<16x32xf32>
    %191 = arith.mulf %171, %181 : vector<16x32xf32>
    %192 = arith.addf %190, %191 : vector<16x32xf32>
    %193 = math.tanh %192 : vector<16x32xf32>
    %194 = arith.mulf %189, %193 : vector<16x32xf32>
    %195 = arith.truncf %194 : vector<16x32xf32> to vector<16x32xbf16>
    %196 = arith.index_cast %155 : i32 to index
    %c0_77 = arith.constant 0 : index
    %c0_78 = arith.constant 0 : index
    %197 = vector.load %arg9[%196, %c0_77, %c0_78] : memref<8x16x32xbf16, #tpu.memory_space<vmem>>, vector<1x16x32xbf16>
    %198 = vector.shape_cast %197 : vector<1x16x32xbf16> to vector<16x32xbf16>
    %199 = vector.shape_cast %195 : vector<16x32xbf16> to vector<1x16x32xbf16>
    tpu.vector_store %arg9[%196, %c0_77, %c0_78], %199 {strides = array<i32>} : memref<8x16x32xbf16, #tpu.memory_space<vmem>>, vector<1x16x32xbf16>,
    %c2_i32 = arith.constant 2 : i32
    %c16_i32_79 = arith.constant 16 : i32
    %200 = arith.muli %c2_i32, %c16_i32_79 : i32
    %201 = tpu.assume_multiple %200, 16 : i32
    %cst_80 = arith.constant dense<0.000000e+00> : vector<16x128xf32>
    %202 = tpu.matmul %150, %10, %cst_80 {dimension_numbers = #tpu.dot_dimension_numbers<[1], [0], [0], [1], [0, 0, 1, 1], [], []>} : vector<16x32xbf16>, vector<32x128xbf16>, vector<16x128xf32> -> vector<16x128xf32>
    %203 = arith.index_cast %201 : i32 to index
    %c0_81 = arith.constant 0 : index
    %204 = vector.load %arg10[%203, %c0_81] : memref<128x128xbf16, #tpu.memory_space<vmem>>, vector<16x128xbf16>
    %205 = arith.extf %204 : vector<16x128xbf16> to vector<16x128xf32>
    %206 = arith.addf %202, %205 : vector<16x128xf32>
    %207 = arith.addf %206, %14 : vector<16x128xf32>
    %208 = vector.extract_strided_slice %207 {offsets = [0, 0], sizes = [16, 32], strides = [1, 1]} : vector<16x128xf32> to vector<16x32xf32>
    %cst_82 = arith.constant 5.000000e-01 : f32
    %209 = vector.broadcast %cst_82 : f32 to vector<16x32xf32>
    %210 = arith.mulf %209, %208 : vector<16x32xf32>
    %211 = math.tanh %210 : vector<16x32xf32>
    %cst_83 = arith.constant 1.000000e+00 : f32
    %212 = vector.broadcast %cst_83 : f32 to vector<16x32xf32>
    %213 = arith.addf %212, %211 : vector<16x32xf32>
    %cst_84 = arith.constant 5.000000e-01 : f32
    %214 = vector.broadcast %cst_84 : f32 to vector<16x32xf32>
    %215 = arith.mulf %214, %213 : vector<16x32xf32>
    %216 = vector.extract_strided_slice %207 {offsets = [0, 32], sizes = [16, 32], strides = [1, 1]} : vector<16x128xf32> to vector<16x32xf32>
    %cst_85 = arith.constant 5.000000e-01 : f32
    %217 = vector.broadcast %cst_85 : f32 to vector<16x32xf32>
    %218 = arith.mulf %217, %216 : vector<16x32xf32>
    %219 = math.tanh %218 : vector<16x32xf32>
    %cst_86 = arith.constant 1.000000e+00 : f32
    %220 = vector.broadcast %cst_86 : f32 to vector<16x32xf32>
    %221 = arith.addf %220, %219 : vector<16x32xf32>
    %cst_87 = arith.constant 5.000000e-01 : f32
    %222 = vector.broadcast %cst_87 : f32 to vector<16x32xf32>
    %223 = arith.mulf %222, %221 : vector<16x32xf32>
    %224 = vector.extract_strided_slice %207 {offsets = [0, 64], sizes = [16, 32], strides = [1, 1]} : vector<16x128xf32> to vector<16x32xf32>
    %225 = math.tanh %224 : vector<16x32xf32>
    %226 = vector.extract_strided_slice %207 {offsets = [0, 96], sizes = [16, 32], strides = [1, 1]} : vector<16x128xf32> to vector<16x32xf32>
    %cst_88 = arith.constant 5.000000e-01 : f32
    %227 = vector.broadcast %cst_88 : f32 to vector<16x32xf32>
    %228 = arith.mulf %227, %226 : vector<16x32xf32>
    %229 = math.tanh %228 : vector<16x32xf32>
    %cst_89 = arith.constant 1.000000e+00 : f32
    %230 = vector.broadcast %cst_89 : f32 to vector<16x32xf32>
    %231 = arith.addf %230, %229 : vector<16x32xf32>
    %cst_90 = arith.constant 5.000000e-01 : f32
    %232 = vector.broadcast %cst_90 : f32 to vector<16x32xf32>
    %233 = arith.mulf %232, %231 : vector<16x32xf32>
    %234 = arith.mulf %223, %147 : vector<16x32xf32>
    %235 = arith.mulf %215, %225 : vector<16x32xf32>
    %236 = arith.addf %234, %235 : vector<16x32xf32>
    %237 = math.tanh %236 : vector<16x32xf32>
    %238 = arith.mulf %233, %237 : vector<16x32xf32>
    %239 = arith.truncf %238 : vector<16x32xf32> to vector<16x32xbf16>
    %240 = arith.index_cast %c2_i32 : i32 to index
    %c0_91 = arith.constant 0 : index
    %c0_92 = arith.constant 0 : index
    %241 = vector.load %arg8[%240, %c0_91, %c0_92] : memref<8x16x32xbf16, #tpu.memory_space<vmem>>, vector<1x16x32xbf16>
    %242 = vector.shape_cast %241 : vector<1x16x32xbf16> to vector<16x32xbf16>
    %243 = vector.shape_cast %239 : vector<16x32xbf16> to vector<1x16x32xbf16>
    tpu.vector_store %arg8[%240, %c0_91, %c0_92], %243 {strides = array<i32>} : memref<8x16x32xbf16, #tpu.memory_space<vmem>>, vector<1x16x32xbf16>,
    %c7_i32_93 = arith.constant 7 : i32
    %244 = arith.subi %c7_i32_93, %c2_i32 : i32
    %c16_i32_94 = arith.constant 16 : i32
    %245 = arith.muli %244, %c16_i32_94 : i32
    %246 = tpu.assume_multiple %245, 16 : i32
    %cst_95 = arith.constant dense<0.000000e+00> : vector<16x128xf32>
    %247 = tpu.matmul %195, %11, %cst_95 {dimension_numbers = #tpu.dot_dimension_numbers<[1], [0], [0], [1], [0, 0, 1, 1], [], []>} : vector<16x32xbf16>, vector<32x128xbf16>, vector<16x128xf32> -> vector<16x128xf32>
    %248 = arith.index_cast %246 : i32 to index
    %c0_96 = arith.constant 0 : index
    %249 = vector.load %arg11[%248, %c0_96] : memref<128x128xbf16, #tpu.memory_space<vmem>>, vector<16x128xbf16>
    %250 = arith.extf %249 : vector<16x128xbf16> to vector<16x128xf32>
    %251 = arith.addf %247, %250 : vector<16x128xf32>
    %252 = arith.addf %251, %17 : vector<16x128xf32>
    %253 = vector.extract_strided_slice %252 {offsets = [0, 0], sizes = [16, 32], strides = [1, 1]} : vector<16x128xf32> to vector<16x32xf32>
    %cst_97 = arith.constant 5.000000e-01 : f32
    %254 = vector.broadcast %cst_97 : f32 to vector<16x32xf32>
    %255 = arith.mulf %254, %253 : vector<16x32xf32>
    %256 = math.tanh %255 : vector<16x32xf32>
    %cst_98 = arith.constant 1.000000e+00 : f32
    %257 = vector.broadcast %cst_98 : f32 to vector<16x32xf32>
    %258 = arith.addf %257, %256 : vector<16x32xf32>
    %cst_99 = arith.constant 5.000000e-01 : f32
    %259 = vector.broadcast %cst_99 : f32 to vector<16x32xf32>
    %260 = arith.mulf %259, %258 : vector<16x32xf32>
    %261 = vector.extract_strided_slice %252 {offsets = [0, 32], sizes = [16, 32], strides = [1, 1]} : vector<16x128xf32> to vector<16x32xf32>
    %cst_100 = arith.constant 5.000000e-01 : f32
    %262 = vector.broadcast %cst_100 : f32 to vector<16x32xf32>
    %263 = arith.mulf %262, %261 : vector<16x32xf32>
    %264 = math.tanh %263 : vector<16x32xf32>
    %cst_101 = arith.constant 1.000000e+00 : f32
    %265 = vector.broadcast %cst_101 : f32 to vector<16x32xf32>
    %266 = arith.addf %265, %264 : vector<16x32xf32>
    %cst_102 = arith.constant 5.000000e-01 : f32
    %267 = vector.broadcast %cst_102 : f32 to vector<16x32xf32>
    %268 = arith.mulf %267, %266 : vector<16x32xf32>
    %269 = vector.extract_strided_slice %252 {offsets = [0, 64], sizes = [16, 32], strides = [1, 1]} : vector<16x128xf32> to vector<16x32xf32>
    %270 = math.tanh %269 : vector<16x32xf32>
    %271 = vector.extract_strided_slice %252 {offsets = [0, 96], sizes = [16, 32], strides = [1, 1]} : vector<16x128xf32> to vector<16x32xf32>
    %cst_103 = arith.constant 5.000000e-01 : f32
    %272 = vector.broadcast %cst_103 : f32 to vector<16x32xf32>
    %273 = arith.mulf %272, %271 : vector<16x32xf32>
    %274 = math.tanh %273 : vector<16x32xf32>
    %cst_104 = arith.constant 1.000000e+00 : f32
    %275 = vector.broadcast %cst_104 : f32 to vector<16x32xf32>
    %276 = arith.addf %275, %274 : vector<16x32xf32>
    %cst_105 = arith.constant 5.000000e-01 : f32
    %277 = vector.broadcast %cst_105 : f32 to vector<16x32xf32>
    %278 = arith.mulf %277, %276 : vector<16x32xf32>
    %279 = arith.mulf %268, %192 : vector<16x32xf32>
    %280 = arith.mulf %260, %270 : vector<16x32xf32>
    %281 = arith.addf %279, %280 : vector<16x32xf32>
    %282 = math.tanh %281 : vector<16x32xf32>
    %283 = arith.mulf %278, %282 : vector<16x32xf32>
    %284 = arith.truncf %283 : vector<16x32xf32> to vector<16x32xbf16>
    %285 = arith.index_cast %244 : i32 to index
    %c0_106 = arith.constant 0 : index
    %c0_107 = arith.constant 0 : index
    %286 = vector.load %arg9[%285, %c0_106, %c0_107] : memref<8x16x32xbf16, #tpu.memory_space<vmem>>, vector<1x16x32xbf16>
    %287 = vector.shape_cast %286 : vector<1x16x32xbf16> to vector<16x32xbf16>
    %288 = vector.shape_cast %284 : vector<16x32xbf16> to vector<1x16x32xbf16>
    tpu.vector_store %arg9[%285, %c0_106, %c0_107], %288 {strides = array<i32>} : memref<8x16x32xbf16, #tpu.memory_space<vmem>>, vector<1x16x32xbf16>,
    %c3_i32 = arith.constant 3 : i32
    %c16_i32_108 = arith.constant 16 : i32
    %289 = arith.muli %c3_i32, %c16_i32_108 : i32
    %290 = tpu.assume_multiple %289, 16 : i32
    %cst_109 = arith.constant dense<0.000000e+00> : vector<16x128xf32>
    %291 = tpu.matmul %239, %10, %cst_109 {dimension_numbers = #tpu.dot_dimension_numbers<[1], [0], [0], [1], [0, 0, 1, 1], [], []>} : vector<16x32xbf16>, vector<32x128xbf16>, vector<16x128xf32> -> vector<16x128xf32>
    %292 = arith.index_cast %290 : i32 to index
    %c0_110 = arith.constant 0 : index
    %293 = vector.load %arg10[%292, %c0_110] : memref<128x128xbf16, #tpu.memory_space<vmem>>, vector<16x128xbf16>
    %294 = arith.extf %293 : vector<16x128xbf16> to vector<16x128xf32>
    %295 = arith.addf %291, %294 : vector<16x128xf32>
    %296 = arith.addf %295, %14 : vector<16x128xf32>
    %297 = vector.extract_strided_slice %296 {offsets = [0, 0], sizes = [16, 32], strides = [1, 1]} : vector<16x128xf32> to vector<16x32xf32>
    %cst_111 = arith.constant 5.000000e-01 : f32
    %298 = vector.broadcast %cst_111 : f32 to vector<16x32xf32>
    %299 = arith.mulf %298, %297 : vector<16x32xf32>
    %300 = math.tanh %299 : vector<16x32xf32>
    %cst_112 = arith.constant 1.000000e+00 : f32
    %301 = vector.broadcast %cst_112 : f32 to vector<16x32xf32>
    %302 = arith.addf %301, %300 : vector<16x32xf32>
    %cst_113 = arith.constant 5.000000e-01 : f32
    %303 = vector.broadcast %cst_113 : f32 to vector<16x32xf32>
    %304 = arith.mulf %303, %302 : vector<16x32xf32>
    %305 = vector.extract_strided_slice %296 {offsets = [0, 32], sizes = [16, 32], strides = [1, 1]} : vector<16x128xf32> to vector<16x32xf32>
    %cst_114 = arith.constant 5.000000e-01 : f32
    %306 = vector.broadcast %cst_114 : f32 to vector<16x32xf32>
    %307 = arith.mulf %306, %305 : vector<16x32xf32>
    %308 = math.tanh %307 : vector<16x32xf32>
    %cst_115 = arith.constant 1.000000e+00 : f32
    %309 = vector.broadcast %cst_115 : f32 to vector<16x32xf32>
    %310 = arith.addf %309, %308 : vector<16x32xf32>
    %cst_116 = arith.constant 5.000000e-01 : f32
    %311 = vector.broadcast %cst_116 : f32 to vector<16x32xf32>
    %312 = arith.mulf %311, %310 : vector<16x32xf32>
    %313 = vector.extract_strided_slice %296 {offsets = [0, 64], sizes = [16, 32], strides = [1, 1]} : vector<16x128xf32> to vector<16x32xf32>
    %314 = math.tanh %313 : vector<16x32xf32>
    %315 = vector.extract_strided_slice %296 {offsets = [0, 96], sizes = [16, 32], strides = [1, 1]} : vector<16x128xf32> to vector<16x32xf32>
    %cst_117 = arith.constant 5.000000e-01 : f32
    %316 = vector.broadcast %cst_117 : f32 to vector<16x32xf32>
    %317 = arith.mulf %316, %315 : vector<16x32xf32>
    %318 = math.tanh %317 : vector<16x32xf32>
    %cst_118 = arith.constant 1.000000e+00 : f32
    %319 = vector.broadcast %cst_118 : f32 to vector<16x32xf32>
    %320 = arith.addf %319, %318 : vector<16x32xf32>
    %cst_119 = arith.constant 5.000000e-01 : f32
    %321 = vector.broadcast %cst_119 : f32 to vector<16x32xf32>
    %322 = arith.mulf %321, %320 : vector<16x32xf32>
    %323 = arith.mulf %312, %236 : vector<16x32xf32>
    %324 = arith.mulf %304, %314 : vector<16x32xf32>
    %325 = arith.addf %323, %324 : vector<16x32xf32>
    %326 = math.tanh %325 : vector<16x32xf32>
    %327 = arith.mulf %322, %326 : vector<16x32xf32>
    %328 = arith.truncf %327 : vector<16x32xf32> to vector<16x32xbf16>
    %329 = arith.index_cast %c3_i32 : i32 to index
    %c0_120 = arith.constant 0 : index
    %c0_121 = arith.constant 0 : index
    %330 = vector.load %arg8[%329, %c0_120, %c0_121] : memref<8x16x32xbf16, #tpu.memory_space<vmem>>, vector<1x16x32xbf16>
    %331 = vector.shape_cast %330 : vector<1x16x32xbf16> to vector<16x32xbf16>
    %332 = vector.shape_cast %328 : vector<16x32xbf16> to vector<1x16x32xbf16>
    tpu.vector_store %arg8[%329, %c0_120, %c0_121], %332 {strides = array<i32>} : memref<8x16x32xbf16, #tpu.memory_space<vmem>>, vector<1x16x32xbf16>,
    %c7_i32_122 = arith.constant 7 : i32
    %333 = arith.subi %c7_i32_122, %c3_i32 : i32
    %c16_i32_123 = arith.constant 16 : i32
    %334 = arith.muli %333, %c16_i32_123 : i32
    %335 = tpu.assume_multiple %334, 16 : i32
    %cst_124 = arith.constant dense<0.000000e+00> : vector<16x128xf32>
    %336 = tpu.matmul %284, %11, %cst_124 {dimension_numbers = #tpu.dot_dimension_numbers<[1], [0], [0], [1], [0, 0, 1, 1], [], []>} : vector<16x32xbf16>, vector<32x128xbf16>, vector<16x128xf32> -> vector<16x128xf32>
    %337 = arith.index_cast %335 : i32 to index
    %c0_125 = arith.constant 0 : index
    %338 = vector.load %arg11[%337, %c0_125] : memref<128x128xbf16, #tpu.memory_space<vmem>>, vector<16x128xbf16>
    %339 = arith.extf %338 : vector<16x128xbf16> to vector<16x128xf32>
    %340 = arith.addf %336, %339 : vector<16x128xf32>
    %341 = arith.addf %340, %17 : vector<16x128xf32>
    %342 = vector.extract_strided_slice %341 {offsets = [0, 0], sizes = [16, 32], strides = [1, 1]} : vector<16x128xf32> to vector<16x32xf32>
    %cst_126 = arith.constant 5.000000e-01 : f32
    %343 = vector.broadcast %cst_126 : f32 to vector<16x32xf32>
    %344 = arith.mulf %343, %342 : vector<16x32xf32>
    %345 = math.tanh %344 : vector<16x32xf32>
    %cst_127 = arith.constant 1.000000e+00 : f32
    %346 = vector.broadcast %cst_127 : f32 to vector<16x32xf32>
    %347 = arith.addf %346, %345 : vector<16x32xf32>
    %cst_128 = arith.constant 5.000000e-01 : f32
    %348 = vector.broadcast %cst_128 : f32 to vector<16x32xf32>
    %349 = arith.mulf %348, %347 : vector<16x32xf32>
    %350 = vector.extract_strided_slice %341 {offsets = [0, 32], sizes = [16, 32], strides = [1, 1]} : vector<16x128xf32> to vector<16x32xf32>
    %cst_129 = arith.constant 5.000000e-01 : f32
    %351 = vector.broadcast %cst_129 : f32 to vector<16x32xf32>
    %352 = arith.mulf %351, %350 : vector<16x32xf32>
    %353 = math.tanh %352 : vector<16x32xf32>
    %cst_130 = arith.constant 1.000000e+00 : f32
    %354 = vector.broadcast %cst_130 : f32 to vector<16x32xf32>
    %355 = arith.addf %354, %353 : vector<16x32xf32>
    %cst_131 = arith.constant 5.000000e-01 : f32
    %356 = vector.broadcast %cst_131 : f32 to vector<16x32xf32>
    %357 = arith.mulf %356, %355 : vector<16x32xf32>
    %358 = vector.extract_strided_slice %341 {offsets = [0, 64], sizes = [16, 32], strides = [1, 1]} : vector<16x128xf32> to vector<16x32xf32>
    %359 = math.tanh %358 : vector<16x32xf32>
    %360 = vector.extract_strided_slice %341 {offsets = [0, 96], sizes = [16, 32], strides = [1, 1]} : vector<16x128xf32> to vector<16x32xf32>
    %cst_132 = arith.constant 5.000000e-01 : f32
    %361 = vector.broadcast %cst_132 : f32 to vector<16x32xf32>
    %362 = arith.mulf %361, %360 : vector<16x32xf32>
    %363 = math.tanh %362 : vector<16x32xf32>
    %cst_133 = arith.constant 1.000000e+00 : f32
    %364 = vector.broadcast %cst_133 : f32 to vector<16x32xf32>
    %365 = arith.addf %364, %363 : vector<16x32xf32>
    %cst_134 = arith.constant 5.000000e-01 : f32
    %366 = vector.broadcast %cst_134 : f32 to vector<16x32xf32>
    %367 = arith.mulf %366, %365 : vector<16x32xf32>
    %368 = arith.mulf %357, %281 : vector<16x32xf32>
    %369 = arith.mulf %349, %359 : vector<16x32xf32>
    %370 = arith.addf %368, %369 : vector<16x32xf32>
    %371 = math.tanh %370 : vector<16x32xf32>
    %372 = arith.mulf %367, %371 : vector<16x32xf32>
    %373 = arith.truncf %372 : vector<16x32xf32> to vector<16x32xbf16>
    %374 = arith.index_cast %333 : i32 to index
    %c0_135 = arith.constant 0 : index
    %c0_136 = arith.constant 0 : index
    %375 = vector.load %arg9[%374, %c0_135, %c0_136] : memref<8x16x32xbf16, #tpu.memory_space<vmem>>, vector<1x16x32xbf16>
    %376 = vector.shape_cast %375 : vector<1x16x32xbf16> to vector<16x32xbf16>
    %377 = vector.shape_cast %373 : vector<16x32xbf16> to vector<1x16x32xbf16>
    tpu.vector_store %arg9[%374, %c0_135, %c0_136], %377 {strides = array<i32>} : memref<8x16x32xbf16, #tpu.memory_space<vmem>>, vector<1x16x32xbf16>,
    %c4_i32 = arith.constant 4 : i32
    %c16_i32_137 = arith.constant 16 : i32
    %378 = arith.muli %c4_i32, %c16_i32_137 : i32
    %379 = tpu.assume_multiple %378, 16 : i32
    %cst_138 = arith.constant dense<0.000000e+00> : vector<16x128xf32>
    %380 = tpu.matmul %328, %10, %cst_138 {dimension_numbers = #tpu.dot_dimension_numbers<[1], [0], [0], [1], [0, 0, 1, 1], [], []>} : vector<16x32xbf16>, vector<32x128xbf16>, vector<16x128xf32> -> vector<16x128xf32>
    %381 = arith.index_cast %379 : i32 to index
    %c0_139 = arith.constant 0 : index
    %382 = vector.load %arg10[%381, %c0_139] : memref<128x128xbf16, #tpu.memory_space<vmem>>, vector<16x128xbf16>
    %383 = arith.extf %382 : vector<16x128xbf16> to vector<16x128xf32>
    %384 = arith.addf %380, %383 : vector<16x128xf32>
    %385 = arith.addf %384, %14 : vector<16x128xf32>
    %386 = vector.extract_strided_slice %385 {offsets = [0, 0], sizes = [16, 32], strides = [1, 1]} : vector<16x128xf32> to vector<16x32xf32>
    %cst_140 = arith.constant 5.000000e-01 : f32
    %387 = vector.broadcast %cst_140 : f32 to vector<16x32xf32>
    %388 = arith.mulf %387, %386 : vector<16x32xf32>
    %389 = math.tanh %388 : vector<16x32xf32>
    %cst_141 = arith.constant 1.000000e+00 : f32
    %390 = vector.broadcast %cst_141 : f32 to vector<16x32xf32>
    %391 = arith.addf %390, %389 : vector<16x32xf32>
    %cst_142 = arith.constant 5.000000e-01 : f32
    %392 = vector.broadcast %cst_142 : f32 to vector<16x32xf32>
    %393 = arith.mulf %392, %391 : vector<16x32xf32>
    %394 = vector.extract_strided_slice %385 {offsets = [0, 32], sizes = [16, 32], strides = [1, 1]} : vector<16x128xf32> to vector<16x32xf32>
    %cst_143 = arith.constant 5.000000e-01 : f32
    %395 = vector.broadcast %cst_143 : f32 to vector<16x32xf32>
    %396 = arith.mulf %395, %394 : vector<16x32xf32>
    %397 = math.tanh %396 : vector<16x32xf32>
    %cst_144 = arith.constant 1.000000e+00 : f32
    %398 = vector.broadcast %cst_144 : f32 to vector<16x32xf32>
    %399 = arith.addf %398, %397 : vector<16x32xf32>
    %cst_145 = arith.constant 5.000000e-01 : f32
    %400 = vector.broadcast %cst_145 : f32 to vector<16x32xf32>
    %401 = arith.mulf %400, %399 : vector<16x32xf32>
    %402 = vector.extract_strided_slice %385 {offsets = [0, 64], sizes = [16, 32], strides = [1, 1]} : vector<16x128xf32> to vector<16x32xf32>
    %403 = math.tanh %402 : vector<16x32xf32>
    %404 = vector.extract_strided_slice %385 {offsets = [0, 96], sizes = [16, 32], strides = [1, 1]} : vector<16x128xf32> to vector<16x32xf32>
    %cst_146 = arith.constant 5.000000e-01 : f32
    %405 = vector.broadcast %cst_146 : f32 to vector<16x32xf32>
    %406 = arith.mulf %405, %404 : vector<16x32xf32>
    %407 = math.tanh %406 : vector<16x32xf32>
    %cst_147 = arith.constant 1.000000e+00 : f32
    %408 = vector.broadcast %cst_147 : f32 to vector<16x32xf32>
    %409 = arith.addf %408, %407 : vector<16x32xf32>
    %cst_148 = arith.constant 5.000000e-01 : f32
    %410 = vector.broadcast %cst_148 : f32 to vector<16x32xf32>
    %411 = arith.mulf %410, %409 : vector<16x32xf32>
    %412 = arith.mulf %401, %325 : vector<16x32xf32>
    %413 = arith.mulf %393, %403 : vector<16x32xf32>
    %414 = arith.addf %412, %413 : vector<16x32xf32>
    %415 = math.tanh %414 : vector<16x32xf32>
    %416 = arith.mulf %411, %415 : vector<16x32xf32>
    %417 = arith.truncf %416 : vector<16x32xf32> to vector<16x32xbf16>
    %418 = arith.index_cast %c4_i32 : i32 to index
    %c0_149 = arith.constant 0 : index
    %c0_150 = arith.constant 0 : index
    %419 = vector.load %arg8[%418, %c0_149, %c0_150] : memref<8x16x32xbf16, #tpu.memory_space<vmem>>, vector<1x16x32xbf16>
    %420 = vector.shape_cast %419 : vector<1x16x32xbf16> to vector<16x32xbf16>
    %421 = vector.shape_cast %417 : vector<16x32xbf16> to vector<1x16x32xbf16>
    tpu.vector_store %arg8[%418, %c0_149, %c0_150], %421 {strides = array<i32>} : memref<8x16x32xbf16, #tpu.memory_space<vmem>>, vector<1x16x32xbf16>,
    %c7_i32_151 = arith.constant 7 : i32
    %422 = arith.subi %c7_i32_151, %c4_i32 : i32
    %c16_i32_152 = arith.constant 16 : i32
    %423 = arith.muli %422, %c16_i32_152 : i32
    %424 = tpu.assume_multiple %423, 16 : i32
    %cst_153 = arith.constant dense<0.000000e+00> : vector<16x128xf32>
    %425 = tpu.matmul %373, %11, %cst_153 {dimension_numbers = #tpu.dot_dimension_numbers<[1], [0], [0], [1], [0, 0, 1, 1], [], []>} : vector<16x32xbf16>, vector<32x128xbf16>, vector<16x128xf32> -> vector<16x128xf32>
    %426 = arith.index_cast %424 : i32 to index
    %c0_154 = arith.constant 0 : index
    %427 = vector.load %arg11[%426, %c0_154] : memref<128x128xbf16, #tpu.memory_space<vmem>>, vector<16x128xbf16>
    %428 = arith.extf %427 : vector<16x128xbf16> to vector<16x128xf32>
    %429 = arith.addf %425, %428 : vector<16x128xf32>
    %430 = arith.addf %429, %17 : vector<16x128xf32>
    %431 = vector.extract_strided_slice %430 {offsets = [0, 0], sizes = [16, 32], strides = [1, 1]} : vector<16x128xf32> to vector<16x32xf32>
    %cst_155 = arith.constant 5.000000e-01 : f32
    %432 = vector.broadcast %cst_155 : f32 to vector<16x32xf32>
    %433 = arith.mulf %432, %431 : vector<16x32xf32>
    %434 = math.tanh %433 : vector<16x32xf32>
    %cst_156 = arith.constant 1.000000e+00 : f32
    %435 = vector.broadcast %cst_156 : f32 to vector<16x32xf32>
    %436 = arith.addf %435, %434 : vector<16x32xf32>
    %cst_157 = arith.constant 5.000000e-01 : f32
    %437 = vector.broadcast %cst_157 : f32 to vector<16x32xf32>
    %438 = arith.mulf %437, %436 : vector<16x32xf32>
    %439 = vector.extract_strided_slice %430 {offsets = [0, 32], sizes = [16, 32], strides = [1, 1]} : vector<16x128xf32> to vector<16x32xf32>
    %cst_158 = arith.constant 5.000000e-01 : f32
    %440 = vector.broadcast %cst_158 : f32 to vector<16x32xf32>
    %441 = arith.mulf %440, %439 : vector<16x32xf32>
    %442 = math.tanh %441 : vector<16x32xf32>
    %cst_159 = arith.constant 1.000000e+00 : f32
    %443 = vector.broadcast %cst_159 : f32 to vector<16x32xf32>
    %444 = arith.addf %443, %442 : vector<16x32xf32>
    %cst_160 = arith.constant 5.000000e-01 : f32
    %445 = vector.broadcast %cst_160 : f32 to vector<16x32xf32>
    %446 = arith.mulf %445, %444 : vector<16x32xf32>
    %447 = vector.extract_strided_slice %430 {offsets = [0, 64], sizes = [16, 32], strides = [1, 1]} : vector<16x128xf32> to vector<16x32xf32>
    %448 = math.tanh %447 : vector<16x32xf32>
    %449 = vector.extract_strided_slice %430 {offsets = [0, 96], sizes = [16, 32], strides = [1, 1]} : vector<16x128xf32> to vector<16x32xf32>
    %cst_161 = arith.constant 5.000000e-01 : f32
    %450 = vector.broadcast %cst_161 : f32 to vector<16x32xf32>
    %451 = arith.mulf %450, %449 : vector<16x32xf32>
    %452 = math.tanh %451 : vector<16x32xf32>
    %cst_162 = arith.constant 1.000000e+00 : f32
    %453 = vector.broadcast %cst_162 : f32 to vector<16x32xf32>
    %454 = arith.addf %453, %452 : vector<16x32xf32>
    %cst_163 = arith.constant 5.000000e-01 : f32
    %455 = vector.broadcast %cst_163 : f32 to vector<16x32xf32>
    %456 = arith.mulf %455, %454 : vector<16x32xf32>
    %457 = arith.mulf %446, %370 : vector<16x32xf32>
    %458 = arith.mulf %438, %448 : vector<16x32xf32>
    %459 = arith.addf %457, %458 : vector<16x32xf32>
    %460 = math.tanh %459 : vector<16x32xf32>
    %461 = arith.mulf %456, %460 : vector<16x32xf32>
    %462 = arith.truncf %461 : vector<16x32xf32> to vector<16x32xbf16>
    %463 = arith.index_cast %422 : i32 to index
    %c0_164 = arith.constant 0 : index
    %c0_165 = arith.constant 0 : index
    %464 = vector.load %arg9[%463, %c0_164, %c0_165] : memref<8x16x32xbf16, #tpu.memory_space<vmem>>, vector<1x16x32xbf16>
    %465 = vector.shape_cast %464 : vector<1x16x32xbf16> to vector<16x32xbf16>
    %466 = vector.shape_cast %462 : vector<16x32xbf16> to vector<1x16x32xbf16>
    tpu.vector_store %arg9[%463, %c0_164, %c0_165], %466 {strides = array<i32>} : memref<8x16x32xbf16, #tpu.memory_space<vmem>>, vector<1x16x32xbf16>,
    %c5_i32 = arith.constant 5 : i32
    %c16_i32_166 = arith.constant 16 : i32
    %467 = arith.muli %c5_i32, %c16_i32_166 : i32
    %468 = tpu.assume_multiple %467, 16 : i32
    %cst_167 = arith.constant dense<0.000000e+00> : vector<16x128xf32>
    %469 = tpu.matmul %417, %10, %cst_167 {dimension_numbers = #tpu.dot_dimension_numbers<[1], [0], [0], [1], [0, 0, 1, 1], [], []>} : vector<16x32xbf16>, vector<32x128xbf16>, vector<16x128xf32> -> vector<16x128xf32>
    %470 = arith.index_cast %468 : i32 to index
    %c0_168 = arith.constant 0 : index
    %471 = vector.load %arg10[%470, %c0_168] : memref<128x128xbf16, #tpu.memory_space<vmem>>, vector<16x128xbf16>
    %472 = arith.extf %471 : vector<16x128xbf16> to vector<16x128xf32>
    %473 = arith.addf %469, %472 : vector<16x128xf32>
    %474 = arith.addf %473, %14 : vector<16x128xf32>
    %475 = vector.extract_strided_slice %474 {offsets = [0, 0], sizes = [16, 32], strides = [1, 1]} : vector<16x128xf32> to vector<16x32xf32>
    %cst_169 = arith.constant 5.000000e-01 : f32
    %476 = vector.broadcast %cst_169 : f32 to vector<16x32xf32>
    %477 = arith.mulf %476, %475 : vector<16x32xf32>
    %478 = math.tanh %477 : vector<16x32xf32>
    %cst_170 = arith.constant 1.000000e+00 : f32
    %479 = vector.broadcast %cst_170 : f32 to vector<16x32xf32>
    %480 = arith.addf %479, %478 : vector<16x32xf32>
    %cst_171 = arith.constant 5.000000e-01 : f32
    %481 = vector.broadcast %cst_171 : f32 to vector<16x32xf32>
    %482 = arith.mulf %481, %480 : vector<16x32xf32>
    %483 = vector.extract_strided_slice %474 {offsets = [0, 32], sizes = [16, 32], strides = [1, 1]} : vector<16x128xf32> to vector<16x32xf32>
    %cst_172 = arith.constant 5.000000e-01 : f32
    %484 = vector.broadcast %cst_172 : f32 to vector<16x32xf32>
    %485 = arith.mulf %484, %483 : vector<16x32xf32>
    %486 = math.tanh %485 : vector<16x32xf32>
    %cst_173 = arith.constant 1.000000e+00 : f32
    %487 = vector.broadcast %cst_173 : f32 to vector<16x32xf32>
    %488 = arith.addf %487, %486 : vector<16x32xf32>
    %cst_174 = arith.constant 5.000000e-01 : f32
    %489 = vector.broadcast %cst_174 : f32 to vector<16x32xf32>
    %490 = arith.mulf %489, %488 : vector<16x32xf32>
    %491 = vector.extract_strided_slice %474 {offsets = [0, 64], sizes = [16, 32], strides = [1, 1]} : vector<16x128xf32> to vector<16x32xf32>
    %492 = math.tanh %491 : vector<16x32xf32>
    %493 = vector.extract_strided_slice %474 {offsets = [0, 96], sizes = [16, 32], strides = [1, 1]} : vector<16x128xf32> to vector<16x32xf32>
    %cst_175 = arith.constant 5.000000e-01 : f32
    %494 = vector.broadcast %cst_175 : f32 to vector<16x32xf32>
    %495 = arith.mulf %494, %493 : vector<16x32xf32>
    %496 = math.tanh %495 : vector<16x32xf32>
    %cst_176 = arith.constant 1.000000e+00 : f32
    %497 = vector.broadcast %cst_176 : f32 to vector<16x32xf32>
    %498 = arith.addf %497, %496 : vector<16x32xf32>
    %cst_177 = arith.constant 5.000000e-01 : f32
    %499 = vector.broadcast %cst_177 : f32 to vector<16x32xf32>
    %500 = arith.mulf %499, %498 : vector<16x32xf32>
    %501 = arith.mulf %490, %414 : vector<16x32xf32>
    %502 = arith.mulf %482, %492 : vector<16x32xf32>
    %503 = arith.addf %501, %502 : vector<16x32xf32>
    %504 = math.tanh %503 : vector<16x32xf32>
    %505 = arith.mulf %500, %504 : vector<16x32xf32>
    %506 = arith.truncf %505 : vector<16x32xf32> to vector<16x32xbf16>
    %507 = arith.index_cast %c5_i32 : i32 to index
    %c0_178 = arith.constant 0 : index
    %c0_179 = arith.constant 0 : index
    %508 = vector.load %arg8[%507, %c0_178, %c0_179] : memref<8x16x32xbf16, #tpu.memory_space<vmem>>, vector<1x16x32xbf16>
    %509 = vector.shape_cast %508 : vector<1x16x32xbf16> to vector<16x32xbf16>
    %510 = vector.shape_cast %506 : vector<16x32xbf16> to vector<1x16x32xbf16>
    tpu.vector_store %arg8[%507, %c0_178, %c0_179], %510 {strides = array<i32>} : memref<8x16x32xbf16, #tpu.memory_space<vmem>>, vector<1x16x32xbf16>,
    %c7_i32_180 = arith.constant 7 : i32
    %511 = arith.subi %c7_i32_180, %c5_i32 : i32
    %c16_i32_181 = arith.constant 16 : i32
    %512 = arith.muli %511, %c16_i32_181 : i32
    %513 = tpu.assume_multiple %512, 16 : i32
    %cst_182 = arith.constant dense<0.000000e+00> : vector<16x128xf32>
    %514 = tpu.matmul %462, %11, %cst_182 {dimension_numbers = #tpu.dot_dimension_numbers<[1], [0], [0], [1], [0, 0, 1, 1], [], []>} : vector<16x32xbf16>, vector<32x128xbf16>, vector<16x128xf32> -> vector<16x128xf32>
    %515 = arith.index_cast %513 : i32 to index
    %c0_183 = arith.constant 0 : index
    %516 = vector.load %arg11[%515, %c0_183] : memref<128x128xbf16, #tpu.memory_space<vmem>>, vector<16x128xbf16>
    %517 = arith.extf %516 : vector<16x128xbf16> to vector<16x128xf32>
    %518 = arith.addf %514, %517 : vector<16x128xf32>
    %519 = arith.addf %518, %17 : vector<16x128xf32>
    %520 = vector.extract_strided_slice %519 {offsets = [0, 0], sizes = [16, 32], strides = [1, 1]} : vector<16x128xf32> to vector<16x32xf32>
    %cst_184 = arith.constant 5.000000e-01 : f32
    %521 = vector.broadcast %cst_184 : f32 to vector<16x32xf32>
    %522 = arith.mulf %521, %520 : vector<16x32xf32>
    %523 = math.tanh %522 : vector<16x32xf32>
    %cst_185 = arith.constant 1.000000e+00 : f32
    %524 = vector.broadcast %cst_185 : f32 to vector<16x32xf32>
    %525 = arith.addf %524, %523 : vector<16x32xf32>
    %cst_186 = arith.constant 5.000000e-01 : f32
    %526 = vector.broadcast %cst_186 : f32 to vector<16x32xf32>
    %527 = arith.mulf %526, %525 : vector<16x32xf32>
    %528 = vector.extract_strided_slice %519 {offsets = [0, 32], sizes = [16, 32], strides = [1, 1]} : vector<16x128xf32> to vector<16x32xf32>
    %cst_187 = arith.constant 5.000000e-01 : f32
    %529 = vector.broadcast %cst_187 : f32 to vector<16x32xf32>
    %530 = arith.mulf %529, %528 : vector<16x32xf32>
    %531 = math.tanh %530 : vector<16x32xf32>
    %cst_188 = arith.constant 1.000000e+00 : f32
    %532 = vector.broadcast %cst_188 : f32 to vector<16x32xf32>
    %533 = arith.addf %532, %531 : vector<16x32xf32>
    %cst_189 = arith.constant 5.000000e-01 : f32
    %534 = vector.broadcast %cst_189 : f32 to vector<16x32xf32>
    %535 = arith.mulf %534, %533 : vector<16x32xf32>
    %536 = vector.extract_strided_slice %519 {offsets = [0, 64], sizes = [16, 32], strides = [1, 1]} : vector<16x128xf32> to vector<16x32xf32>
    %537 = math.tanh %536 : vector<16x32xf32>
    %538 = vector.extract_strided_slice %519 {offsets = [0, 96], sizes = [16, 32], strides = [1, 1]} : vector<16x128xf32> to vector<16x32xf32>
    %cst_190 = arith.constant 5.000000e-01 : f32
    %539 = vector.broadcast %cst_190 : f32 to vector<16x32xf32>
    %540 = arith.mulf %539, %538 : vector<16x32xf32>
    %541 = math.tanh %540 : vector<16x32xf32>
    %cst_191 = arith.constant 1.000000e+00 : f32
    %542 = vector.broadcast %cst_191 : f32 to vector<16x32xf32>
    %543 = arith.addf %542, %541 : vector<16x32xf32>
    %cst_192 = arith.constant 5.000000e-01 : f32
    %544 = vector.broadcast %cst_192 : f32 to vector<16x32xf32>
    %545 = arith.mulf %544, %543 : vector<16x32xf32>
    %546 = arith.mulf %535, %459 : vector<16x32xf32>
    %547 = arith.mulf %527, %537 : vector<16x32xf32>
    %548 = arith.addf %546, %547 : vector<16x32xf32>
    %549 = math.tanh %548 : vector<16x32xf32>
    %550 = arith.mulf %545, %549 : vector<16x32xf32>
    %551 = arith.truncf %550 : vector<16x32xf32> to vector<16x32xbf16>
    %552 = arith.index_cast %511 : i32 to index
    %c0_193 = arith.constant 0 : index
    %c0_194 = arith.constant 0 : index
    %553 = vector.load %arg9[%552, %c0_193, %c0_194] : memref<8x16x32xbf16, #tpu.memory_space<vmem>>, vector<1x16x32xbf16>
    %554 = vector.shape_cast %553 : vector<1x16x32xbf16> to vector<16x32xbf16>
    %555 = vector.shape_cast %551 : vector<16x32xbf16> to vector<1x16x32xbf16>
    tpu.vector_store %arg9[%552, %c0_193, %c0_194], %555 {strides = array<i32>} : memref<8x16x32xbf16, #tpu.memory_space<vmem>>, vector<1x16x32xbf16>,
    %c6_i32 = arith.constant 6 : i32
    %c16_i32_195 = arith.constant 16 : i32
    %556 = arith.muli %c6_i32, %c16_i32_195 : i32
    %557 = tpu.assume_multiple %556, 16 : i32
    %cst_196 = arith.constant dense<0.000000e+00> : vector<16x128xf32>
    %558 = tpu.matmul %506, %10, %cst_196 {dimension_numbers = #tpu.dot_dimension_numbers<[1], [0], [0], [1], [0, 0, 1, 1], [], []>} : vector<16x32xbf16>, vector<32x128xbf16>, vector<16x128xf32> -> vector<16x128xf32>
    %559 = arith.index_cast %557 : i32 to index
    %c0_197 = arith.constant 0 : index
    %560 = vector.load %arg10[%559, %c0_197] : memref<128x128xbf16, #tpu.memory_space<vmem>>, vector<16x128xbf16>
    %561 = arith.extf %560 : vector<16x128xbf16> to vector<16x128xf32>
    %562 = arith.addf %558, %561 : vector<16x128xf32>
    %563 = arith.addf %562, %14 : vector<16x128xf32>
    %564 = vector.extract_strided_slice %563 {offsets = [0, 0], sizes = [16, 32], strides = [1, 1]} : vector<16x128xf32> to vector<16x32xf32>
    %cst_198 = arith.constant 5.000000e-01 : f32
    %565 = vector.broadcast %cst_198 : f32 to vector<16x32xf32>
    %566 = arith.mulf %565, %564 : vector<16x32xf32>
    %567 = math.tanh %566 : vector<16x32xf32>
    %cst_199 = arith.constant 1.000000e+00 : f32
    %568 = vector.broadcast %cst_199 : f32 to vector<16x32xf32>
    %569 = arith.addf %568, %567 : vector<16x32xf32>
    %cst_200 = arith.constant 5.000000e-01 : f32
    %570 = vector.broadcast %cst_200 : f32 to vector<16x32xf32>
    %571 = arith.mulf %570, %569 : vector<16x32xf32>
    %572 = vector.extract_strided_slice %563 {offsets = [0, 32], sizes = [16, 32], strides = [1, 1]} : vector<16x128xf32> to vector<16x32xf32>
    %cst_201 = arith.constant 5.000000e-01 : f32
    %573 = vector.broadcast %cst_201 : f32 to vector<16x32xf32>
    %574 = arith.mulf %573, %572 : vector<16x32xf32>
    %575 = math.tanh %574 : vector<16x32xf32>
    %cst_202 = arith.constant 1.000000e+00 : f32
    %576 = vector.broadcast %cst_202 : f32 to vector<16x32xf32>
    %577 = arith.addf %576, %575 : vector<16x32xf32>
    %cst_203 = arith.constant 5.000000e-01 : f32
    %578 = vector.broadcast %cst_203 : f32 to vector<16x32xf32>
    %579 = arith.mulf %578, %577 : vector<16x32xf32>
    %580 = vector.extract_strided_slice %563 {offsets = [0, 64], sizes = [16, 32], strides = [1, 1]} : vector<16x128xf32> to vector<16x32xf32>
    %581 = math.tanh %580 : vector<16x32xf32>
    %582 = vector.extract_strided_slice %563 {offsets = [0, 96], sizes = [16, 32], strides = [1, 1]} : vector<16x128xf32> to vector<16x32xf32>
    %cst_204 = arith.constant 5.000000e-01 : f32
    %583 = vector.broadcast %cst_204 : f32 to vector<16x32xf32>
    %584 = arith.mulf %583, %582 : vector<16x32xf32>
    %585 = math.tanh %584 : vector<16x32xf32>
    %cst_205 = arith.constant 1.000000e+00 : f32
    %586 = vector.broadcast %cst_205 : f32 to vector<16x32xf32>
    %587 = arith.addf %586, %585 : vector<16x32xf32>
    %cst_206 = arith.constant 5.000000e-01 : f32
    %588 = vector.broadcast %cst_206 : f32 to vector<16x32xf32>
    %589 = arith.mulf %588, %587 : vector<16x32xf32>
    %590 = arith.mulf %579, %503 : vector<16x32xf32>
    %591 = arith.mulf %571, %581 : vector<16x32xf32>
    %592 = arith.addf %590, %591 : vector<16x32xf32>
    %593 = math.tanh %592 : vector<16x32xf32>
    %594 = arith.mulf %589, %593 : vector<16x32xf32>
    %595 = arith.truncf %594 : vector<16x32xf32> to vector<16x32xbf16>
    %596 = arith.index_cast %c6_i32 : i32 to index
    %c0_207 = arith.constant 0 : index
    %c0_208 = arith.constant 0 : index
    %597 = vector.load %arg8[%596, %c0_207, %c0_208] : memref<8x16x32xbf16, #tpu.memory_space<vmem>>, vector<1x16x32xbf16>
    %598 = vector.shape_cast %597 : vector<1x16x32xbf16> to vector<16x32xbf16>
    %599 = vector.shape_cast %595 : vector<16x32xbf16> to vector<1x16x32xbf16>
    tpu.vector_store %arg8[%596, %c0_207, %c0_208], %599 {strides = array<i32>} : memref<8x16x32xbf16, #tpu.memory_space<vmem>>, vector<1x16x32xbf16>,
    %c7_i32_209 = arith.constant 7 : i32
    %600 = arith.subi %c7_i32_209, %c6_i32 : i32
    %c16_i32_210 = arith.constant 16 : i32
    %601 = arith.muli %600, %c16_i32_210 : i32
    %602 = tpu.assume_multiple %601, 16 : i32
    %cst_211 = arith.constant dense<0.000000e+00> : vector<16x128xf32>
    %603 = tpu.matmul %551, %11, %cst_211 {dimension_numbers = #tpu.dot_dimension_numbers<[1], [0], [0], [1], [0, 0, 1, 1], [], []>} : vector<16x32xbf16>, vector<32x128xbf16>, vector<16x128xf32> -> vector<16x128xf32>
    %604 = arith.index_cast %602 : i32 to index
    %c0_212 = arith.constant 0 : index
    %605 = vector.load %arg11[%604, %c0_212] : memref<128x128xbf16, #tpu.memory_space<vmem>>, vector<16x128xbf16>
    %606 = arith.extf %605 : vector<16x128xbf16> to vector<16x128xf32>
    %607 = arith.addf %603, %606 : vector<16x128xf32>
    %608 = arith.addf %607, %17 : vector<16x128xf32>
    %609 = vector.extract_strided_slice %608 {offsets = [0, 0], sizes = [16, 32], strides = [1, 1]} : vector<16x128xf32> to vector<16x32xf32>
    %cst_213 = arith.constant 5.000000e-01 : f32
    %610 = vector.broadcast %cst_213 : f32 to vector<16x32xf32>
    %611 = arith.mulf %610, %609 : vector<16x32xf32>
    %612 = math.tanh %611 : vector<16x32xf32>
    %cst_214 = arith.constant 1.000000e+00 : f32
    %613 = vector.broadcast %cst_214 : f32 to vector<16x32xf32>
    %614 = arith.addf %613, %612 : vector<16x32xf32>
    %cst_215 = arith.constant 5.000000e-01 : f32
    %615 = vector.broadcast %cst_215 : f32 to vector<16x32xf32>
    %616 = arith.mulf %615, %614 : vector<16x32xf32>
    %617 = vector.extract_strided_slice %608 {offsets = [0, 32], sizes = [16, 32], strides = [1, 1]} : vector<16x128xf32> to vector<16x32xf32>
    %cst_216 = arith.constant 5.000000e-01 : f32
    %618 = vector.broadcast %cst_216 : f32 to vector<16x32xf32>
    %619 = arith.mulf %618, %617 : vector<16x32xf32>
    %620 = math.tanh %619 : vector<16x32xf32>
    %cst_217 = arith.constant 1.000000e+00 : f32
    %621 = vector.broadcast %cst_217 : f32 to vector<16x32xf32>
    %622 = arith.addf %621, %620 : vector<16x32xf32>
    %cst_218 = arith.constant 5.000000e-01 : f32
    %623 = vector.broadcast %cst_218 : f32 to vector<16x32xf32>
    %624 = arith.mulf %623, %622 : vector<16x32xf32>
    %625 = vector.extract_strided_slice %608 {offsets = [0, 64], sizes = [16, 32], strides = [1, 1]} : vector<16x128xf32> to vector<16x32xf32>
    %626 = math.tanh %625 : vector<16x32xf32>
    %627 = vector.extract_strided_slice %608 {offsets = [0, 96], sizes = [16, 32], strides = [1, 1]} : vector<16x128xf32> to vector<16x32xf32>
    %cst_219 = arith.constant 5.000000e-01 : f32
    %628 = vector.broadcast %cst_219 : f32 to vector<16x32xf32>
    %629 = arith.mulf %628, %627 : vector<16x32xf32>
    %630 = math.tanh %629 : vector<16x32xf32>
    %cst_220 = arith.constant 1.000000e+00 : f32
    %631 = vector.broadcast %cst_220 : f32 to vector<16x32xf32>
    %632 = arith.addf %631, %630 : vector<16x32xf32>
    %cst_221 = arith.constant 5.000000e-01 : f32
    %633 = vector.broadcast %cst_221 : f32 to vector<16x32xf32>
    %634 = arith.mulf %633, %632 : vector<16x32xf32>
    %635 = arith.mulf %624, %548 : vector<16x32xf32>
    %636 = arith.mulf %616, %626 : vector<16x32xf32>
    %637 = arith.addf %635, %636 : vector<16x32xf32>
    %638 = math.tanh %637 : vector<16x32xf32>
    %639 = arith.mulf %634, %638 : vector<16x32xf32>
    %640 = arith.truncf %639 : vector<16x32xf32> to vector<16x32xbf16>
    %641 = arith.index_cast %600 : i32 to index
    %c0_222 = arith.constant 0 : index
    %c0_223 = arith.constant 0 : index
    %642 = vector.load %arg9[%641, %c0_222, %c0_223] : memref<8x16x32xbf16, #tpu.memory_space<vmem>>, vector<1x16x32xbf16>
    %643 = vector.shape_cast %642 : vector<1x16x32xbf16> to vector<16x32xbf16>
    %644 = vector.shape_cast %640 : vector<16x32xbf16> to vector<1x16x32xbf16>
    tpu.vector_store %arg9[%641, %c0_222, %c0_223], %644 {strides = array<i32>} : memref<8x16x32xbf16, #tpu.memory_space<vmem>>, vector<1x16x32xbf16>,
    %c7_i32_224 = arith.constant 7 : i32
    %c16_i32_225 = arith.constant 16 : i32
    %645 = arith.muli %c7_i32_224, %c16_i32_225 : i32
    %646 = tpu.assume_multiple %645, 16 : i32
    %cst_226 = arith.constant dense<0.000000e+00> : vector<16x128xf32>
    %647 = tpu.matmul %595, %10, %cst_226 {dimension_numbers = #tpu.dot_dimension_numbers<[1], [0], [0], [1], [0, 0, 1, 1], [], []>} : vector<16x32xbf16>, vector<32x128xbf16>, vector<16x128xf32> -> vector<16x128xf32>
    %648 = arith.index_cast %646 : i32 to index
    %c0_227 = arith.constant 0 : index
    %649 = vector.load %arg10[%648, %c0_227] : memref<128x128xbf16, #tpu.memory_space<vmem>>, vector<16x128xbf16>
    %650 = arith.extf %649 : vector<16x128xbf16> to vector<16x128xf32>
    %651 = arith.addf %647, %650 : vector<16x128xf32>
    %652 = arith.addf %651, %14 : vector<16x128xf32>
    %653 = vector.extract_strided_slice %652 {offsets = [0, 0], sizes = [16, 32], strides = [1, 1]} : vector<16x128xf32> to vector<16x32xf32>
    %cst_228 = arith.constant 5.000000e-01 : f32
    %654 = vector.broadcast %cst_228 : f32 to vector<16x32xf32>
    %655 = arith.mulf %654, %653 : vector<16x32xf32>
    %656 = math.tanh %655 : vector<16x32xf32>
    %cst_229 = arith.constant 1.000000e+00 : f32
    %657 = vector.broadcast %cst_229 : f32 to vector<16x32xf32>
    %658 = arith.addf %657, %656 : vector<16x32xf32>
    %cst_230 = arith.constant 5.000000e-01 : f32
    %659 = vector.broadcast %cst_230 : f32 to vector<16x32xf32>
    %660 = arith.mulf %659, %658 : vector<16x32xf32>
    %661 = vector.extract_strided_slice %652 {offsets = [0, 32], sizes = [16, 32], strides = [1, 1]} : vector<16x128xf32> to vector<16x32xf32>
    %cst_231 = arith.constant 5.000000e-01 : f32
    %662 = vector.broadcast %cst_231 : f32 to vector<16x32xf32>
    %663 = arith.mulf %662, %661 : vector<16x32xf32>
    %664 = math.tanh %663 : vector<16x32xf32>
    %cst_232 = arith.constant 1.000000e+00 : f32
    %665 = vector.broadcast %cst_232 : f32 to vector<16x32xf32>
    %666 = arith.addf %665, %664 : vector<16x32xf32>
    %cst_233 = arith.constant 5.000000e-01 : f32
    %667 = vector.broadcast %cst_233 : f32 to vector<16x32xf32>
    %668 = arith.mulf %667, %666 : vector<16x32xf32>
    %669 = vector.extract_strided_slice %652 {offsets = [0, 64], sizes = [16, 32], strides = [1, 1]} : vector<16x128xf32> to vector<16x32xf32>
    %670 = math.tanh %669 : vector<16x32xf32>
    %671 = vector.extract_strided_slice %652 {offsets = [0, 96], sizes = [16, 32], strides = [1, 1]} : vector<16x128xf32> to vector<16x32xf32>
    %cst_234 = arith.constant 5.000000e-01 : f32
    %672 = vector.broadcast %cst_234 : f32 to vector<16x32xf32>
    %673 = arith.mulf %672, %671 : vector<16x32xf32>
    %674 = math.tanh %673 : vector<16x32xf32>
    %cst_235 = arith.constant 1.000000e+00 : f32
    %675 = vector.broadcast %cst_235 : f32 to vector<16x32xf32>
    %676 = arith.addf %675, %674 : vector<16x32xf32>
    %cst_236 = arith.constant 5.000000e-01 : f32
    %677 = vector.broadcast %cst_236 : f32 to vector<16x32xf32>
    %678 = arith.mulf %677, %676 : vector<16x32xf32>
    %679 = arith.mulf %668, %592 : vector<16x32xf32>
    %680 = arith.mulf %660, %670 : vector<16x32xf32>
    %681 = arith.addf %679, %680 : vector<16x32xf32>
    %682 = math.tanh %681 : vector<16x32xf32>
    %683 = arith.mulf %678, %682 : vector<16x32xf32>
    %684 = arith.truncf %683 : vector<16x32xf32> to vector<16x32xbf16>
    %685 = arith.index_cast %c7_i32_224 : i32 to index
    %c0_237 = arith.constant 0 : index
    %c0_238 = arith.constant 0 : index
    %686 = vector.load %arg8[%685, %c0_237, %c0_238] : memref<8x16x32xbf16, #tpu.memory_space<vmem>>, vector<1x16x32xbf16>
    %687 = vector.shape_cast %686 : vector<1x16x32xbf16> to vector<16x32xbf16>
    %688 = vector.shape_cast %684 : vector<16x32xbf16> to vector<1x16x32xbf16>
    tpu.vector_store %arg8[%685, %c0_237, %c0_238], %688 {strides = array<i32>} : memref<8x16x32xbf16, #tpu.memory_space<vmem>>, vector<1x16x32xbf16>,
    %c7_i32_239 = arith.constant 7 : i32
    %689 = arith.subi %c7_i32_239, %c7_i32_224 : i32
    %c16_i32_240 = arith.constant 16 : i32
    %690 = arith.muli %689, %c16_i32_240 : i32
    %691 = tpu.assume_multiple %690, 16 : i32
    %cst_241 = arith.constant dense<0.000000e+00> : vector<16x128xf32>
    %692 = tpu.matmul %640, %11, %cst_241 {dimension_numbers = #tpu.dot_dimension_numbers<[1], [0], [0], [1], [0, 0, 1, 1], [], []>} : vector<16x32xbf16>, vector<32x128xbf16>, vector<16x128xf32> -> vector<16x128xf32>
    %693 = arith.index_cast %691 : i32 to index
    %c0_242 = arith.constant 0 : index
    %694 = vector.load %arg11[%693, %c0_242] : memref<128x128xbf16, #tpu.memory_space<vmem>>, vector<16x128xbf16>
    %695 = arith.extf %694 : vector<16x128xbf16> to vector<16x128xf32>
    %696 = arith.addf %692, %695 : vector<16x128xf32>
    %697 = arith.addf %696, %17 : vector<16x128xf32>
    %698 = vector.extract_strided_slice %697 {offsets = [0, 0], sizes = [16, 32], strides = [1, 1]} : vector<16x128xf32> to vector<16x32xf32>
    %cst_243 = arith.constant 5.000000e-01 : f32
    %699 = vector.broadcast %cst_243 : f32 to vector<16x32xf32>
    %700 = arith.mulf %699, %698 : vector<16x32xf32>
    %701 = math.tanh %700 : vector<16x32xf32>
    %cst_244 = arith.constant 1.000000e+00 : f32
    %702 = vector.broadcast %cst_244 : f32 to vector<16x32xf32>
    %703 = arith.addf %702, %701 : vector<16x32xf32>
    %cst_245 = arith.constant 5.000000e-01 : f32
    %704 = vector.broadcast %cst_245 : f32 to vector<16x32xf32>
    %705 = arith.mulf %704, %703 : vector<16x32xf32>
    %706 = vector.extract_strided_slice %697 {offsets = [0, 32], sizes = [16, 32], strides = [1, 1]} : vector<16x128xf32> to vector<16x32xf32>
    %cst_246 = arith.constant 5.000000e-01 : f32
    %707 = vector.broadcast %cst_246 : f32 to vector<16x32xf32>
    %708 = arith.mulf %707, %706 : vector<16x32xf32>
    %709 = math.tanh %708 : vector<16x32xf32>
    %cst_247 = arith.constant 1.000000e+00 : f32
    %710 = vector.broadcast %cst_247 : f32 to vector<16x32xf32>
    %711 = arith.addf %710, %709 : vector<16x32xf32>
    %cst_248 = arith.constant 5.000000e-01 : f32
    %712 = vector.broadcast %cst_248 : f32 to vector<16x32xf32>
    %713 = arith.mulf %712, %711 : vector<16x32xf32>
    %714 = vector.extract_strided_slice %697 {offsets = [0, 64], sizes = [16, 32], strides = [1, 1]} : vector<16x128xf32> to vector<16x32xf32>
    %715 = math.tanh %714 : vector<16x32xf32>
    %716 = vector.extract_strided_slice %697 {offsets = [0, 96], sizes = [16, 32], strides = [1, 1]} : vector<16x128xf32> to vector<16x32xf32>
    %cst_249 = arith.constant 5.000000e-01 : f32
    %717 = vector.broadcast %cst_249 : f32 to vector<16x32xf32>
    %718 = arith.mulf %717, %716 : vector<16x32xf32>
    %719 = math.tanh %718 : vector<16x32xf32>
    %cst_250 = arith.constant 1.000000e+00 : f32
    %720 = vector.broadcast %cst_250 : f32 to vector<16x32xf32>
    %721 = arith.addf %720, %719 : vector<16x32xf32>
    %cst_251 = arith.constant 5.000000e-01 : f32
    %722 = vector.broadcast %cst_251 : f32 to vector<16x32xf32>
    %723 = arith.mulf %722, %721 : vector<16x32xf32>
    %724 = arith.mulf %713, %637 : vector<16x32xf32>
    %725 = arith.mulf %705, %715 : vector<16x32xf32>
    %726 = arith.addf %724, %725 : vector<16x32xf32>
    %727 = math.tanh %726 : vector<16x32xf32>
    %728 = arith.mulf %723, %727 : vector<16x32xf32>
    %729 = arith.truncf %728 : vector<16x32xf32> to vector<16x32xbf16>
    %730 = arith.index_cast %689 : i32 to index
    %c0_252 = arith.constant 0 : index
    %c0_253 = arith.constant 0 : index
    %731 = vector.load %arg9[%730, %c0_252, %c0_253] : memref<8x16x32xbf16, #tpu.memory_space<vmem>>, vector<1x16x32xbf16>
    %732 = vector.shape_cast %731 : vector<1x16x32xbf16> to vector<16x32xbf16>
    %733 = vector.shape_cast %729 : vector<16x32xbf16> to vector<1x16x32xbf16>
    tpu.vector_store %arg9[%730, %c0_252, %c0_253], %733 {strides = array<i32>} : memref<8x16x32xbf16, #tpu.memory_space<vmem>>, vector<1x16x32xbf16>,
    %c8_i32 = arith.constant 8 : i32
    return
  }
  func.func @transform_0(%arg0: i32) -> (i32, i32, i32) {
    %c0_i32 = arith.constant 0 : i32
    %c0_i32_0 = arith.constant 0 : i32
    %c0_i32_1 = arith.constant 0 : i32
    return %c0_i32, %arg0, %c0_i32_0 : i32, i32, i32
  }
  func.func @transform_1(%arg0: i32) -> (i32, i32) {
    %c0_i32 = arith.constant 0 : i32
    %c0_i32_0 = arith.constant 0 : i32
    %c0_i32_1 = arith.constant 0 : i32
    return %c0_i32, %c0_i32_0 : i32, i32
  }
  func.func @transform_2(%arg0: i32) -> (i32, i32) {
    %c0_i32 = arith.constant 0 : i32
    %c0_i32_0 = arith.constant 0 : i32
    %c0_i32_1 = arith.constant 0 : i32
    return %c0_i32, %c0_i32_0 : i32, i32
  }
  func.func @transform_3(%arg0: i32) -> (i32, i32) {
    %c0_i32 = arith.constant 0 : i32
    %c0_i32_0 = arith.constant 0 : i32
    %c0_i32_1 = arith.constant 0 : i32
    return %c0_i32, %c0_i32_0 : i32, i32
  }
  func.func @transform_4(%arg0: i32) -> (i32, i32) {
    %c0_i32 = arith.constant 0 : i32
    %c0_i32_0 = arith.constant 0 : i32
    %c0_i32_1 = arith.constant 0 : i32
    return %c0_i32, %c0_i32_0 : i32, i32
  }
  func.func @transform_5(%arg0: i32) -> (i32, i32) {
    %c0_i32 = arith.constant 0 : i32
    %c0_i32_0 = arith.constant 0 : i32
    %c0_i32_1 = arith.constant 0 : i32
    return %c0_i32, %c0_i32_0 : i32, i32
  }
  func.func @transform_6(%arg0: i32) -> (i32, i32) {
    %c0_i32 = arith.constant 0 : i32
    %c0_i32_0 = arith.constant 0 : i32
    %c0_i32_1 = arith.constant 0 : i32
    return %c0_i32, %c0_i32_0 : i32, i32
  }
  func.func @transform_7(%arg0: i32) -> (i32, i32, i32) {
    %c0_i32 = arith.constant 0 : i32
    %c0_i32_0 = arith.constant 0 : i32
    %c0_i32_1 = arith.constant 0 : i32
    return %c0_i32, %arg0, %c0_i32_0 : i32, i32, i32
  }
  func.func @transform_8(%arg0: i32) -> (i32, i32, i32) {
    %c0_i32 = arith.constant 0 : i32
    %c0_i32_0 = arith.constant 0 : i32
    %c0_i32_1 = arith.constant 0 : i32
    return %c0_i32, %arg0, %c0_i32_0 : i32, i32, i32
  }
}

</mosaic_0001>

<llo_original>
// kernel: seq_model_forward.2
$region0: #{seq_model_forward.2}
  #allocation0 [shape = 'u32[]', space=smem, size = 0x4, offset = 0x4, fixed_abs, tag = 'smem constant byte address 0x4 - core index']
  #allocation1 [shape = 'u32[144,128]{1,0:T(1,128)}', space=vmem, size = 0x12000, scoped, tag = 'internal scratch']
  #allocation2 [shape = 'bf16[128,128]{1,0:T(8,128)(2,1)}', space=vmem, size = 0x8000, scoped, tag = 'scratch operand']
  #allocation3 [shape = 'bf16[128,128]{1,0:T(8,128)(2,1)}', space=vmem, size = 0x8000, scoped, tag = 'scratch operand']
  %s0 = inlined_call_operand.vmem [shape: bf16[8,16,7], index: 0, kind: input, shape index: {}]
  %s1 = inlined_call_operand.vmem [shape: bf16[7,128], index: 1, kind: input, shape index: {}]
  %s2 = inlined_call_operand.vmem [shape: bf16[32,128], index: 2, kind: input, shape index: {}]
  %s3 = inlined_call_operand.vmem [shape: f32[1,128], index: 3, kind: input, shape index: {}]
  %s4 = inlined_call_operand.vmem [shape: bf16[7,128], index: 4, kind: input, shape index: {}]
  %s5 = inlined_call_operand.vmem [shape: bf16[32,128], index: 5, kind: input, shape index: {}]
  %s6 = inlined_call_operand.vmem [shape: f32[1,128], index: 6, kind: input, shape index: {}]
  %s7 = inlined_call_operand.vmem [shape: bf16[8,16,32], index: 7, kind: output, shape index: {0}]
  %s8 = inlined_call_operand.vmem [shape: bf16[8,16,32], index: 8, kind: output, shape index: {1}]
  %9 = xla_tuple %s7, %s8
  %s10 = sld [smem:[#allocation0]]
  $region46: #{seq_model_forward.2} parent=0
    _
  %s12 = ssub.s32 1, %s10
  %s13 = scalar_select 0, %s12, %s10
  // Predicated region
  $region2: #{seq_model_forward.2} parent=0 // pred_check
    _
  $region3: #{seq_model_forward.2} parent=0 // pred_check_branch
    %15 = sbr.rel (0) target = $region5
  $region4: #{seq_model_forward.2} parent=0 // pred_region
    _
  $region5: #{seq_model_forward.2} parent=0 // pred_fallthru
    _
  // Predicated region
  $region6: #{seq_model_forward.2} parent=0 // pred_check
    _
  $region7: #{seq_model_forward.2} parent=0 // pred_check_branch
    %17 = sbr.rel (0) target = $region9
  $region8: #{seq_model_forward.2} parent=0 // pred_region
    _
  $region9: #{seq_model_forward.2} parent=0 // pred_fallthru
    _
  // Predicated region
  $region10: #{seq_model_forward.2} parent=0 // pred_check
    _
  $region11: #{seq_model_forward.2} parent=0 // pred_check_branch
    %19 = sbr.rel (0) target = $region13
  $region12: #{seq_model_forward.2} parent=0 // pred_region
    _
  $region13: #{seq_model_forward.2} parent=0 // pred_fallthru
    _
  // Predicated region
  $region14: #{seq_model_forward.2} parent=0 // pred_check
    _
  $region15: #{seq_model_forward.2} parent=0 // pred_check_branch
    %21 = sbr.rel (0) target = $region17
  $region16: #{seq_model_forward.2} parent=0 // pred_region
    _
  $region17: #{seq_model_forward.2} parent=0 // pred_fallthru
    _
  // Predicated region
  $region18: #{seq_model_forward.2} parent=0 // pred_check
    _
  $region19: #{seq_model_forward.2} parent=0 // pred_check_branch
    %23 = sbr.rel (0) target = $region21
  $region20: #{seq_model_forward.2} parent=0 // pred_region
    _
  $region21: #{seq_model_forward.2} parent=0 // pred_fallthru
    _
  // Predicated region
  $region22: #{seq_model_forward.2} parent=0 // pred_check
    _
  $region23: #{seq_model_forward.2} parent=0 // pred_check_branch
    %25 = sbr.rel (0) target = $region25
  $region24: #{seq_model_forward.2} parent=0 // pred_region
    _
  $region25: #{seq_model_forward.2} parent=0 // pred_fallthru
    _
  // Predicated region
  $region26: #{seq_model_forward.2} parent=0 // pred_check
    _
  $region27: #{seq_model_forward.2} parent=0 // pred_check_branch
    %27 = sbr.rel (0) target = $region29
  $region28: #{seq_model_forward.2} parent=0 // pred_region
    _
  $region29: #{seq_model_forward.2} parent=0 // pred_fallthru
    _
  %v29 = vld [vmem:[%s0] sm:$0xf]
  %v30 = vld [vmem:[%s0 + $0x4] sm:$0xf]
  %v31 = vld [vmem:[%s0 + $0x8] sm:$0xf]
  %v32 = vld [vmem:[%s0 + $0xc] sm:$0xf]
  %v33 = vld [vmem:[%s0 + $0x10] sm:$0xf]
  %v34 = vld [vmem:[%s0 + $0x14] sm:$0xf]
  %v35 = vld [vmem:[%s0 + $0x18] sm:$0xf]
  %v36 = vld [vmem:[%s0 + $0x1c] sm:$0xf]
  %v37 = vld [vmem:[%s0 + $0x20] sm:$0xf]
  %v38 = vld [vmem:[%s0 + $0x24] sm:$0xf]
  %v39 = vld [vmem:[%s0 + $0x28] sm:$0xf]
  %v40 = vld [vmem:[%s0 + $0x2c] sm:$0xf]
  %v41 = vld [vmem:[%s0 + $0x30] sm:$0xf]
  %v42 = vld [vmem:[%s0 + $0x34] sm:$0xf]
  %v43 = vld [vmem:[%s0 + $0x38] sm:$0xf]
  %v44 = vld [vmem:[%s0 + $0x3c] sm:$0xf]
  %v45 = vld [vmem:[%s1] sm:$0xf]
  %v62 = vunpack.c.l.b16 %v29
  %v63 = vunpack.c.l.b16 %v30
  %v64 = vunpack.c.l.b16 %v31
  %v65 = vunpack.c.l.b16 %v32
  %v66 = vunpack.c.l.b16 %v33
  %v67 = vunpack.c.l.b16 %v34
  %v68 = vunpack.c.l.b16 %v35
  %v69 = vunpack.c.l.b16 %v36
  %v70 = vunpack.c.l.b16 %v37
  %v71 = vunpack.c.l.b16 %v38
  %v72 = vunpack.c.l.b16 %v39
  %v73 = vunpack.c.l.b16 %v40
  %v74 = vunpack.c.l.b16 %v41
  %v75 = vunpack.c.l.b16 %v42
  %v76 = vunpack.c.l.b16 %v43
  %v77 = vunpack.c.l.b16 %v44
  %v78 = vpack.c.b16 %v63, %v62
  %v79 = vpack.c.b16 %v65, %v64
  %v80 = vpack.c.b16 %v67, %v66
  %v81 = vpack.c.b16 %v69, %v68
  %v82 = vpack.c.b16 %v71, %v70
  %v83 = vpack.c.b16 %v73, %v72
  %v84 = vpack.c.b16 %v75, %v74
  %v85 = vpack.c.b16 %v77, %v76
  %vm86 = vcmask 56320
  %v88 = vsel %vm86, %v78, 0
  %v91 = vsel %vm86, %v79, 0
  %v94 = vsel %vm86, %v80, 0
  %v97 = vsel %vm86, %v81, 0
  %v100 = vsel %vm86, %v82, 0
  %v103 = vsel %vm86, %v83, 0
  %v106 = vsel %vm86, %v84, 0
  %v109 = vsel %vm86, %v85, 0
  %vm111 = vcmask 1042432
  %vm112 = vcmask 1043456
  %v113 = vsel %vm111, 4294967295, 65535
  %v114 = vsel %vm112, %v113, 0
  %v116 = vand.u32 %v45, %v114
  %118 = vmatprep.subr.bf16.mxu0 0
  %119 = vmatpush1.bf16.msra.mxu0 0
  %120 = vmatprep.subr.bf16.mxu0 0
  %121 = vmatpush1.bf16.msra.mxu0 0
  %122 = vmatprep.subr.bf16.mxu0 0
  %123 = vmatpush1.bf16.msra.mxu0 0
  %124 = vmatprep.subr.bf16.mxu0 0
  %125 = vmatpush1.bf16.msra.mxu0 0
  %126 = vmatprep.subr.bf16.mxu0 0
  %127 = vmatpush1.bf16.msra.mxu0 0
  %128 = vmatprep.subr.bf16.mxu0 0
  %129 = vmatpush1.bf16.msra.mxu0 0
  %130 = vmatprep.subr.bf16.mxu0 0
  %131 = vmatpush1.bf16.msra.mxu0 0
  %132 = vmatprep.subr.bf16.mxu0 0
  %133 = vmatpush1.bf16.msra.mxu0 %v116
  %134 = vmatprep.subr.bf16.mxu0 0
  %135 = vmatpush2.bf16.msra.mxu0 0
  %136 = vmatprep.subr.bf16.mxu0 0
  %137 = vmatpush2.bf16.msra.mxu0 0
  %138 = vmatprep.subr.bf16.mxu0 0
  %139 = vmatpush2.bf16.msra.mxu0 0
  %140 = vmatprep.subr.bf16.mxu0 0
  %141 = vmatpush2.bf16.msra.mxu0 0
  %142 = vmatprep.subr.bf16.mxu0 0
  %143 = vmatpush2.bf16.msra.mxu0 0
  %144 = vmatprep.subr.bf16.mxu0 0
  %145 = vmatpush2.bf16.msra.mxu0 0
  %146 = vmatprep.subr.bf16.mxu0 0
  %147 = vmatpush2.bf16.msra.mxu0 0
  %148 = vmatprep.subr.bf16.mxu0 0
  %149 = vmatpush2.bf16.msra.mxu0 0
  %150 = vmatprep.mubr.bf16.mxu0 0
  %151 = vmatmul.mubr.bf16.gmra.mxu0 %v88
  %v152 = vpop.f32.mrf.mxu0
  %v153 = vadd.f32 0.0, %v152
  %v154 = vpop.f32.mrf.mxu0
  %v155 = vpop.f32.mrf.mxu0
  %v156 = vadd.f32 0.0, %v155
  %v157 = vpop.f32.mrf.mxu0
  %158 = vmatprep.mubr.bf16.mxu0 0
  %159 = vmatmul.mubr.bf16.gmra.mxu0 %v91
  %v160 = vpop.f32.mrf.mxu0
  %v161 = vadd.f32 0.0, %v160
  %v162 = vpop.f32.mrf.mxu0
  %v163 = vpop.f32.mrf.mxu0
  %v164 = vadd.f32 0.0, %v163
  %v165 = vpop.f32.mrf.mxu0
  %166 = vmatprep.mubr.bf16.mxu0 0
  %167 = vmatmul.mubr.bf16.gmra.mxu0 %v94
  %v168 = vpop.f32.mrf.mxu0
  %v169 = vadd.f32 0.0, %v168
  %v170 = vpop.f32.mrf.mxu0
  %v171 = vpop.f32.mrf.mxu0
  %v172 = vadd.f32 0.0, %v171
  %v173 = vpop.f32.mrf.mxu0
  %174 = vmatprep.mubr.bf16.mxu0 0
  %175 = vmatmul.mubr.bf16.gmra.mxu0 %v97
  %v176 = vpop.f32.mrf.mxu0
  %v177 = vadd.f32 0.0, %v176
  %v178 = vpop.f32.mrf.mxu0
  %v179 = vpop.f32.mrf.mxu0
  %v180 = vadd.f32 0.0, %v179
  %v181 = vpop.f32.mrf.mxu0
  %182 = vmatprep.mubr.bf16.mxu0 0
  %183 = vmatmul.mubr.bf16.gmra.mxu0 %v100
  %v184 = vpop.f32.mrf.mxu0
  %v185 = vadd.f32 0.0, %v184
  %v186 = vpop.f32.mrf.mxu0
  %v187 = vpop.f32.mrf.mxu0
  %v188 = vadd.f32 0.0, %v187
  %v189 = vpop.f32.mrf.mxu0
  %190 = vmatprep.mubr.bf16.mxu0 0
  %191 = vmatmul.mubr.bf16.gmra.mxu0 %v103
  %v192 = vpop.f32.mrf.mxu0
  %v193 = vadd.f32 0.0, %v192
  %v194 = vpop.f32.mrf.mxu0
  %v195 = vpop.f32.mrf.mxu0
  %v196 = vadd.f32 0.0, %v195
  %v197 = vpop.f32.mrf.mxu0
  %198 = vmatprep.mubr.bf16.mxu0 0
  %199 = vmatmul.mubr.bf16.gmra.mxu0 %v106
  %v200 = vpop.f32.mrf.mxu0
  %v201 = vadd.f32 0.0, %v200
  %v202 = vpop.f32.mrf.mxu0
  %v203 = vpop.f32.mrf.mxu0
  %v204 = vadd.f32 0.0, %v203
  %v205 = vpop.f32.mrf.mxu0
  %206 = vmatprep.mubr.bf16.mxu0 0
  %207 = vmatmul.mubr.bf16.gmra.mxu0 %v109
  %v208 = vpop.f32.mrf.mxu0
  %v209 = vadd.f32 0.0, %v208
  %v210 = vpop.f32.mrf.mxu0
  %v211 = vpop.f32.mrf.mxu0
  %v212 = vadd.f32 0.0, %v211
  %v213 = vpop.f32.mrf.mxu0
  %214 = vdwg.mxu0
  %v215 = vpack.c.bf16 %v156, %v153
  %v216 = vpack.c.bf16 %v164, %v161
  %v217 = vpack.c.bf16 %v172, %v169
  %v218 = vpack.c.bf16 %v180, %v177
  %v219 = vpack.c.bf16 %v188, %v185
  %v220 = vpack.c.bf16 %v196, %v193
  %v221 = vpack.c.bf16 %v204, %v201
  %v222 = vpack.c.bf16 %v212, %v209
  %v231 = vunpack.c.l.b16 %v215
  %v232 = vunpack.c.h.b16 %v215
  %v233 = vunpack.c.l.b16 %v216
  %v234 = vunpack.c.h.b16 %v216
  %v235 = vunpack.c.l.b16 %v217
  %v236 = vunpack.c.h.b16 %v217
  %v237 = vunpack.c.l.b16 %v218
  %v238 = vunpack.c.h.b16 %v218
  %v239 = vunpack.c.l.b16 %v219
  %v240 = vunpack.c.h.b16 %v219
  %v241 = vunpack.c.l.b16 %v220
  %v242 = vunpack.c.h.b16 %v220
  %v243 = vunpack.c.l.b16 %v221
  %v244 = vunpack.c.h.b16 %v221
  %v245 = vunpack.c.l.b16 %v222
  %v246 = vunpack.c.h.b16 %v222
  %v247 = vpack.c.b16 %v231, %v231
  %v248 = vpack.c.b16 %v232, %v232
  %v249 = vpack.c.b16 %v233, %v233
  %v250 = vpack.c.b16 %v234, %v234
  %v251 = vpack.c.b16 %v235, %v235
  %v252 = vpack.c.b16 %v236, %v236
  %v253 = vpack.c.b16 %v237, %v237
  %v254 = vpack.c.b16 %v238, %v238
  %v255 = vpack.c.b16 %v239, %v239
  %v256 = vpack.c.b16 %v240, %v240
  %v257 = vpack.c.b16 %v241, %v241
  %v258 = vpack.c.b16 %v242, %v242
  %v259 = vpack.c.b16 %v243, %v243
  %v260 = vpack.c.b16 %v244, %v244
  %v261 = vpack.c.b16 %v245, %v245
  %v262 = vpack.c.b16 %v246, %v246
  %279 = vst [vmem:[#allocation2] sm:$0xf] %v247
  %280 = vst [vmem:[#allocation2 + $0x4] sm:$0xf] %v248
  %281 = vst [vmem:[#allocation2 + $0x8] sm:$0xf] %v249
  %282 = vst [vmem:[#allocation2 + $0xc] sm:$0xf] %v250
  %283 = vst [vmem:[#allocation2 + $0x10] sm:$0xf] %v251
  %284 = vst [vmem:[#allocation2 + $0x14] sm:$0xf] %v252
  %285 = vst [vmem:[#allocation2 + $0x18] sm:$0xf] %v253
  %286 = vst [vmem:[#allocation2 + $0x1c] sm:$0xf] %v254
  %287 = vst [vmem:[#allocation2 + $0x20] sm:$0xf] %v255
  %288 = vst [vmem:[#allocation2 + $0x24] sm:$0xf] %v256
  %289 = vst [vmem:[#allocation2 + $0x28] sm:$0xf] %v257
  %290 = vst [vmem:[#allocation2 + $0x2c] sm:$0xf] %v258
  %291 = vst [vmem:[#allocation2 + $0x30] sm:$0xf] %v259
  %292 = vst [vmem:[#allocation2 + $0x34] sm:$0xf] %v260
  %293 = vst [vmem:[#allocation2 + $0x38] sm:$0xf] %v261
  %294 = vst [vmem:[#allocation2 + $0x3c] sm:$0xf] %v262
  %v295 = vld [vmem:[%s4] sm:$0xf]
  %v297 = vand.u32 %v295, %v114
  %299 = vmatprep.subr.bf16.mxu0 0
  %300 = vmatpush1.bf16.msra.mxu0 0
  %301 = vmatprep.subr.bf16.mxu0 0
  %302 = vmatpush1.bf16.msra.mxu0 0
  %303 = vmatprep.subr.bf16.mxu0 0
  %304 = vmatpush1.bf16.msra.mxu0 0
  %305 = vmatprep.subr.bf16.mxu0 0
  %306 = vmatpush1.bf16.msra.mxu0 0
  %307 = vmatprep.subr.bf16.mxu0 0
  %308 = vmatpush1.bf16.msra.mxu0 0
  %309 = vmatprep.subr.bf16.mxu0 0
  %310 = vmatpush1.bf16.msra.mxu0 0
  %311 = vmatprep.subr.bf16.mxu0 0
  %312 = vmatpush1.bf16.msra.mxu0 0
  %313 = vmatprep.subr.bf16.mxu0 0
  %314 = vmatpush1.bf16.msra.mxu0 %v297
  %315 = vmatprep.subr.bf16.mxu0 0
  %316 = vmatpush2.bf16.msra.mxu0 0
  %317 = vmatprep.subr.bf16.mxu0 0
  %318 = vmatpush2.bf16.msra.mxu0 0
  %319 = vmatprep.subr.bf16.mxu0 0
  %320 = vmatpush2.bf16.msra.mxu0 0
  %321 = vmatprep.subr.bf16.mxu0 0
  %322 = vmatpush2.bf16.msra.mxu0 0
  %323 = vmatprep.subr.bf16.mxu0 0
  %324 = vmatpush2.bf16.msra.mxu0 0
  %325 = vmatprep.subr.bf16.mxu0 0
  %326 = vmatpush2.bf16.msra.mxu0 0
  %327 = vmatprep.subr.bf16.mxu0 0
  %328 = vmatpush2.bf16.msra.mxu0 0
  %329 = vmatprep.subr.bf16.mxu0 0
  %330 = vmatpush2.bf16.msra.mxu0 0
  %331 = vmatprep.mubr.bf16.mxu0 0
  %332 = vmatmul.mubr.bf16.gmra.mxu0 %v88
  %v333 = vpop.f32.mrf.mxu0
  %v334 = vadd.f32 0.0, %v333
  %v335 = vpop.f32.mrf.mxu0
  %v336 = vpop.f32.mrf.mxu0
  %v337 = vadd.f32 0.0, %v336
  %v338 = vpop.f32.mrf.mxu0
  %339 = vmatprep.mubr.bf16.mxu0 0
  %340 = vmatmul.mubr.bf16.gmra.mxu0 %v91
  %v341 = vpop.f32.mrf.mxu0
  %v342 = vadd.f32 0.0, %v341
  %v343 = vpop.f32.mrf.mxu0
  %v344 = vpop.f32.mrf.mxu0
  %v345 = vadd.f32 0.0, %v344
  %v346 = vpop.f32.mrf.mxu0
  %347 = vmatprep.mubr.bf16.mxu0 0
  %348 = vmatmul.mubr.bf16.gmra.mxu0 %v94
  %v349 = vpop.f32.mrf.mxu0
  %v350 = vadd.f32 0.0, %v349
  %v351 = vpop.f32.mrf.mxu0
  %v352 = vpop.f32.mrf.mxu0
  %v353 = vadd.f32 0.0, %v352
  %v354 = vpop.f32.mrf.mxu0
  %355 = vmatprep.mubr.bf16.mxu0 0
  %356 = vmatmul.mubr.bf16.gmra.mxu0 %v97
  %v357 = vpop.f32.mrf.mxu0
  %v358 = vadd.f32 0.0, %v357
  %v359 = vpop.f32.mrf.mxu0
  %v360 = vpop.f32.mrf.mxu0
  %v361 = vadd.f32 0.0, %v360
  %v362 = vpop.f32.mrf.mxu0
  %363 = vmatprep.mubr.bf16.mxu0 0
  %364 = vmatmul.mubr.bf16.gmra.mxu0 %v100
  %v365 = vpop.f32.mrf.mxu0
  %v366 = vadd.f32 0.0, %v365
  %v367 = vpop.f32.mrf.mxu0
  %v368 = vpop.f32.mrf.mxu0
  %v369 = vadd.f32 0.0, %v368
  %v370 = vpop.f32.mrf.mxu0
  %371 = vmatprep.mubr.bf16.mxu0 0
  %372 = vmatmul.mubr.bf16.gmra.mxu0 %v103
  %v373 = vpop.f32.mrf.mxu0
  %v374 = vadd.f32 0.0, %v373
  %v375 = vpop.f32.mrf.mxu0
  %v376 = vpop.f32.mrf.mxu0
  %v377 = vadd.f32 0.0, %v376
  %v378 = vpop.f32.mrf.mxu0
  %379 = vmatprep.mubr.bf16.mxu0 0
  %380 = vmatmul.mubr.bf16.gmra.mxu0 %v106
  %v381 = vpop.f32.mrf.mxu0
  %v382 = vadd.f32 0.0, %v381
  %v383 = vpop.f32.mrf.mxu0
  %v384 = vpop.f32.mrf.mxu0
  %v385 = vadd.f32 0.0, %v384
  %v386 = vpop.f32.mrf.mxu0
  %387 = vmatprep.mubr.bf16.mxu0 0
  %388 = vmatmul.mubr.bf16.gmra.mxu0 %v109
  %v389 = vpop.f32.mrf.mxu0
  %v390 = vadd.f32 0.0, %v389
  %v391 = vpop.f32.mrf.mxu0
  %v392 = vpop.f32.mrf.mxu0
  %v393 = vadd.f32 0.0, %v392
  %v394 = vpop.f32.mrf.mxu0
  %395 = vdwg.mxu0
  %v396 = vpack.c.bf16 %v337, %v334
  %v397 = vpack.c.bf16 %v345, %v342
  %v398 = vpack.c.bf16 %v353, %v350
  %v399 = vpack.c.bf16 %v361, %v358
  %v400 = vpack.c.bf16 %v369, %v366
  %v401 = vpack.c.bf16 %v377, %v374
  %v402 = vpack.c.bf16 %v385, %v382
  %v403 = vpack.c.bf16 %v393, %v390
  %v412 = vunpack.c.l.b16 %v396
  %v413 = vunpack.c.h.b16 %v396
  %v414 = vunpack.c.l.b16 %v397
  %v415 = vunpack.c.h.b16 %v397
  %v416 = vunpack.c.l.b16 %v398
  %v417 = vunpack.c.h.b16 %v398
  %v418 = vunpack.c.l.b16 %v399
  %v419 = vunpack.c.h.b16 %v399
  %v420 = vunpack.c.l.b16 %v400
  %v421 = vunpack.c.h.b16 %v400
  %v422 = vunpack.c.l.b16 %v401
  %v423 = vunpack.c.h.b16 %v401
  %v424 = vunpack.c.l.b16 %v402
  %v425 = vunpack.c.h.b16 %v402
  %v426 = vunpack.c.l.b16 %v403
  %v427 = vunpack.c.h.b16 %v403
  %v428 = vpack.c.b16 %v412, %v412
  %v429 = vpack.c.b16 %v413, %v413
  %v430 = vpack.c.b16 %v414, %v414
  %v431 = vpack.c.b16 %v415, %v415
  %v432 = vpack.c.b16 %v416, %v416
  %v433 = vpack.c.b16 %v417, %v417
  %v434 = vpack.c.b16 %v418, %v418
  %v435 = vpack.c.b16 %v419, %v419
  %v436 = vpack.c.b16 %v420, %v420
  %v437 = vpack.c.b16 %v421, %v421
  %v438 = vpack.c.b16 %v422, %v422
  %v439 = vpack.c.b16 %v423, %v423
  %v440 = vpack.c.b16 %v424, %v424
  %v441 = vpack.c.b16 %v425, %v425
  %v442 = vpack.c.b16 %v426, %v426
  %v443 = vpack.c.b16 %v427, %v427
  %460 = vst [vmem:[#allocation3] sm:$0xf] %v428
  %461 = vst [vmem:[#allocation3 + $0x4] sm:$0xf] %v429
  %462 = vst [vmem:[#allocation3 + $0x8] sm:$0xf] %v430
  %463 = vst [vmem:[#allocation3 + $0xc] sm:$0xf] %v431
  %464 = vst [vmem:[#allocation3 + $0x10] sm:$0xf] %v432
  %465 = vst [vmem:[#allocation3 + $0x14] sm:$0xf] %v433
  %466 = vst [vmem:[#allocation3 + $0x18] sm:$0xf] %v434
  %467 = vst [vmem:[#allocation3 + $0x1c] sm:$0xf] %v435
  %468 = vst [vmem:[#allocation3 + $0x20] sm:$0xf] %v436
  %469 = vst [vmem:[#allocation3 + $0x24] sm:$0xf] %v437
  %470 = vst [vmem:[#allocation3 + $0x28] sm:$0xf] %v438
  %471 = vst [vmem:[#allocation3 + $0x2c] sm:$0xf] %v439
  %472 = vst [vmem:[#allocation3 + $0x30] sm:$0xf] %v440
  %473 = vst [vmem:[#allocation3 + $0x34] sm:$0xf] %v441
  %474 = vst [vmem:[#allocation3 + $0x38] sm:$0xf] %v442
  %475 = vst [vmem:[#allocation3 + $0x3c] sm:$0xf] %v443
  %v476 = vld [vmem:[%s2] sm:$0xf]
  %v477 = vld [vmem:[%s2 + $0x4] sm:$0xf]
  %v478 = vld [vmem:[%s2 + $0x8] sm:$0xf]
  %v479 = vld [vmem:[%s2 + $0xc] sm:$0xf]
  %v480 = vld [vmem:[%s5] sm:$0xf]
  %v481 = vld [vmem:[%s5 + $0x4] sm:$0xf]
  %v482 = vld [vmem:[%s5 + $0x8] sm:$0xf]
  %v483 = vld [vmem:[%s5 + $0xc] sm:$0xf]
  %v484 = vld [vmem:[%s3] sm:$0x1]
  %v486 = vlaneseq
  %v487 = vshrl.u32 %v486, 7
  %v488 = vsub.s32 0, %v487
  %v489 = vrot.slane %v484, %v488
  %v491 = vld [vmem:[%s6] sm:$0x1]
  %v493 = vlaneseq
  %v494 = vshrl.u32 %v493, 7
  %v495 = vsub.s32 0, %v494
  %v496 = vrot.slane %v491, %v495
  %v498 = vld [vmem:[#allocation2] sm:$0xf]
  %v499 = vld [vmem:[#allocation2 + $0x4] sm:$0xf]
  %v500 = vunpack.c.l.bf16 %v498
  %v501 = vunpack.c.l.bf16 %v499
  %v506 = vunpack.c.l.b16 %v476
  %v507 = vunpack.c.l.b16 %v477
  %v508 = vunpack.c.l.b16 %v478
  %v509 = vunpack.c.l.b16 %v479
  %v510 = vpack.c.b16 %v507, %v506
  %v511 = vpack.c.b16 %v509, %v508
  %vm514 = vcmask 261120
  %v516 = vsel %vm514, 0, 0
  %518 = vmatprep.subr.bf16.mxu0 0
  %519 = vmatpush1.bf16.msra.mxu0 0
  %520 = vmatprep.subr.bf16.mxu0 0
  %521 = vmatpush1.bf16.msra.mxu0 0
  %522 = vmatprep.subr.bf16.mxu0 0
  %523 = vmatpush1.bf16.msra.mxu0 0
  %524 = vmatprep.subr.bf16.mxu0 0
  %525 = vmatpush1.bf16.msra.mxu0 0
  %526 = vmatprep.subr.bf16.mxu0 0
  %527 = vmatpush1.bf16.msra.mxu0 0
  %528 = vmatprep.subr.bf16.mxu0 0
  %529 = vmatpush1.bf16.msra.mxu0 0
  %530 = vmatprep.subr.bf16.mxu0 0
  %531 = vmatpush1.bf16.msra.mxu0 %v511
  %532 = vmatprep.subr.bf16.mxu0 0
  %533 = vmatpush1.bf16.msra.mxu0 %v510
  %534 = vmatprep.subr.bf16.mxu0 0
  %535 = vmatpush2.bf16.msra.mxu0 0
  %536 = vmatprep.subr.bf16.mxu0 0
  %537 = vmatpush2.bf16.msra.mxu0 0
  %538 = vmatprep.subr.bf16.mxu0 0
  %539 = vmatpush2.bf16.msra.mxu0 0
  %540 = vmatprep.subr.bf16.mxu0 0
  %541 = vmatpush2.bf16.msra.mxu0 0
  %542 = vmatprep.subr.bf16.mxu0 0
  %543 = vmatpush2.bf16.msra.mxu0 0
  %544 = vmatprep.subr.bf16.mxu0 0
  %545 = vmatpush2.bf16.msra.mxu0 0
  %546 = vmatprep.subr.bf16.mxu0 0
  %547 = vmatpush2.bf16.msra.mxu0 0
  %548 = vmatprep.subr.bf16.mxu0 0
  %549 = vmatpush2.bf16.msra.mxu0 0
  %550 = vmatprep.mubr.bf16.mxu0 0
  %551 = vmatmul.mubr.bf16.gmra.mxu0 %v516
  %v552 = vpop.f32.mrf.mxu0
  %v553 = vadd.f32 %v500, %v552
  %v554 = vpop.f32.mrf.mxu0
  %v555 = vpop.f32.mrf.mxu0
  %v556 = vadd.f32 %v501, %v555
  %v557 = vpop.f32.mrf.mxu0
  %558 = vdwg.mxu0
  %v559 = vadd.f32 %v553, %v489
  %v560 = vadd.f32 %v556, %v489
  %v561 = vmul.f32 %v559, 0.5
  %v562 = vmul.f32 %v560, 0.5
  %v563 = vtanh.pop %v561
  %v564 = vtanh.pop %v562
  %v565 = vadd.f32 %v563, 1.0
  %v566 = vadd.f32 %v564, 1.0
  %v567 = vmul.f32 %v565, 0.5
  %v568 = vmul.f32 %v566, 0.5
  %v569 = vtanh.pop %v559
  %v570 = vtanh.pop %v560
  %v571 = vmul.f32 %v567, 0.0
  %v572 = vmul.f32 %v568, 0.0
  %575 = vrot.lane.b32.xlu0 %v569, 64
  %v576 = vpop.permute.xlu0 %575
  %577 = vrot.lane.b32.xlu0 %v570, 64
  %v578 = vpop.permute.xlu0 %577
  %v581 = vmul.f32 %v567, %v576
  %v582 = vmul.f32 %v568, %v578
  %585 = vrot.lane.b32.xlu0 %v581, 32
  %v586 = vpop.permute.xlu0 %585
  %587 = vrot.lane.b32.xlu0 %v582, 32
  %v588 = vpop.permute.xlu0 %587
  %v591 = vadd.f32 %v571, %v586
  %v592 = vadd.f32 %v572, %v588
  %v593 = vtanh.pop %v591
  %v594 = vtanh.pop %v592
  %597 = vrot.lane.b32.xlu0 %v593, 64
  %v598 = vpop.permute.xlu0 %597
  %599 = vrot.lane.b32.xlu0 %v594, 64
  %v600 = vpop.permute.xlu0 %599
  %v603 = vmul.f32 %v567, %v598
  %v604 = vmul.f32 %v568, %v600
  %v605 = vpack.c.bf16 %v604, %v603
  %v607 = vunpack.c.l.b16 %v605
  %v608 = vunpack.c.h.b16 %v605
  %v609 = vpack.c.b16 %v607, %v607
  %v610 = vpack.c.b16 %v608, %v608
  %611 = vrot.lane.b32.xlu0 %v609, 32
  %v612 = vpop.permute.xlu0 %611
  %613 = vrot.lane.b32.xlu0 %v610, 32
  %v614 = vpop.permute.xlu0 %613
  %vm617 = vcmask 257024
  %618 = vst.msk [vmem:[%s7] sm:$0xf] %vm617, %v612
  %619 = vst.msk [vmem:[%s7 + $0x4] sm:$0xf] %vm617, %v614
  %s620 = scalar_lea.vmem [#allocation3], 56
  %v621 = vld [vmem:[%s620] sm:$0xf]
  %v622 = vld [vmem:[%s620 + $0x4] sm:$0xf]
  %v623 = vunpack.c.l.bf16 %v621
  %v624 = vunpack.c.l.bf16 %v622
  %v629 = vunpack.c.l.b16 %v480
  %v630 = vunpack.c.l.b16 %v481
  %v631 = vunpack.c.l.b16 %v482
  %v632 = vunpack.c.l.b16 %v483
  %v633 = vpack.c.b16 %v630, %v629
  %v634 = vpack.c.b16 %v632, %v631
  %637 = vmatprep.subr.bf16.mxu0 0
  %638 = vmatpush1.bf16.msra.mxu0 0
  %639 = vmatprep.subr.bf16.mxu0 0
  %640 = vmatpush1.bf16.msra.mxu0 0
  %641 = vmatprep.subr.bf16.mxu0 0
  %642 = vmatpush1.bf16.msra.mxu0 0
  %643 = vmatprep.subr.bf16.mxu0 0
  %644 = vmatpush1.bf16.msra.mxu0 0
  %645 = vmatprep.subr.bf16.mxu0 0
  %646 = vmatpush1.bf16.msra.mxu0 0
  %647 = vmatprep.subr.bf16.mxu0 0
  %648 = vmatpush1.bf16.msra.mxu0 0
  %649 = vmatprep.subr.bf16.mxu0 0
  %650 = vmatpush1.bf16.msra.mxu0 %v634
  %651 = vmatprep.subr.bf16.mxu0 0
  %652 = vmatpush1.bf16.msra.mxu0 %v633
  %653 = vmatprep.subr.bf16.mxu0 0
  %654 = vmatpush2.bf16.msra.mxu0 0
  %655 = vmatprep.subr.bf16.mxu0 0
  %656 = vmatpush2.bf16.msra.mxu0 0
  %657 = vmatprep.subr.bf16.mxu0 0
  %658 = vmatpush2.bf16.msra.mxu0 0
  %659 = vmatprep.subr.bf16.mxu0 0
  %660 = vmatpush2.bf16.msra.mxu0 0
  %661 = vmatprep.subr.bf16.mxu0 0
  %662 = vmatpush2.bf16.msra.mxu0 0
  %663 = vmatprep.subr.bf16.mxu0 0
  %664 = vmatpush2.bf16.msra.mxu0 0
  %665 = vmatprep.subr.bf16.mxu0 0
  %666 = vmatpush2.bf16.msra.mxu0 0
  %667 = vmatprep.subr.bf16.mxu0 0
  %668 = vmatpush2.bf16.msra.mxu0 0
  %669 = vmatprep.mubr.bf16.mxu0 0
  %670 = vmatmul.mubr.bf16.gmra.mxu0 %v516
  %v671 = vpop.f32.mrf.mxu0
  %v672 = vadd.f32 %v623, %v671
  %v673 = vpop.f32.mrf.mxu0
  %v674 = vpop.f32.mrf.mxu0
  %v675 = vadd.f32 %v624, %v674
  %v676 = vpop.f32.mrf.mxu0
  %677 = vdwg.mxu0
  %v678 = vadd.f32 %v672, %v496
  %v679 = vadd.f32 %v675, %v496
  %v680 = vmul.f32 %v678, 0.5
  %v681 = vmul.f32 %v679, 0.5
  %v682 = vtanh.pop %v680
  %v683 = vtanh.pop %v681
  %v684 = vadd.f32 %v682, 1.0
  %v685 = vadd.f32 %v683, 1.0
  %v686 = vmul.f32 %v684, 0.5
  %v687 = vmul.f32 %v685, 0.5
  %v688 = vtanh.pop %v678
  %v689 = vtanh.pop %v679
  %v690 = vmul.f32 %v686, 0.0
  %v691 = vmul.f32 %v687, 0.0
  %694 = vrot.lane.b32.xlu0 %v688, 64
  %v695 = vpop.permute.xlu0 %694
  %696 = vrot.lane.b32.xlu0 %v689, 64
  %v697 = vpop.permute.xlu0 %696
  %v700 = vmul.f32 %v686, %v695
  %v701 = vmul.f32 %v687, %v697
  %704 = vrot.lane.b32.xlu0 %v700, 32
  %v705 = vpop.permute.xlu0 %704
  %706 = vrot.lane.b32.xlu0 %v701, 32
  %v707 = vpop.permute.xlu0 %706
  %v710 = vadd.f32 %v690, %v705
  %v711 = vadd.f32 %v691, %v707
  %v712 = vtanh.pop %v710
  %v713 = vtanh.pop %v711
  %716 = vrot.lane.b32.xlu0 %v712, 64
  %v717 = vpop.permute.xlu0 %716
  %718 = vrot.lane.b32.xlu0 %v713, 64
  %v719 = vpop.permute.xlu0 %718
  %v722 = vmul.f32 %v686, %v717
  %v723 = vmul.f32 %v687, %v719
  %v724 = vpack.c.bf16 %v723, %v722
  %v726 = vunpack.c.l.b16 %v724
  %v727 = vunpack.c.h.b16 %v724
  %v728 = vpack.c.b16 %v726, %v726
  %v729 = vpack.c.b16 %v727, %v727
  %730 = vrot.lane.b32.xlu0 %v728, 32
  %v731 = vpop.permute.xlu0 %730
  %732 = vrot.lane.b32.xlu0 %v729, 32
  %v733 = vpop.permute.xlu0 %732
  %s736 = scalar_lea.vmem %s8, 56
  %737 = vst.msk [vmem:[%s736] sm:$0xf] %vm617, %v731
  %738 = vst.msk [vmem:[%s736 + $0x4] sm:$0xf] %vm617, %v733
  %s739 = scalar_lea.vmem [#allocation2], 8
  %v740 = vld [vmem:[%s739] sm:$0xf]
  %v741 = vld [vmem:[%s739 + $0x4] sm:$0xf]
  %v742 = vunpack.c.l.bf16 %v740
  %v743 = vunpack.c.l.bf16 %v741
  %744 = vrot.lane.b32.xlu0 %v605, 32
  %v745 = vpop.permute.xlu0 %744
  %v747 = vsel %vm514, %v745, 0
  %749 = vmatprep.subr.bf16.mxu0 0
  %750 = vmatpush1.bf16.msra.mxu0 0
  %751 = vmatprep.subr.bf16.mxu0 0
  %752 = vmatpush1.bf16.msra.mxu0 0
  %753 = vmatprep.subr.bf16.mxu0 0
  %754 = vmatpush1.bf16.msra.mxu0 0
  %755 = vmatprep.subr.bf16.mxu0 0
  %756 = vmatpush1.bf16.msra.mxu0 0
  %757 = vmatprep.subr.bf16.mxu0 0
  %758 = vmatpush1.bf16.msra.mxu0 0
  %759 = vmatprep.subr.bf16.mxu0 0
  %760 = vmatpush1.bf16.msra.mxu0 0
  %761 = vmatprep.subr.bf16.mxu0 0
  %762 = vmatpush1.bf16.msra.mxu0 %v511
  %763 = vmatprep.subr.bf16.mxu0 0
  %764 = vmatpush1.bf16.msra.mxu0 %v510
  %765 = vmatprep.subr.bf16.mxu0 0
  %766 = vmatpush2.bf16.msra.mxu0 0
  %767 = vmatprep.subr.bf16.mxu0 0
  %768 = vmatpush2.bf16.msra.mxu0 0
  %769 = vmatprep.subr.bf16.mxu0 0
  %770 = vmatpush2.bf16.msra.mxu0 0
  %771 = vmatprep.subr.bf16.mxu0 0
  %772 = vmatpush2.bf16.msra.mxu0 0
  %773 = vmatprep.subr.bf16.mxu0 0
  %774 = vmatpush2.bf16.msra.mxu0 0
  %775 = vmatprep.subr.bf16.mxu0 0
  %776 = vmatpush2.bf16.msra.mxu0 0
  %777 = vmatprep.subr.bf16.mxu0 0
  %778 = vmatpush2.bf16.msra.mxu0 0
  %779 = vmatprep.subr.bf16.mxu0 0
  %780 = vmatpush2.bf16.msra.mxu0 0
  %781 = vmatprep.mubr.bf16.mxu0 0
  %782 = vmatmul.mubr.bf16.gmra.mxu0 %v747
  %v783 = vpop.f32.mrf.mxu0
  %v784 = vadd.f32 %v742, %v783
  %v785 = vpop.f32.mrf.mxu0
  %v786 = vpop.f32.mrf.mxu0
  %v787 = vadd.f32 %v743, %v786
  %v788 = vpop.f32.mrf.mxu0
  %789 = vdwg.mxu0
  %v790 = vadd.f32 %v784, %v489
  %v791 = vadd.f32 %v787, %v489
  %v792 = vmul.f32 %v790, 0.5
  %v793 = vmul.f32 %v791, 0.5
  %v794 = vtanh.pop %v792
  %v795 = vtanh.pop %v793
  %v796 = vadd.f32 %v794, 1.0
  %v797 = vadd.f32 %v795, 1.0
  %v798 = vmul.f32 %v796, 0.5
  %v799 = vmul.f32 %v797, 0.5
  %v800 = vtanh.pop %v790
  %v801 = vtanh.pop %v791
  %v802 = vmul.f32 %v798, %v591
  %v803 = vmul.f32 %v799, %v592
  %806 = vrot.lane.b32.xlu0 %v800, 64
  %v807 = vpop.permute.xlu0 %806
  %808 = vrot.lane.b32.xlu0 %v801, 64
  %v809 = vpop.permute.xlu0 %808
  %v812 = vmul.f32 %v798, %v807
  %v813 = vmul.f32 %v799, %v809
  %816 = vrot.lane.b32.xlu0 %v812, 32
  %v817 = vpop.permute.xlu0 %816
  %818 = vrot.lane.b32.xlu0 %v813, 32
  %v819 = vpop.permute.xlu0 %818
  %v822 = vadd.f32 %v802, %v817
  %v823 = vadd.f32 %v803, %v819
  %v824 = vtanh.pop %v822
  %v825 = vtanh.pop %v823
  %828 = vrot.lane.b32.xlu0 %v824, 64
  %v829 = vpop.permute.xlu0 %828
  %830 = vrot.lane.b32.xlu0 %v825, 64
  %v831 = vpop.permute.xlu0 %830
  %v834 = vmul.f32 %v798, %v829
  %v835 = vmul.f32 %v799, %v831
  %v836 = vpack.c.bf16 %v835, %v834
  %v838 = vunpack.c.l.b16 %v836
  %v839 = vunpack.c.h.b16 %v836
  %v840 = vpack.c.b16 %v838, %v838
  %v841 = vpack.c.b16 %v839, %v839
  %842 = vrot.lane.b32.xlu0 %v840, 32
  %v843 = vpop.permute.xlu0 %842
  %844 = vrot.lane.b32.xlu0 %v841, 32
  %v845 = vpop.permute.xlu0 %844
  %s848 = scalar_lea.vmem %s7, 8
  %849 = vst.msk [vmem:[%s848] sm:$0xf] %vm617, %v843
  %850 = vst.msk [vmem:[%s848 + $0x4] sm:$0xf] %vm617, %v845
  %s851 = scalar_lea.vmem [#allocation3], 48
  %v852 = vld [vmem:[%s851] sm:$0xf]
  %v853 = vld [vmem:[%s851 + $0x4] sm:$0xf]
  %v854 = vunpack.c.l.bf16 %v852
  %v855 = vunpack.c.l.bf16 %v853
  %856 = vrot.lane.b32.xlu0 %v724, 32
  %v857 = vpop.permute.xlu0 %856
  %v859 = vsel %vm514, %v857, 0
  %861 = vmatprep.subr.bf16.mxu0 0
  %862 = vmatpush1.bf16.msra.mxu0 0
  %863 = vmatprep.subr.bf16.mxu0 0
  %864 = vmatpush1.bf16.msra.mxu0 0
  %865 = vmatprep.subr.bf16.mxu0 0
  %866 = vmatpush1.bf16.msra.mxu0 0
  %867 = vmatprep.subr.bf16.mxu0 0
  %868 = vmatpush1.bf16.msra.mxu0 0
  %869 = vmatprep.subr.bf16.mxu0 0
  %870 = vmatpush1.bf16.msra.mxu0 0
  %871 = vmatprep.subr.bf16.mxu0 0
  %872 = vmatpush1.bf16.msra.mxu0 0
  %873 = vmatprep.subr.bf16.mxu0 0
  %874 = vmatpush1.bf16.msra.mxu0 %v634
  %875 = vmatprep.subr.bf16.mxu0 0
  %876 = vmatpush1.bf16.msra.mxu0 %v633
  %877 = vmatprep.subr.bf16.mxu0 0
  %878 = vmatpush2.bf16.msra.mxu0 0
  %879 = vmatprep.subr.bf16.mxu0 0
  %880 = vmatpush2.bf16.msra.mxu0 0
  %881 = vmatprep.subr.bf16.mxu0 0
  %882 = vmatpush2.bf16.msra.mxu0 0
  %883 = vmatprep.subr.bf16.mxu0 0
  %884 = vmatpush2.bf16.msra.mxu0 0
  %885 = vmatprep.subr.bf16.mxu0 0
  %886 = vmatpush2.bf16.msra.mxu0 0
  %887 = vmatprep.subr.bf16.mxu0 0
  %888 = vmatpush2.bf16.msra.mxu0 0
  %889 = vmatprep.subr.bf16.mxu0 0
  %890 = vmatpush2.bf16.msra.mxu0 0
  %891 = vmatprep.subr.bf16.mxu0 0
  %892 = vmatpush2.bf16.msra.mxu0 0
  %893 = vmatprep.mubr.bf16.mxu0 0
  %894 = vmatmul.mubr.bf16.gmra.mxu0 %v859
  %v895 = vpop.f32.mrf.mxu0
  %v896 = vadd.f32 %v854, %v895
  %v897 = vpop.f32.mrf.mxu0
  %v898 = vpop.f32.mrf.mxu0
  %v899 = vadd.f32 %v855, %v898
  %v900 = vpop.f32.mrf.mxu0
  %901 = vdwg.mxu0
  %v902 = vadd.f32 %v896, %v496
  %v903 = vadd.f32 %v899, %v496
  %v904 = vmul.f32 %v902, 0.5
  %v905 = vmul.f32 %v903, 0.5
  %v906 = vtanh.pop %v904
  %v907 = vtanh.pop %v905
  %v908 = vadd.f32 %v906, 1.0
  %v909 = vadd.f32 %v907, 1.0
  %v910 = vmul.f32 %v908, 0.5
  %v911 = vmul.f32 %v909, 0.5
  %v912 = vtanh.pop %v902
  %v913 = vtanh.pop %v903
  %v914 = vmul.f32 %v910, %v710
  %v915 = vmul.f32 %v911, %v711
  %918 = vrot.lane.b32.xlu0 %v912, 64
  %v919 = vpop.permute.xlu0 %918
  %920 = vrot.lane.b32.xlu0 %v913, 64
  %v921 = vpop.permute.xlu0 %920
  %v924 = vmul.f32 %v910, %v919
  %v925 = vmul.f32 %v911, %v921
  %928 = vrot.lane.b32.xlu0 %v924, 32
  %v929 = vpop.permute.xlu0 %928
  %930 = vrot.lane.b32.xlu0 %v925, 32
  %v931 = vpop.permute.xlu0 %930
  %v934 = vadd.f32 %v914, %v929
  %v935 = vadd.f32 %v915, %v931
  %v936 = vtanh.pop %v934
  %v937 = vtanh.pop %v935
  %940 = vrot.lane.b32.xlu0 %v936, 64
  %v941 = vpop.permute.xlu0 %940
  %942 = vrot.lane.b32.xlu0 %v937, 64
  %v943 = vpop.permute.xlu0 %942
  %v946 = vmul.f32 %v910, %v941
  %v947 = vmul.f32 %v911, %v943
  %v948 = vpack.c.bf16 %v947, %v946
  %v950 = vunpack.c.l.b16 %v948
  %v951 = vunpack.c.h.b16 %v948
  %v952 = vpack.c.b16 %v950, %v950
  %v953 = vpack.c.b16 %v951, %v951
  %954 = vrot.lane.b32.xlu0 %v952, 32
  %v955 = vpop.permute.xlu0 %954
  %956 = vrot.lane.b32.xlu0 %v953, 32
  %v957 = vpop.permute.xlu0 %956
  %s960 = scalar_lea.vmem %s8, 48
  %961 = vst.msk [vmem:[%s960] sm:$0xf] %vm617, %v955
  %962 = vst.msk [vmem:[%s960 + $0x4] sm:$0xf] %vm617, %v957
  %s963 = scalar_lea.vmem [#allocation2], 16
  %v964 = vld [vmem:[%s963] sm:$0xf]
  %v965 = vld [vmem:[%s963 + $0x4] sm:$0xf]
  %v966 = vunpack.c.l.bf16 %v964
  %v967 = vunpack.c.l.bf16 %v965
  %968 = vrot.lane.b32.xlu0 %v836, 32
  %v969 = vpop.permute.xlu0 %968
  %v971 = vsel %vm514, %v969, 0
  %973 = vmatprep.subr.bf16.mxu0 0
  %974 = vmatpush1.bf16.msra.mxu0 0
  %975 = vmatprep.subr.bf16.mxu0 0
  %976 = vmatpush1.bf16.msra.mxu0 0
  %977 = vmatprep.subr.bf16.mxu0 0
  %978 = vmatpush1.bf16.msra.mxu0 0
  %979 = vmatprep.subr.bf16.mxu0 0
  %980 = vmatpush1.bf16.msra.mxu0 0
  %981 = vmatprep.subr.bf16.mxu0 0
  %982 = vmatpush1.bf16.msra.mxu0 0
  %983 = vmatprep.subr.bf16.mxu0 0
  %984 = vmatpush1.bf16.msra.mxu0 0
  %985 = vmatprep.subr.bf16.mxu0 0
  %986 = vmatpush1.bf16.msra.mxu0 %v511
  %987 = vmatprep.subr.bf16.mxu0 0
  %988 = vmatpush1.bf16.msra.mxu0 %v510
  %989 = vmatprep.subr.bf16.mxu0 0
  %990 = vmatpush2.bf16.msra.mxu0 0
  %991 = vmatprep.subr.bf16.mxu0 0
  %992 = vmatpush2.bf16.msra.mxu0 0
  %993 = vmatprep.subr.bf16.mxu0 0
  %994 = vmatpush2.bf16.msra.mxu0 0
  %995 = vmatprep.subr.bf16.mxu0 0
  %996 = vmatpush2.bf16.msra.mxu0 0
  %997 = vmatprep.subr.bf16.mxu0 0
  %998 = vmatpush2.bf16.msra.mxu0 0
  %999 = vmatprep.subr.bf16.mxu0 0
  %1000 = vmatpush2.bf16.msra.mxu0 0
  %1001 = vmatprep.subr.bf16.mxu0 0
  %1002 = vmatpush2.bf16.msra.mxu0 0
  %1003 = vmatprep.subr.bf16.mxu0 0
  %1004 = vmatpush2.bf16.msra.mxu0 0
  %1005 = vmatprep.mubr.bf16.mxu0 0
  %1006 = vmatmul.mubr.bf16.gmra.mxu0 %v971
  %v1007 = vpop.f32.mrf.mxu0
  %v1008 = vadd.f32 %v966, %v1007
  %v1009 = vpop.f32.mrf.mxu0
  %v1010 = vpop.f32.mrf.mxu0
  %v1011 = vadd.f32 %v967, %v1010
  %v1012 = vpop.f32.mrf.mxu0
  %1013 = vdwg.mxu0
  %v1014 = vadd.f32 %v1008, %v489
  %v1015 = vadd.f32 %v1011, %v489
  %v1016 = vmul.f32 %v1014, 0.5
  %v1017 = vmul.f32 %v1015, 0.5
  %v1018 = vtanh.pop %v1016
  %v1019 = vtanh.pop %v1017
  %v1020 = vadd.f32 %v1018, 1.0
  %v1021 = vadd.f32 %v1019, 1.0
  %v1022 = vmul.f32 %v1020, 0.5
  %v1023 = vmul.f32 %v1021, 0.5
  %v1024 = vtanh.pop %v1014
  %v1025 = vtanh.pop %v1015
  %v1026 = vmul.f32 %v1022, %v822
  %v1027 = vmul.f32 %v1023, %v823
  %1030 = vrot.lane.b32.xlu0 %v1024, 64
  %v1031 = vpop.permute.xlu0 %1030
  %1032 = vrot.lane.b32.xlu0 %v1025, 64
  %v1033 = vpop.permute.xlu0 %1032
  %v1036 = vmul.f32 %v1022, %v1031
  %v1037 = vmul.f32 %v1023, %v1033
  %1040 = vrot.lane.b32.xlu0 %v1036, 32
  %v1041 = vpop.permute.xlu0 %1040
  %1042 = vrot.lane.b32.xlu0 %v1037, 32
  %v1043 = vpop.permute.xlu0 %1042
  %v1046 = vadd.f32 %v1026, %v1041
  %v1047 = vadd.f32 %v1027, %v1043
  %v1048 = vtanh.pop %v1046
  %v1049 = vtanh.pop %v1047
  %1052 = vrot.lane.b32.xlu0 %v1048, 64
  %v1053 = vpop.permute.xlu0 %1052
  %1054 = vrot.lane.b32.xlu0 %v1049, 64
  %v1055 = vpop.permute.xlu0 %1054
  %v1058 = vmul.f32 %v1022, %v1053
  %v1059 = vmul.f32 %v1023, %v1055
  %v1060 = vpack.c.bf16 %v1059, %v1058
  %v1062 = vunpack.c.l.b16 %v1060
  %v1063 = vunpack.c.h.b16 %v1060
  %v1064 = vpack.c.b16 %v1062, %v1062
  %v1065 = vpack.c.b16 %v1063, %v1063
  %1066 = vrot.lane.b32.xlu0 %v1064, 32
  %v1067 = vpop.permute.xlu0 %1066
  %1068 = vrot.lane.b32.xlu0 %v1065, 32
  %v1069 = vpop.permute.xlu0 %1068
  %s1072 = scalar_lea.vmem %s7, 16
  %1073 = vst.msk [vmem:[%s1072] sm:$0xf] %vm617, %v1067
  %1074 = vst.msk [vmem:[%s1072 + $0x4] sm:$0xf] %vm617, %v1069
  %s1075 = scalar_lea.vmem [#allocation3], 40
  %v1076 = vld [vmem:[%s1075] sm:$0xf]
  %v1077 = vld [vmem:[%s1075 + $0x4] sm:$0xf]
  %v1078 = vunpack.c.l.bf16 %v1076
  %v1079 = vunpack.c.l.bf16 %v1077
  %1080 = vrot.lane.b32.xlu0 %v948, 32
  %v1081 = vpop.permute.xlu0 %1080
  %v1083 = vsel %vm514, %v1081, 0
  %1085 = vmatprep.subr.bf16.mxu0 0
  %1086 = vmatpush1.bf16.msra.mxu0 0
  %1087 = vmatprep.subr.bf16.mxu0 0
  %1088 = vmatpush1.bf16.msra.mxu0 0
  %1089 = vmatprep.subr.bf16.mxu0 0
  %1090 = vmatpush1.bf16.msra.mxu0 0
  %1091 = vmatprep.subr.bf16.mxu0 0
  %1092 = vmatpush1.bf16.msra.mxu0 0
  %1093 = vmatprep.subr.bf16.mxu0 0
  %1094 = vmatpush1.bf16.msra.mxu0 0
  %1095 = vmatprep.subr.bf16.mxu0 0
  %1096 = vmatpush1.bf16.msra.mxu0 0
  %1097 = vmatprep.subr.bf16.mxu0 0
  %1098 = vmatpush1.bf16.msra.mxu0 %v634
  %1099 = vmatprep.subr.bf16.mxu0 0
  %1100 = vmatpush1.bf16.msra.mxu0 %v633
  %1101 = vmatprep.subr.bf16.mxu0 0
  %1102 = vmatpush2.bf16.msra.mxu0 0
  %1103 = vmatprep.subr.bf16.mxu0 0
  %1104 = vmatpush2.bf16.msra.mxu0 0
  %1105 = vmatprep.subr.bf16.mxu0 0
  %1106 = vmatpush2.bf16.msra.mxu0 0
  %1107 = vmatprep.subr.bf16.mxu0 0
  %1108 = vmatpush2.bf16.msra.mxu0 0
  %1109 = vmatprep.subr.bf16.mxu0 0
  %1110 = vmatpush2.bf16.msra.mxu0 0
  %1111 = vmatprep.subr.bf16.mxu0 0
  %1112 = vmatpush2.bf16.msra.mxu0 0
  %1113 = vmatprep.subr.bf16.mxu0 0
  %1114 = vmatpush2.bf16.msra.mxu0 0
  %1115 = vmatprep.subr.bf16.mxu0 0
  %1116 = vmatpush2.bf16.msra.mxu0 0
  %1117 = vmatprep.mubr.bf16.mxu0 0
  %1118 = vmatmul.mubr.bf16.gmra.mxu0 %v1083
  %v1119 = vpop.f32.mrf.mxu0
  %v1120 = vadd.f32 %v1078, %v1119
  %v1121 = vpop.f32.mrf.mxu0
  %v1122 = vpop.f32.mrf.mxu0
  %v1123 = vadd.f32 %v1079, %v1122
  %v1124 = vpop.f32.mrf.mxu0
  %1125 = vdwg.mxu0
  %v1126 = vadd.f32 %v1120, %v496
  %v1127 = vadd.f32 %v1123, %v496
  %v1128 = vmul.f32 %v1126, 0.5
  %v1129 = vmul.f32 %v1127, 0.5
  %v1130 = vtanh.pop %v1128
  %v1131 = vtanh.pop %v1129
  %v1132 = vadd.f32 %v1130, 1.0
  %v1133 = vadd.f32 %v1131, 1.0
  %v1134 = vmul.f32 %v1132, 0.5
  %v1135 = vmul.f32 %v1133, 0.5
  %v1136 = vtanh.pop %v1126
  %v1137 = vtanh.pop %v1127
  %v1138 = vmul.f32 %v1134, %v934
  %v1139 = vmul.f32 %v1135, %v935
  %1142 = vrot.lane.b32.xlu0 %v1136, 64
  %v1143 = vpop.permute.xlu0 %1142
  %1144 = vrot.lane.b32.xlu0 %v1137, 64
  %v1145 = vpop.permute.xlu0 %1144
  %v1148 = vmul.f32 %v1134, %v1143
  %v1149 = vmul.f32 %v1135, %v1145
  %1152 = vrot.lane.b32.xlu0 %v1148, 32
  %v1153 = vpop.permute.xlu0 %1152
  %1154 = vrot.lane.b32.xlu0 %v1149, 32
  %v1155 = vpop.permute.xlu0 %1154
  %v1158 = vadd.f32 %v1138, %v1153
  %v1159 = vadd.f32 %v1139, %v1155
  %v1160 = vtanh.pop %v1158
  %v1161 = vtanh.pop %v1159
  %1164 = vrot.lane.b32.xlu0 %v1160, 64
  %v1165 = vpop.permute.xlu0 %1164
  %1166 = vrot.lane.b32.xlu0 %v1161, 64
  %v1167 = vpop.permute.xlu0 %1166
  %v1170 = vmul.f32 %v1134, %v1165
  %v1171 = vmul.f32 %v1135, %v1167
  %v1172 = vpack.c.bf16 %v1171, %v1170
  %v1174 = vunpack.c.l.b16 %v1172
  %v1175 = vunpack.c.h.b16 %v1172
  %v1176 = vpack.c.b16 %v1174, %v1174
  %v1177 = vpack.c.b16 %v1175, %v1175
  %1178 = vrot.lane.b32.xlu0 %v1176, 32
  %v1179 = vpop.permute.xlu0 %1178
  %1180 = vrot.lane.b32.xlu0 %v1177, 32
  %v1181 = vpop.permute.xlu0 %1180
  %s1184 = scalar_lea.vmem %s8, 40
  %1185 = vst.msk [vmem:[%s1184] sm:$0xf] %vm617, %v1179
  %1186 = vst.msk [vmem:[%s1184 + $0x4] sm:$0xf] %vm617, %v1181
  %s1187 = scalar_lea.vmem [#allocation2], 24
  %v1188 = vld [vmem:[%s1187] sm:$0xf]
  %v1189 = vld [vmem:[%s1187 + $0x4] sm:$0xf]
  %v1190 = vunpack.c.l.bf16 %v1188
  %v1191 = vunpack.c.l.bf16 %v1189
  %1192 = vrot.lane.b32.xlu0 %v1060, 32
  %v1193 = vpop.permute.xlu0 %1192
  %v1195 = vsel %vm514, %v1193, 0
  %1197 = vmatprep.subr.bf16.mxu0 0
  %1198 = vmatpush1.bf16.msra.mxu0 0
  %1199 = vmatprep.subr.bf16.mxu0 0
  %1200 = vmatpush1.bf16.msra.mxu0 0
  %1201 = vmatprep.subr.bf16.mxu0 0
  %1202 = vmatpush1.bf16.msra.mxu0 0
  %1203 = vmatprep.subr.bf16.mxu0 0
  %1204 = vmatpush1.bf16.msra.mxu0 0
  %1205 = vmatprep.subr.bf16.mxu0 0
  %1206 = vmatpush1.bf16.msra.mxu0 0
  %1207 = vmatprep.subr.bf16.mxu0 0
  %1208 = vmatpush1.bf16.msra.mxu0 0
  %1209 = vmatprep.subr.bf16.mxu0 0
  %1210 = vmatpush1.bf16.msra.mxu0 %v511
  %1211 = vmatprep.subr.bf16.mxu0 0
  %1212 = vmatpush1.bf16.msra.mxu0 %v510
  %1213 = vmatprep.subr.bf16.mxu0 0
  %1214 = vmatpush2.bf16.msra.mxu0 0
  %1215 = vmatprep.subr.bf16.mxu0 0
  %1216 = vmatpush2.bf16.msra.mxu0 0
  %1217 = vmatprep.subr.bf16.mxu0 0
  %1218 = vmatpush2.bf16.msra.mxu0 0
  %1219 = vmatprep.subr.bf16.mxu0 0
  %1220 = vmatpush2.bf16.msra.mxu0 0
  %1221 = vmatprep.subr.bf16.mxu0 0
  %1222 = vmatpush2.bf16.msra.mxu0 0
  %1223 = vmatprep.subr.bf16.mxu0 0
  %1224 = vmatpush2.bf16.msra.mxu0 0
  %1225 = vmatprep.subr.bf16.mxu0 0
  %1226 = vmatpush2.bf16.msra.mxu0 0
  %1227 = vmatprep.subr.bf16.mxu0 0
  %1228 = vmatpush2.bf16.msra.mxu0 0
  %1229 = vmatprep.mubr.bf16.mxu0 0
  %1230 = vmatmul.mubr.bf16.gmra.mxu0 %v1195
  %v1231 = vpop.f32.mrf.mxu0
  %v1232 = vadd.f32 %v1190, %v1231
  %v1233 = vpop.f32.mrf.mxu0
  %v1234 = vpop.f32.mrf.mxu0
  %v1235 = vadd.f32 %v1191, %v1234
  %v1236 = vpop.f32.mrf.mxu0
  %1237 = vdwg.mxu0
  %v1238 = vadd.f32 %v1232, %v489
  %v1239 = vadd.f32 %v1235, %v489
  %v1240 = vmul.f32 %v1238, 0.5
  %v1241 = vmul.f32 %v1239, 0.5
  %v1242 = vtanh.pop %v1240
  %v1243 = vtanh.pop %v1241
  %v1244 = vadd.f32 %v1242, 1.0
  %v1245 = vadd.f32 %v1243, 1.0
  %v1246 = vmul.f32 %v1244, 0.5
  %v1247 = vmul.f32 %v1245, 0.5
  %v1248 = vtanh.pop %v1238
  %v1249 = vtanh.pop %v1239
  %v1250 = vmul.f32 %v1246, %v1046
  %v1251 = vmul.f32 %v1247, %v1047
  %1254 = vrot.lane.b32.xlu0 %v1248, 64
  %v1255 = vpop.permute.xlu0 %1254
  %1256 = vrot.lane.b32.xlu0 %v1249, 64
  %v1257 = vpop.permute.xlu0 %1256
  %v1260 = vmul.f32 %v1246, %v1255
  %v1261 = vmul.f32 %v1247, %v1257
  %1264 = vrot.lane.b32.xlu0 %v1260, 32
  %v1265 = vpop.permute.xlu0 %1264
  %1266 = vrot.lane.b32.xlu0 %v1261, 32
  %v1267 = vpop.permute.xlu0 %1266
  %v1270 = vadd.f32 %v1250, %v1265
  %v1271 = vadd.f32 %v1251, %v1267
  %v1272 = vtanh.pop %v1270
  %v1273 = vtanh.pop %v1271
  %1276 = vrot.lane.b32.xlu0 %v1272, 64
  %v1277 = vpop.permute.xlu0 %1276
  %1278 = vrot.lane.b32.xlu0 %v1273, 64
  %v1279 = vpop.permute.xlu0 %1278
  %v1282 = vmul.f32 %v1246, %v1277
  %v1283 = vmul.f32 %v1247, %v1279
  %v1284 = vpack.c.bf16 %v1283, %v1282
  %v1286 = vunpack.c.l.b16 %v1284
  %v1287 = vunpack.c.h.b16 %v1284
  %v1288 = vpack.c.b16 %v1286, %v1286
  %v1289 = vpack.c.b16 %v1287, %v1287
  %1290 = vrot.lane.b32.xlu0 %v1288, 32
  %v1291 = vpop.permute.xlu0 %1290
  %1292 = vrot.lane.b32.xlu0 %v1289, 32
  %v1293 = vpop.permute.xlu0 %1292
  %s1296 = scalar_lea.vmem %s7, 24
  %1297 = vst.msk [vmem:[%s1296] sm:$0xf] %vm617, %v1291
  %1298 = vst.msk [vmem:[%s1296 + $0x4] sm:$0xf] %vm617, %v1293
  %s1299 = scalar_lea.vmem [#allocation3], 32
  %v1300 = vld [vmem:[%s1299] sm:$0xf]
  %v1301 = vld [vmem:[%s1299 + $0x4] sm:$0xf]
  %v1302 = vunpack.c.l.bf16 %v1300
  %v1303 = vunpack.c.l.bf16 %v1301
  %1304 = vrot.lane.b32.xlu0 %v1172, 32
  %v1305 = vpop.permute.xlu0 %1304
  %v1307 = vsel %vm514, %v1305, 0
  %1309 = vmatprep.subr.bf16.mxu0 0
  %1310 = vmatpush1.bf16.msra.mxu0 0
  %1311 = vmatprep.subr.bf16.mxu0 0
  %1312 = vmatpush1.bf16.msra.mxu0 0
  %1313 = vmatprep.subr.bf16.mxu0 0
  %1314 = vmatpush1.bf16.msra.mxu0 0
  %1315 = vmatprep.subr.bf16.mxu0 0
  %1316 = vmatpush1.bf16.msra.mxu0 0
  %1317 = vmatprep.subr.bf16.mxu0 0
  %1318 = vmatpush1.bf16.msra.mxu0 0
  %1319 = vmatprep.subr.bf16.mxu0 0
  %1320 = vmatpush1.bf16.msra.mxu0 0
  %1321 = vmatprep.subr.bf16.mxu0 0
  %1322 = vmatpush1.bf16.msra.mxu0 %v634
  %1323 = vmatprep.subr.bf16.mxu0 0
  %1324 = vmatpush1.bf16.msra.mxu0 %v633
  %1325 = vmatprep.subr.bf16.mxu0 0
  %1326 = vmatpush2.bf16.msra.mxu0 0
  %1327 = vmatprep.subr.bf16.mxu0 0
  %1328 = vmatpush2.bf16.msra.mxu0 0
  %1329 = vmatprep.subr.bf16.mxu0 0
  %1330 = vmatpush2.bf16.msra.mxu0 0
  %1331 = vmatprep.subr.bf16.mxu0 0
  %1332 = vmatpush2.bf16.msra.mxu0 0
  %1333 = vmatprep.subr.bf16.mxu0 0
  %1334 = vmatpush2.bf16.msra.mxu0 0
  %1335 = vmatprep.subr.bf16.mxu0 0
  %1336 = vmatpush2.bf16.msra.mxu0 0
  %1337 = vmatprep.subr.bf16.mxu0 0
  %1338 = vmatpush2.bf16.msra.mxu0 0
  %1339 = vmatprep.subr.bf16.mxu0 0
  %1340 = vmatpush2.bf16.msra.mxu0 0
  %1341 = vmatprep.mubr.bf16.mxu0 0
  %1342 = vmatmul.mubr.bf16.gmra.mxu0 %v1307
  %v1343 = vpop.f32.mrf.mxu0
  %v1344 = vadd.f32 %v1302, %v1343
  %v1345 = vpop.f32.mrf.mxu0
  %v1346 = vpop.f32.mrf.mxu0
  %v1347 = vadd.f32 %v1303, %v1346
  %v1348 = vpop.f32.mrf.mxu0
  %1349 = vdwg.mxu0
  %v1350 = vadd.f32 %v1344, %v496
  %v1351 = vadd.f32 %v1347, %v496
  %v1352 = vmul.f32 %v1350, 0.5
  %v1353 = vmul.f32 %v1351, 0.5
  %v1354 = vtanh.pop %v1352
  %v1355 = vtanh.pop %v1353
  %v1356 = vadd.f32 %v1354, 1.0
  %v1357 = vadd.f32 %v1355, 1.0
  %v1358 = vmul.f32 %v1356, 0.5
  %v1359 = vmul.f32 %v1357, 0.5
  %v1360 = vtanh.pop %v1350
  %v1361 = vtanh.pop %v1351
  %v1362 = vmul.f32 %v1358, %v1158
  %v1363 = vmul.f32 %v1359, %v1159
  %1366 = vrot.lane.b32.xlu0 %v1360, 64
  %v1367 = vpop.permute.xlu0 %1366
  %1368 = vrot.lane.b32.xlu0 %v1361, 64
  %v1369 = vpop.permute.xlu0 %1368
  %v1372 = vmul.f32 %v1358, %v1367
  %v1373 = vmul.f32 %v1359, %v1369
  %1376 = vrot.lane.b32.xlu0 %v1372, 32
  %v1377 = vpop.permute.xlu0 %1376
  %1378 = vrot.lane.b32.xlu0 %v1373, 32
  %v1379 = vpop.permute.xlu0 %1378
  %v1382 = vadd.f32 %v1362, %v1377
  %v1383 = vadd.f32 %v1363, %v1379
  %v1384 = vtanh.pop %v1382
  %v1385 = vtanh.pop %v1383
  %1388 = vrot.lane.b32.xlu0 %v1384, 64
  %v1389 = vpop.permute.xlu0 %1388
  %1390 = vrot.lane.b32.xlu0 %v1385, 64
  %v1391 = vpop.permute.xlu0 %1390
  %v1394 = vmul.f32 %v1358, %v1389
  %v1395 = vmul.f32 %v1359, %v1391
  %v1396 = vpack.c.bf16 %v1395, %v1394
  %v1398 = vunpack.c.l.b16 %v1396
  %v1399 = vunpack.c.h.b16 %v1396
  %v1400 = vpack.c.b16 %v1398, %v1398
  %v1401 = vpack.c.b16 %v1399, %v1399
  %1402 = vrot.lane.b32.xlu0 %v1400, 32
  %v1403 = vpop.permute.xlu0 %1402
  %1404 = vrot.lane.b32.xlu0 %v1401, 32
  %v1405 = vpop.permute.xlu0 %1404
  %s1408 = scalar_lea.vmem %s8, 32
  %1409 = vst.msk [vmem:[%s1408] sm:$0xf] %vm617, %v1403
  %1410 = vst.msk [vmem:[%s1408 + $0x4] sm:$0xf] %vm617, %v1405
  %s1411 = scalar_lea.vmem [#allocation2], 32
  %v1412 = vld [vmem:[%s1411] sm:$0xf]
  %v1413 = vld [vmem:[%s1411 + $0x4] sm:$0xf]
  %v1414 = vunpack.c.l.bf16 %v1412
  %v1415 = vunpack.c.l.bf16 %v1413
  %1416 = vrot.lane.b32.xlu0 %v1284, 32
  %v1417 = vpop.permute.xlu0 %1416
  %v1419 = vsel %vm514, %v1417, 0
  %1421 = vmatprep.subr.bf16.mxu0 0
  %1422 = vmatpush1.bf16.msra.mxu0 0
  %1423 = vmatprep.subr.bf16.mxu0 0
  %1424 = vmatpush1.bf16.msra.mxu0 0
  %1425 = vmatprep.subr.bf16.mxu0 0
  %1426 = vmatpush1.bf16.msra.mxu0 0
  %1427 = vmatprep.subr.bf16.mxu0 0
  %1428 = vmatpush1.bf16.msra.mxu0 0
  %1429 = vmatprep.subr.bf16.mxu0 0
  %1430 = vmatpush1.bf16.msra.mxu0 0
  %1431 = vmatprep.subr.bf16.mxu0 0
  %1432 = vmatpush1.bf16.msra.mxu0 0
  %1433 = vmatprep.subr.bf16.mxu0 0
  %1434 = vmatpush1.bf16.msra.mxu0 %v511
  %1435 = vmatprep.subr.bf16.mxu0 0
  %1436 = vmatpush1.bf16.msra.mxu0 %v510
  %1437 = vmatprep.subr.bf16.mxu0 0
  %1438 = vmatpush2.bf16.msra.mxu0 0
  %1439 = vmatprep.subr.bf16.mxu0 0
  %1440 = vmatpush2.bf16.msra.mxu0 0
  %1441 = vmatprep.subr.bf16.mxu0 0
  %1442 = vmatpush2.bf16.msra.mxu0 0
  %1443 = vmatprep.subr.bf16.mxu0 0
  %1444 = vmatpush2.bf16.msra.mxu0 0
  %1445 = vmatprep.subr.bf16.mxu0 0
  %1446 = vmatpush2.bf16.msra.mxu0 0
  %1447 = vmatprep.subr.bf16.mxu0 0
  %1448 = vmatpush2.bf16.msra.mxu0 0
  %1449 = vmatprep.subr.bf16.mxu0 0
  %1450 = vmatpush2.bf16.msra.mxu0 0
  %1451 = vmatprep.subr.bf16.mxu0 0
  %1452 = vmatpush2.bf16.msra.mxu0 0
  %1453 = vmatprep.mubr.bf16.mxu0 0
  %1454 = vmatmul.mubr.bf16.gmra.mxu0 %v1419
  %v1455 = vpop.f32.mrf.mxu0
  %v1456 = vadd.f32 %v1414, %v1455
  %v1457 = vpop.f32.mrf.mxu0
  %v1458 = vpop.f32.mrf.mxu0
  %v1459 = vadd.f32 %v1415, %v1458
  %v1460 = vpop.f32.mrf.mxu0
  %1461 = vdwg.mxu0
  %v1462 = vadd.f32 %v1456, %v489
  %v1463 = vadd.f32 %v1459, %v489
  %v1464 = vmul.f32 %v1462, 0.5
  %v1465 = vmul.f32 %v1463, 0.5
  %v1466 = vtanh.pop %v1464
  %v1467 = vtanh.pop %v1465
  %v1468 = vadd.f32 %v1466, 1.0
  %v1469 = vadd.f32 %v1467, 1.0
  %v1470 = vmul.f32 %v1468, 0.5
  %v1471 = vmul.f32 %v1469, 0.5
  %v1472 = vtanh.pop %v1462
  %v1473 = vtanh.pop %v1463
  %v1474 = vmul.f32 %v1470, %v1270
  %v1475 = vmul.f32 %v1471, %v1271
  %1478 = vrot.lane.b32.xlu0 %v1472, 64
  %v1479 = vpop.permute.xlu0 %1478
  %1480 = vrot.lane.b32.xlu0 %v1473, 64
  %v1481 = vpop.permute.xlu0 %1480
  %v1484 = vmul.f32 %v1470, %v1479
  %v1485 = vmul.f32 %v1471, %v1481
  %1488 = vrot.lane.b32.xlu0 %v1484, 32
  %v1489 = vpop.permute.xlu0 %1488
  %1490 = vrot.lane.b32.xlu0 %v1485, 32
  %v1491 = vpop.permute.xlu0 %1490
  %v1494 = vadd.f32 %v1474, %v1489
  %v1495 = vadd.f32 %v1475, %v1491
  %v1496 = vtanh.pop %v1494
  %v1497 = vtanh.pop %v1495
  %1500 = vrot.lane.b32.xlu0 %v1496, 64
  %v1501 = vpop.permute.xlu0 %1500
  %1502 = vrot.lane.b32.xlu0 %v1497, 64
  %v1503 = vpop.permute.xlu0 %1502
  %v1506 = vmul.f32 %v1470, %v1501
  %v1507 = vmul.f32 %v1471, %v1503
  %v1508 = vpack.c.bf16 %v1507, %v1506
  %v1510 = vunpack.c.l.b16 %v1508
  %v1511 = vunpack.c.h.b16 %v1508
  %v1512 = vpack.c.b16 %v1510, %v1510
  %v1513 = vpack.c.b16 %v1511, %v1511
  %1514 = vrot.lane.b32.xlu0 %v1512, 32
  %v1515 = vpop.permute.xlu0 %1514
  %1516 = vrot.lane.b32.xlu0 %v1513, 32
  %v1517 = vpop.permute.xlu0 %1516
  %s1520 = scalar_lea.vmem %s7, 32
  %1521 = vst.msk [vmem:[%s1520] sm:$0xf] %vm617, %v1515
  %1522 = vst.msk [vmem:[%s1520 + $0x4] sm:$0xf] %vm617, %v1517
  %s1523 = scalar_lea.vmem [#allocation3], 24
  %v1524 = vld [vmem:[%s1523] sm:$0xf]
  %v1525 = vld [vmem:[%s1523 + $0x4] sm:$0xf]
  %v1526 = vunpack.c.l.bf16 %v1524
  %v1527 = vunpack.c.l.bf16 %v1525
  %1528 = vrot.lane.b32.xlu0 %v1396, 32
  %v1529 = vpop.permute.xlu0 %1528
  %v1531 = vsel %vm514, %v1529, 0
  %1533 = vmatprep.subr.bf16.mxu0 0
  %1534 = vmatpush1.bf16.msra.mxu0 0
  %1535 = vmatprep.subr.bf16.mxu0 0
  %1536 = vmatpush1.bf16.msra.mxu0 0
  %1537 = vmatprep.subr.bf16.mxu0 0
  %1538 = vmatpush1.bf16.msra.mxu0 0
  %1539 = vmatprep.subr.bf16.mxu0 0
  %1540 = vmatpush1.bf16.msra.mxu0 0
  %1541 = vmatprep.subr.bf16.mxu0 0
  %1542 = vmatpush1.bf16.msra.mxu0 0
  %1543 = vmatprep.subr.bf16.mxu0 0
  %1544 = vmatpush1.bf16.msra.mxu0 0
  %1545 = vmatprep.subr.bf16.mxu0 0
  %1546 = vmatpush1.bf16.msra.mxu0 %v634
  %1547 = vmatprep.subr.bf16.mxu0 0
  %1548 = vmatpush1.bf16.msra.mxu0 %v633
  %1549 = vmatprep.subr.bf16.mxu0 0
  %1550 = vmatpush2.bf16.msra.mxu0 0
  %1551 = vmatprep.subr.bf16.mxu0 0
  %1552 = vmatpush2.bf16.msra.mxu0 0
  %1553 = vmatprep.subr.bf16.mxu0 0
  %1554 = vmatpush2.bf16.msra.mxu0 0
  %1555 = vmatprep.subr.bf16.mxu0 0
  %1556 = vmatpush2.bf16.msra.mxu0 0
  %1557 = vmatprep.subr.bf16.mxu0 0
  %1558 = vmatpush2.bf16.msra.mxu0 0
  %1559 = vmatprep.subr.bf16.mxu0 0
  %1560 = vmatpush2.bf16.msra.mxu0 0
  %1561 = vmatprep.subr.bf16.mxu0 0
  %1562 = vmatpush2.bf16.msra.mxu0 0
  %1563 = vmatprep.subr.bf16.mxu0 0
  %1564 = vmatpush2.bf16.msra.mxu0 0
  %1565 = vmatprep.mubr.bf16.mxu0 0
  %1566 = vmatmul.mubr.bf16.gmra.mxu0 %v1531
  %v1567 = vpop.f32.mrf.mxu0
  %v1568 = vadd.f32 %v1526, %v1567
  %v1569 = vpop.f32.mrf.mxu0
  %v1570 = vpop.f32.mrf.mxu0
  %v1571 = vadd.f32 %v1527, %v1570
  %v1572 = vpop.f32.mrf.mxu0
  %1573 = vdwg.mxu0
  %v1574 = vadd.f32 %v1568, %v496
  %v1575 = vadd.f32 %v1571, %v496
  %v1576 = vmul.f32 %v1574, 0.5
  %v1577 = vmul.f32 %v1575, 0.5
  %v1578 = vtanh.pop %v1576
  %v1579 = vtanh.pop %v1577
  %v1580 = vadd.f32 %v1578, 1.0
  %v1581 = vadd.f32 %v1579, 1.0
  %v1582 = vmul.f32 %v1580, 0.5
  %v1583 = vmul.f32 %v1581, 0.5
  %v1584 = vtanh.pop %v1574
  %v1585 = vtanh.pop %v1575
  %v1586 = vmul.f32 %v1582, %v1382
  %v1587 = vmul.f32 %v1583, %v1383
  %1590 = vrot.lane.b32.xlu0 %v1584, 64
  %v1591 = vpop.permute.xlu0 %1590
  %1592 = vrot.lane.b32.xlu0 %v1585, 64
  %v1593 = vpop.permute.xlu0 %1592
  %v1596 = vmul.f32 %v1582, %v1591
  %v1597 = vmul.f32 %v1583, %v1593
  %1600 = vrot.lane.b32.xlu0 %v1596, 32
  %v1601 = vpop.permute.xlu0 %1600
  %1602 = vrot.lane.b32.xlu0 %v1597, 32
  %v1603 = vpop.permute.xlu0 %1602
  %v1606 = vadd.f32 %v1586, %v1601
  %v1607 = vadd.f32 %v1587, %v1603
  %v1608 = vtanh.pop %v1606
  %v1609 = vtanh.pop %v1607
  %1612 = vrot.lane.b32.xlu0 %v1608, 64
  %v1613 = vpop.permute.xlu0 %1612
  %1614 = vrot.lane.b32.xlu0 %v1609, 64
  %v1615 = vpop.permute.xlu0 %1614
  %v1618 = vmul.f32 %v1582, %v1613
  %v1619 = vmul.f32 %v1583, %v1615
  %v1620 = vpack.c.bf16 %v1619, %v1618
  %v1622 = vunpack.c.l.b16 %v1620
  %v1623 = vunpack.c.h.b16 %v1620
  %v1624 = vpack.c.b16 %v1622, %v1622
  %v1625 = vpack.c.b16 %v1623, %v1623
  %1626 = vrot.lane.b32.xlu0 %v1624, 32
  %v1627 = vpop.permute.xlu0 %1626
  %1628 = vrot.lane.b32.xlu0 %v1625, 32
  %v1629 = vpop.permute.xlu0 %1628
  %s1632 = scalar_lea.vmem %s8, 24
  %1633 = vst.msk [vmem:[%s1632] sm:$0xf] %vm617, %v1627
  %1634 = vst.msk [vmem:[%s1632 + $0x4] sm:$0xf] %vm617, %v1629
  %s1635 = scalar_lea.vmem [#allocation2], 40
  %v1636 = vld [vmem:[%s1635] sm:$0xf]
  %v1637 = vld [vmem:[%s1635 + $0x4] sm:$0xf]
  %v1638 = vunpack.c.l.bf16 %v1636
  %v1639 = vunpack.c.l.bf16 %v1637
  %1640 = vrot.lane.b32.xlu0 %v1508, 32
  %v1641 = vpop.permute.xlu0 %1640
  %v1643 = vsel %vm514, %v1641, 0
  %1645 = vmatprep.subr.bf16.mxu0 0
  %1646 = vmatpush1.bf16.msra.mxu0 0
  %1647 = vmatprep.subr.bf16.mxu0 0
  %1648 = vmatpush1.bf16.msra.mxu0 0
  %1649 = vmatprep.subr.bf16.mxu0 0
  %1650 = vmatpush1.bf16.msra.mxu0 0
  %1651 = vmatprep.subr.bf16.mxu0 0
  %1652 = vmatpush1.bf16.msra.mxu0 0
  %1653 = vmatprep.subr.bf16.mxu0 0
  %1654 = vmatpush1.bf16.msra.mxu0 0
  %1655 = vmatprep.subr.bf16.mxu0 0
  %1656 = vmatpush1.bf16.msra.mxu0 0
  %1657 = vmatprep.subr.bf16.mxu0 0
  %1658 = vmatpush1.bf16.msra.mxu0 %v511
  %1659 = vmatprep.subr.bf16.mxu0 0
  %1660 = vmatpush1.bf16.msra.mxu0 %v510
  %1661 = vmatprep.subr.bf16.mxu0 0
  %1662 = vmatpush2.bf16.msra.mxu0 0
  %1663 = vmatprep.subr.bf16.mxu0 0
  %1664 = vmatpush2.bf16.msra.mxu0 0
  %1665 = vmatprep.subr.bf16.mxu0 0
  %1666 = vmatpush2.bf16.msra.mxu0 0
  %1667 = vmatprep.subr.bf16.mxu0 0
  %1668 = vmatpush2.bf16.msra.mxu0 0
  %1669 = vmatprep.subr.bf16.mxu0 0
  %1670 = vmatpush2.bf16.msra.mxu0 0
  %1671 = vmatprep.subr.bf16.mxu0 0
  %1672 = vmatpush2.bf16.msra.mxu0 0
  %1673 = vmatprep.subr.bf16.mxu0 0
  %1674 = vmatpush2.bf16.msra.mxu0 0
  %1675 = vmatprep.subr.bf16.mxu0 0
  %1676 = vmatpush2.bf16.msra.mxu0 0
  %1677 = vmatprep.mubr.bf16.mxu0 0
  %1678 = vmatmul.mubr.bf16.gmra.mxu0 %v1643
  %v1679 = vpop.f32.mrf.mxu0
  %v1680 = vadd.f32 %v1638, %v1679
  %v1681 = vpop.f32.mrf.mxu0
  %v1682 = vpop.f32.mrf.mxu0
  %v1683 = vadd.f32 %v1639, %v1682
  %v1684 = vpop.f32.mrf.mxu0
  %1685 = vdwg.mxu0
  %v1686 = vadd.f32 %v1680, %v489
  %v1687 = vadd.f32 %v1683, %v489
  %v1688 = vmul.f32 %v1686, 0.5
  %v1689 = vmul.f32 %v1687, 0.5
  %v1690 = vtanh.pop %v1688
  %v1691 = vtanh.pop %v1689
  %v1692 = vadd.f32 %v1690, 1.0
  %v1693 = vadd.f32 %v1691, 1.0
  %v1694 = vmul.f32 %v1692, 0.5
  %v1695 = vmul.f32 %v1693, 0.5
  %v1696 = vtanh.pop %v1686
  %v1697 = vtanh.pop %v1687
  %v1698 = vmul.f32 %v1694, %v1494
  %v1699 = vmul.f32 %v1695, %v1495
  %1702 = vrot.lane.b32.xlu0 %v1696, 64
  %v1703 = vpop.permute.xlu0 %1702
  %1704 = vrot.lane.b32.xlu0 %v1697, 64
  %v1705 = vpop.permute.xlu0 %1704
  %v1708 = vmul.f32 %v1694, %v1703
  %v1709 = vmul.f32 %v1695, %v1705
  %1712 = vrot.lane.b32.xlu0 %v1708, 32
  %v1713 = vpop.permute.xlu0 %1712
  %1714 = vrot.lane.b32.xlu0 %v1709, 32
  %v1715 = vpop.permute.xlu0 %1714
  %v1718 = vadd.f32 %v1698, %v1713
  %v1719 = vadd.f32 %v1699, %v1715
  %v1720 = vtanh.pop %v1718
  %v1721 = vtanh.pop %v1719
  %1724 = vrot.lane.b32.xlu0 %v1720, 64
  %v1725 = vpop.permute.xlu0 %1724
  %1726 = vrot.lane.b32.xlu0 %v1721, 64
  %v1727 = vpop.permute.xlu0 %1726
  %v1730 = vmul.f32 %v1694, %v1725
  %v1731 = vmul.f32 %v1695, %v1727
  %v1732 = vpack.c.bf16 %v1731, %v1730
  %v1734 = vunpack.c.l.b16 %v1732
  %v1735 = vunpack.c.h.b16 %v1732
  %v1736 = vpack.c.b16 %v1734, %v1734
  %v1737 = vpack.c.b16 %v1735, %v1735
  %1738 = vrot.lane.b32.xlu0 %v1736, 32
  %v1739 = vpop.permute.xlu0 %1738
  %1740 = vrot.lane.b32.xlu0 %v1737, 32
  %v1741 = vpop.permute.xlu0 %1740
  %s1744 = scalar_lea.vmem %s7, 40
  %1745 = vst.msk [vmem:[%s1744] sm:$0xf] %vm617, %v1739
  %1746 = vst.msk [vmem:[%s1744 + $0x4] sm:$0xf] %vm617, %v1741
  %s1747 = scalar_lea.vmem [#allocation3], 16
  %v1748 = vld [vmem:[%s1747] sm:$0xf]
  %v1749 = vld [vmem:[%s1747 + $0x4] sm:$0xf]
  %v1750 = vunpack.c.l.bf16 %v1748
  %v1751 = vunpack.c.l.bf16 %v1749
  %1752 = vrot.lane.b32.xlu0 %v1620, 32
  %v1753 = vpop.permute.xlu0 %1752
  %v1755 = vsel %vm514, %v1753, 0
  %1757 = vmatprep.subr.bf16.mxu0 0
  %1758 = vmatpush1.bf16.msra.mxu0 0
  %1759 = vmatprep.subr.bf16.mxu0 0
  %1760 = vmatpush1.bf16.msra.mxu0 0
  %1761 = vmatprep.subr.bf16.mxu0 0
  %1762 = vmatpush1.bf16.msra.mxu0 0
  %1763 = vmatprep.subr.bf16.mxu0 0
  %1764 = vmatpush1.bf16.msra.mxu0 0
  %1765 = vmatprep.subr.bf16.mxu0 0
  %1766 = vmatpush1.bf16.msra.mxu0 0
  %1767 = vmatprep.subr.bf16.mxu0 0
  %1768 = vmatpush1.bf16.msra.mxu0 0
  %1769 = vmatprep.subr.bf16.mxu0 0
  %1770 = vmatpush1.bf16.msra.mxu0 %v634
  %1771 = vmatprep.subr.bf16.mxu0 0
  %1772 = vmatpush1.bf16.msra.mxu0 %v633
  %1773 = vmatprep.subr.bf16.mxu0 0
  %1774 = vmatpush2.bf16.msra.mxu0 0
  %1775 = vmatprep.subr.bf16.mxu0 0
  %1776 = vmatpush2.bf16.msra.mxu0 0
  %1777 = vmatprep.subr.bf16.mxu0 0
  %1778 = vmatpush2.bf16.msra.mxu0 0
  %1779 = vmatprep.subr.bf16.mxu0 0
  %1780 = vmatpush2.bf16.msra.mxu0 0
  %1781 = vmatprep.subr.bf16.mxu0 0
  %1782 = vmatpush2.bf16.msra.mxu0 0
  %1783 = vmatprep.subr.bf16.mxu0 0
  %1784 = vmatpush2.bf16.msra.mxu0 0
  %1785 = vmatprep.subr.bf16.mxu0 0
  %1786 = vmatpush2.bf16.msra.mxu0 0
  %1787 = vmatprep.subr.bf16.mxu0 0
  %1788 = vmatpush2.bf16.msra.mxu0 0
  %1789 = vmatprep.mubr.bf16.mxu0 0
  %1790 = vmatmul.mubr.bf16.gmra.mxu0 %v1755
  %v1791 = vpop.f32.mrf.mxu0
  %v1792 = vadd.f32 %v1750, %v1791
  %v1793 = vpop.f32.mrf.mxu0
  %v1794 = vpop.f32.mrf.mxu0
  %v1795 = vadd.f32 %v1751, %v1794
  %v1796 = vpop.f32.mrf.mxu0
  %1797 = vdwg.mxu0
  %v1798 = vadd.f32 %v1792, %v496
  %v1799 = vadd.f32 %v1795, %v496
  %v1800 = vmul.f32 %v1798, 0.5
  %v1801 = vmul.f32 %v1799, 0.5
  %v1802 = vtanh.pop %v1800
  %v1803 = vtanh.pop %v1801
  %v1804 = vadd.f32 %v1802, 1.0
  %v1805 = vadd.f32 %v1803, 1.0
  %v1806 = vmul.f32 %v1804, 0.5
  %v1807 = vmul.f32 %v1805, 0.5
  %v1808 = vtanh.pop %v1798
  %v1809 = vtanh.pop %v1799
  %v1810 = vmul.f32 %v1806, %v1606
  %v1811 = vmul.f32 %v1807, %v1607
  %1814 = vrot.lane.b32.xlu0 %v1808, 64
  %v1815 = vpop.permute.xlu0 %1814
  %1816 = vrot.lane.b32.xlu0 %v1809, 64
  %v1817 = vpop.permute.xlu0 %1816
  %v1820 = vmul.f32 %v1806, %v1815
  %v1821 = vmul.f32 %v1807, %v1817
  %1824 = vrot.lane.b32.xlu0 %v1820, 32
  %v1825 = vpop.permute.xlu0 %1824
  %1826 = vrot.lane.b32.xlu0 %v1821, 32
  %v1827 = vpop.permute.xlu0 %1826
  %v1830 = vadd.f32 %v1810, %v1825
  %v1831 = vadd.f32 %v1811, %v1827
  %v1832 = vtanh.pop %v1830
  %v1833 = vtanh.pop %v1831
  %1836 = vrot.lane.b32.xlu0 %v1832, 64
  %v1837 = vpop.permute.xlu0 %1836
  %1838 = vrot.lane.b32.xlu0 %v1833, 64
  %v1839 = vpop.permute.xlu0 %1838
  %v1842 = vmul.f32 %v1806, %v1837
  %v1843 = vmul.f32 %v1807, %v1839
  %v1844 = vpack.c.bf16 %v1843, %v1842
  %v1846 = vunpack.c.l.b16 %v1844
  %v1847 = vunpack.c.h.b16 %v1844
  %v1848 = vpack.c.b16 %v1846, %v1846
  %v1849 = vpack.c.b16 %v1847, %v1847
  %1850 = vrot.lane.b32.xlu0 %v1848, 32
  %v1851 = vpop.permute.xlu0 %1850
  %1852 = vrot.lane.b32.xlu0 %v1849, 32
  %v1853 = vpop.permute.xlu0 %1852
  %s1856 = scalar_lea.vmem %s8, 16
  %1857 = vst.msk [vmem:[%s1856] sm:$0xf] %vm617, %v1851
  %1858 = vst.msk [vmem:[%s1856 + $0x4] sm:$0xf] %vm617, %v1853
  %s1859 = scalar_lea.vmem [#allocation2], 48
  %v1860 = vld [vmem:[%s1859] sm:$0xf]
  %v1861 = vld [vmem:[%s1859 + $0x4] sm:$0xf]
  %v1862 = vunpack.c.l.bf16 %v1860
  %v1863 = vunpack.c.l.bf16 %v1861
  %1864 = vrot.lane.b32.xlu0 %v1732, 32
  %v1865 = vpop.permute.xlu0 %1864
  %v1867 = vsel %vm514, %v1865, 0
  %1869 = vmatprep.subr.bf16.mxu0 0
  %1870 = vmatpush1.bf16.msra.mxu0 0
  %1871 = vmatprep.subr.bf16.mxu0 0
  %1872 = vmatpush1.bf16.msra.mxu0 0
  %1873 = vmatprep.subr.bf16.mxu0 0
  %1874 = vmatpush1.bf16.msra.mxu0 0
  %1875 = vmatprep.subr.bf16.mxu0 0
  %1876 = vmatpush1.bf16.msra.mxu0 0
  %1877 = vmatprep.subr.bf16.mxu0 0
  %1878 = vmatpush1.bf16.msra.mxu0 0
  %1879 = vmatprep.subr.bf16.mxu0 0
  %1880 = vmatpush1.bf16.msra.mxu0 0
  %1881 = vmatprep.subr.bf16.mxu0 0
  %1882 = vmatpush1.bf16.msra.mxu0 %v511
  %1883 = vmatprep.subr.bf16.mxu0 0
  %1884 = vmatpush1.bf16.msra.mxu0 %v510
  %1885 = vmatprep.subr.bf16.mxu0 0
  %1886 = vmatpush2.bf16.msra.mxu0 0
  %1887 = vmatprep.subr.bf16.mxu0 0
  %1888 = vmatpush2.bf16.msra.mxu0 0
  %1889 = vmatprep.subr.bf16.mxu0 0
  %1890 = vmatpush2.bf16.msra.mxu0 0
  %1891 = vmatprep.subr.bf16.mxu0 0
  %1892 = vmatpush2.bf16.msra.mxu0 0
  %1893 = vmatprep.subr.bf16.mxu0 0
  %1894 = vmatpush2.bf16.msra.mxu0 0
  %1895 = vmatprep.subr.bf16.mxu0 0
  %1896 = vmatpush2.bf16.msra.mxu0 0
  %1897 = vmatprep.subr.bf16.mxu0 0
  %1898 = vmatpush2.bf16.msra.mxu0 0
  %1899 = vmatprep.subr.bf16.mxu0 0
  %1900 = vmatpush2.bf16.msra.mxu0 0
  %1901 = vmatprep.mubr.bf16.mxu0 0
  %1902 = vmatmul.mubr.bf16.gmra.mxu0 %v1867
  %v1903 = vpop.f32.mrf.mxu0
  %v1904 = vadd.f32 %v1862, %v1903
  %v1905 = vpop.f32.mrf.mxu0
  %v1906 = vpop.f32.mrf.mxu0
  %v1907 = vadd.f32 %v1863, %v1906
  %v1908 = vpop.f32.mrf.mxu0
  %1909 = vdwg.mxu0
  %v1910 = vadd.f32 %v1904, %v489
  %v1911 = vadd.f32 %v1907, %v489
  %v1912 = vmul.f32 %v1910, 0.5
  %v1913 = vmul.f32 %v1911, 0.5
  %v1914 = vtanh.pop %v1912
  %v1915 = vtanh.pop %v1913
  %v1916 = vadd.f32 %v1914, 1.0
  %v1917 = vadd.f32 %v1915, 1.0
  %v1918 = vmul.f32 %v1916, 0.5
  %v1919 = vmul.f32 %v1917, 0.5
  %v1920 = vtanh.pop %v1910
  %v1921 = vtanh.pop %v1911
  %v1922 = vmul.f32 %v1918, %v1718
  %v1923 = vmul.f32 %v1919, %v1719
  %1926 = vrot.lane.b32.xlu0 %v1920, 64
  %v1927 = vpop.permute.xlu0 %1926
  %1928 = vrot.lane.b32.xlu0 %v1921, 64
  %v1929 = vpop.permute.xlu0 %1928
  %v1932 = vmul.f32 %v1918, %v1927
  %v1933 = vmul.f32 %v1919, %v1929
  %1936 = vrot.lane.b32.xlu0 %v1932, 32
  %v1937 = vpop.permute.xlu0 %1936
  %1938 = vrot.lane.b32.xlu0 %v1933, 32
  %v1939 = vpop.permute.xlu0 %1938
  %v1942 = vadd.f32 %v1922, %v1937
  %v1943 = vadd.f32 %v1923, %v1939
  %v1944 = vtanh.pop %v1942
  %v1945 = vtanh.pop %v1943
  %1948 = vrot.lane.b32.xlu0 %v1944, 64
  %v1949 = vpop.permute.xlu0 %1948
  %1950 = vrot.lane.b32.xlu0 %v1945, 64
  %v1951 = vpop.permute.xlu0 %1950
  %v1954 = vmul.f32 %v1918, %v1949
  %v1955 = vmul.f32 %v1919, %v1951
  %v1956 = vpack.c.bf16 %v1955, %v1954
  %v1958 = vunpack.c.l.b16 %v1956
  %v1959 = vunpack.c.h.b16 %v1956
  %v1960 = vpack.c.b16 %v1958, %v1958
  %v1961 = vpack.c.b16 %v1959, %v1959
  %1962 = vrot.lane.b32.xlu0 %v1960, 32
  %v1963 = vpop.permute.xlu0 %1962
  %1964 = vrot.lane.b32.xlu0 %v1961, 32
  %v1965 = vpop.permute.xlu0 %1964
  %s1968 = scalar_lea.vmem %s7, 48
  %1969 = vst.msk [vmem:[%s1968] sm:$0xf] %vm617, %v1963
  %1970 = vst.msk [vmem:[%s1968 + $0x4] sm:$0xf] %vm617, %v1965
  %s1971 = scalar_lea.vmem [#allocation3], 8
  %v1972 = vld [vmem:[%s1971] sm:$0xf]
  %v1973 = vld [vmem:[%s1971 + $0x4] sm:$0xf]
  %v1974 = vunpack.c.l.bf16 %v1972
  %v1975 = vunpack.c.l.bf16 %v1973
  %1976 = vrot.lane.b32.xlu0 %v1844, 32
  %v1977 = vpop.permute.xlu0 %1976
  %v1979 = vsel %vm514, %v1977, 0
  %1981 = vmatprep.subr.bf16.mxu0 0
  %1982 = vmatpush1.bf16.msra.mxu0 0
  %1983 = vmatprep.subr.bf16.mxu0 0
  %1984 = vmatpush1.bf16.msra.mxu0 0
  %1985 = vmatprep.subr.bf16.mxu0 0
  %1986 = vmatpush1.bf16.msra.mxu0 0
  %1987 = vmatprep.subr.bf16.mxu0 0
  %1988 = vmatpush1.bf16.msra.mxu0 0
  %1989 = vmatprep.subr.bf16.mxu0 0
  %1990 = vmatpush1.bf16.msra.mxu0 0
  %1991 = vmatprep.subr.bf16.mxu0 0
  %1992 = vmatpush1.bf16.msra.mxu0 0
  %1993 = vmatprep.subr.bf16.mxu0 0
  %1994 = vmatpush1.bf16.msra.mxu0 %v634
  %1995 = vmatprep.subr.bf16.mxu0 0
  %1996 = vmatpush1.bf16.msra.mxu0 %v633
  %1997 = vmatprep.subr.bf16.mxu0 0
  %1998 = vmatpush2.bf16.msra.mxu0 0
  %1999 = vmatprep.subr.bf16.mxu0 0
  %2000 = vmatpush2.bf16.msra.mxu0 0
  %2001 = vmatprep.subr.bf16.mxu0 0
  %2002 = vmatpush2.bf16.msra.mxu0 0
  %2003 = vmatprep.subr.bf16.mxu0 0
  %2004 = vmatpush2.bf16.msra.mxu0 0
  %2005 = vmatprep.subr.bf16.mxu0 0
  %2006 = vmatpush2.bf16.msra.mxu0 0
  %2007 = vmatprep.subr.bf16.mxu0 0
  %2008 = vmatpush2.bf16.msra.mxu0 0
  %2009 = vmatprep.subr.bf16.mxu0 0
  %2010 = vmatpush2.bf16.msra.mxu0 0
  %2011 = vmatprep.subr.bf16.mxu0 0
  %2012 = vmatpush2.bf16.msra.mxu0 0
  %2013 = vmatprep.mubr.bf16.mxu0 0
  %2014 = vmatmul.mubr.bf16.gmra.mxu0 %v1979
  %v2015 = vpop.f32.mrf.mxu0
  %v2016 = vadd.f32 %v1974, %v2015
  %v2017 = vpop.f32.mrf.mxu0
  %v2018 = vpop.f32.mrf.mxu0
  %v2019 = vadd.f32 %v1975, %v2018
  %v2020 = vpop.f32.mrf.mxu0
  %2021 = vdwg.mxu0
  %v2022 = vadd.f32 %v2016, %v496
  %v2023 = vadd.f32 %v2019, %v496
  %v2024 = vmul.f32 %v2022, 0.5
  %v2025 = vmul.f32 %v2023, 0.5
  %v2026 = vtanh.pop %v2024
  %v2027 = vtanh.pop %v2025
  %v2028 = vadd.f32 %v2026, 1.0
  %v2029 = vadd.f32 %v2027, 1.0
  %v2030 = vmul.f32 %v2028, 0.5
  %v2031 = vmul.f32 %v2029, 0.5
  %v2032 = vtanh.pop %v2022
  %v2033 = vtanh.pop %v2023
  %v2034 = vmul.f32 %v2030, %v1830
  %v2035 = vmul.f32 %v2031, %v1831
  %2038 = vrot.lane.b32.xlu0 %v2032, 64
  %v2039 = vpop.permute.xlu0 %2038
  %2040 = vrot.lane.b32.xlu0 %v2033, 64
  %v2041 = vpop.permute.xlu0 %2040
  %v2044 = vmul.f32 %v2030, %v2039
  %v2045 = vmul.f32 %v2031, %v2041
  %2048 = vrot.lane.b32.xlu0 %v2044, 32
  %v2049 = vpop.permute.xlu0 %2048
  %2050 = vrot.lane.b32.xlu0 %v2045, 32
  %v2051 = vpop.permute.xlu0 %2050
  %v2054 = vadd.f32 %v2034, %v2049
  %v2055 = vadd.f32 %v2035, %v2051
  %v2056 = vtanh.pop %v2054
  %v2057 = vtanh.pop %v2055
  %2060 = vrot.lane.b32.xlu0 %v2056, 64
  %v2061 = vpop.permute.xlu0 %2060
  %2062 = vrot.lane.b32.xlu0 %v2057, 64
  %v2063 = vpop.permute.xlu0 %2062
  %v2066 = vmul.f32 %v2030, %v2061
  %v2067 = vmul.f32 %v2031, %v2063
  %v2068 = vpack.c.bf16 %v2067, %v2066
  %v2070 = vunpack.c.l.b16 %v2068
  %v2071 = vunpack.c.h.b16 %v2068
  %v2072 = vpack.c.b16 %v2070, %v2070
  %v2073 = vpack.c.b16 %v2071, %v2071
  %2074 = vrot.lane.b32.xlu0 %v2072, 32
  %v2075 = vpop.permute.xlu0 %2074
  %2076 = vrot.lane.b32.xlu0 %v2073, 32
  %v2077 = vpop.permute.xlu0 %2076
  %s2080 = scalar_lea.vmem %s8, 8
  %2081 = vst.msk [vmem:[%s2080] sm:$0xf] %vm617, %v2075
  %2082 = vst.msk [vmem:[%s2080 + $0x4] sm:$0xf] %vm617, %v2077
  %s2083 = scalar_lea.vmem [#allocation2], 56
  %v2084 = vld [vmem:[%s2083] sm:$0xf]
  %v2085 = vld [vmem:[%s2083 + $0x4] sm:$0xf]
  %v2086 = vunpack.c.l.bf16 %v2084
  %v2087 = vunpack.c.l.bf16 %v2085
  %2088 = vrot.lane.b32.xlu0 %v1956, 32
  %v2089 = vpop.permute.xlu0 %2088
  %v2091 = vsel %vm514, %v2089, 0
  %2093 = vmatprep.subr.bf16.mxu0 0
  %2094 = vmatpush1.bf16.msra.mxu0 0
  %2095 = vmatprep.subr.bf16.mxu0 0
  %2096 = vmatpush1.bf16.msra.mxu0 0
  %2097 = vmatprep.subr.bf16.mxu0 0
  %2098 = vmatpush1.bf16.msra.mxu0 0
  %2099 = vmatprep.subr.bf16.mxu0 0
  %2100 = vmatpush1.bf16.msra.mxu0 0
  %2101 = vmatprep.subr.bf16.mxu0 0
  %2102 = vmatpush1.bf16.msra.mxu0 0
  %2103 = vmatprep.subr.bf16.mxu0 0
  %2104 = vmatpush1.bf16.msra.mxu0 0
  %2105 = vmatprep.subr.bf16.mxu0 0
  %2106 = vmatpush1.bf16.msra.mxu0 %v511
  %2107 = vmatprep.subr.bf16.mxu0 0
  %2108 = vmatpush1.bf16.msra.mxu0 %v510
  %2109 = vmatprep.subr.bf16.mxu0 0
  %2110 = vmatpush2.bf16.msra.mxu0 0
  %2111 = vmatprep.subr.bf16.mxu0 0
  %2112 = vmatpush2.bf16.msra.mxu0 0
  %2113 = vmatprep.subr.bf16.mxu0 0
  %2114 = vmatpush2.bf16.msra.mxu0 0
  %2115 = vmatprep.subr.bf16.mxu0 0
  %2116 = vmatpush2.bf16.msra.mxu0 0
  %2117 = vmatprep.subr.bf16.mxu0 0
  %2118 = vmatpush2.bf16.msra.mxu0 0
  %2119 = vmatprep.subr.bf16.mxu0 0
  %2120 = vmatpush2.bf16.msra.mxu0 0
  %2121 = vmatprep.subr.bf16.mxu0 0
  %2122 = vmatpush2.bf16.msra.mxu0 0
  %2123 = vmatprep.subr.bf16.mxu0 0
  %2124 = vmatpush2.bf16.msra.mxu0 0
  %2125 = vmatprep.mubr.bf16.mxu0 0
  %2126 = vmatmul.mubr.bf16.gmra.mxu0 %v2091
  %v2127 = vpop.f32.mrf.mxu0
  %v2128 = vadd.f32 %v2086, %v2127
  %v2129 = vpop.f32.mrf.mxu0
  %v2130 = vpop.f32.mrf.mxu0
  %v2131 = vadd.f32 %v2087, %v2130
  %v2132 = vpop.f32.mrf.mxu0
  %2133 = vdwg.mxu0
  %v2134 = vadd.f32 %v2128, %v489
  %v2135 = vadd.f32 %v2131, %v489
  %v2136 = vmul.f32 %v2134, 0.5
  %v2137 = vmul.f32 %v2135, 0.5
  %v2138 = vtanh.pop %v2136
  %v2139 = vtanh.pop %v2137
  %v2140 = vadd.f32 %v2138, 1.0
  %v2141 = vadd.f32 %v2139, 1.0
  %v2142 = vmul.f32 %v2140, 0.5
  %v2143 = vmul.f32 %v2141, 0.5
  %v2144 = vtanh.pop %v2134
  %v2145 = vtanh.pop %v2135
  %v2146 = vmul.f32 %v2142, %v1942
  %v2147 = vmul.f32 %v2143, %v1943
  %2150 = vrot.lane.b32.xlu0 %v2144, 64
  %v2151 = vpop.permute.xlu0 %2150
  %2152 = vrot.lane.b32.xlu0 %v2145, 64
  %v2153 = vpop.permute.xlu0 %2152
  %v2156 = vmul.f32 %v2142, %v2151
  %v2157 = vmul.f32 %v2143, %v2153
  %2160 = vrot.lane.b32.xlu0 %v2156, 32
  %v2161 = vpop.permute.xlu0 %2160
  %2162 = vrot.lane.b32.xlu0 %v2157, 32
  %v2163 = vpop.permute.xlu0 %2162
  %v2166 = vadd.f32 %v2146, %v2161
  %v2167 = vadd.f32 %v2147, %v2163
  %v2168 = vtanh.pop %v2166
  %v2169 = vtanh.pop %v2167
  %2172 = vrot.lane.b32.xlu0 %v2168, 64
  %v2173 = vpop.permute.xlu0 %2172
  %2174 = vrot.lane.b32.xlu0 %v2169, 64
  %v2175 = vpop.permute.xlu0 %2174
  %v2178 = vmul.f32 %v2142, %v2173
  %v2179 = vmul.f32 %v2143, %v2175
  %v2180 = vpack.c.bf16 %v2179, %v2178
  %v2182 = vunpack.c.l.b16 %v2180
  %v2183 = vunpack.c.h.b16 %v2180
  %v2184 = vpack.c.b16 %v2182, %v2182
  %v2185 = vpack.c.b16 %v2183, %v2183
  %2186 = vrot.lane.b32.xlu0 %v2184, 32
  %v2187 = vpop.permute.xlu0 %2186
  %2188 = vrot.lane.b32.xlu0 %v2185, 32
  %v2189 = vpop.permute.xlu0 %2188
  %s2192 = scalar_lea.vmem %s7, 56
  %2193 = vst.msk [vmem:[%s2192] sm:$0xf] %vm617, %v2187
  %2194 = vst.msk [vmem:[%s2192 + $0x4] sm:$0xf] %vm617, %v2189
  %v2195 = vld [vmem:[#allocation3] sm:$0xf]
  %v2196 = vld [vmem:[#allocation3 + $0x4] sm:$0xf]
  %v2197 = vunpack.c.l.bf16 %v2195
  %v2198 = vunpack.c.l.bf16 %v2196
  %2199 = vrot.lane.b32.xlu0 %v2068, 32
  %v2200 = vpop.permute.xlu0 %2199
  %v2202 = vsel %vm514, %v2200, 0
  %2204 = vmatprep.subr.bf16.mxu0 0
  %2205 = vmatpush1.bf16.msra.mxu0 0
  %2206 = vmatprep.subr.bf16.mxu0 0
  %2207 = vmatpush1.bf16.msra.mxu0 0
  %2208 = vmatprep.subr.bf16.mxu0 0
  %2209 = vmatpush1.bf16.msra.mxu0 0
  %2210 = vmatprep.subr.bf16.mxu0 0
  %2211 = vmatpush1.bf16.msra.mxu0 0
  %2212 = vmatprep.subr.bf16.mxu0 0
  %2213 = vmatpush1.bf16.msra.mxu0 0
  %2214 = vmatprep.subr.bf16.mxu0 0
  %2215 = vmatpush1.bf16.msra.mxu0 0
  %2216 = vmatprep.subr.bf16.mxu0 0
  %2217 = vmatpush1.bf16.msra.mxu0 %v634
  %2218 = vmatprep.subr.bf16.mxu0 0
  %2219 = vmatpush1.bf16.msra.mxu0 %v633
  %2220 = vmatprep.subr.bf16.mxu0 0
  %2221 = vmatpush2.bf16.msra.mxu0 0
  %2222 = vmatprep.subr.bf16.mxu0 0
  %2223 = vmatpush2.bf16.msra.mxu0 0
  %2224 = vmatprep.subr.bf16.mxu0 0
  %2225 = vmatpush2.bf16.msra.mxu0 0
  %2226 = vmatprep.subr.bf16.mxu0 0
  %2227 = vmatpush2.bf16.msra.mxu0 0
  %2228 = vmatprep.subr.bf16.mxu0 0
  %2229 = vmatpush2.bf16.msra.mxu0 0
  %2230 = vmatprep.subr.bf16.mxu0 0
  %2231 = vmatpush2.bf16.msra.mxu0 0
  %2232 = vmatprep.subr.bf16.mxu0 0
  %2233 = vmatpush2.bf16.msra.mxu0 0
  %2234 = vmatprep.subr.bf16.mxu0 0
  %2235 = vmatpush2.bf16.msra.mxu0 0
  %2236 = vmatprep.mubr.bf16.mxu0 0
  %2237 = vmatmul.mubr.bf16.gmra.mxu0 %v2202
  %v2238 = vpop.f32.mrf.mxu0
  %v2239 = vadd.f32 %v2197, %v2238
  %v2240 = vpop.f32.mrf.mxu0
  %v2241 = vpop.f32.mrf.mxu0
  %v2242 = vadd.f32 %v2198, %v2241
  %v2243 = vpop.f32.mrf.mxu0
  %2244 = vdwg.mxu0
  %v2245 = vadd.f32 %v2239, %v496
  %v2246 = vadd.f32 %v2242, %v496
  %v2247 = vmul.f32 %v2245, 0.5
  %v2248 = vmul.f32 %v2246, 0.5
  %v2249 = vtanh.pop %v2247
  %v2250 = vtanh.pop %v2248
  %v2251 = vadd.f32 %v2249, 1.0
  %v2252 = vadd.f32 %v2250, 1.0
  %v2253 = vmul.f32 %v2251, 0.5
  %v2254 = vmul.f32 %v2252, 0.5
  %v2255 = vtanh.pop %v2245
  %v2256 = vtanh.pop %v2246
  %v2257 = vmul.f32 %v2253, %v2054
  %v2258 = vmul.f32 %v2254, %v2055
  %2261 = vrot.lane.b32.xlu0 %v2255, 64
  %v2262 = vpop.permute.xlu0 %2261
  %2263 = vrot.lane.b32.xlu0 %v2256, 64
  %v2264 = vpop.permute.xlu0 %2263
  %v2267 = vmul.f32 %v2253, %v2262
  %v2268 = vmul.f32 %v2254, %v2264
  %2271 = vrot.lane.b32.xlu0 %v2267, 32
  %v2272 = vpop.permute.xlu0 %2271
  %2273 = vrot.lane.b32.xlu0 %v2268, 32
  %v2274 = vpop.permute.xlu0 %2273
  %v2277 = vadd.f32 %v2257, %v2272
  %v2278 = vadd.f32 %v2258, %v2274
  %v2279 = vtanh.pop %v2277
  %v2280 = vtanh.pop %v2278
  %2283 = vrot.lane.b32.xlu0 %v2279, 64
  %v2284 = vpop.permute.xlu0 %2283
  %2285 = vrot.lane.b32.xlu0 %v2280, 64
  %v2286 = vpop.permute.xlu0 %2285
  %v2289 = vmul.f32 %v2253, %v2284
  %v2290 = vmul.f32 %v2254, %v2286
  %v2291 = vpack.c.bf16 %v2290, %v2289
  %v2293 = vunpack.c.l.b16 %v2291
  %v2294 = vunpack.c.h.b16 %v2291
  %v2295 = vpack.c.b16 %v2293, %v2293
  %v2296 = vpack.c.b16 %v2294, %v2294
  %2297 = vrot.lane.b32.xlu0 %v2295, 32
  %v2298 = vpop.permute.xlu0 %2297
  %2299 = vrot.lane.b32.xlu0 %v2296, 32
  %v2300 = vpop.permute.xlu0 %2299
  %2303 = vst.msk [vmem:[%s8] sm:$0xf] %vm617, %v2298
  %2304 = vst.msk [vmem:[%s8 + $0x4] sm:$0xf] %vm617, %v2300
  // Predicated region
  $region30: #{seq_model_forward.2} parent=0 // pred_check
    _
  $region31: #{seq_model_forward.2} parent=0 // pred_check_branch
    %2306 = sbr.rel (0) target = $region33
  $region32: #{seq_model_forward.2} parent=0 // pred_region
    _
  $region33: #{seq_model_forward.2} parent=0 // pred_fallthru
    _
  // Predicated region
  $region34: #{seq_model_forward.2} parent=0 // pred_check
    _
  $region35: #{seq_model_forward.2} parent=0 // pred_check_branch
    %2308 = sbr.rel (0) target = $region37
  $region36: #{seq_model_forward.2} parent=0 // pred_region
    _
  $region37: #{seq_model_forward.2} parent=0 // pred_fallthru
    _
  // Predicated region
  $region38: #{seq_model_forward.2} parent=0 // pred_check
    _
  $region39: #{seq_model_forward.2} parent=0 // pred_check_branch
    %2310 = sbr.rel (0) target = $region41
  $region40: #{seq_model_forward.2} parent=0 // pred_region
    _
  $region41: #{seq_model_forward.2} parent=0 // pred_fallthru
    _
  // Predicated region
  $region42: #{seq_model_forward.2} parent=0 // pred_check
    _
  $region43: #{seq_model_forward.2} parent=0 // pred_check_branch
    %2312 = sbr.rel (0) target = $region45
  $region44: #{seq_model_forward.2} parent=0 // pred_region
    _
  $region45: #{seq_model_forward.2} parent=0 // pred_fallthru
    _

// kernel: seq_model_forward.3
$region0: #{seq_model_forward.3}
  #allocation0 [shape = 'u32[]', space=smem, size = 0x4, offset = 0x4, fixed_abs, tag = 'smem constant byte address 0x4 - core index']
  #allocation1 [shape = 'u32[144,128]{1,0:T(1,128)}', space=vmem, size = 0x12000, scoped, tag = 'internal scratch']
  #allocation2 [shape = 'bf16[128,128]{1,0:T(8,128)(2,1)}', space=vmem, size = 0x8000, scoped, tag = 'scratch operand']
  #allocation3 [shape = 'bf16[128,128]{1,0:T(8,128)(2,1)}', space=vmem, size = 0x8000, scoped, tag = 'scratch operand']
  #allocation4 [shape = 'bf16[8,16,32]{2,1,0:T(8,128)(2,1)}', space=vmem, size = 0x8000, scoped, tag = 'scratch operand']
  #allocation5 [shape = 'bf16[8,16,32]{2,1,0:T(8,128)(2,1)}', space=vmem, size = 0x8000, scoped, tag = 'scratch operand']
  %s0 = inlined_call_operand.vmem [shape: bf16[8,16,32], index: 0, kind: input, shape index: {}]
  %s1 = inlined_call_operand.vmem [shape: bf16[8,16,32], index: 1, kind: input, shape index: {}]
  %s2 = inlined_call_operand.vmem [shape: bf16[64,128], index: 2, kind: input, shape index: {}]
  %s3 = inlined_call_operand.vmem [shape: bf16[32,128], index: 3, kind: input, shape index: {}]
  %s4 = inlined_call_operand.vmem [shape: f32[1,128], index: 4, kind: input, shape index: {}]
  %s5 = inlined_call_operand.vmem [shape: bf16[64,128], index: 5, kind: input, shape index: {}]
  %s6 = inlined_call_operand.vmem [shape: bf16[32,128], index: 6, kind: input, shape index: {}]
  %s7 = inlined_call_operand.vmem [shape: f32[1,128], index: 7, kind: input, shape index: {}]
  %s8 = inlined_call_operand.vmem [shape: bf16[32,7], index: 8, kind: input, shape index: {}]
  %s9 = inlined_call_operand.vmem [shape: bf16[32,7], index: 9, kind: input, shape index: {}]
  %s10 = inlined_call_operand.vmem [shape: f32[1,7], index: 10, kind: input, shape index: {}]
  %s11 = inlined_call_operand.vmem [shape: f32[8,16,7], index: 11, kind: input, shape index: {}]
  %s12 = inlined_call_operand.vmem [shape: f32[8,16,7], index: 12, kind: output, shape index: {}]
  %s13 = sld [smem:[#allocation0]]
  $region58: #{seq_model_forward.3} parent=0
    _
  %s15 = ssub.s32 1, %s13
  %s16 = scalar_select 0, %s15, %s13
  // Predicated region
  $region2: #{seq_model_forward.3} parent=0 // pred_check
    _
  $region3: #{seq_model_forward.3} parent=0 // pred_check_branch
    %18 = sbr.rel (0) target = $region5
  $region4: #{seq_model_forward.3} parent=0 // pred_region
    _
  $region5: #{seq_model_forward.3} parent=0 // pred_fallthru
    _
  // Predicated region
  $region6: #{seq_model_forward.3} parent=0 // pred_check
    _
  $region7: #{seq_model_forward.3} parent=0 // pred_check_branch
    %20 = sbr.rel (0) target = $region9
  $region8: #{seq_model_forward.3} parent=0 // pred_region
    _
  $region9: #{seq_model_forward.3} parent=0 // pred_fallthru
    _
  // Predicated region
  $region10: #{seq_model_forward.3} parent=0 // pred_check
    _
  $region11: #{seq_model_forward.3} parent=0 // pred_check_branch
    %22 = sbr.rel (0) target = $region13
  $region12: #{seq_model_forward.3} parent=0 // pred_region
    _
  $region13: #{seq_model_forward.3} parent=0 // pred_fallthru
    _
  // Predicated region
  $region14: #{seq_model_forward.3} parent=0 // pred_check
    _
  $region15: #{seq_model_forward.3} parent=0 // pred_check_branch
    %24 = sbr.rel (0) target = $region17
  $region16: #{seq_model_forward.3} parent=0 // pred_region
    _
  $region17: #{seq_model_forward.3} parent=0 // pred_fallthru
    _
  // Predicated region
  $region18: #{seq_model_forward.3} parent=0 // pred_check
    _
  $region19: #{seq_model_forward.3} parent=0 // pred_check_branch
    %26 = sbr.rel (0) target = $region21
  $region20: #{seq_model_forward.3} parent=0 // pred_region
    _
  $region21: #{seq_model_forward.3} parent=0 // pred_fallthru
    _
  // Predicated region
  $region22: #{seq_model_forward.3} parent=0 // pred_check
    _
  $region23: #{seq_model_forward.3} parent=0 // pred_check_branch
    %28 = sbr.rel (0) target = $region25
  $region24: #{seq_model_forward.3} parent=0 // pred_region
    _
  $region25: #{seq_model_forward.3} parent=0 // pred_fallthru
    _
  // Predicated region
  $region26: #{seq_model_forward.3} parent=0 // pred_check
    _
  $region27: #{seq_model_forward.3} parent=0 // pred_check_branch
    %30 = sbr.rel (0) target = $region29
  $region28: #{seq_model_forward.3} parent=0 // pred_region
    _
  $region29: #{seq_model_forward.3} parent=0 // pred_fallthru
    _
  // Predicated region
  $region30: #{seq_model_forward.3} parent=0 // pred_check
    _
  $region31: #{seq_model_forward.3} parent=0 // pred_check_branch
    %32 = sbr.rel (0) target = $region33
  $region32: #{seq_model_forward.3} parent=0 // pred_region
    _
  $region33: #{seq_model_forward.3} parent=0 // pred_fallthru
    _
  // Predicated region
  $region34: #{seq_model_forward.3} parent=0 // pred_check
    _
  $region35: #{seq_model_forward.3} parent=0 // pred_check_branch
    %34 = sbr.rel (0) target = $region37
  $region36: #{seq_model_forward.3} parent=0 // pred_region
    _
  $region37: #{seq_model_forward.3} parent=0 // pred_fallthru
    _
  // Predicated region
  $region38: #{seq_model_forward.3} parent=0 // pred_check
    _
  $region39: #{seq_model_forward.3} parent=0 // pred_check_branch
    %36 = sbr.rel (0) target = $region41
  $region40: #{seq_model_forward.3} parent=0 // pred_region
    _
  $region41: #{seq_model_forward.3} parent=0 // pred_fallthru
    _
  // Predicated region
  $region42: #{seq_model_forward.3} parent=0 // pred_check
    _
  $region43: #{seq_model_forward.3} parent=0 // pred_check_branch
    %38 = sbr.rel (0) target = $region45
  $region44: #{seq_model_forward.3} parent=0 // pred_region
    _
  $region45: #{seq_model_forward.3} parent=0 // pred_fallthru
    _
  // Predicated region
  $region46: #{seq_model_forward.3} parent=0 // pred_check
    _
  $region47: #{seq_model_forward.3} parent=0 // pred_check_branch
    %40 = sbr.rel (0) target = $region49
  $region48: #{seq_model_forward.3} parent=0 // pred_region
    _
  $region49: #{seq_model_forward.3} parent=0 // pred_fallthru
    _
  %v42 = vld [vmem:[%s0] sm:$0xf]
  %v43 = vld [vmem:[%s0 + $0x4] sm:$0xf]
  %v44 = vld [vmem:[%s0 + $0x8] sm:$0xf]
  %v45 = vld [vmem:[%s0 + $0xc] sm:$0xf]
  %v46 = vld [vmem:[%s0 + $0x10] sm:$0xf]
  %v47 = vld [vmem:[%s0 + $0x14] sm:$0xf]
  %v48 = vld [vmem:[%s0 + $0x18] sm:$0xf]
  %v49 = vld [vmem:[%s0 + $0x1c] sm:$0xf]
  %v50 = vld [vmem:[%s0 + $0x20] sm:$0xf]
  %v51 = vld [vmem:[%s0 + $0x24] sm:$0xf]
  %v52 = vld [vmem:[%s0 + $0x28] sm:$0xf]
  %v53 = vld [vmem:[%s0 + $0x2c] sm:$0xf]
  %v54 = vld [vmem:[%s0 + $0x30] sm:$0xf]
  %v55 = vld [vmem:[%s0 + $0x34] sm:$0xf]
  %v56 = vld [vmem:[%s0 + $0x38] sm:$0xf]
  %v57 = vld [vmem:[%s0 + $0x3c] sm:$0xf]
  %v58 = vld [vmem:[%s1] sm:$0xf]
  %v59 = vld [vmem:[%s1 + $0x4] sm:$0xf]
  %v60 = vld [vmem:[%s1 + $0x8] sm:$0xf]
  %v61 = vld [vmem:[%s1 + $0xc] sm:$0xf]
  %v62 = vld [vmem:[%s1 + $0x10] sm:$0xf]
  %v63 = vld [vmem:[%s1 + $0x14] sm:$0xf]
  %v64 = vld [vmem:[%s1 + $0x18] sm:$0xf]
  %v65 = vld [vmem:[%s1 + $0x1c] sm:$0xf]
  %v66 = vld [vmem:[%s1 + $0x20] sm:$0xf]
  %v67 = vld [vmem:[%s1 + $0x24] sm:$0xf]
  %v68 = vld [vmem:[%s1 + $0x28] sm:$0xf]
  %v69 = vld [vmem:[%s1 + $0x2c] sm:$0xf]
  %v70 = vld [vmem:[%s1 + $0x30] sm:$0xf]
  %v71 = vld [vmem:[%s1 + $0x34] sm:$0xf]
  %v72 = vld [vmem:[%s1 + $0x38] sm:$0xf]
  %v73 = vld [vmem:[%s1 + $0x3c] sm:$0xf]
  %v74 = vld [vmem:[%s2] sm:$0xf]
  %v75 = vld [vmem:[%s2 + $0x4] sm:$0xf]
  %v76 = vld [vmem:[%s2 + $0x8] sm:$0xf]
  %v77 = vld [vmem:[%s2 + $0xc] sm:$0xf]
  %v78 = vld [vmem:[%s2 + $0x10] sm:$0xf]
  %v79 = vld [vmem:[%s2 + $0x14] sm:$0xf]
  %v80 = vld [vmem:[%s2 + $0x18] sm:$0xf]
  %v81 = vld [vmem:[%s2 + $0x1c] sm:$0xf]
  %v98 = vunpack.c.l.b16 %v58
  %v99 = vunpack.c.l.b16 %v59
  %v100 = vunpack.c.l.b16 %v60
  %v101 = vunpack.c.l.b16 %v61
  %v102 = vunpack.c.l.b16 %v62
  %v103 = vunpack.c.l.b16 %v63
  %v104 = vunpack.c.l.b16 %v64
  %v105 = vunpack.c.l.b16 %v65
  %v106 = vunpack.c.l.b16 %v66
  %v107 = vunpack.c.l.b16 %v67
  %v108 = vunpack.c.l.b16 %v68
  %v109 = vunpack.c.l.b16 %v69
  %v110 = vunpack.c.l.b16 %v70
  %v111 = vunpack.c.l.b16 %v71
  %v112 = vunpack.c.l.b16 %v72
  %v113 = vunpack.c.l.b16 %v73
  %v114 = vpack.c.b16 %v99, %v98
  %v115 = vpack.c.b16 %v101, %v100
  %v116 = vpack.c.b16 %v103, %v102
  %v117 = vpack.c.b16 %v105, %v104
  %v118 = vpack.c.b16 %v107, %v106
  %v119 = vpack.c.b16 %v109, %v108
  %v120 = vpack.c.b16 %v111, %v110
  %v121 = vpack.c.b16 %v113, %v112
  %v126 = vunpack.c.l.b16 %v78
  %v127 = vunpack.c.l.b16 %v79
  %v128 = vunpack.c.l.b16 %v80
  %v129 = vunpack.c.l.b16 %v81
  %v130 = vpack.c.b16 %v127, %v126
  %v131 = vpack.c.b16 %v129, %v128
  %vm134 = vcmask 261120
  %v136 = vsel %vm134, %v114, 0
  %v139 = vsel %vm134, %v115, 0
  %v142 = vsel %vm134, %v116, 0
  %v145 = vsel %vm134, %v117, 0
  %v148 = vsel %vm134, %v118, 0
  %v151 = vsel %vm134, %v119, 0
  %v154 = vsel %vm134, %v120, 0
  %v157 = vsel %vm134, %v121, 0
  %159 = vmatprep.subr.bf16.mxu0 0
  %160 = vmatpush1.bf16.msra.mxu0 0
  %161 = vmatprep.subr.bf16.mxu0 0
  %162 = vmatpush1.bf16.msra.mxu0 0
  %163 = vmatprep.subr.bf16.mxu0 0
  %164 = vmatpush1.bf16.msra.mxu0 0
  %165 = vmatprep.subr.bf16.mxu0 0
  %166 = vmatpush1.bf16.msra.mxu0 0
  %167 = vmatprep.subr.bf16.mxu0 0
  %168 = vmatpush1.bf16.msra.mxu0 0
  %169 = vmatprep.subr.bf16.mxu0 0
  %170 = vmatpush1.bf16.msra.mxu0 0
  %171 = vmatprep.subr.bf16.mxu0 0
  %172 = vmatpush1.bf16.msra.mxu0 %v131
  %173 = vmatprep.subr.bf16.mxu0 0
  %174 = vmatpush1.bf16.msra.mxu0 %v130
  %175 = vmatprep.subr.bf16.mxu0 0
  %176 = vmatpush2.bf16.msra.mxu0 0
  %177 = vmatprep.subr.bf16.mxu0 0
  %178 = vmatpush2.bf16.msra.mxu0 0
  %179 = vmatprep.subr.bf16.mxu0 0
  %180 = vmatpush2.bf16.msra.mxu0 0
  %181 = vmatprep.subr.bf16.mxu0 0
  %182 = vmatpush2.bf16.msra.mxu0 0
  %183 = vmatprep.subr.bf16.mxu0 0
  %184 = vmatpush2.bf16.msra.mxu0 0
  %185 = vmatprep.subr.bf16.mxu0 0
  %186 = vmatpush2.bf16.msra.mxu0 0
  %187 = vmatprep.subr.bf16.mxu0 0
  %188 = vmatpush2.bf16.msra.mxu0 0
  %189 = vmatprep.subr.bf16.mxu0 0
  %190 = vmatpush2.bf16.msra.mxu0 0
  %191 = vmatprep.mubr.bf16.mxu0 0
  %192 = vmatmul.mubr.bf16.gmra.mxu0 %v136
  %v193 = vpop.f32.mrf.mxu0
  %v194 = vadd.f32 0.0, %v193
  %v195 = vpop.f32.mrf.mxu0
  %v196 = vpop.f32.mrf.mxu0
  %v197 = vadd.f32 0.0, %v196
  %v198 = vpop.f32.mrf.mxu0
  %199 = vmatprep.mubr.bf16.mxu0 0
  %200 = vmatmul.mubr.bf16.gmra.mxu0 %v139
  %v201 = vpop.f32.mrf.mxu0
  %v202 = vadd.f32 0.0, %v201
  %v203 = vpop.f32.mrf.mxu0
  %v204 = vpop.f32.mrf.mxu0
  %v205 = vadd.f32 0.0, %v204
  %v206 = vpop.f32.mrf.mxu0
  %207 = vmatprep.mubr.bf16.mxu0 0
  %208 = vmatmul.mubr.bf16.gmra.mxu0 %v142
  %v209 = vpop.f32.mrf.mxu0
  %v210 = vadd.f32 0.0, %v209
  %v211 = vpop.f32.mrf.mxu0
  %v212 = vpop.f32.mrf.mxu0
  %v213 = vadd.f32 0.0, %v212
  %v214 = vpop.f32.mrf.mxu0
  %215 = vmatprep.mubr.bf16.mxu0 0
  %216 = vmatmul.mubr.bf16.gmra.mxu0 %v145
  %v217 = vpop.f32.mrf.mxu0
  %v218 = vadd.f32 0.0, %v217
  %v219 = vpop.f32.mrf.mxu0
  %v220 = vpop.f32.mrf.mxu0
  %v221 = vadd.f32 0.0, %v220
  %v222 = vpop.f32.mrf.mxu0
  %223 = vmatprep.mubr.bf16.mxu0 0
  %224 = vmatmul.mubr.bf16.gmra.mxu0 %v148
  %v225 = vpop.f32.mrf.mxu0
  %v226 = vadd.f32 0.0, %v225
  %v227 = vpop.f32.mrf.mxu0
  %v228 = vpop.f32.mrf.mxu0
  %v229 = vadd.f32 0.0, %v228
  %v230 = vpop.f32.mrf.mxu0
  %231 = vmatprep.mubr.bf16.mxu0 0
  %232 = vmatmul.mubr.bf16.gmra.mxu0 %v151
  %v233 = vpop.f32.mrf.mxu0
  %v234 = vadd.f32 0.0, %v233
  %v235 = vpop.f32.mrf.mxu0
  %v236 = vpop.f32.mrf.mxu0
  %v237 = vadd.f32 0.0, %v236
  %v238 = vpop.f32.mrf.mxu0
  %239 = vmatprep.mubr.bf16.mxu0 0
  %240 = vmatmul.mubr.bf16.gmra.mxu0 %v154
  %v241 = vpop.f32.mrf.mxu0
  %v242 = vadd.f32 0.0, %v241
  %v243 = vpop.f32.mrf.mxu0
  %v244 = vpop.f32.mrf.mxu0
  %v245 = vadd.f32 0.0, %v244
  %v246 = vpop.f32.mrf.mxu0
  %247 = vmatprep.mubr.bf16.mxu0 0
  %248 = vmatmul.mubr.bf16.gmra.mxu0 %v157
  %v249 = vpop.f32.mrf.mxu0
  %v250 = vadd.f32 0.0, %v249
  %v251 = vpop.f32.mrf.mxu0
  %v252 = vpop.f32.mrf.mxu0
  %v253 = vadd.f32 0.0, %v252
  %v254 = vpop.f32.mrf.mxu0
  %255 = vdwg.mxu0
  %v272 = vunpack.c.l.b16 %v42
  %v273 = vunpack.c.l.b16 %v43
  %v274 = vunpack.c.l.b16 %v44
  %v275 = vunpack.c.l.b16 %v45
  %v276 = vunpack.c.l.b16 %v46
  %v277 = vunpack.c.l.b16 %v47
  %v278 = vunpack.c.l.b16 %v48
  %v279 = vunpack.c.l.b16 %v49
  %v280 = vunpack.c.l.b16 %v50
  %v281 = vunpack.c.l.b16 %v51
  %v282 = vunpack.c.l.b16 %v52
  %v283 = vunpack.c.l.b16 %v53
  %v284 = vunpack.c.l.b16 %v54
  %v285 = vunpack.c.l.b16 %v55
  %v286 = vunpack.c.l.b16 %v56
  %v287 = vunpack.c.l.b16 %v57
  %v288 = vpack.c.b16 %v273, %v272
  %v289 = vpack.c.b16 %v275, %v274
  %v290 = vpack.c.b16 %v277, %v276
  %v291 = vpack.c.b16 %v279, %v278
  %v292 = vpack.c.b16 %v281, %v280
  %v293 = vpack.c.b16 %v283, %v282
  %v294 = vpack.c.b16 %v285, %v284
  %v295 = vpack.c.b16 %v287, %v286
  %v300 = vunpack.c.l.b16 %v74
  %v301 = vunpack.c.l.b16 %v75
  %v302 = vunpack.c.l.b16 %v76
  %v303 = vunpack.c.l.b16 %v77
  %v304 = vpack.c.b16 %v301, %v300
  %v305 = vpack.c.b16 %v303, %v302
  %v309 = vsel %vm134, %v288, 0
  %v312 = vsel %vm134, %v289, 0
  %v315 = vsel %vm134, %v290, 0
  %v318 = vsel %vm134, %v291, 0
  %v321 = vsel %vm134, %v292, 0
  %v324 = vsel %vm134, %v293, 0
  %v327 = vsel %vm134, %v294, 0
  %v330 = vsel %vm134, %v295, 0
  %332 = vmatprep.subr.bf16.mxu0 0
  %333 = vmatpush1.bf16.msra.mxu0 0
  %334 = vmatprep.subr.bf16.mxu0 0
  %335 = vmatpush1.bf16.msra.mxu0 0
  %336 = vmatprep.subr.bf16.mxu0 0
  %337 = vmatpush1.bf16.msra.mxu0 0
  %338 = vmatprep.subr.bf16.mxu0 0
  %339 = vmatpush1.bf16.msra.mxu0 0
  %340 = vmatprep.subr.bf16.mxu0 0
  %341 = vmatpush1.bf16.msra.mxu0 0
  %342 = vmatprep.subr.bf16.mxu0 0
  %343 = vmatpush1.bf16.msra.mxu0 0
  %344 = vmatprep.subr.bf16.mxu0 0
  %345 = vmatpush1.bf16.msra.mxu0 %v305
  %346 = vmatprep.subr.bf16.mxu0 0
  %347 = vmatpush1.bf16.msra.mxu0 %v304
  %348 = vmatprep.subr.bf16.mxu0 0
  %349 = vmatpush2.bf16.msra.mxu0 0
  %350 = vmatprep.subr.bf16.mxu0 0
  %351 = vmatpush2.bf16.msra.mxu0 0
  %352 = vmatprep.subr.bf16.mxu0 0
  %353 = vmatpush2.bf16.msra.mxu0 0
  %354 = vmatprep.subr.bf16.mxu0 0
  %355 = vmatpush2.bf16.msra.mxu0 0
  %356 = vmatprep.subr.bf16.mxu0 0
  %357 = vmatpush2.bf16.msra.mxu0 0
  %358 = vmatprep.subr.bf16.mxu0 0
  %359 = vmatpush2.bf16.msra.mxu0 0
  %360 = vmatprep.subr.bf16.mxu0 0
  %361 = vmatpush2.bf16.msra.mxu0 0
  %362 = vmatprep.subr.bf16.mxu0 0
  %363 = vmatpush2.bf16.msra.mxu0 0
  %364 = vmatprep.mubr.bf16.mxu0 0
  %365 = vmatmul.mubr.bf16.gmra.mxu0 %v309
  %v366 = vpop.f32.mrf.mxu0
  %v367 = vadd.f32 %v194, %v366
  %v368 = vpop.f32.mrf.mxu0
  %v369 = vpop.f32.mrf.mxu0
  %v370 = vadd.f32 %v197, %v369
  %v371 = vpop.f32.mrf.mxu0
  %372 = vmatprep.mubr.bf16.mxu0 0
  %373 = vmatmul.mubr.bf16.gmra.mxu0 %v312
  %v374 = vpop.f32.mrf.mxu0
  %v375 = vadd.f32 %v202, %v374
  %v376 = vpop.f32.mrf.mxu0
  %v377 = vpop.f32.mrf.mxu0
  %v378 = vadd.f32 %v205, %v377
  %v379 = vpop.f32.mrf.mxu0
  %380 = vmatprep.mubr.bf16.mxu0 0
  %381 = vmatmul.mubr.bf16.gmra.mxu0 %v315
  %v382 = vpop.f32.mrf.mxu0
  %v383 = vadd.f32 %v210, %v382
  %v384 = vpop.f32.mrf.mxu0
  %v385 = vpop.f32.mrf.mxu0
  %v386 = vadd.f32 %v213, %v385
  %v387 = vpop.f32.mrf.mxu0
  %388 = vmatprep.mubr.bf16.mxu0 0
  %389 = vmatmul.mubr.bf16.gmra.mxu0 %v318
  %v390 = vpop.f32.mrf.mxu0
  %v391 = vadd.f32 %v218, %v390
  %v392 = vpop.f32.mrf.mxu0
  %v393 = vpop.f32.mrf.mxu0
  %v394 = vadd.f32 %v221, %v393
  %v395 = vpop.f32.mrf.mxu0
  %396 = vmatprep.mubr.bf16.mxu0 0
  %397 = vmatmul.mubr.bf16.gmra.mxu0 %v321
  %v398 = vpop.f32.mrf.mxu0
  %v399 = vadd.f32 %v226, %v398
  %v400 = vpop.f32.mrf.mxu0
  %v401 = vpop.f32.mrf.mxu0
  %v402 = vadd.f32 %v229, %v401
  %v403 = vpop.f32.mrf.mxu0
  %404 = vmatprep.mubr.bf16.mxu0 0
  %405 = vmatmul.mubr.bf16.gmra.mxu0 %v324
  %v406 = vpop.f32.mrf.mxu0
  %v407 = vadd.f32 %v234, %v406
  %v408 = vpop.f32.mrf.mxu0
  %v409 = vpop.f32.mrf.mxu0
  %v410 = vadd.f32 %v237, %v409
  %v411 = vpop.f32.mrf.mxu0
  %412 = vmatprep.mubr.bf16.mxu0 0
  %413 = vmatmul.mubr.bf16.gmra.mxu0 %v327
  %v414 = vpop.f32.mrf.mxu0
  %v415 = vadd.f32 %v242, %v414
  %v416 = vpop.f32.mrf.mxu0
  %v417 = vpop.f32.mrf.mxu0
  %v418 = vadd.f32 %v245, %v417
  %v419 = vpop.f32.mrf.mxu0
  %420 = vmatprep.mubr.bf16.mxu0 0
  %421 = vmatmul.mubr.bf16.gmra.mxu0 %v330
  %v422 = vpop.f32.mrf.mxu0
  %v423 = vadd.f32 %v250, %v422
  %v424 = vpop.f32.mrf.mxu0
  %v425 = vpop.f32.mrf.mxu0
  %v426 = vadd.f32 %v253, %v425
  %v427 = vpop.f32.mrf.mxu0
  %428 = vdwg.mxu0
  %v429 = vpack.c.bf16 %v370, %v367
  %v430 = vpack.c.bf16 %v378, %v375
  %v431 = vpack.c.bf16 %v386, %v383
  %v432 = vpack.c.bf16 %v394, %v391
  %v433 = vpack.c.bf16 %v402, %v399
  %v434 = vpack.c.bf16 %v410, %v407
  %v435 = vpack.c.bf16 %v418, %v415
  %v436 = vpack.c.bf16 %v426, %v423
  %v445 = vunpack.c.l.b16 %v429
  %v446 = vunpack.c.h.b16 %v429
  %v447 = vunpack.c.l.b16 %v430
  %v448 = vunpack.c.h.b16 %v430
  %v449 = vunpack.c.l.b16 %v431
  %v450 = vunpack.c.h.b16 %v431
  %v451 = vunpack.c.l.b16 %v432
  %v452 = vunpack.c.h.b16 %v432
  %v453 = vunpack.c.l.b16 %v433
  %v454 = vunpack.c.h.b16 %v433
  %v455 = vunpack.c.l.b16 %v434
  %v456 = vunpack.c.h.b16 %v434
  %v457 = vunpack.c.l.b16 %v435
  %v458 = vunpack.c.h.b16 %v435
  %v459 = vunpack.c.l.b16 %v436
  %v460 = vunpack.c.h.b16 %v436
  %v461 = vpack.c.b16 %v445, %v445
  %v462 = vpack.c.b16 %v446, %v446
  %v463 = vpack.c.b16 %v447, %v447
  %v464 = vpack.c.b16 %v448, %v448
  %v465 = vpack.c.b16 %v449, %v449
  %v466 = vpack.c.b16 %v450, %v450
  %v467 = vpack.c.b16 %v451, %v451
  %v468 = vpack.c.b16 %v452, %v452
  %v469 = vpack.c.b16 %v453, %v453
  %v470 = vpack.c.b16 %v454, %v454
  %v471 = vpack.c.b16 %v455, %v455
  %v472 = vpack.c.b16 %v456, %v456
  %v473 = vpack.c.b16 %v457, %v457
  %v474 = vpack.c.b16 %v458, %v458
  %v475 = vpack.c.b16 %v459, %v459
  %v476 = vpack.c.b16 %v460, %v460
  %493 = vst [vmem:[#allocation2] sm:$0xf] %v461
  %494 = vst [vmem:[#allocation2 + $0x4] sm:$0xf] %v462
  %495 = vst [vmem:[#allocation2 + $0x8] sm:$0xf] %v463
  %496 = vst [vmem:[#allocation2 + $0xc] sm:$0xf] %v464
  %497 = vst [vmem:[#allocation2 + $0x10] sm:$0xf] %v465
  %498 = vst [vmem:[#allocation2 + $0x14] sm:$0xf] %v466
  %499 = vst [vmem:[#allocation2 + $0x18] sm:$0xf] %v467
  %500 = vst [vmem:[#allocation2 + $0x1c] sm:$0xf] %v468
  %501 = vst [vmem:[#allocation2 + $0x20] sm:$0xf] %v469
  %502 = vst [vmem:[#allocation2 + $0x24] sm:$0xf] %v470
  %503 = vst [vmem:[#allocation2 + $0x28] sm:$0xf] %v471
  %504 = vst [vmem:[#allocation2 + $0x2c] sm:$0xf] %v472
  %505 = vst [vmem:[#allocation2 + $0x30] sm:$0xf] %v473
  %506 = vst [vmem:[#allocation2 + $0x34] sm:$0xf] %v474
  %507 = vst [vmem:[#allocation2 + $0x38] sm:$0xf] %v475
  %508 = vst [vmem:[#allocation2 + $0x3c] sm:$0xf] %v476
  %v509 = vld [vmem:[%s5] sm:$0xf]
  %v510 = vld [vmem:[%s5 + $0x4] sm:$0xf]
  %v511 = vld [vmem:[%s5 + $0x8] sm:$0xf]
  %v512 = vld [vmem:[%s5 + $0xc] sm:$0xf]
  %v513 = vld [vmem:[%s5 + $0x10] sm:$0xf]
  %v514 = vld [vmem:[%s5 + $0x14] sm:$0xf]
  %v515 = vld [vmem:[%s5 + $0x18] sm:$0xf]
  %v516 = vld [vmem:[%s5 + $0x1c] sm:$0xf]
  %v521 = vunpack.c.l.b16 %v513
  %v522 = vunpack.c.l.b16 %v514
  %v523 = vunpack.c.l.b16 %v515
  %v524 = vunpack.c.l.b16 %v516
  %v525 = vpack.c.b16 %v522, %v521
  %v526 = vpack.c.b16 %v524, %v523
  %529 = vmatprep.subr.bf16.mxu0 0
  %530 = vmatpush1.bf16.msra.mxu0 0
  %531 = vmatprep.subr.bf16.mxu0 0
  %532 = vmatpush1.bf16.msra.mxu0 0
  %533 = vmatprep.subr.bf16.mxu0 0
  %534 = vmatpush1.bf16.msra.mxu0 0
  %535 = vmatprep.subr.bf16.mxu0 0
  %536 = vmatpush1.bf16.msra.mxu0 0
  %537 = vmatprep.subr.bf16.mxu0 0
  %538 = vmatpush1.bf16.msra.mxu0 0
  %539 = vmatprep.subr.bf16.mxu0 0
  %540 = vmatpush1.bf16.msra.mxu0 0
  %541 = vmatprep.subr.bf16.mxu0 0
  %542 = vmatpush1.bf16.msra.mxu0 %v526
  %543 = vmatprep.subr.bf16.mxu0 0
  %544 = vmatpush1.bf16.msra.mxu0 %v525
  %545 = vmatprep.subr.bf16.mxu0 0
  %546 = vmatpush2.bf16.msra.mxu0 0
  %547 = vmatprep.subr.bf16.mxu0 0
  %548 = vmatpush2.bf16.msra.mxu0 0
  %549 = vmatprep.subr.bf16.mxu0 0
  %550 = vmatpush2.bf16.msra.mxu0 0
  %551 = vmatprep.subr.bf16.mxu0 0
  %552 = vmatpush2.bf16.msra.mxu0 0
  %553 = vmatprep.subr.bf16.mxu0 0
  %554 = vmatpush2.bf16.msra.mxu0 0
  %555 = vmatprep.subr.bf16.mxu0 0
  %556 = vmatpush2.bf16.msra.mxu0 0
  %557 = vmatprep.subr.bf16.mxu0 0
  %558 = vmatpush2.bf16.msra.mxu0 0
  %559 = vmatprep.subr.bf16.mxu0 0
  %560 = vmatpush2.bf16.msra.mxu0 0
  %561 = vmatprep.mubr.bf16.mxu0 0
  %562 = vmatmul.mubr.bf16.gmra.mxu0 %v136
  %v563 = vpop.f32.mrf.mxu0
  %v564 = vadd.f32 0.0, %v563
  %v565 = vpop.f32.mrf.mxu0
  %v566 = vpop.f32.mrf.mxu0
  %v567 = vadd.f32 0.0, %v566
  %v568 = vpop.f32.mrf.mxu0
  %569 = vmatprep.mubr.bf16.mxu0 0
  %570 = vmatmul.mubr.bf16.gmra.mxu0 %v139
  %v571 = vpop.f32.mrf.mxu0
  %v572 = vadd.f32 0.0, %v571
  %v573 = vpop.f32.mrf.mxu0
  %v574 = vpop.f32.mrf.mxu0
  %v575 = vadd.f32 0.0, %v574
  %v576 = vpop.f32.mrf.mxu0
  %577 = vmatprep.mubr.bf16.mxu0 0
  %578 = vmatmul.mubr.bf16.gmra.mxu0 %v142
  %v579 = vpop.f32.mrf.mxu0
  %v580 = vadd.f32 0.0, %v579
  %v581 = vpop.f32.mrf.mxu0
  %v582 = vpop.f32.mrf.mxu0
  %v583 = vadd.f32 0.0, %v582
  %v584 = vpop.f32.mrf.mxu0
  %585 = vmatprep.mubr.bf16.mxu0 0
  %586 = vmatmul.mubr.bf16.gmra.mxu0 %v145
  %v587 = vpop.f32.mrf.mxu0
  %v588 = vadd.f32 0.0, %v587
  %v589 = vpop.f32.mrf.mxu0
  %v590 = vpop.f32.mrf.mxu0
  %v591 = vadd.f32 0.0, %v590
  %v592 = vpop.f32.mrf.mxu0
  %593 = vmatprep.mubr.bf16.mxu0 0
  %594 = vmatmul.mubr.bf16.gmra.mxu0 %v148
  %v595 = vpop.f32.mrf.mxu0
  %v596 = vadd.f32 0.0, %v595
  %v597 = vpop.f32.mrf.mxu0
  %v598 = vpop.f32.mrf.mxu0
  %v599 = vadd.f32 0.0, %v598
  %v600 = vpop.f32.mrf.mxu0
  %601 = vmatprep.mubr.bf16.mxu0 0
  %602 = vmatmul.mubr.bf16.gmra.mxu0 %v151
  %v603 = vpop.f32.mrf.mxu0
  %v604 = vadd.f32 0.0, %v603
  %v605 = vpop.f32.mrf.mxu0
  %v606 = vpop.f32.mrf.mxu0
  %v607 = vadd.f32 0.0, %v606
  %v608 = vpop.f32.mrf.mxu0
  %609 = vmatprep.mubr.bf16.mxu0 0
  %610 = vmatmul.mubr.bf16.gmra.mxu0 %v154
  %v611 = vpop.f32.mrf.mxu0
  %v612 = vadd.f32 0.0, %v611
  %v613 = vpop.f32.mrf.mxu0
  %v614 = vpop.f32.mrf.mxu0
  %v615 = vadd.f32 0.0, %v614
  %v616 = vpop.f32.mrf.mxu0
  %617 = vmatprep.mubr.bf16.mxu0 0
  %618 = vmatmul.mubr.bf16.gmra.mxu0 %v157
  %v619 = vpop.f32.mrf.mxu0
  %v620 = vadd.f32 0.0, %v619
  %v621 = vpop.f32.mrf.mxu0
  %v622 = vpop.f32.mrf.mxu0
  %v623 = vadd.f32 0.0, %v622
  %v624 = vpop.f32.mrf.mxu0
  %625 = vdwg.mxu0
  %v630 = vunpack.c.l.b16 %v509
  %v631 = vunpack.c.l.b16 %v510
  %v632 = vunpack.c.l.b16 %v511
  %v633 = vunpack.c.l.b16 %v512
  %v634 = vpack.c.b16 %v631, %v630
  %v635 = vpack.c.b16 %v633, %v632
  %638 = vmatprep.subr.bf16.mxu0 0
  %639 = vmatpush1.bf16.msra.mxu0 0
  %640 = vmatprep.subr.bf16.mxu0 0
  %641 = vmatpush1.bf16.msra.mxu0 0
  %642 = vmatprep.subr.bf16.mxu0 0
  %643 = vmatpush1.bf16.msra.mxu0 0
  %644 = vmatprep.subr.bf16.mxu0 0
  %645 = vmatpush1.bf16.msra.mxu0 0
  %646 = vmatprep.subr.bf16.mxu0 0
  %647 = vmatpush1.bf16.msra.mxu0 0
  %648 = vmatprep.subr.bf16.mxu0 0
  %649 = vmatpush1.bf16.msra.mxu0 0
  %650 = vmatprep.subr.bf16.mxu0 0
  %651 = vmatpush1.bf16.msra.mxu0 %v635
  %652 = vmatprep.subr.bf16.mxu0 0
  %653 = vmatpush1.bf16.msra.mxu0 %v634
  %654 = vmatprep.subr.bf16.mxu0 0
  %655 = vmatpush2.bf16.msra.mxu0 0
  %656 = vmatprep.subr.bf16.mxu0 0
  %657 = vmatpush2.bf16.msra.mxu0 0
  %658 = vmatprep.subr.bf16.mxu0 0
  %659 = vmatpush2.bf16.msra.mxu0 0
  %660 = vmatprep.subr.bf16.mxu0 0
  %661 = vmatpush2.bf16.msra.mxu0 0
  %662 = vmatprep.subr.bf16.mxu0 0
  %663 = vmatpush2.bf16.msra.mxu0 0
  %664 = vmatprep.subr.bf16.mxu0 0
  %665 = vmatpush2.bf16.msra.mxu0 0
  %666 = vmatprep.subr.bf16.mxu0 0
  %667 = vmatpush2.bf16.msra.mxu0 0
  %668 = vmatprep.subr.bf16.mxu0 0
  %669 = vmatpush2.bf16.msra.mxu0 0
  %670 = vmatprep.mubr.bf16.mxu0 0
  %671 = vmatmul.mubr.bf16.gmra.mxu0 %v309
  %v672 = vpop.f32.mrf.mxu0
  %v673 = vadd.f32 %v564, %v672
  %v674 = vpop.f32.mrf.mxu0
  %v675 = vpop.f32.mrf.mxu0
  %v676 = vadd.f32 %v567, %v675
  %v677 = vpop.f32.mrf.mxu0
  %678 = vmatprep.mubr.bf16.mxu0 0
  %679 = vmatmul.mubr.bf16.gmra.mxu0 %v312
  %v680 = vpop.f32.mrf.mxu0
  %v681 = vadd.f32 %v572, %v680
  %v682 = vpop.f32.mrf.mxu0
  %v683 = vpop.f32.mrf.mxu0
  %v684 = vadd.f32 %v575, %v683
  %v685 = vpop.f32.mrf.mxu0
  %686 = vmatprep.mubr.bf16.mxu0 0
  %687 = vmatmul.mubr.bf16.gmra.mxu0 %v315
  %v688 = vpop.f32.mrf.mxu0
  %v689 = vadd.f32 %v580, %v688
  %v690 = vpop.f32.mrf.mxu0
  %v691 = vpop.f32.mrf.mxu0
  %v692 = vadd.f32 %v583, %v691
  %v693 = vpop.f32.mrf.mxu0
  %694 = vmatprep.mubr.bf16.mxu0 0
  %695 = vmatmul.mubr.bf16.gmra.mxu0 %v318
  %v696 = vpop.f32.mrf.mxu0
  %v697 = vadd.f32 %v588, %v696
  %v698 = vpop.f32.mrf.mxu0
  %v699 = vpop.f32.mrf.mxu0
  %v700 = vadd.f32 %v591, %v699
  %v701 = vpop.f32.mrf.mxu0
  %702 = vmatprep.mubr.bf16.mxu0 0
  %703 = vmatmul.mubr.bf16.gmra.mxu0 %v321
  %v704 = vpop.f32.mrf.mxu0
  %v705 = vadd.f32 %v596, %v704
  %v706 = vpop.f32.mrf.mxu0
  %v707 = vpop.f32.mrf.mxu0
  %v708 = vadd.f32 %v599, %v707
  %v709 = vpop.f32.mrf.mxu0
  %710 = vmatprep.mubr.bf16.mxu0 0
  %711 = vmatmul.mubr.bf16.gmra.mxu0 %v324
  %v712 = vpop.f32.mrf.mxu0
  %v713 = vadd.f32 %v604, %v712
  %v714 = vpop.f32.mrf.mxu0
  %v715 = vpop.f32.mrf.mxu0
  %v716 = vadd.f32 %v607, %v715
  %v717 = vpop.f32.mrf.mxu0
  %718 = vmatprep.mubr.bf16.mxu0 0
  %719 = vmatmul.mubr.bf16.gmra.mxu0 %v327
  %v720 = vpop.f32.mrf.mxu0
  %v721 = vadd.f32 %v612, %v720
  %v722 = vpop.f32.mrf.mxu0
  %v723 = vpop.f32.mrf.mxu0
  %v724 = vadd.f32 %v615, %v723
  %v725 = vpop.f32.mrf.mxu0
  %726 = vmatprep.mubr.bf16.mxu0 0
  %727 = vmatmul.mubr.bf16.gmra.mxu0 %v330
  %v728 = vpop.f32.mrf.mxu0
  %v729 = vadd.f32 %v620, %v728
  %v730 = vpop.f32.mrf.mxu0
  %v731 = vpop.f32.mrf.mxu0
  %v732 = vadd.f32 %v623, %v731
  %v733 = vpop.f32.mrf.mxu0
  %734 = vdwg.mxu0
  %v735 = vpack.c.bf16 %v676, %v673
  %v736 = vpack.c.bf16 %v684, %v681
  %v737 = vpack.c.bf16 %v692, %v689
  %v738 = vpack.c.bf16 %v700, %v697
  %v739 = vpack.c.bf16 %v708, %v705
  %v740 = vpack.c.bf16 %v716, %v713
  %v741 = vpack.c.bf16 %v724, %v721
  %v742 = vpack.c.bf16 %v732, %v729
  %v751 = vunpack.c.l.b16 %v735
  %v752 = vunpack.c.h.b16 %v735
  %v753 = vunpack.c.l.b16 %v736
  %v754 = vunpack.c.h.b16 %v736
  %v755 = vunpack.c.l.b16 %v737
  %v756 = vunpack.c.h.b16 %v737
  %v757 = vunpack.c.l.b16 %v738
  %v758 = vunpack.c.h.b16 %v738
  %v759 = vunpack.c.l.b16 %v739
  %v760 = vunpack.c.h.b16 %v739
  %v761 = vunpack.c.l.b16 %v740
  %v762 = vunpack.c.h.b16 %v740
  %v763 = vunpack.c.l.b16 %v741
  %v764 = vunpack.c.h.b16 %v741
  %v765 = vunpack.c.l.b16 %v742
  %v766 = vunpack.c.h.b16 %v742
  %v767 = vpack.c.b16 %v751, %v751
  %v768 = vpack.c.b16 %v752, %v752
  %v769 = vpack.c.b16 %v753, %v753
  %v770 = vpack.c.b16 %v754, %v754
  %v771 = vpack.c.b16 %v755, %v755
  %v772 = vpack.c.b16 %v756, %v756
  %v773 = vpack.c.b16 %v757, %v757
  %v774 = vpack.c.b16 %v758, %v758
  %v775 = vpack.c.b16 %v759, %v759
  %v776 = vpack.c.b16 %v760, %v760
  %v777 = vpack.c.b16 %v761, %v761
  %v778 = vpack.c.b16 %v762, %v762
  %v779 = vpack.c.b16 %v763, %v763
  %v780 = vpack.c.b16 %v764, %v764
  %v781 = vpack.c.b16 %v765, %v765
  %v782 = vpack.c.b16 %v766, %v766
  %799 = vst [vmem:[#allocation3] sm:$0xf] %v767
  %800 = vst [vmem:[#allocation3 + $0x4] sm:$0xf] %v768
  %801 = vst [vmem:[#allocation3 + $0x8] sm:$0xf] %v769
  %802 = vst [vmem:[#allocation3 + $0xc] sm:$0xf] %v770
  %803 = vst [vmem:[#allocation3 + $0x10] sm:$0xf] %v771
  %804 = vst [vmem:[#allocation3 + $0x14] sm:$0xf] %v772
  %805 = vst [vmem:[#allocation3 + $0x18] sm:$0xf] %v773
  %806 = vst [vmem:[#allocation3 + $0x1c] sm:$0xf] %v774
  %807 = vst [vmem:[#allocation3 + $0x20] sm:$0xf] %v775
  %808 = vst [vmem:[#allocation3 + $0x24] sm:$0xf] %v776
  %809 = vst [vmem:[#allocation3 + $0x28] sm:$0xf] %v777
  %810 = vst [vmem:[#allocation3 + $0x2c] sm:$0xf] %v778
  %811 = vst [vmem:[#allocation3 + $0x30] sm:$0xf] %v779
  %812 = vst [vmem:[#allocation3 + $0x34] sm:$0xf] %v780
  %813 = vst [vmem:[#allocation3 + $0x38] sm:$0xf] %v781
  %814 = vst [vmem:[#allocation3 + $0x3c] sm:$0xf] %v782
  %v815 = vld [vmem:[%s3] sm:$0xf]
  %v816 = vld [vmem:[%s3 + $0x4] sm:$0xf]
  %v817 = vld [vmem:[%s3 + $0x8] sm:$0xf]
  %v818 = vld [vmem:[%s3 + $0xc] sm:$0xf]
  %v819 = vld [vmem:[%s6] sm:$0xf]
  %v820 = vld [vmem:[%s6 + $0x4] sm:$0xf]
  %v821 = vld [vmem:[%s6 + $0x8] sm:$0xf]
  %v822 = vld [vmem:[%s6 + $0xc] sm:$0xf]
  %v823 = vld [vmem:[%s4] sm:$0x1]
  %v825 = vlaneseq
  %v826 = vshrl.u32 %v825, 7
  %v827 = vsub.s32 0, %v826
  %v828 = vrot.slane %v823, %v827
  %v830 = vld [vmem:[%s7] sm:$0x1]
  %v832 = vlaneseq
  %v833 = vshrl.u32 %v832, 7
  %v834 = vsub.s32 0, %v833
  %v835 = vrot.slane %v830, %v834
  %v837 = vld [vmem:[#allocation2] sm:$0xf]
  %v838 = vld [vmem:[#allocation2 + $0x4] sm:$0xf]
  %v839 = vunpack.c.l.bf16 %v837
  %v840 = vunpack.c.l.bf16 %v838
  %v845 = vunpack.c.l.b16 %v815
  %v846 = vunpack.c.l.b16 %v816
  %v847 = vunpack.c.l.b16 %v817
  %v848 = vunpack.c.l.b16 %v818
  %v849 = vpack.c.b16 %v846, %v845
  %v850 = vpack.c.b16 %v848, %v847
  %v854 = vsel %vm134, 0, 0
  %856 = vmatprep.subr.bf16.mxu0 0
  %857 = vmatpush1.bf16.msra.mxu0 0
  %858 = vmatprep.subr.bf16.mxu0 0
  %859 = vmatpush1.bf16.msra.mxu0 0
  %860 = vmatprep.subr.bf16.mxu0 0
  %861 = vmatpush1.bf16.msra.mxu0 0
  %862 = vmatprep.subr.bf16.mxu0 0
  %863 = vmatpush1.bf16.msra.mxu0 0
  %864 = vmatprep.subr.bf16.mxu0 0
  %865 = vmatpush1.bf16.msra.mxu0 0
  %866 = vmatprep.subr.bf16.mxu0 0
  %867 = vmatpush1.bf16.msra.mxu0 0
  %868 = vmatprep.subr.bf16.mxu0 0
  %869 = vmatpush1.bf16.msra.mxu0 %v850
  %870 = vmatprep.subr.bf16.mxu0 0
  %871 = vmatpush1.bf16.msra.mxu0 %v849
  %872 = vmatprep.subr.bf16.mxu0 0
  %873 = vmatpush2.bf16.msra.mxu0 0
  %874 = vmatprep.subr.bf16.mxu0 0
  %875 = vmatpush2.bf16.msra.mxu0 0
  %876 = vmatprep.subr.bf16.mxu0 0
  %877 = vmatpush2.bf16.msra.mxu0 0
  %878 = vmatprep.subr.bf16.mxu0 0
  %879 = vmatpush2.bf16.msra.mxu0 0
  %880 = vmatprep.subr.bf16.mxu0 0
  %881 = vmatpush2.bf16.msra.mxu0 0
  %882 = vmatprep.subr.bf16.mxu0 0
  %883 = vmatpush2.bf16.msra.mxu0 0
  %884 = vmatprep.subr.bf16.mxu0 0
  %885 = vmatpush2.bf16.msra.mxu0 0
  %886 = vmatprep.subr.bf16.mxu0 0
  %887 = vmatpush2.bf16.msra.mxu0 0
  %888 = vmatprep.mubr.bf16.mxu0 0
  %889 = vmatmul.mubr.bf16.gmra.mxu0 %v854
  %v890 = vpop.f32.mrf.mxu0
  %v891 = vadd.f32 %v839, %v890
  %v892 = vpop.f32.mrf.mxu0
  %v893 = vpop.f32.mrf.mxu0
  %v894 = vadd.f32 %v840, %v893
  %v895 = vpop.f32.mrf.mxu0
  %896 = vdwg.mxu0
  %v897 = vadd.f32 %v891, %v828
  %v898 = vadd.f32 %v894, %v828
  %v899 = vmul.f32 %v897, 0.5
  %v900 = vmul.f32 %v898, 0.5
  %v901 = vtanh.pop %v899
  %v902 = vtanh.pop %v900
  %v903 = vadd.f32 %v901, 1.0
  %v904 = vadd.f32 %v902, 1.0
  %v905 = vmul.f32 %v903, 0.5
  %v906 = vmul.f32 %v904, 0.5
  %v907 = vtanh.pop %v897
  %v908 = vtanh.pop %v898
  %v909 = vmul.f32 %v905, 0.0
  %v910 = vmul.f32 %v906, 0.0
  %913 = vrot.lane.b32.xlu0 %v907, 64
  %v914 = vpop.permute.xlu0 %913
  %915 = vrot.lane.b32.xlu0 %v908, 64
  %v916 = vpop.permute.xlu0 %915
  %v919 = vmul.f32 %v905, %v914
  %v920 = vmul.f32 %v906, %v916
  %923 = vrot.lane.b32.xlu0 %v919, 32
  %v924 = vpop.permute.xlu0 %923
  %925 = vrot.lane.b32.xlu0 %v920, 32
  %v926 = vpop.permute.xlu0 %925
  %v929 = vadd.f32 %v909, %v924
  %v930 = vadd.f32 %v910, %v926
  %v931 = vtanh.pop %v929
  %v932 = vtanh.pop %v930
  %935 = vrot.lane.b32.xlu0 %v931, 64
  %v936 = vpop.permute.xlu0 %935
  %937 = vrot.lane.b32.xlu0 %v932, 64
  %v938 = vpop.permute.xlu0 %937
  %v941 = vmul.f32 %v905, %v936
  %v942 = vmul.f32 %v906, %v938
  %v943 = vpack.c.bf16 %v942, %v941
  %v945 = vunpack.c.l.b16 %v943
  %v946 = vunpack.c.h.b16 %v943
  %v947 = vpack.c.b16 %v945, %v945
  %v948 = vpack.c.b16 %v946, %v946
  %949 = vrot.lane.b32.xlu0 %v947, 32
  %v950 = vpop.permute.xlu0 %949
  %951 = vrot.lane.b32.xlu0 %v948, 32
  %v952 = vpop.permute.xlu0 %951
  %vm955 = vcmask 257024
  %956 = vst.msk [vmem:[#allocation4] sm:$0xf] %vm955, %v950
  %957 = vst.msk [vmem:[#allocation4 + $0x4] sm:$0xf] %vm955, %v952
  %s958 = scalar_lea.vmem [#allocation3], 56
  %v959 = vld [vmem:[%s958] sm:$0xf]
  %v960 = vld [vmem:[%s958 + $0x4] sm:$0xf]
  %v961 = vunpack.c.l.bf16 %v959
  %v962 = vunpack.c.l.bf16 %v960
  %v967 = vunpack.c.l.b16 %v819
  %v968 = vunpack.c.l.b16 %v820
  %v969 = vunpack.c.l.b16 %v821
  %v970 = vunpack.c.l.b16 %v822
  %v971 = vpack.c.b16 %v968, %v967
  %v972 = vpack.c.b16 %v970, %v969
  %975 = vmatprep.subr.bf16.mxu0 0
  %976 = vmatpush1.bf16.msra.mxu0 0
  %977 = vmatprep.subr.bf16.mxu0 0
  %978 = vmatpush1.bf16.msra.mxu0 0
  %979 = vmatprep.subr.bf16.mxu0 0
  %980 = vmatpush1.bf16.msra.mxu0 0
  %981 = vmatprep.subr.bf16.mxu0 0
  %982 = vmatpush1.bf16.msra.mxu0 0
  %983 = vmatprep.subr.bf16.mxu0 0
  %984 = vmatpush1.bf16.msra.mxu0 0
  %985 = vmatprep.subr.bf16.mxu0 0
  %986 = vmatpush1.bf16.msra.mxu0 0
  %987 = vmatprep.subr.bf16.mxu0 0
  %988 = vmatpush1.bf16.msra.mxu0 %v972
  %989 = vmatprep.subr.bf16.mxu0 0
  %990 = vmatpush1.bf16.msra.mxu0 %v971
  %991 = vmatprep.subr.bf16.mxu0 0
  %992 = vmatpush2.bf16.msra.mxu0 0
  %993 = vmatprep.subr.bf16.mxu0 0
  %994 = vmatpush2.bf16.msra.mxu0 0
  %995 = vmatprep.subr.bf16.mxu0 0
  %996 = vmatpush2.bf16.msra.mxu0 0
  %997 = vmatprep.subr.bf16.mxu0 0
  %998 = vmatpush2.bf16.msra.mxu0 0
  %999 = vmatprep.subr.bf16.mxu0 0
  %1000 = vmatpush2.bf16.msra.mxu0 0
  %1001 = vmatprep.subr.bf16.mxu0 0
  %1002 = vmatpush2.bf16.msra.mxu0 0
  %1003 = vmatprep.subr.bf16.mxu0 0
  %1004 = vmatpush2.bf16.msra.mxu0 0
  %1005 = vmatprep.subr.bf16.mxu0 0
  %1006 = vmatpush2.bf16.msra.mxu0 0
  %1007 = vmatprep.mubr.bf16.mxu0 0
  %1008 = vmatmul.mubr.bf16.gmra.mxu0 %v854
  %v1009 = vpop.f32.mrf.mxu0
  %v1010 = vadd.f32 %v961, %v1009
  %v1011 = vpop.f32.mrf.mxu0
  %v1012 = vpop.f32.mrf.mxu0
  %v1013 = vadd.f32 %v962, %v1012
  %v1014 = vpop.f32.mrf.mxu0
  %1015 = vdwg.mxu0
  %v1016 = vadd.f32 %v1010, %v835
  %v1017 = vadd.f32 %v1013, %v835
  %v1018 = vmul.f32 %v1016, 0.5
  %v1019 = vmul.f32 %v1017, 0.5
  %v1020 = vtanh.pop %v1018
  %v1021 = vtanh.pop %v1019
  %v1022 = vadd.f32 %v1020, 1.0
  %v1023 = vadd.f32 %v1021, 1.0
  %v1024 = vmul.f32 %v1022, 0.5
  %v1025 = vmul.f32 %v1023, 0.5
  %v1026 = vtanh.pop %v1016
  %v1027 = vtanh.pop %v1017
  %v1028 = vmul.f32 %v1024, 0.0
  %v1029 = vmul.f32 %v1025, 0.0
  %1032 = vrot.lane.b32.xlu0 %v1026, 64
  %v1033 = vpop.permute.xlu0 %1032
  %1034 = vrot.lane.b32.xlu0 %v1027, 64
  %v1035 = vpop.permute.xlu0 %1034
  %v1038 = vmul.f32 %v1024, %v1033
  %v1039 = vmul.f32 %v1025, %v1035
  %1042 = vrot.lane.b32.xlu0 %v1038, 32
  %v1043 = vpop.permute.xlu0 %1042
  %1044 = vrot.lane.b32.xlu0 %v1039, 32
  %v1045 = vpop.permute.xlu0 %1044
  %v1048 = vadd.f32 %v1028, %v1043
  %v1049 = vadd.f32 %v1029, %v1045
  %v1050 = vtanh.pop %v1048
  %v1051 = vtanh.pop %v1049
  %1054 = vrot.lane.b32.xlu0 %v1050, 64
  %v1055 = vpop.permute.xlu0 %1054
  %1056 = vrot.lane.b32.xlu0 %v1051, 64
  %v1057 = vpop.permute.xlu0 %1056
  %v1060 = vmul.f32 %v1024, %v1055
  %v1061 = vmul.f32 %v1025, %v1057
  %v1062 = vpack.c.bf16 %v1061, %v1060
  %v1064 = vunpack.c.l.b16 %v1062
  %v1065 = vunpack.c.h.b16 %v1062
  %v1066 = vpack.c.b16 %v1064, %v1064
  %v1067 = vpack.c.b16 %v1065, %v1065
  %1068 = vrot.lane.b32.xlu0 %v1066, 32
  %v1069 = vpop.permute.xlu0 %1068
  %1070 = vrot.lane.b32.xlu0 %v1067, 32
  %v1071 = vpop.permute.xlu0 %1070
  %s1074 = scalar_lea.vmem [#allocation5], 56
  %1075 = vst.msk [vmem:[%s1074] sm:$0xf] %vm955, %v1069
  %1076 = vst.msk [vmem:[%s1074 + $0x4] sm:$0xf] %vm955, %v1071
  %s1077 = scalar_lea.vmem [#allocation2], 8
  %v1078 = vld [vmem:[%s1077] sm:$0xf]
  %v1079 = vld [vmem:[%s1077 + $0x4] sm:$0xf]
  %v1080 = vunpack.c.l.bf16 %v1078
  %v1081 = vunpack.c.l.bf16 %v1079
  %1082 = vrot.lane.b32.xlu0 %v943, 32
  %v1083 = vpop.permute.xlu0 %1082
  %v1085 = vsel %vm134, %v1083, 0
  %1087 = vmatprep.subr.bf16.mxu0 0
  %1088 = vmatpush1.bf16.msra.mxu0 0
  %1089 = vmatprep.subr.bf16.mxu0 0
  %1090 = vmatpush1.bf16.msra.mxu0 0
  %1091 = vmatprep.subr.bf16.mxu0 0
  %1092 = vmatpush1.bf16.msra.mxu0 0
  %1093 = vmatprep.subr.bf16.mxu0 0
  %1094 = vmatpush1.bf16.msra.mxu0 0
  %1095 = vmatprep.subr.bf16.mxu0 0
  %1096 = vmatpush1.bf16.msra.mxu0 0
  %1097 = vmatprep.subr.bf16.mxu0 0
  %1098 = vmatpush1.bf16.msra.mxu0 0
  %1099 = vmatprep.subr.bf16.mxu0 0
  %1100 = vmatpush1.bf16.msra.mxu0 %v850
  %1101 = vmatprep.subr.bf16.mxu0 0
  %1102 = vmatpush1.bf16.msra.mxu0 %v849
  %1103 = vmatprep.subr.bf16.mxu0 0
  %1104 = vmatpush2.bf16.msra.mxu0 0
  %1105 = vmatprep.subr.bf16.mxu0 0
  %1106 = vmatpush2.bf16.msra.mxu0 0
  %1107 = vmatprep.subr.bf16.mxu0 0
  %1108 = vmatpush2.bf16.msra.mxu0 0
  %1109 = vmatprep.subr.bf16.mxu0 0
  %1110 = vmatpush2.bf16.msra.mxu0 0
  %1111 = vmatprep.subr.bf16.mxu0 0
  %1112 = vmatpush2.bf16.msra.mxu0 0
  %1113 = vmatprep.subr.bf16.mxu0 0
  %1114 = vmatpush2.bf16.msra.mxu0 0
  %1115 = vmatprep.subr.bf16.mxu0 0
  %1116 = vmatpush2.bf16.msra.mxu0 0
  %1117 = vmatprep.subr.bf16.mxu0 0
  %1118 = vmatpush2.bf16.msra.mxu0 0
  %1119 = vmatprep.mubr.bf16.mxu0 0
  %1120 = vmatmul.mubr.bf16.gmra.mxu0 %v1085
  %v1121 = vpop.f32.mrf.mxu0
  %v1122 = vadd.f32 %v1080, %v1121
  %v1123 = vpop.f32.mrf.mxu0
  %v1124 = vpop.f32.mrf.mxu0
  %v1125 = vadd.f32 %v1081, %v1124
  %v1126 = vpop.f32.mrf.mxu0
  %1127 = vdwg.mxu0
  %v1128 = vadd.f32 %v1122, %v828
  %v1129 = vadd.f32 %v1125, %v828
  %v1130 = vmul.f32 %v1128, 0.5
  %v1131 = vmul.f32 %v1129, 0.5
  %v1132 = vtanh.pop %v1130
  %v1133 = vtanh.pop %v1131
  %v1134 = vadd.f32 %v1132, 1.0
  %v1135 = vadd.f32 %v1133, 1.0
  %v1136 = vmul.f32 %v1134, 0.5
  %v1137 = vmul.f32 %v1135, 0.5
  %v1138 = vtanh.pop %v1128
  %v1139 = vtanh.pop %v1129
  %v1140 = vmul.f32 %v1136, %v929
  %v1141 = vmul.f32 %v1137, %v930
  %1144 = vrot.lane.b32.xlu0 %v1138, 64
  %v1145 = vpop.permute.xlu0 %1144
  %1146 = vrot.lane.b32.xlu0 %v1139, 64
  %v1147 = vpop.permute.xlu0 %1146
  %v1150 = vmul.f32 %v1136, %v1145
  %v1151 = vmul.f32 %v1137, %v1147
  %1154 = vrot.lane.b32.xlu0 %v1150, 32
  %v1155 = vpop.permute.xlu0 %1154
  %1156 = vrot.lane.b32.xlu0 %v1151, 32
  %v1157 = vpop.permute.xlu0 %1156
  %v1160 = vadd.f32 %v1140, %v1155
  %v1161 = vadd.f32 %v1141, %v1157
  %v1162 = vtanh.pop %v1160
  %v1163 = vtanh.pop %v1161
  %1166 = vrot.lane.b32.xlu0 %v1162, 64
  %v1167 = vpop.permute.xlu0 %1166
  %1168 = vrot.lane.b32.xlu0 %v1163, 64
  %v1169 = vpop.permute.xlu0 %1168
  %v1172 = vmul.f32 %v1136, %v1167
  %v1173 = vmul.f32 %v1137, %v1169
  %v1174 = vpack.c.bf16 %v1173, %v1172
  %v1176 = vunpack.c.l.b16 %v1174
  %v1177 = vunpack.c.h.b16 %v1174
  %v1178 = vpack.c.b16 %v1176, %v1176
  %v1179 = vpack.c.b16 %v1177, %v1177
  %1180 = vrot.lane.b32.xlu0 %v1178, 32
  %v1181 = vpop.permute.xlu0 %1180
  %1182 = vrot.lane.b32.xlu0 %v1179, 32
  %v1183 = vpop.permute.xlu0 %1182
  %s1186 = scalar_lea.vmem [#allocation4], 8
  %1187 = vst.msk [vmem:[%s1186] sm:$0xf] %vm955, %v1181
  %1188 = vst.msk [vmem:[%s1186 + $0x4] sm:$0xf] %vm955, %v1183
  %s1189 = scalar_lea.vmem [#allocation3], 48
  %v1190 = vld [vmem:[%s1189] sm:$0xf]
  %v1191 = vld [vmem:[%s1189 + $0x4] sm:$0xf]
  %v1192 = vunpack.c.l.bf16 %v1190
  %v1193 = vunpack.c.l.bf16 %v1191
  %1194 = vrot.lane.b32.xlu0 %v1062, 32
  %v1195 = vpop.permute.xlu0 %1194
  %v1197 = vsel %vm134, %v1195, 0
  %1199 = vmatprep.subr.bf16.mxu0 0
  %1200 = vmatpush1.bf16.msra.mxu0 0
  %1201 = vmatprep.subr.bf16.mxu0 0
  %1202 = vmatpush1.bf16.msra.mxu0 0
  %1203 = vmatprep.subr.bf16.mxu0 0
  %1204 = vmatpush1.bf16.msra.mxu0 0
  %1205 = vmatprep.subr.bf16.mxu0 0
  %1206 = vmatpush1.bf16.msra.mxu0 0
  %1207 = vmatprep.subr.bf16.mxu0 0
  %1208 = vmatpush1.bf16.msra.mxu0 0
  %1209 = vmatprep.subr.bf16.mxu0 0
  %1210 = vmatpush1.bf16.msra.mxu0 0
  %1211 = vmatprep.subr.bf16.mxu0 0
  %1212 = vmatpush1.bf16.msra.mxu0 %v972
  %1213 = vmatprep.subr.bf16.mxu0 0
  %1214 = vmatpush1.bf16.msra.mxu0 %v971
  %1215 = vmatprep.subr.bf16.mxu0 0
  %1216 = vmatpush2.bf16.msra.mxu0 0
  %1217 = vmatprep.subr.bf16.mxu0 0
  %1218 = vmatpush2.bf16.msra.mxu0 0
  %1219 = vmatprep.subr.bf16.mxu0 0
  %1220 = vmatpush2.bf16.msra.mxu0 0
  %1221 = vmatprep.subr.bf16.mxu0 0
  %1222 = vmatpush2.bf16.msra.mxu0 0
  %1223 = vmatprep.subr.bf16.mxu0 0
  %1224 = vmatpush2.bf16.msra.mxu0 0
  %1225 = vmatprep.subr.bf16.mxu0 0
  %1226 = vmatpush2.bf16.msra.mxu0 0
  %1227 = vmatprep.subr.bf16.mxu0 0
  %1228 = vmatpush2.bf16.msra.mxu0 0
  %1229 = vmatprep.subr.bf16.mxu0 0
  %1230 = vmatpush2.bf16.msra.mxu0 0
  %1231 = vmatprep.mubr.bf16.mxu0 0
  %1232 = vmatmul.mubr.bf16.gmra.mxu0 %v1197
  %v1233 = vpop.f32.mrf.mxu0
  %v1234 = vadd.f32 %v1192, %v1233
  %v1235 = vpop.f32.mrf.mxu0
  %v1236 = vpop.f32.mrf.mxu0
  %v1237 = vadd.f32 %v1193, %v1236
  %v1238 = vpop.f32.mrf.mxu0
  %1239 = vdwg.mxu0
  %v1240 = vadd.f32 %v1234, %v835
  %v1241 = vadd.f32 %v1237, %v835
  %v1242 = vmul.f32 %v1240, 0.5
  %v1243 = vmul.f32 %v1241, 0.5
  %v1244 = vtanh.pop %v1242
  %v1245 = vtanh.pop %v1243
  %v1246 = vadd.f32 %v1244, 1.0
  %v1247 = vadd.f32 %v1245, 1.0
  %v1248 = vmul.f32 %v1246, 0.5
  %v1249 = vmul.f32 %v1247, 0.5
  %v1250 = vtanh.pop %v1240
  %v1251 = vtanh.pop %v1241
  %v1252 = vmul.f32 %v1248, %v1048
  %v1253 = vmul.f32 %v1249, %v1049
  %1256 = vrot.lane.b32.xlu0 %v1250, 64
  %v1257 = vpop.permute.xlu0 %1256
  %1258 = vrot.lane.b32.xlu0 %v1251, 64
  %v1259 = vpop.permute.xlu0 %1258
  %v1262 = vmul.f32 %v1248, %v1257
  %v1263 = vmul.f32 %v1249, %v1259
  %1266 = vrot.lane.b32.xlu0 %v1262, 32
  %v1267 = vpop.permute.xlu0 %1266
  %1268 = vrot.lane.b32.xlu0 %v1263, 32
  %v1269 = vpop.permute.xlu0 %1268
  %v1272 = vadd.f32 %v1252, %v1267
  %v1273 = vadd.f32 %v1253, %v1269
  %v1274 = vtanh.pop %v1272
  %v1275 = vtanh.pop %v1273
  %1278 = vrot.lane.b32.xlu0 %v1274, 64
  %v1279 = vpop.permute.xlu0 %1278
  %1280 = vrot.lane.b32.xlu0 %v1275, 64
  %v1281 = vpop.permute.xlu0 %1280
  %v1284 = vmul.f32 %v1248, %v1279
  %v1285 = vmul.f32 %v1249, %v1281
  %v1286 = vpack.c.bf16 %v1285, %v1284
  %v1288 = vunpack.c.l.b16 %v1286
  %v1289 = vunpack.c.h.b16 %v1286
  %v1290 = vpack.c.b16 %v1288, %v1288
  %v1291 = vpack.c.b16 %v1289, %v1289
  %1292 = vrot.lane.b32.xlu0 %v1290, 32
  %v1293 = vpop.permute.xlu0 %1292
  %1294 = vrot.lane.b32.xlu0 %v1291, 32
  %v1295 = vpop.permute.xlu0 %1294
  %s1298 = scalar_lea.vmem [#allocation5], 48
  %1299 = vst.msk [vmem:[%s1298] sm:$0xf] %vm955, %v1293
  %1300 = vst.msk [vmem:[%s1298 + $0x4] sm:$0xf] %vm955, %v1295
  %s1301 = scalar_lea.vmem [#allocation2], 16
  %v1302 = vld [vmem:[%s1301] sm:$0xf]
  %v1303 = vld [vmem:[%s1301 + $0x4] sm:$0xf]
  %v1304 = vunpack.c.l.bf16 %v1302
  %v1305 = vunpack.c.l.bf16 %v1303
  %1306 = vrot.lane.b32.xlu0 %v1174, 32
  %v1307 = vpop.permute.xlu0 %1306
  %v1309 = vsel %vm134, %v1307, 0
  %1311 = vmatprep.subr.bf16.mxu0 0
  %1312 = vmatpush1.bf16.msra.mxu0 0
  %1313 = vmatprep.subr.bf16.mxu0 0
  %1314 = vmatpush1.bf16.msra.mxu0 0
  %1315 = vmatprep.subr.bf16.mxu0 0
  %1316 = vmatpush1.bf16.msra.mxu0 0
  %1317 = vmatprep.subr.bf16.mxu0 0
  %1318 = vmatpush1.bf16.msra.mxu0 0
  %1319 = vmatprep.subr.bf16.mxu0 0
  %1320 = vmatpush1.bf16.msra.mxu0 0
  %1321 = vmatprep.subr.bf16.mxu0 0
  %1322 = vmatpush1.bf16.msra.mxu0 0
  %1323 = vmatprep.subr.bf16.mxu0 0
  %1324 = vmatpush1.bf16.msra.mxu0 %v850
  %1325 = vmatprep.subr.bf16.mxu0 0
  %1326 = vmatpush1.bf16.msra.mxu0 %v849
  %1327 = vmatprep.subr.bf16.mxu0 0
  %1328 = vmatpush2.bf16.msra.mxu0 0
  %1329 = vmatprep.subr.bf16.mxu0 0
  %1330 = vmatpush2.bf16.msra.mxu0 0
  %1331 = vmatprep.subr.bf16.mxu0 0
  %1332 = vmatpush2.bf16.msra.mxu0 0
  %1333 = vmatprep.subr.bf16.mxu0 0
  %1334 = vmatpush2.bf16.msra.mxu0 0
  %1335 = vmatprep.subr.bf16.mxu0 0
  %1336 = vmatpush2.bf16.msra.mxu0 0
  %1337 = vmatprep.subr.bf16.mxu0 0
  %1338 = vmatpush2.bf16.msra.mxu0 0
  %1339 = vmatprep.subr.bf16.mxu0 0
  %1340 = vmatpush2.bf16.msra.mxu0 0
  %1341 = vmatprep.subr.bf16.mxu0 0
  %1342 = vmatpush2.bf16.msra.mxu0 0
  %1343 = vmatprep.mubr.bf16.mxu0 0
  %1344 = vmatmul.mubr.bf16.gmra.mxu0 %v1309
  %v1345 = vpop.f32.mrf.mxu0
  %v1346 = vadd.f32 %v1304, %v1345
  %v1347 = vpop.f32.mrf.mxu0
  %v1348 = vpop.f32.mrf.mxu0
  %v1349 = vadd.f32 %v1305, %v1348
  %v1350 = vpop.f32.mrf.mxu0
  %1351 = vdwg.mxu0
  %v1352 = vadd.f32 %v1346, %v828
  %v1353 = vadd.f32 %v1349, %v828
  %v1354 = vmul.f32 %v1352, 0.5
  %v1355 = vmul.f32 %v1353, 0.5
  %v1356 = vtanh.pop %v1354
  %v1357 = vtanh.pop %v1355
  %v1358 = vadd.f32 %v1356, 1.0
  %v1359 = vadd.f32 %v1357, 1.0
  %v1360 = vmul.f32 %v1358, 0.5
  %v1361 = vmul.f32 %v1359, 0.5
  %v1362 = vtanh.pop %v1352
  %v1363 = vtanh.pop %v1353
  %v1364 = vmul.f32 %v1360, %v1160
  %v1365 = vmul.f32 %v1361, %v1161
  %1368 = vrot.lane.b32.xlu0 %v1362, 64
  %v1369 = vpop.permute.xlu0 %1368
  %1370 = vrot.lane.b32.xlu0 %v1363, 64
  %v1371 = vpop.permute.xlu0 %1370
  %v1374 = vmul.f32 %v1360, %v1369
  %v1375 = vmul.f32 %v1361, %v1371
  %1378 = vrot.lane.b32.xlu0 %v1374, 32
  %v1379 = vpop.permute.xlu0 %1378
  %1380 = vrot.lane.b32.xlu0 %v1375, 32
  %v1381 = vpop.permute.xlu0 %1380
  %v1384 = vadd.f32 %v1364, %v1379
  %v1385 = vadd.f32 %v1365, %v1381
  %v1386 = vtanh.pop %v1384
  %v1387 = vtanh.pop %v1385
  %1390 = vrot.lane.b32.xlu0 %v1386, 64
  %v1391 = vpop.permute.xlu0 %1390
  %1392 = vrot.lane.b32.xlu0 %v1387, 64
  %v1393 = vpop.permute.xlu0 %1392
  %v1396 = vmul.f32 %v1360, %v1391
  %v1397 = vmul.f32 %v1361, %v1393
  %v1398 = vpack.c.bf16 %v1397, %v1396
  %v1400 = vunpack.c.l.b16 %v1398
  %v1401 = vunpack.c.h.b16 %v1398
  %v1402 = vpack.c.b16 %v1400, %v1400
  %v1403 = vpack.c.b16 %v1401, %v1401
  %1404 = vrot.lane.b32.xlu0 %v1402, 32
  %v1405 = vpop.permute.xlu0 %1404
  %1406 = vrot.lane.b32.xlu0 %v1403, 32
  %v1407 = vpop.permute.xlu0 %1406
  %s1410 = scalar_lea.vmem [#allocation4], 16
  %1411 = vst.msk [vmem:[%s1410] sm:$0xf] %vm955, %v1405
  %1412 = vst.msk [vmem:[%s1410 + $0x4] sm:$0xf] %vm955, %v1407
  %s1413 = scalar_lea.vmem [#allocation3], 40
  %v1414 = vld [vmem:[%s1413] sm:$0xf]
  %v1415 = vld [vmem:[%s1413 + $0x4] sm:$0xf]
  %v1416 = vunpack.c.l.bf16 %v1414
  %v1417 = vunpack.c.l.bf16 %v1415
  %1418 = vrot.lane.b32.xlu0 %v1286, 32
  %v1419 = vpop.permute.xlu0 %1418
  %v1421 = vsel %vm134, %v1419, 0
  %1423 = vmatprep.subr.bf16.mxu0 0
  %1424 = vmatpush1.bf16.msra.mxu0 0
  %1425 = vmatprep.subr.bf16.mxu0 0
  %1426 = vmatpush1.bf16.msra.mxu0 0
  %1427 = vmatprep.subr.bf16.mxu0 0
  %1428 = vmatpush1.bf16.msra.mxu0 0
  %1429 = vmatprep.subr.bf16.mxu0 0
  %1430 = vmatpush1.bf16.msra.mxu0 0
  %1431 = vmatprep.subr.bf16.mxu0 0
  %1432 = vmatpush1.bf16.msra.mxu0 0
  %1433 = vmatprep.subr.bf16.mxu0 0
  %1434 = vmatpush1.bf16.msra.mxu0 0
  %1435 = vmatprep.subr.bf16.mxu0 0
  %1436 = vmatpush1.bf16.msra.mxu0 %v972
  %1437 = vmatprep.subr.bf16.mxu0 0
  %1438 = vmatpush1.bf16.msra.mxu0 %v971
  %1439 = vmatprep.subr.bf16.mxu0 0
  %1440 = vmatpush2.bf16.msra.mxu0 0
  %1441 = vmatprep.subr.bf16.mxu0 0
  %1442 = vmatpush2.bf16.msra.mxu0 0
  %1443 = vmatprep.subr.bf16.mxu0 0
  %1444 = vmatpush2.bf16.msra.mxu0 0
  %1445 = vmatprep.subr.bf16.mxu0 0
  %1446 = vmatpush2.bf16.msra.mxu0 0
  %1447 = vmatprep.subr.bf16.mxu0 0
  %1448 = vmatpush2.bf16.msra.mxu0 0
  %1449 = vmatprep.subr.bf16.mxu0 0
  %1450 = vmatpush2.bf16.msra.mxu0 0
  %1451 = vmatprep.subr.bf16.mxu0 0
  %1452 = vmatpush2.bf16.msra.mxu0 0
  %1453 = vmatprep.subr.bf16.mxu0 0
  %1454 = vmatpush2.bf16.msra.mxu0 0
  %1455 = vmatprep.mubr.bf16.mxu0 0
  %1456 = vmatmul.mubr.bf16.gmra.mxu0 %v1421
  %v1457 = vpop.f32.mrf.mxu0
  %v1458 = vadd.f32 %v1416, %v1457
  %v1459 = vpop.f32.mrf.mxu0
  %v1460 = vpop.f32.mrf.mxu0
  %v1461 = vadd.f32 %v1417, %v1460
  %v1462 = vpop.f32.mrf.mxu0
  %1463 = vdwg.mxu0
  %v1464 = vadd.f32 %v1458, %v835
  %v1465 = vadd.f32 %v1461, %v835
  %v1466 = vmul.f32 %v1464, 0.5
  %v1467 = vmul.f32 %v1465, 0.5
  %v1468 = vtanh.pop %v1466
  %v1469 = vtanh.pop %v1467
  %v1470 = vadd.f32 %v1468, 1.0
  %v1471 = vadd.f32 %v1469, 1.0
  %v1472 = vmul.f32 %v1470, 0.5
  %v1473 = vmul.f32 %v1471, 0.5
  %v1474 = vtanh.pop %v1464
  %v1475 = vtanh.pop %v1465
  %v1476 = vmul.f32 %v1472, %v1272
  %v1477 = vmul.f32 %v1473, %v1273
  %1480 = vrot.lane.b32.xlu0 %v1474, 64
  %v1481 = vpop.permute.xlu0 %1480
  %1482 = vrot.lane.b32.xlu0 %v1475, 64
  %v1483 = vpop.permute.xlu0 %1482
  %v1486 = vmul.f32 %v1472, %v1481
  %v1487 = vmul.f32 %v1473, %v1483
  %1490 = vrot.lane.b32.xlu0 %v1486, 32
  %v1491 = vpop.permute.xlu0 %1490
  %1492 = vrot.lane.b32.xlu0 %v1487, 32
  %v1493 = vpop.permute.xlu0 %1492
  %v1496 = vadd.f32 %v1476, %v1491
  %v1497 = vadd.f32 %v1477, %v1493
  %v1498 = vtanh.pop %v1496
  %v1499 = vtanh.pop %v1497
  %1502 = vrot.lane.b32.xlu0 %v1498, 64
  %v1503 = vpop.permute.xlu0 %1502
  %1504 = vrot.lane.b32.xlu0 %v1499, 64
  %v1505 = vpop.permute.xlu0 %1504
  %v1508 = vmul.f32 %v1472, %v1503
  %v1509 = vmul.f32 %v1473, %v1505
  %v1510 = vpack.c.bf16 %v1509, %v1508
  %v1512 = vunpack.c.l.b16 %v1510
  %v1513 = vunpack.c.h.b16 %v1510
  %v1514 = vpack.c.b16 %v1512, %v1512
  %v1515 = vpack.c.b16 %v1513, %v1513
  %1516 = vrot.lane.b32.xlu0 %v1514, 32
  %v1517 = vpop.permute.xlu0 %1516
  %1518 = vrot.lane.b32.xlu0 %v1515, 32
  %v1519 = vpop.permute.xlu0 %1518
  %s1522 = scalar_lea.vmem [#allocation5], 40
  %1523 = vst.msk [vmem:[%s1522] sm:$0xf] %vm955, %v1517
  %1524 = vst.msk [vmem:[%s1522 + $0x4] sm:$0xf] %vm955, %v1519
  %s1525 = scalar_lea.vmem [#allocation2], 24
  %v1526 = vld [vmem:[%s1525] sm:$0xf]
  %v1527 = vld [vmem:[%s1525 + $0x4] sm:$0xf]
  %v1528 = vunpack.c.l.bf16 %v1526
  %v1529 = vunpack.c.l.bf16 %v1527
  %1530 = vrot.lane.b32.xlu0 %v1398, 32
  %v1531 = vpop.permute.xlu0 %1530
  %v1533 = vsel %vm134, %v1531, 0
  %1535 = vmatprep.subr.bf16.mxu0 0
  %1536 = vmatpush1.bf16.msra.mxu0 0
  %1537 = vmatprep.subr.bf16.mxu0 0
  %1538 = vmatpush1.bf16.msra.mxu0 0
  %1539 = vmatprep.subr.bf16.mxu0 0
  %1540 = vmatpush1.bf16.msra.mxu0 0
  %1541 = vmatprep.subr.bf16.mxu0 0
  %1542 = vmatpush1.bf16.msra.mxu0 0
  %1543 = vmatprep.subr.bf16.mxu0 0
  %1544 = vmatpush1.bf16.msra.mxu0 0
  %1545 = vmatprep.subr.bf16.mxu0 0
  %1546 = vmatpush1.bf16.msra.mxu0 0
  %1547 = vmatprep.subr.bf16.mxu0 0
  %1548 = vmatpush1.bf16.msra.mxu0 %v850
  %1549 = vmatprep.subr.bf16.mxu0 0
  %1550 = vmatpush1.bf16.msra.mxu0 %v849
  %1551 = vmatprep.subr.bf16.mxu0 0
  %1552 = vmatpush2.bf16.msra.mxu0 0
  %1553 = vmatprep.subr.bf16.mxu0 0
  %1554 = vmatpush2.bf16.msra.mxu0 0
  %1555 = vmatprep.subr.bf16.mxu0 0
  %1556 = vmatpush2.bf16.msra.mxu0 0
  %1557 = vmatprep.subr.bf16.mxu0 0
  %1558 = vmatpush2.bf16.msra.mxu0 0
  %1559 = vmatprep.subr.bf16.mxu0 0
  %1560 = vmatpush2.bf16.msra.mxu0 0
  %1561 = vmatprep.subr.bf16.mxu0 0
  %1562 = vmatpush2.bf16.msra.mxu0 0
  %1563 = vmatprep.subr.bf16.mxu0 0
  %1564 = vmatpush2.bf16.msra.mxu0 0
  %1565 = vmatprep.subr.bf16.mxu0 0
  %1566 = vmatpush2.bf16.msra.mxu0 0
  %1567 = vmatprep.mubr.bf16.mxu0 0
  %1568 = vmatmul.mubr.bf16.gmra.mxu0 %v1533
  %v1569 = vpop.f32.mrf.mxu0
  %v1570 = vadd.f32 %v1528, %v1569
  %v1571 = vpop.f32.mrf.mxu0
  %v1572 = vpop.f32.mrf.mxu0
  %v1573 = vadd.f32 %v1529, %v1572
  %v1574 = vpop.f32.mrf.mxu0
  %1575 = vdwg.mxu0
  %v1576 = vadd.f32 %v1570, %v828
  %v1577 = vadd.f32 %v1573, %v828
  %v1578 = vmul.f32 %v1576, 0.5
  %v1579 = vmul.f32 %v1577, 0.5
  %v1580 = vtanh.pop %v1578
  %v1581 = vtanh.pop %v1579
  %v1582 = vadd.f32 %v1580, 1.0
  %v1583 = vadd.f32 %v1581, 1.0
  %v1584 = vmul.f32 %v1582, 0.5
  %v1585 = vmul.f32 %v1583, 0.5
  %v1586 = vtanh.pop %v1576
  %v1587 = vtanh.pop %v1577
  %v1588 = vmul.f32 %v1584, %v1384
  %v1589 = vmul.f32 %v1585, %v1385
  %1592 = vrot.lane.b32.xlu0 %v1586, 64
  %v1593 = vpop.permute.xlu0 %1592
  %1594 = vrot.lane.b32.xlu0 %v1587, 64
  %v1595 = vpop.permute.xlu0 %1594
  %v1598 = vmul.f32 %v1584, %v1593
  %v1599 = vmul.f32 %v1585, %v1595
  %1602 = vrot.lane.b32.xlu0 %v1598, 32
  %v1603 = vpop.permute.xlu0 %1602
  %1604 = vrot.lane.b32.xlu0 %v1599, 32
  %v1605 = vpop.permute.xlu0 %1604
  %v1608 = vadd.f32 %v1588, %v1603
  %v1609 = vadd.f32 %v1589, %v1605
  %v1610 = vtanh.pop %v1608
  %v1611 = vtanh.pop %v1609
  %1614 = vrot.lane.b32.xlu0 %v1610, 64
  %v1615 = vpop.permute.xlu0 %1614
  %1616 = vrot.lane.b32.xlu0 %v1611, 64
  %v1617 = vpop.permute.xlu0 %1616
  %v1620 = vmul.f32 %v1584, %v1615
  %v1621 = vmul.f32 %v1585, %v1617
  %v1622 = vpack.c.bf16 %v1621, %v1620
  %v1624 = vunpack.c.l.b16 %v1622
  %v1625 = vunpack.c.h.b16 %v1622
  %v1626 = vpack.c.b16 %v1624, %v1624
  %v1627 = vpack.c.b16 %v1625, %v1625
  %1628 = vrot.lane.b32.xlu0 %v1626, 32
  %v1629 = vpop.permute.xlu0 %1628
  %1630 = vrot.lane.b32.xlu0 %v1627, 32
  %v1631 = vpop.permute.xlu0 %1630
  %s1634 = scalar_lea.vmem [#allocation4], 24
  %1635 = vst.msk [vmem:[%s1634] sm:$0xf] %vm955, %v1629
  %1636 = vst.msk [vmem:[%s1634 + $0x4] sm:$0xf] %vm955, %v1631
  %s1637 = scalar_lea.vmem [#allocation3], 32
  %v1638 = vld [vmem:[%s1637] sm:$0xf]
  %v1639 = vld [vmem:[%s1637 + $0x4] sm:$0xf]
  %v1640 = vunpack.c.l.bf16 %v1638
  %v1641 = vunpack.c.l.bf16 %v1639
  %1642 = vrot.lane.b32.xlu0 %v1510, 32
  %v1643 = vpop.permute.xlu0 %1642
  %v1645 = vsel %vm134, %v1643, 0
  %1647 = vmatprep.subr.bf16.mxu0 0
  %1648 = vmatpush1.bf16.msra.mxu0 0
  %1649 = vmatprep.subr.bf16.mxu0 0
  %1650 = vmatpush1.bf16.msra.mxu0 0
  %1651 = vmatprep.subr.bf16.mxu0 0
  %1652 = vmatpush1.bf16.msra.mxu0 0
  %1653 = vmatprep.subr.bf16.mxu0 0
  %1654 = vmatpush1.bf16.msra.mxu0 0
  %1655 = vmatprep.subr.bf16.mxu0 0
  %1656 = vmatpush1.bf16.msra.mxu0 0
  %1657 = vmatprep.subr.bf16.mxu0 0
  %1658 = vmatpush1.bf16.msra.mxu0 0
  %1659 = vmatprep.subr.bf16.mxu0 0
  %1660 = vmatpush1.bf16.msra.mxu0 %v972
  %1661 = vmatprep.subr.bf16.mxu0 0
  %1662 = vmatpush1.bf16.msra.mxu0 %v971
  %1663 = vmatprep.subr.bf16.mxu0 0
  %1664 = vmatpush2.bf16.msra.mxu0 0
  %1665 = vmatprep.subr.bf16.mxu0 0
  %1666 = vmatpush2.bf16.msra.mxu0 0
  %1667 = vmatprep.subr.bf16.mxu0 0
  %1668 = vmatpush2.bf16.msra.mxu0 0
  %1669 = vmatprep.subr.bf16.mxu0 0
  %1670 = vmatpush2.bf16.msra.mxu0 0
  %1671 = vmatprep.subr.bf16.mxu0 0
  %1672 = vmatpush2.bf16.msra.mxu0 0
  %1673 = vmatprep.subr.bf16.mxu0 0
  %1674 = vmatpush2.bf16.msra.mxu0 0
  %1675 = vmatprep.subr.bf16.mxu0 0
  %1676 = vmatpush2.bf16.msra.mxu0 0
  %1677 = vmatprep.subr.bf16.mxu0 0
  %1678 = vmatpush2.bf16.msra.mxu0 0
  %1679 = vmatprep.mubr.bf16.mxu0 0
  %1680 = vmatmul.mubr.bf16.gmra.mxu0 %v1645
  %v1681 = vpop.f32.mrf.mxu0
  %v1682 = vadd.f32 %v1640, %v1681
  %v1683 = vpop.f32.mrf.mxu0
  %v1684 = vpop.f32.mrf.mxu0
  %v1685 = vadd.f32 %v1641, %v1684
  %v1686 = vpop.f32.mrf.mxu0
  %1687 = vdwg.mxu0
  %v1688 = vadd.f32 %v1682, %v835
  %v1689 = vadd.f32 %v1685, %v835
  %v1690 = vmul.f32 %v1688, 0.5
  %v1691 = vmul.f32 %v1689, 0.5
  %v1692 = vtanh.pop %v1690
  %v1693 = vtanh.pop %v1691
  %v1694 = vadd.f32 %v1692, 1.0
  %v1695 = vadd.f32 %v1693, 1.0
  %v1696 = vmul.f32 %v1694, 0.5
  %v1697 = vmul.f32 %v1695, 0.5
  %v1698 = vtanh.pop %v1688
  %v1699 = vtanh.pop %v1689
  %v1700 = vmul.f32 %v1696, %v1496
  %v1701 = vmul.f32 %v1697, %v1497
  %1704 = vrot.lane.b32.xlu0 %v1698, 64
  %v1705 = vpop.permute.xlu0 %1704
  %1706 = vrot.lane.b32.xlu0 %v1699, 64
  %v1707 = vpop.permute.xlu0 %1706
  %v1710 = vmul.f32 %v1696, %v1705
  %v1711 = vmul.f32 %v1697, %v1707
  %1714 = vrot.lane.b32.xlu0 %v1710, 32
  %v1715 = vpop.permute.xlu0 %1714
  %1716 = vrot.lane.b32.xlu0 %v1711, 32
  %v1717 = vpop.permute.xlu0 %1716
  %v1720 = vadd.f32 %v1700, %v1715
  %v1721 = vadd.f32 %v1701, %v1717
  %v1722 = vtanh.pop %v1720
  %v1723 = vtanh.pop %v1721
  %1726 = vrot.lane.b32.xlu0 %v1722, 64
  %v1727 = vpop.permute.xlu0 %1726
  %1728 = vrot.lane.b32.xlu0 %v1723, 64
  %v1729 = vpop.permute.xlu0 %1728
  %v1732 = vmul.f32 %v1696, %v1727
  %v1733 = vmul.f32 %v1697, %v1729
  %v1734 = vpack.c.bf16 %v1733, %v1732
  %v1736 = vunpack.c.l.b16 %v1734
  %v1737 = vunpack.c.h.b16 %v1734
  %v1738 = vpack.c.b16 %v1736, %v1736
  %v1739 = vpack.c.b16 %v1737, %v1737
  %1740 = vrot.lane.b32.xlu0 %v1738, 32
  %v1741 = vpop.permute.xlu0 %1740
  %1742 = vrot.lane.b32.xlu0 %v1739, 32
  %v1743 = vpop.permute.xlu0 %1742
  %s1746 = scalar_lea.vmem [#allocation5], 32
  %1747 = vst.msk [vmem:[%s1746] sm:$0xf] %vm955, %v1741
  %1748 = vst.msk [vmem:[%s1746 + $0x4] sm:$0xf] %vm955, %v1743
  %s1749 = scalar_lea.vmem [#allocation2], 32
  %v1750 = vld [vmem:[%s1749] sm:$0xf]
  %v1751 = vld [vmem:[%s1749 + $0x4] sm:$0xf]
  %v1752 = vunpack.c.l.bf16 %v1750
  %v1753 = vunpack.c.l.bf16 %v1751
  %1754 = vrot.lane.b32.xlu0 %v1622, 32
  %v1755 = vpop.permute.xlu0 %1754
  %v1757 = vsel %vm134, %v1755, 0
  %1759 = vmatprep.subr.bf16.mxu0 0
  %1760 = vmatpush1.bf16.msra.mxu0 0
  %1761 = vmatprep.subr.bf16.mxu0 0
  %1762 = vmatpush1.bf16.msra.mxu0 0
  %1763 = vmatprep.subr.bf16.mxu0 0
  %1764 = vmatpush1.bf16.msra.mxu0 0
  %1765 = vmatprep.subr.bf16.mxu0 0
  %1766 = vmatpush1.bf16.msra.mxu0 0
  %1767 = vmatprep.subr.bf16.mxu0 0
  %1768 = vmatpush1.bf16.msra.mxu0 0
  %1769 = vmatprep.subr.bf16.mxu0 0
  %1770 = vmatpush1.bf16.msra.mxu0 0
  %1771 = vmatprep.subr.bf16.mxu0 0
  %1772 = vmatpush1.bf16.msra.mxu0 %v850
  %1773 = vmatprep.subr.bf16.mxu0 0
  %1774 = vmatpush1.bf16.msra.mxu0 %v849
  %1775 = vmatprep.subr.bf16.mxu0 0
  %1776 = vmatpush2.bf16.msra.mxu0 0
  %1777 = vmatprep.subr.bf16.mxu0 0
  %1778 = vmatpush2.bf16.msra.mxu0 0
  %1779 = vmatprep.subr.bf16.mxu0 0
  %1780 = vmatpush2.bf16.msra.mxu0 0
  %1781 = vmatprep.subr.bf16.mxu0 0
  %1782 = vmatpush2.bf16.msra.mxu0 0
  %1783 = vmatprep.subr.bf16.mxu0 0
  %1784 = vmatpush2.bf16.msra.mxu0 0
  %1785 = vmatprep.subr.bf16.mxu0 0
  %1786 = vmatpush2.bf16.msra.mxu0 0
  %1787 = vmatprep.subr.bf16.mxu0 0
  %1788 = vmatpush2.bf16.msra.mxu0 0
  %1789 = vmatprep.subr.bf16.mxu0 0
  %1790 = vmatpush2.bf16.msra.mxu0 0
  %1791 = vmatprep.mubr.bf16.mxu0 0
  %1792 = vmatmul.mubr.bf16.gmra.mxu0 %v1757
  %v1793 = vpop.f32.mrf.mxu0
  %v1794 = vadd.f32 %v1752, %v1793
  %v1795 = vpop.f32.mrf.mxu0
  %v1796 = vpop.f32.mrf.mxu0
  %v1797 = vadd.f32 %v1753, %v1796
  %v1798 = vpop.f32.mrf.mxu0
  %1799 = vdwg.mxu0
  %v1800 = vadd.f32 %v1794, %v828
  %v1801 = vadd.f32 %v1797, %v828
  %v1802 = vmul.f32 %v1800, 0.5
  %v1803 = vmul.f32 %v1801, 0.5
  %v1804 = vtanh.pop %v1802
  %v1805 = vtanh.pop %v1803
  %v1806 = vadd.f32 %v1804, 1.0
  %v1807 = vadd.f32 %v1805, 1.0
  %v1808 = vmul.f32 %v1806, 0.5
  %v1809 = vmul.f32 %v1807, 0.5
  %v1810 = vtanh.pop %v1800
  %v1811 = vtanh.pop %v1801
  %v1812 = vmul.f32 %v1808, %v1608
  %v1813 = vmul.f32 %v1809, %v1609
  %1816 = vrot.lane.b32.xlu0 %v1810, 64
  %v1817 = vpop.permute.xlu0 %1816
  %1818 = vrot.lane.b32.xlu0 %v1811, 64
  %v1819 = vpop.permute.xlu0 %1818
  %v1822 = vmul.f32 %v1808, %v1817
  %v1823 = vmul.f32 %v1809, %v1819
  %1826 = vrot.lane.b32.xlu0 %v1822, 32
  %v1827 = vpop.permute.xlu0 %1826
  %1828 = vrot.lane.b32.xlu0 %v1823, 32
  %v1829 = vpop.permute.xlu0 %1828
  %v1832 = vadd.f32 %v1812, %v1827
  %v1833 = vadd.f32 %v1813, %v1829
  %v1834 = vtanh.pop %v1832
  %v1835 = vtanh.pop %v1833
  %1838 = vrot.lane.b32.xlu0 %v1834, 64
  %v1839 = vpop.permute.xlu0 %1838
  %1840 = vrot.lane.b32.xlu0 %v1835, 64
  %v1841 = vpop.permute.xlu0 %1840
  %v1844 = vmul.f32 %v1808, %v1839
  %v1845 = vmul.f32 %v1809, %v1841
  %v1846 = vpack.c.bf16 %v1845, %v1844
  %v1848 = vunpack.c.l.b16 %v1846
  %v1849 = vunpack.c.h.b16 %v1846
  %v1850 = vpack.c.b16 %v1848, %v1848
  %v1851 = vpack.c.b16 %v1849, %v1849
  %1852 = vrot.lane.b32.xlu0 %v1850, 32
  %v1853 = vpop.permute.xlu0 %1852
  %1854 = vrot.lane.b32.xlu0 %v1851, 32
  %v1855 = vpop.permute.xlu0 %1854
  %s1858 = scalar_lea.vmem [#allocation4], 32
  %1859 = vst.msk [vmem:[%s1858] sm:$0xf] %vm955, %v1853
  %1860 = vst.msk [vmem:[%s1858 + $0x4] sm:$0xf] %vm955, %v1855
  %s1861 = scalar_lea.vmem [#allocation3], 24
  %v1862 = vld [vmem:[%s1861] sm:$0xf]
  %v1863 = vld [vmem:[%s1861 + $0x4] sm:$0xf]
  %v1864 = vunpack.c.l.bf16 %v1862
  %v1865 = vunpack.c.l.bf16 %v1863
  %1866 = vrot.lane.b32.xlu0 %v1734, 32
  %v1867 = vpop.permute.xlu0 %1866
  %v1869 = vsel %vm134, %v1867, 0
  %1871 = vmatprep.subr.bf16.mxu0 0
  %1872 = vmatpush1.bf16.msra.mxu0 0
  %1873 = vmatprep.subr.bf16.mxu0 0
  %1874 = vmatpush1.bf16.msra.mxu0 0
  %1875 = vmatprep.subr.bf16.mxu0 0
  %1876 = vmatpush1.bf16.msra.mxu0 0
  %1877 = vmatprep.subr.bf16.mxu0 0
  %1878 = vmatpush1.bf16.msra.mxu0 0
  %1879 = vmatprep.subr.bf16.mxu0 0
  %1880 = vmatpush1.bf16.msra.mxu0 0
  %1881 = vmatprep.subr.bf16.mxu0 0
  %1882 = vmatpush1.bf16.msra.mxu0 0
  %1883 = vmatprep.subr.bf16.mxu0 0
  %1884 = vmatpush1.bf16.msra.mxu0 %v972
  %1885 = vmatprep.subr.bf16.mxu0 0
  %1886 = vmatpush1.bf16.msra.mxu0 %v971
  %1887 = vmatprep.subr.bf16.mxu0 0
  %1888 = vmatpush2.bf16.msra.mxu0 0
  %1889 = vmatprep.subr.bf16.mxu0 0
  %1890 = vmatpush2.bf16.msra.mxu0 0
  %1891 = vmatprep.subr.bf16.mxu0 0
  %1892 = vmatpush2.bf16.msra.mxu0 0
  %1893 = vmatprep.subr.bf16.mxu0 0
  %1894 = vmatpush2.bf16.msra.mxu0 0
  %1895 = vmatprep.subr.bf16.mxu0 0
  %1896 = vmatpush2.bf16.msra.mxu0 0
  %1897 = vmatprep.subr.bf16.mxu0 0
  %1898 = vmatpush2.bf16.msra.mxu0 0
  %1899 = vmatprep.subr.bf16.mxu0 0
  %1900 = vmatpush2.bf16.msra.mxu0 0
  %1901 = vmatprep.subr.bf16.mxu0 0
  %1902 = vmatpush2.bf16.msra.mxu0 0
  %1903 = vmatprep.mubr.bf16.mxu0 0
  %1904 = vmatmul.mubr.bf16.gmra.mxu0 %v1869
  %v1905 = vpop.f32.mrf.mxu0
  %v1906 = vadd.f32 %v1864, %v1905
  %v1907 = vpop.f32.mrf.mxu0
  %v1908 = vpop.f32.mrf.mxu0
  %v1909 = vadd.f32 %v1865, %v1908
  %v1910 = vpop.f32.mrf.mxu0
  %1911 = vdwg.mxu0
  %v1912 = vadd.f32 %v1906, %v835
  %v1913 = vadd.f32 %v1909, %v835
  %v1914 = vmul.f32 %v1912, 0.5
  %v1915 = vmul.f32 %v1913, 0.5
  %v1916 = vtanh.pop %v1914
  %v1917 = vtanh.pop %v1915
  %v1918 = vadd.f32 %v1916, 1.0
  %v1919 = vadd.f32 %v1917, 1.0
  %v1920 = vmul.f32 %v1918, 0.5
  %v1921 = vmul.f32 %v1919, 0.5
  %v1922 = vtanh.pop %v1912
  %v1923 = vtanh.pop %v1913
  %v1924 = vmul.f32 %v1920, %v1720
  %v1925 = vmul.f32 %v1921, %v1721
  %1928 = vrot.lane.b32.xlu0 %v1922, 64
  %v1929 = vpop.permute.xlu0 %1928
  %1930 = vrot.lane.b32.xlu0 %v1923, 64
  %v1931 = vpop.permute.xlu0 %1930
  %v1934 = vmul.f32 %v1920, %v1929
  %v1935 = vmul.f32 %v1921, %v1931
  %1938 = vrot.lane.b32.xlu0 %v1934, 32
  %v1939 = vpop.permute.xlu0 %1938
  %1940 = vrot.lane.b32.xlu0 %v1935, 32
  %v1941 = vpop.permute.xlu0 %1940
  %v1944 = vadd.f32 %v1924, %v1939
  %v1945 = vadd.f32 %v1925, %v1941
  %v1946 = vtanh.pop %v1944
  %v1947 = vtanh.pop %v1945
  %1950 = vrot.lane.b32.xlu0 %v1946, 64
  %v1951 = vpop.permute.xlu0 %1950
  %1952 = vrot.lane.b32.xlu0 %v1947, 64
  %v1953 = vpop.permute.xlu0 %1952
  %v1956 = vmul.f32 %v1920, %v1951
  %v1957 = vmul.f32 %v1921, %v1953
  %v1958 = vpack.c.bf16 %v1957, %v1956
  %v1960 = vunpack.c.l.b16 %v1958
  %v1961 = vunpack.c.h.b16 %v1958
  %v1962 = vpack.c.b16 %v1960, %v1960
  %v1963 = vpack.c.b16 %v1961, %v1961
  %1964 = vrot.lane.b32.xlu0 %v1962, 32
  %v1965 = vpop.permute.xlu0 %1964
  %1966 = vrot.lane.b32.xlu0 %v1963, 32
  %v1967 = vpop.permute.xlu0 %1966
  %s1970 = scalar_lea.vmem [#allocation5], 24
  %1971 = vst.msk [vmem:[%s1970] sm:$0xf] %vm955, %v1965
  %1972 = vst.msk [vmem:[%s1970 + $0x4] sm:$0xf] %vm955, %v1967
  %s1973 = scalar_lea.vmem [#allocation2], 40
  %v1974 = vld [vmem:[%s1973] sm:$0xf]
  %v1975 = vld [vmem:[%s1973 + $0x4] sm:$0xf]
  %v1976 = vunpack.c.l.bf16 %v1974
  %v1977 = vunpack.c.l.bf16 %v1975
  %1978 = vrot.lane.b32.xlu0 %v1846, 32
  %v1979 = vpop.permute.xlu0 %1978
  %v1981 = vsel %vm134, %v1979, 0
  %1983 = vmatprep.subr.bf16.mxu0 0
  %1984 = vmatpush1.bf16.msra.mxu0 0
  %1985 = vmatprep.subr.bf16.mxu0 0
  %1986 = vmatpush1.bf16.msra.mxu0 0
  %1987 = vmatprep.subr.bf16.mxu0 0
  %1988 = vmatpush1.bf16.msra.mxu0 0
  %1989 = vmatprep.subr.bf16.mxu0 0
  %1990 = vmatpush1.bf16.msra.mxu0 0
  %1991 = vmatprep.subr.bf16.mxu0 0
  %1992 = vmatpush1.bf16.msra.mxu0 0
  %1993 = vmatprep.subr.bf16.mxu0 0
  %1994 = vmatpush1.bf16.msra.mxu0 0
  %1995 = vmatprep.subr.bf16.mxu0 0
  %1996 = vmatpush1.bf16.msra.mxu0 %v850
  %1997 = vmatprep.subr.bf16.mxu0 0
  %1998 = vmatpush1.bf16.msra.mxu0 %v849
  %1999 = vmatprep.subr.bf16.mxu0 0
  %2000 = vmatpush2.bf16.msra.mxu0 0
  %2001 = vmatprep.subr.bf16.mxu0 0
  %2002 = vmatpush2.bf16.msra.mxu0 0
  %2003 = vmatprep.subr.bf16.mxu0 0
  %2004 = vmatpush2.bf16.msra.mxu0 0
  %2005 = vmatprep.subr.bf16.mxu0 0
  %2006 = vmatpush2.bf16.msra.mxu0 0
  %2007 = vmatprep.subr.bf16.mxu0 0
  %2008 = vmatpush2.bf16.msra.mxu0 0
  %2009 = vmatprep.subr.bf16.mxu0 0
  %2010 = vmatpush2.bf16.msra.mxu0 0
  %2011 = vmatprep.subr.bf16.mxu0 0
  %2012 = vmatpush2.bf16.msra.mxu0 0
  %2013 = vmatprep.subr.bf16.mxu0 0
  %2014 = vmatpush2.bf16.msra.mxu0 0
  %2015 = vmatprep.mubr.bf16.mxu0 0
  %2016 = vmatmul.mubr.bf16.gmra.mxu0 %v1981
  %v2017 = vpop.f32.mrf.mxu0
  %v2018 = vadd.f32 %v1976, %v2017
  %v2019 = vpop.f32.mrf.mxu0
  %v2020 = vpop.f32.mrf.mxu0
  %v2021 = vadd.f32 %v1977, %v2020
  %v2022 = vpop.f32.mrf.mxu0
  %2023 = vdwg.mxu0
  %v2024 = vadd.f32 %v2018, %v828
  %v2025 = vadd.f32 %v2021, %v828
  %v2026 = vmul.f32 %v2024, 0.5
  %v2027 = vmul.f32 %v2025, 0.5
  %v2028 = vtanh.pop %v2026
  %v2029 = vtanh.pop %v2027
  %v2030 = vadd.f32 %v2028, 1.0
  %v2031 = vadd.f32 %v2029, 1.0
  %v2032 = vmul.f32 %v2030, 0.5
  %v2033 = vmul.f32 %v2031, 0.5
  %v2034 = vtanh.pop %v2024
  %v2035 = vtanh.pop %v2025
  %v2036 = vmul.f32 %v2032, %v1832
  %v2037 = vmul.f32 %v2033, %v1833
  %2040 = vrot.lane.b32.xlu0 %v2034, 64
  %v2041 = vpop.permute.xlu0 %2040
  %2042 = vrot.lane.b32.xlu0 %v2035, 64
  %v2043 = vpop.permute.xlu0 %2042
  %v2046 = vmul.f32 %v2032, %v2041
  %v2047 = vmul.f32 %v2033, %v2043
  %2050 = vrot.lane.b32.xlu0 %v2046, 32
  %v2051 = vpop.permute.xlu0 %2050
  %2052 = vrot.lane.b32.xlu0 %v2047, 32
  %v2053 = vpop.permute.xlu0 %2052
  %v2056 = vadd.f32 %v2036, %v2051
  %v2057 = vadd.f32 %v2037, %v2053
  %v2058 = vtanh.pop %v2056
  %v2059 = vtanh.pop %v2057
  %2062 = vrot.lane.b32.xlu0 %v2058, 64
  %v2063 = vpop.permute.xlu0 %2062
  %2064 = vrot.lane.b32.xlu0 %v2059, 64
  %v2065 = vpop.permute.xlu0 %2064
  %v2068 = vmul.f32 %v2032, %v2063
  %v2069 = vmul.f32 %v2033, %v2065
  %v2070 = vpack.c.bf16 %v2069, %v2068
  %v2072 = vunpack.c.l.b16 %v2070
  %v2073 = vunpack.c.h.b16 %v2070
  %v2074 = vpack.c.b16 %v2072, %v2072
  %v2075 = vpack.c.b16 %v2073, %v2073
  %2076 = vrot.lane.b32.xlu0 %v2074, 32
  %v2077 = vpop.permute.xlu0 %2076
  %2078 = vrot.lane.b32.xlu0 %v2075, 32
  %v2079 = vpop.permute.xlu0 %2078
  %s2082 = scalar_lea.vmem [#allocation4], 40
  %2083 = vst.msk [vmem:[%s2082] sm:$0xf] %vm955, %v2077
  %2084 = vst.msk [vmem:[%s2082 + $0x4] sm:$0xf] %vm955, %v2079
  %s2085 = scalar_lea.vmem [#allocation3], 16
  %v2086 = vld [vmem:[%s2085] sm:$0xf]
  %v2087 = vld [vmem:[%s2085 + $0x4] sm:$0xf]
  %v2088 = vunpack.c.l.bf16 %v2086
  %v2089 = vunpack.c.l.bf16 %v2087
  %2090 = vrot.lane.b32.xlu0 %v1958, 32
  %v2091 = vpop.permute.xlu0 %2090
  %v2093 = vsel %vm134, %v2091, 0
  %2095 = vmatprep.subr.bf16.mxu0 0
  %2096 = vmatpush1.bf16.msra.mxu0 0
  %2097 = vmatprep.subr.bf16.mxu0 0
  %2098 = vmatpush1.bf16.msra.mxu0 0
  %2099 = vmatprep.subr.bf16.mxu0 0
  %2100 = vmatpush1.bf16.msra.mxu0 0
  %2101 = vmatprep.subr.bf16.mxu0 0
  %2102 = vmatpush1.bf16.msra.mxu0 0
  %2103 = vmatprep.subr.bf16.mxu0 0
  %2104 = vmatpush1.bf16.msra.mxu0 0
  %2105 = vmatprep.subr.bf16.mxu0 0
  %2106 = vmatpush1.bf16.msra.mxu0 0
  %2107 = vmatprep.subr.bf16.mxu0 0
  %2108 = vmatpush1.bf16.msra.mxu0 %v972
  %2109 = vmatprep.subr.bf16.mxu0 0
  %2110 = vmatpush1.bf16.msra.mxu0 %v971
  %2111 = vmatprep.subr.bf16.mxu0 0
  %2112 = vmatpush2.bf16.msra.mxu0 0
  %2113 = vmatprep.subr.bf16.mxu0 0
  %2114 = vmatpush2.bf16.msra.mxu0 0
  %2115 = vmatprep.subr.bf16.mxu0 0
  %2116 = vmatpush2.bf16.msra.mxu0 0
  %2117 = vmatprep.subr.bf16.mxu0 0
  %2118 = vmatpush2.bf16.msra.mxu0 0
  %2119 = vmatprep.subr.bf16.mxu0 0
  %2120 = vmatpush2.bf16.msra.mxu0 0
  %2121 = vmatprep.subr.bf16.mxu0 0
  %2122 = vmatpush2.bf16.msra.mxu0 0
  %2123 = vmatprep.subr.bf16.mxu0 0
  %2124 = vmatpush2.bf16.msra.mxu0 0
  %2125 = vmatprep.subr.bf16.mxu0 0
  %2126 = vmatpush2.bf16.msra.mxu0 0
  %2127 = vmatprep.mubr.bf16.mxu0 0
  %2128 = vmatmul.mubr.bf16.gmra.mxu0 %v2093
  %v2129 = vpop.f32.mrf.mxu0
  %v2130 = vadd.f32 %v2088, %v2129
  %v2131 = vpop.f32.mrf.mxu0
  %v2132 = vpop.f32.mrf.mxu0
  %v2133 = vadd.f32 %v2089, %v2132
  %v2134 = vpop.f32.mrf.mxu0
  %2135 = vdwg.mxu0
  %v2136 = vadd.f32 %v2130, %v835
  %v2137 = vadd.f32 %v2133, %v835
  %v2138 = vmul.f32 %v2136, 0.5
  %v2139 = vmul.f32 %v2137, 0.5
  %v2140 = vtanh.pop %v2138
  %v2141 = vtanh.pop %v2139
  %v2142 = vadd.f32 %v2140, 1.0
  %v2143 = vadd.f32 %v2141, 1.0
  %v2144 = vmul.f32 %v2142, 0.5
  %v2145 = vmul.f32 %v2143, 0.5
  %v2146 = vtanh.pop %v2136
  %v2147 = vtanh.pop %v2137
  %v2148 = vmul.f32 %v2144, %v1944
  %v2149 = vmul.f32 %v2145, %v1945
  %2152 = vrot.lane.b32.xlu0 %v2146, 64
  %v2153 = vpop.permute.xlu0 %2152
  %2154 = vrot.lane.b32.xlu0 %v2147, 64
  %v2155 = vpop.permute.xlu0 %2154
  %v2158 = vmul.f32 %v2144, %v2153
  %v2159 = vmul.f32 %v2145, %v2155
  %2162 = vrot.lane.b32.xlu0 %v2158, 32
  %v2163 = vpop.permute.xlu0 %2162
  %2164 = vrot.lane.b32.xlu0 %v2159, 32
  %v2165 = vpop.permute.xlu0 %2164
  %v2168 = vadd.f32 %v2148, %v2163
  %v2169 = vadd.f32 %v2149, %v2165
  %v2170 = vtanh.pop %v2168
  %v2171 = vtanh.pop %v2169
  %2174 = vrot.lane.b32.xlu0 %v2170, 64
  %v2175 = vpop.permute.xlu0 %2174
  %2176 = vrot.lane.b32.xlu0 %v2171, 64
  %v2177 = vpop.permute.xlu0 %2176
  %v2180 = vmul.f32 %v2144, %v2175
  %v2181 = vmul.f32 %v2145, %v2177
  %v2182 = vpack.c.bf16 %v2181, %v2180
  %v2184 = vunpack.c.l.b16 %v2182
  %v2185 = vunpack.c.h.b16 %v2182
  %v2186 = vpack.c.b16 %v2184, %v2184
  %v2187 = vpack.c.b16 %v2185, %v2185
  %2188 = vrot.lane.b32.xlu0 %v2186, 32
  %v2189 = vpop.permute.xlu0 %2188
  %2190 = vrot.lane.b32.xlu0 %v2187, 32
  %v2191 = vpop.permute.xlu0 %2190
  %s2194 = scalar_lea.vmem [#allocation5], 16
  %2195 = vst.msk [vmem:[%s2194] sm:$0xf] %vm955, %v2189
  %2196 = vst.msk [vmem:[%s2194 + $0x4] sm:$0xf] %vm955, %v2191
  %s2197 = scalar_lea.vmem [#allocation2], 48
  %v2198 = vld [vmem:[%s2197] sm:$0xf]
  %v2199 = vld [vmem:[%s2197 + $0x4] sm:$0xf]
  %v2200 = vunpack.c.l.bf16 %v2198
  %v2201 = vunpack.c.l.bf16 %v2199
  %2202 = vrot.lane.b32.xlu0 %v2070, 32
  %v2203 = vpop.permute.xlu0 %2202
  %v2205 = vsel %vm134, %v2203, 0
  %2207 = vmatprep.subr.bf16.mxu0 0
  %2208 = vmatpush1.bf16.msra.mxu0 0
  %2209 = vmatprep.subr.bf16.mxu0 0
  %2210 = vmatpush1.bf16.msra.mxu0 0
  %2211 = vmatprep.subr.bf16.mxu0 0
  %2212 = vmatpush1.bf16.msra.mxu0 0
  %2213 = vmatprep.subr.bf16.mxu0 0
  %2214 = vmatpush1.bf16.msra.mxu0 0
  %2215 = vmatprep.subr.bf16.mxu0 0
  %2216 = vmatpush1.bf16.msra.mxu0 0
  %2217 = vmatprep.subr.bf16.mxu0 0
  %2218 = vmatpush1.bf16.msra.mxu0 0
  %2219 = vmatprep.subr.bf16.mxu0 0
  %2220 = vmatpush1.bf16.msra.mxu0 %v850
  %2221 = vmatprep.subr.bf16.mxu0 0
  %2222 = vmatpush1.bf16.msra.mxu0 %v849
  %2223 = vmatprep.subr.bf16.mxu0 0
  %2224 = vmatpush2.bf16.msra.mxu0 0
  %2225 = vmatprep.subr.bf16.mxu0 0
  %2226 = vmatpush2.bf16.msra.mxu0 0
  %2227 = vmatprep.subr.bf16.mxu0 0
  %2228 = vmatpush2.bf16.msra.mxu0 0
  %2229 = vmatprep.subr.bf16.mxu0 0
  %2230 = vmatpush2.bf16.msra.mxu0 0
  %2231 = vmatprep.subr.bf16.mxu0 0
  %2232 = vmatpush2.bf16.msra.mxu0 0
  %2233 = vmatprep.subr.bf16.mxu0 0
  %2234 = vmatpush2.bf16.msra.mxu0 0
  %2235 = vmatprep.subr.bf16.mxu0 0
  %2236 = vmatpush2.bf16.msra.mxu0 0
  %2237 = vmatprep.subr.bf16.mxu0 0
  %2238 = vmatpush2.bf16.msra.mxu0 0
  %2239 = vmatprep.mubr.bf16.mxu0 0
  %2240 = vmatmul.mubr.bf16.gmra.mxu0 %v2205
  %v2241 = vpop.f32.mrf.mxu0
  %v2242 = vadd.f32 %v2200, %v2241
  %v2243 = vpop.f32.mrf.mxu0
  %v2244 = vpop.f32.mrf.mxu0
  %v2245 = vadd.f32 %v2201, %v2244
  %v2246 = vpop.f32.mrf.mxu0
  %2247 = vdwg.mxu0
  %v2248 = vadd.f32 %v2242, %v828
  %v2249 = vadd.f32 %v2245, %v828
  %v2250 = vmul.f32 %v2248, 0.5
  %v2251 = vmul.f32 %v2249, 0.5
  %v2252 = vtanh.pop %v2250
  %v2253 = vtanh.pop %v2251
  %v2254 = vadd.f32 %v2252, 1.0
  %v2255 = vadd.f32 %v2253, 1.0
  %v2256 = vmul.f32 %v2254, 0.5
  %v2257 = vmul.f32 %v2255, 0.5
  %v2258 = vtanh.pop %v2248
  %v2259 = vtanh.pop %v2249
  %v2260 = vmul.f32 %v2256, %v2056
  %v2261 = vmul.f32 %v2257, %v2057
  %2264 = vrot.lane.b32.xlu0 %v2258, 64
  %v2265 = vpop.permute.xlu0 %2264
  %2266 = vrot.lane.b32.xlu0 %v2259, 64
  %v2267 = vpop.permute.xlu0 %2266
  %v2270 = vmul.f32 %v2256, %v2265
  %v2271 = vmul.f32 %v2257, %v2267
  %2274 = vrot.lane.b32.xlu0 %v2270, 32
  %v2275 = vpop.permute.xlu0 %2274
  %2276 = vrot.lane.b32.xlu0 %v2271, 32
  %v2277 = vpop.permute.xlu0 %2276
  %v2280 = vadd.f32 %v2260, %v2275
  %v2281 = vadd.f32 %v2261, %v2277
  %v2282 = vtanh.pop %v2280
  %v2283 = vtanh.pop %v2281
  %2286 = vrot.lane.b32.xlu0 %v2282, 64
  %v2287 = vpop.permute.xlu0 %2286
  %2288 = vrot.lane.b32.xlu0 %v2283, 64
  %v2289 = vpop.permute.xlu0 %2288
  %v2292 = vmul.f32 %v2256, %v2287
  %v2293 = vmul.f32 %v2257, %v2289
  %v2294 = vpack.c.bf16 %v2293, %v2292
  %v2296 = vunpack.c.l.b16 %v2294
  %v2297 = vunpack.c.h.b16 %v2294
  %v2298 = vpack.c.b16 %v2296, %v2296
  %v2299 = vpack.c.b16 %v2297, %v2297
  %2300 = vrot.lane.b32.xlu0 %v2298, 32
  %v2301 = vpop.permute.xlu0 %2300
  %2302 = vrot.lane.b32.xlu0 %v2299, 32
  %v2303 = vpop.permute.xlu0 %2302
  %s2306 = scalar_lea.vmem [#allocation4], 48
  %2307 = vst.msk [vmem:[%s2306] sm:$0xf] %vm955, %v2301
  %2308 = vst.msk [vmem:[%s2306 + $0x4] sm:$0xf] %vm955, %v2303
  %s2309 = scalar_lea.vmem [#allocation3], 8
  %v2310 = vld [vmem:[%s2309] sm:$0xf]
  %v2311 = vld [vmem:[%s2309 + $0x4] sm:$0xf]
  %v2312 = vunpack.c.l.bf16 %v2310
  %v2313 = vunpack.c.l.bf16 %v2311
  %2314 = vrot.lane.b32.xlu0 %v2182, 32
  %v2315 = vpop.permute.xlu0 %2314
  %v2317 = vsel %vm134, %v2315, 0
  %2319 = vmatprep.subr.bf16.mxu0 0
  %2320 = vmatpush1.bf16.msra.mxu0 0
  %2321 = vmatprep.subr.bf16.mxu0 0
  %2322 = vmatpush1.bf16.msra.mxu0 0
  %2323 = vmatprep.subr.bf16.mxu0 0
  %2324 = vmatpush1.bf16.msra.mxu0 0
  %2325 = vmatprep.subr.bf16.mxu0 0
  %2326 = vmatpush1.bf16.msra.mxu0 0
  %2327 = vmatprep.subr.bf16.mxu0 0
  %2328 = vmatpush1.bf16.msra.mxu0 0
  %2329 = vmatprep.subr.bf16.mxu0 0
  %2330 = vmatpush1.bf16.msra.mxu0 0
  %2331 = vmatprep.subr.bf16.mxu0 0
  %2332 = vmatpush1.bf16.msra.mxu0 %v972
  %2333 = vmatprep.subr.bf16.mxu0 0
  %2334 = vmatpush1.bf16.msra.mxu0 %v971
  %2335 = vmatprep.subr.bf16.mxu0 0
  %2336 = vmatpush2.bf16.msra.mxu0 0
  %2337 = vmatprep.subr.bf16.mxu0 0
  %2338 = vmatpush2.bf16.msra.mxu0 0
  %2339 = vmatprep.subr.bf16.mxu0 0
  %2340 = vmatpush2.bf16.msra.mxu0 0
  %2341 = vmatprep.subr.bf16.mxu0 0
  %2342 = vmatpush2.bf16.msra.mxu0 0
  %2343 = vmatprep.subr.bf16.mxu0 0
  %2344 = vmatpush2.bf16.msra.mxu0 0
  %2345 = vmatprep.subr.bf16.mxu0 0
  %2346 = vmatpush2.bf16.msra.mxu0 0
  %2347 = vmatprep.subr.bf16.mxu0 0
  %2348 = vmatpush2.bf16.msra.mxu0 0
  %2349 = vmatprep.subr.bf16.mxu0 0
  %2350 = vmatpush2.bf16.msra.mxu0 0
  %2351 = vmatprep.mubr.bf16.mxu0 0
  %2352 = vmatmul.mubr.bf16.gmra.mxu0 %v2317
  %v2353 = vpop.f32.mrf.mxu0
  %v2354 = vadd.f32 %v2312, %v2353
  %v2355 = vpop.f32.mrf.mxu0
  %v2356 = vpop.f32.mrf.mxu0
  %v2357 = vadd.f32 %v2313, %v2356
  %v2358 = vpop.f32.mrf.mxu0
  %2359 = vdwg.mxu0
  %v2360 = vadd.f32 %v2354, %v835
  %v2361 = vadd.f32 %v2357, %v835
  %v2362 = vmul.f32 %v2360, 0.5
  %v2363 = vmul.f32 %v2361, 0.5
  %v2364 = vtanh.pop %v2362
  %v2365 = vtanh.pop %v2363
  %v2366 = vadd.f32 %v2364, 1.0
  %v2367 = vadd.f32 %v2365, 1.0
  %v2368 = vmul.f32 %v2366, 0.5
  %v2369 = vmul.f32 %v2367, 0.5
  %v2370 = vtanh.pop %v2360
  %v2371 = vtanh.pop %v2361
  %v2372 = vmul.f32 %v2368, %v2168
  %v2373 = vmul.f32 %v2369, %v2169
  %2376 = vrot.lane.b32.xlu0 %v2370, 64
  %v2377 = vpop.permute.xlu0 %2376
  %2378 = vrot.lane.b32.xlu0 %v2371, 64
  %v2379 = vpop.permute.xlu0 %2378
  %v2382 = vmul.f32 %v2368, %v2377
  %v2383 = vmul.f32 %v2369, %v2379
  %2386 = vrot.lane.b32.xlu0 %v2382, 32
  %v2387 = vpop.permute.xlu0 %2386
  %2388 = vrot.lane.b32.xlu0 %v2383, 32
  %v2389 = vpop.permute.xlu0 %2388
  %v2392 = vadd.f32 %v2372, %v2387
  %v2393 = vadd.f32 %v2373, %v2389
  %v2394 = vtanh.pop %v2392
  %v2395 = vtanh.pop %v2393
  %2398 = vrot.lane.b32.xlu0 %v2394, 64
  %v2399 = vpop.permute.xlu0 %2398
  %2400 = vrot.lane.b32.xlu0 %v2395, 64
  %v2401 = vpop.permute.xlu0 %2400
  %v2404 = vmul.f32 %v2368, %v2399
  %v2405 = vmul.f32 %v2369, %v2401
  %v2406 = vpack.c.bf16 %v2405, %v2404
  %v2408 = vunpack.c.l.b16 %v2406
  %v2409 = vunpack.c.h.b16 %v2406
  %v2410 = vpack.c.b16 %v2408, %v2408
  %v2411 = vpack.c.b16 %v2409, %v2409
  %2412 = vrot.lane.b32.xlu0 %v2410, 32
  %v2413 = vpop.permute.xlu0 %2412
  %2414 = vrot.lane.b32.xlu0 %v2411, 32
  %v2415 = vpop.permute.xlu0 %2414
  %s2418 = scalar_lea.vmem [#allocation5], 8
  %2419 = vst.msk [vmem:[%s2418] sm:$0xf] %vm955, %v2413
  %2420 = vst.msk [vmem:[%s2418 + $0x4] sm:$0xf] %vm955, %v2415
  %s2421 = scalar_lea.vmem [#allocation2], 56
  %v2422 = vld [vmem:[%s2421] sm:$0xf]
  %v2423 = vld [vmem:[%s2421 + $0x4] sm:$0xf]
  %v2424 = vunpack.c.l.bf16 %v2422
  %v2425 = vunpack.c.l.bf16 %v2423
  %2426 = vrot.lane.b32.xlu0 %v2294, 32
  %v2427 = vpop.permute.xlu0 %2426
  %v2429 = vsel %vm134, %v2427, 0
  %2431 = vmatprep.subr.bf16.mxu0 0
  %2432 = vmatpush1.bf16.msra.mxu0 0
  %2433 = vmatprep.subr.bf16.mxu0 0
  %2434 = vmatpush1.bf16.msra.mxu0 0
  %2435 = vmatprep.subr.bf16.mxu0 0
  %2436 = vmatpush1.bf16.msra.mxu0 0
  %2437 = vmatprep.subr.bf16.mxu0 0
  %2438 = vmatpush1.bf16.msra.mxu0 0
  %2439 = vmatprep.subr.bf16.mxu0 0
  %2440 = vmatpush1.bf16.msra.mxu0 0
  %2441 = vmatprep.subr.bf16.mxu0 0
  %2442 = vmatpush1.bf16.msra.mxu0 0
  %2443 = vmatprep.subr.bf16.mxu0 0
  %2444 = vmatpush1.bf16.msra.mxu0 %v850
  %2445 = vmatprep.subr.bf16.mxu0 0
  %2446 = vmatpush1.bf16.msra.mxu0 %v849
  %2447 = vmatprep.subr.bf16.mxu0 0
  %2448 = vmatpush2.bf16.msra.mxu0 0
  %2449 = vmatprep.subr.bf16.mxu0 0
  %2450 = vmatpush2.bf16.msra.mxu0 0
  %2451 = vmatprep.subr.bf16.mxu0 0
  %2452 = vmatpush2.bf16.msra.mxu0 0
  %2453 = vmatprep.subr.bf16.mxu0 0
  %2454 = vmatpush2.bf16.msra.mxu0 0
  %2455 = vmatprep.subr.bf16.mxu0 0
  %2456 = vmatpush2.bf16.msra.mxu0 0
  %2457 = vmatprep.subr.bf16.mxu0 0
  %2458 = vmatpush2.bf16.msra.mxu0 0
  %2459 = vmatprep.subr.bf16.mxu0 0
  %2460 = vmatpush2.bf16.msra.mxu0 0
  %2461 = vmatprep.subr.bf16.mxu0 0
  %2462 = vmatpush2.bf16.msra.mxu0 0
  %2463 = vmatprep.mubr.bf16.mxu0 0
  %2464 = vmatmul.mubr.bf16.gmra.mxu0 %v2429
  %v2465 = vpop.f32.mrf.mxu0
  %v2466 = vadd.f32 %v2424, %v2465
  %v2467 = vpop.f32.mrf.mxu0
  %v2468 = vpop.f32.mrf.mxu0
  %v2469 = vadd.f32 %v2425, %v2468
  %v2470 = vpop.f32.mrf.mxu0
  %2471 = vdwg.mxu0
  %v2472 = vadd.f32 %v2466, %v828
  %v2473 = vadd.f32 %v2469, %v828
  %v2474 = vmul.f32 %v2472, 0.5
  %v2475 = vmul.f32 %v2473, 0.5
  %v2476 = vtanh.pop %v2474
  %v2477 = vtanh.pop %v2475
  %v2478 = vadd.f32 %v2476, 1.0
  %v2479 = vadd.f32 %v2477, 1.0
  %v2480 = vmul.f32 %v2478, 0.5
  %v2481 = vmul.f32 %v2479, 0.5
  %v2482 = vtanh.pop %v2472
  %v2483 = vtanh.pop %v2473
  %v2484 = vmul.f32 %v2480, %v2280
  %v2485 = vmul.f32 %v2481, %v2281
  %2488 = vrot.lane.b32.xlu0 %v2482, 64
  %v2489 = vpop.permute.xlu0 %2488
  %2490 = vrot.lane.b32.xlu0 %v2483, 64
  %v2491 = vpop.permute.xlu0 %2490
  %v2494 = vmul.f32 %v2480, %v2489
  %v2495 = vmul.f32 %v2481, %v2491
  %2498 = vrot.lane.b32.xlu0 %v2494, 32
  %v2499 = vpop.permute.xlu0 %2498
  %2500 = vrot.lane.b32.xlu0 %v2495, 32
  %v2501 = vpop.permute.xlu0 %2500
  %v2504 = vadd.f32 %v2484, %v2499
  %v2505 = vadd.f32 %v2485, %v2501
  %v2506 = vtanh.pop %v2504
  %v2507 = vtanh.pop %v2505
  %2510 = vrot.lane.b32.xlu0 %v2506, 64
  %v2511 = vpop.permute.xlu0 %2510
  %2512 = vrot.lane.b32.xlu0 %v2507, 64
  %v2513 = vpop.permute.xlu0 %2512
  %v2516 = vmul.f32 %v2480, %v2511
  %v2517 = vmul.f32 %v2481, %v2513
  %v2518 = vpack.c.bf16 %v2517, %v2516
  %v2520 = vunpack.c.l.b16 %v2518
  %v2521 = vunpack.c.h.b16 %v2518
  %v2522 = vpack.c.b16 %v2520, %v2520
  %v2523 = vpack.c.b16 %v2521, %v2521
  %2524 = vrot.lane.b32.xlu0 %v2522, 32
  %v2525 = vpop.permute.xlu0 %2524
  %2526 = vrot.lane.b32.xlu0 %v2523, 32
  %v2527 = vpop.permute.xlu0 %2526
  %s2530 = scalar_lea.vmem [#allocation4], 56
  %2531 = vst.msk [vmem:[%s2530] sm:$0xf] %vm955, %v2525
  %2532 = vst.msk [vmem:[%s2530 + $0x4] sm:$0xf] %vm955, %v2527
  %v2533 = vld [vmem:[#allocation3] sm:$0xf]
  %v2534 = vld [vmem:[#allocation3 + $0x4] sm:$0xf]
  %v2535 = vunpack.c.l.bf16 %v2533
  %v2536 = vunpack.c.l.bf16 %v2534
  %2537 = vrot.lane.b32.xlu0 %v2406, 32
  %v2538 = vpop.permute.xlu0 %2537
  %v2540 = vsel %vm134, %v2538, 0
  %2542 = vmatprep.subr.bf16.mxu0 0
  %2543 = vmatpush1.bf16.msra.mxu0 0
  %2544 = vmatprep.subr.bf16.mxu0 0
  %2545 = vmatpush1.bf16.msra.mxu0 0
  %2546 = vmatprep.subr.bf16.mxu0 0
  %2547 = vmatpush1.bf16.msra.mxu0 0
  %2548 = vmatprep.subr.bf16.mxu0 0
  %2549 = vmatpush1.bf16.msra.mxu0 0
  %2550 = vmatprep.subr.bf16.mxu0 0
  %2551 = vmatpush1.bf16.msra.mxu0 0
  %2552 = vmatprep.subr.bf16.mxu0 0
  %2553 = vmatpush1.bf16.msra.mxu0 0
  %2554 = vmatprep.subr.bf16.mxu0 0
  %2555 = vmatpush1.bf16.msra.mxu0 %v972
  %2556 = vmatprep.subr.bf16.mxu0 0
  %2557 = vmatpush1.bf16.msra.mxu0 %v971
  %2558 = vmatprep.subr.bf16.mxu0 0
  %2559 = vmatpush2.bf16.msra.mxu0 0
  %2560 = vmatprep.subr.bf16.mxu0 0
  %2561 = vmatpush2.bf16.msra.mxu0 0
  %2562 = vmatprep.subr.bf16.mxu0 0
  %2563 = vmatpush2.bf16.msra.mxu0 0
  %2564 = vmatprep.subr.bf16.mxu0 0
  %2565 = vmatpush2.bf16.msra.mxu0 0
  %2566 = vmatprep.subr.bf16.mxu0 0
  %2567 = vmatpush2.bf16.msra.mxu0 0
  %2568 = vmatprep.subr.bf16.mxu0 0
  %2569 = vmatpush2.bf16.msra.mxu0 0
  %2570 = vmatprep.subr.bf16.mxu0 0
  %2571 = vmatpush2.bf16.msra.mxu0 0
  %2572 = vmatprep.subr.bf16.mxu0 0
  %2573 = vmatpush2.bf16.msra.mxu0 0
  %2574 = vmatprep.mubr.bf16.mxu0 0
  %2575 = vmatmul.mubr.bf16.gmra.mxu0 %v2540
  %v2576 = vpop.f32.mrf.mxu0
  %v2577 = vadd.f32 %v2535, %v2576
  %v2578 = vpop.f32.mrf.mxu0
  %v2579 = vpop.f32.mrf.mxu0
  %v2580 = vadd.f32 %v2536, %v2579
  %v2581 = vpop.f32.mrf.mxu0
  %2582 = vdwg.mxu0
  %v2583 = vadd.f32 %v2577, %v835
  %v2584 = vadd.f32 %v2580, %v835
  %v2585 = vmul.f32 %v2583, 0.5
  %v2586 = vmul.f32 %v2584, 0.5
  %v2587 = vtanh.pop %v2585
  %v2588 = vtanh.pop %v2586
  %v2589 = vadd.f32 %v2587, 1.0
  %v2590 = vadd.f32 %v2588, 1.0
  %v2591 = vmul.f32 %v2589, 0.5
  %v2592 = vmul.f32 %v2590, 0.5
  %v2593 = vtanh.pop %v2583
  %v2594 = vtanh.pop %v2584
  %v2595 = vmul.f32 %v2591, %v2392
  %v2596 = vmul.f32 %v2592, %v2393
  %2599 = vrot.lane.b32.xlu0 %v2593, 64
  %v2600 = vpop.permute.xlu0 %2599
  %2601 = vrot.lane.b32.xlu0 %v2594, 64
  %v2602 = vpop.permute.xlu0 %2601
  %v2605 = vmul.f32 %v2591, %v2600
  %v2606 = vmul.f32 %v2592, %v2602
  %2609 = vrot.lane.b32.xlu0 %v2605, 32
  %v2610 = vpop.permute.xlu0 %2609
  %2611 = vrot.lane.b32.xlu0 %v2606, 32
  %v2612 = vpop.permute.xlu0 %2611
  %v2615 = vadd.f32 %v2595, %v2610
  %v2616 = vadd.f32 %v2596, %v2612
  %v2617 = vtanh.pop %v2615
  %v2618 = vtanh.pop %v2616
  %2621 = vrot.lane.b32.xlu0 %v2617, 64
  %v2622 = vpop.permute.xlu0 %2621
  %2623 = vrot.lane.b32.xlu0 %v2618, 64
  %v2624 = vpop.permute.xlu0 %2623
  %v2627 = vmul.f32 %v2591, %v2622
  %v2628 = vmul.f32 %v2592, %v2624
  %v2629 = vpack.c.bf16 %v2628, %v2627
  %v2631 = vunpack.c.l.b16 %v2629
  %v2632 = vunpack.c.h.b16 %v2629
  %v2633 = vpack.c.b16 %v2631, %v2631
  %v2634 = vpack.c.b16 %v2632, %v2632
  %2635 = vrot.lane.b32.xlu0 %v2633, 32
  %v2636 = vpop.permute.xlu0 %2635
  %2637 = vrot.lane.b32.xlu0 %v2634, 32
  %v2638 = vpop.permute.xlu0 %2637
  %2641 = vst.msk [vmem:[#allocation5] sm:$0xf] %vm955, %v2636
  %2642 = vst.msk [vmem:[#allocation5 + $0x4] sm:$0xf] %vm955, %v2638
  %v2643 = vld [vmem:[#allocation4] sm:$0xf]
  %v2644 = vld [vmem:[#allocation4 + $0x4] sm:$0xf]
  %v2645 = vld [vmem:[#allocation4 + $0x8] sm:$0xf]
  %v2646 = vld [vmem:[#allocation4 + $0xc] sm:$0xf]
  %v2647 = vld [vmem:[#allocation4 + $0x10] sm:$0xf]
  %v2648 = vld [vmem:[#allocation4 + $0x14] sm:$0xf]
  %v2649 = vld [vmem:[#allocation4 + $0x18] sm:$0xf]
  %v2650 = vld [vmem:[#allocation4 + $0x1c] sm:$0xf]
  %v2651 = vld [vmem:[#allocation4 + $0x20] sm:$0xf]
  %v2652 = vld [vmem:[#allocation4 + $0x24] sm:$0xf]
  %v2653 = vld [vmem:[#allocation4 + $0x28] sm:$0xf]
  %v2654 = vld [vmem:[#allocation4 + $0x2c] sm:$0xf]
  %v2655 = vld [vmem:[#allocation4 + $0x30] sm:$0xf]
  %v2656 = vld [vmem:[#allocation4 + $0x34] sm:$0xf]
  %v2657 = vld [vmem:[#allocation4 + $0x38] sm:$0xf]
  %v2658 = vld [vmem:[#allocation4 + $0x3c] sm:$0xf]
  %v2659 = vld [vmem:[#allocation5] sm:$0xf]
  %v2660 = vld [vmem:[#allocation5 + $0x4] sm:$0xf]
  %v2661 = vld [vmem:[#allocation5 + $0x8] sm:$0xf]
  %v2662 = vld [vmem:[#allocation5 + $0xc] sm:$0xf]
  %v2663 = vld [vmem:[#allocation5 + $0x10] sm:$0xf]
  %v2664 = vld [vmem:[#allocation5 + $0x14] sm:$0xf]
  %v2665 = vld [vmem:[#allocation5 + $0x18] sm:$0xf]
  %v2666 = vld [vmem:[#allocation5 + $0x1c] sm:$0xf]
  %v2667 = vld [vmem:[#allocation5 + $0x20] sm:$0xf]
  %v2668 = vld [vmem:[#allocation5 + $0x24] sm:$0xf]
  %v2669 = vld [vmem:[#allocation5 + $0x28] sm:$0xf]
  %v2670 = vld [vmem:[#allocation5 + $0x2c] sm:$0xf]
  %v2671 = vld [vmem:[#allocation5 + $0x30] sm:$0xf]
  %v2672 = vld [vmem:[#allocation5 + $0x34] sm:$0xf]
  %v2673 = vld [vmem:[#allocation5 + $0x38] sm:$0xf]
  %v2674 = vld [vmem:[#allocation5 + $0x3c] sm:$0xf]
  %v2675 = vld [vmem:[%s8] sm:$0xf]
  %v2676 = vld [vmem:[%s8 + $0x4] sm:$0xf]
  %v2677 = vld [vmem:[%s8 + $0x8] sm:$0xf]
  %v2678 = vld [vmem:[%s8 + $0xc] sm:$0xf]
  %v2679 = vld [vmem:[%s9] sm:$0xf]
  %v2680 = vld [vmem:[%s9 + $0x4] sm:$0xf]
  %v2681 = vld [vmem:[%s9 + $0x8] sm:$0xf]
  %v2682 = vld [vmem:[%s9 + $0xc] sm:$0xf]
  %v2699 = vunpack.c.l.b16 %v2659
  %v2700 = vunpack.c.l.b16 %v2660
  %v2701 = vunpack.c.l.b16 %v2661
  %v2702 = vunpack.c.l.b16 %v2662
  %v2703 = vunpack.c.l.b16 %v2663
  %v2704 = vunpack.c.l.b16 %v2664
  %v2705 = vunpack.c.l.b16 %v2665
  %v2706 = vunpack.c.l.b16 %v2666
  %v2707 = vunpack.c.l.b16 %v2667
  %v2708 = vunpack.c.l.b16 %v2668
  %v2709 = vunpack.c.l.b16 %v2669
  %v2710 = vunpack.c.l.b16 %v2670
  %v2711 = vunpack.c.l.b16 %v2671
  %v2712 = vunpack.c.l.b16 %v2672
  %v2713 = vunpack.c.l.b16 %v2673
  %v2714 = vunpack.c.l.b16 %v2674
  %v2715 = vpack.c.b16 %v2700, %v2699
  %v2716 = vpack.c.b16 %v2702, %v2701
  %v2717 = vpack.c.b16 %v2704, %v2703
  %v2718 = vpack.c.b16 %v2706, %v2705
  %v2719 = vpack.c.b16 %v2708, %v2707
  %v2720 = vpack.c.b16 %v2710, %v2709
  %v2721 = vpack.c.b16 %v2712, %v2711
  %v2722 = vpack.c.b16 %v2714, %v2713
  %v2727 = vunpack.c.l.b16 %v2679
  %v2728 = vunpack.c.l.b16 %v2680
  %v2729 = vunpack.c.l.b16 %v2681
  %v2730 = vunpack.c.l.b16 %v2682
  %v2731 = vpack.c.b16 %v2728, %v2727
  %v2732 = vpack.c.b16 %v2730, %v2729
  %v2736 = vsel %vm134, %v2715, 0
  %v2739 = vsel %vm134, %v2716, 0
  %v2742 = vsel %vm134, %v2717, 0
  %v2745 = vsel %vm134, %v2718, 0
  %v2748 = vsel %vm134, %v2719, 0
  %v2751 = vsel %vm134, %v2720, 0
  %v2754 = vsel %vm134, %v2721, 0
  %v2757 = vsel %vm134, %v2722, 0
  %2759 = vmatprep.subr.bf16.mxu0 0
  %2760 = vmatpush1.bf16.msra.mxu0 0
  %2761 = vmatprep.subr.bf16.mxu0 0
  %2762 = vmatpush1.bf16.msra.mxu0 0
  %2763 = vmatprep.subr.bf16.mxu0 0
  %2764 = vmatpush1.bf16.msra.mxu0 0
  %2765 = vmatprep.subr.bf16.mxu0 0
  %2766 = vmatpush1.bf16.msra.mxu0 0
  %2767 = vmatprep.subr.bf16.mxu0 0
  %2768 = vmatpush1.bf16.msra.mxu0 0
  %2769 = vmatprep.subr.bf16.mxu0 0
  %2770 = vmatpush1.bf16.msra.mxu0 0
  %2771 = vmatprep.subr.bf16.mxu0 0
  %2772 = vmatpush1.bf16.msra.mxu0 %v2732
  %2773 = vmatprep.subr.bf16.mxu0 0
  %2774 = vmatpush1.bf16.msra.mxu0 %v2731
  %2775 = vmatprep.subr.bf16.mxu0 0
  %2776 = vmatpush2.bf16.msra.mxu0 0
  %2777 = vmatprep.subr.bf16.mxu0 0
  %2778 = vmatpush2.bf16.msra.mxu0 0
  %2779 = vmatprep.subr.bf16.mxu0 0
  %2780 = vmatpush2.bf16.msra.mxu0 0
  %2781 = vmatprep.subr.bf16.mxu0 0
  %2782 = vmatpush2.bf16.msra.mxu0 0
  %2783 = vmatprep.subr.bf16.mxu0 0
  %2784 = vmatpush2.bf16.msra.mxu0 0
  %2785 = vmatprep.subr.bf16.mxu0 0
  %2786 = vmatpush2.bf16.msra.mxu0 0
  %2787 = vmatprep.subr.bf16.mxu0 0
  %2788 = vmatpush2.bf16.msra.mxu0 0
  %2789 = vmatprep.subr.bf16.mxu0 0
  %2790 = vmatpush2.bf16.msra.mxu0 0
  %2791 = vmatprep.mubr.bf16.mxu0 0
  %2792 = vmatmul.mubr.bf16.gmra.mxu0 %v2736
  %v2793 = vpop.f32.mrf.mxu0
  %v2794 = vadd.f32 0.0, %v2793
  %v2795 = vpop.f32.mrf.mxu0
  %v2796 = vpop.f32.mrf.mxu0
  %v2797 = vadd.f32 0.0, %v2796
  %v2798 = vpop.f32.mrf.mxu0
  %2799 = vmatprep.mubr.bf16.mxu0 0
  %2800 = vmatmul.mubr.bf16.gmra.mxu0 %v2739
  %v2801 = vpop.f32.mrf.mxu0
  %v2802 = vadd.f32 0.0, %v2801
  %v2803 = vpop.f32.mrf.mxu0
  %v2804 = vpop.f32.mrf.mxu0
  %v2805 = vadd.f32 0.0, %v2804
  %v2806 = vpop.f32.mrf.mxu0
  %2807 = vmatprep.mubr.bf16.mxu0 0
  %2808 = vmatmul.mubr.bf16.gmra.mxu0 %v2742
  %v2809 = vpop.f32.mrf.mxu0
  %v2810 = vadd.f32 0.0, %v2809
  %v2811 = vpop.f32.mrf.mxu0
  %v2812 = vpop.f32.mrf.mxu0
  %v2813 = vadd.f32 0.0, %v2812
  %v2814 = vpop.f32.mrf.mxu0
  %2815 = vmatprep.mubr.bf16.mxu0 0
  %2816 = vmatmul.mubr.bf16.gmra.mxu0 %v2745
  %v2817 = vpop.f32.mrf.mxu0
  %v2818 = vadd.f32 0.0, %v2817
  %v2819 = vpop.f32.mrf.mxu0
  %v2820 = vpop.f32.mrf.mxu0
  %v2821 = vadd.f32 0.0, %v2820
  %v2822 = vpop.f32.mrf.mxu0
  %2823 = vmatprep.mubr.bf16.mxu0 0
  %2824 = vmatmul.mubr.bf16.gmra.mxu0 %v2748
  %v2825 = vpop.f32.mrf.mxu0
  %v2826 = vadd.f32 0.0, %v2825
  %v2827 = vpop.f32.mrf.mxu0
  %v2828 = vpop.f32.mrf.mxu0
  %v2829 = vadd.f32 0.0, %v2828
  %v2830 = vpop.f32.mrf.mxu0
  %2831 = vmatprep.mubr.bf16.mxu0 0
  %2832 = vmatmul.mubr.bf16.gmra.mxu0 %v2751
  %v2833 = vpop.f32.mrf.mxu0
  %v2834 = vadd.f32 0.0, %v2833
  %v2835 = vpop.f32.mrf.mxu0
  %v2836 = vpop.f32.mrf.mxu0
  %v2837 = vadd.f32 0.0, %v2836
  %v2838 = vpop.f32.mrf.mxu0
  %2839 = vmatprep.mubr.bf16.mxu0 0
  %2840 = vmatmul.mubr.bf16.gmra.mxu0 %v2754
  %v2841 = vpop.f32.mrf.mxu0
  %v2842 = vadd.f32 0.0, %v2841
  %v2843 = vpop.f32.mrf.mxu0
  %v2844 = vpop.f32.mrf.mxu0
  %v2845 = vadd.f32 0.0, %v2844
  %v2846 = vpop.f32.mrf.mxu0
  %2847 = vmatprep.mubr.bf16.mxu0 0
  %2848 = vmatmul.mubr.bf16.gmra.mxu0 %v2757
  %v2849 = vpop.f32.mrf.mxu0
  %v2850 = vadd.f32 0.0, %v2849
  %v2851 = vpop.f32.mrf.mxu0
  %v2852 = vpop.f32.mrf.mxu0
  %v2853 = vadd.f32 0.0, %v2852
  %v2854 = vpop.f32.mrf.mxu0
  %2855 = vdwg.mxu0
  %v2872 = vunpack.c.l.b16 %v2643
  %v2873 = vunpack.c.l.b16 %v2644
  %v2874 = vunpack.c.l.b16 %v2645
  %v2875 = vunpack.c.l.b16 %v2646
  %v2876 = vunpack.c.l.b16 %v2647
  %v2877 = vunpack.c.l.b16 %v2648
  %v2878 = vunpack.c.l.b16 %v2649
  %v2879 = vunpack.c.l.b16 %v2650
  %v2880 = vunpack.c.l.b16 %v2651
  %v2881 = vunpack.c.l.b16 %v2652
  %v2882 = vunpack.c.l.b16 %v2653
  %v2883 = vunpack.c.l.b16 %v2654
  %v2884 = vunpack.c.l.b16 %v2655
  %v2885 = vunpack.c.l.b16 %v2656
  %v2886 = vunpack.c.l.b16 %v2657
  %v2887 = vunpack.c.l.b16 %v2658
  %v2888 = vpack.c.b16 %v2873, %v2872
  %v2889 = vpack.c.b16 %v2875, %v2874
  %v2890 = vpack.c.b16 %v2877, %v2876
  %v2891 = vpack.c.b16 %v2879, %v2878
  %v2892 = vpack.c.b16 %v2881, %v2880
  %v2893 = vpack.c.b16 %v2883, %v2882
  %v2894 = vpack.c.b16 %v2885, %v2884
  %v2895 = vpack.c.b16 %v2887, %v2886
  %v2900 = vunpack.c.l.b16 %v2675
  %v2901 = vunpack.c.l.b16 %v2676
  %v2902 = vunpack.c.l.b16 %v2677
  %v2903 = vunpack.c.l.b16 %v2678
  %v2904 = vpack.c.b16 %v2901, %v2900
  %v2905 = vpack.c.b16 %v2903, %v2902
  %v2909 = vsel %vm134, %v2888, 0
  %v2912 = vsel %vm134, %v2889, 0
  %v2915 = vsel %vm134, %v2890, 0
  %v2918 = vsel %vm134, %v2891, 0
  %v2921 = vsel %vm134, %v2892, 0
  %v2924 = vsel %vm134, %v2893, 0
  %v2927 = vsel %vm134, %v2894, 0
  %v2930 = vsel %vm134, %v2895, 0
  %2932 = vmatprep.subr.bf16.mxu0 0
  %2933 = vmatpush1.bf16.msra.mxu0 0
  %2934 = vmatprep.subr.bf16.mxu0 0
  %2935 = vmatpush1.bf16.msra.mxu0 0
  %2936 = vmatprep.subr.bf16.mxu0 0
  %2937 = vmatpush1.bf16.msra.mxu0 0
  %2938 = vmatprep.subr.bf16.mxu0 0
  %2939 = vmatpush1.bf16.msra.mxu0 0
  %2940 = vmatprep.subr.bf16.mxu0 0
  %2941 = vmatpush1.bf16.msra.mxu0 0
  %2942 = vmatprep.subr.bf16.mxu0 0
  %2943 = vmatpush1.bf16.msra.mxu0 0
  %2944 = vmatprep.subr.bf16.mxu0 0
  %2945 = vmatpush1.bf16.msra.mxu0 %v2905
  %2946 = vmatprep.subr.bf16.mxu0 0
  %2947 = vmatpush1.bf16.msra.mxu0 %v2904
  %2948 = vmatprep.subr.bf16.mxu0 0
  %2949 = vmatpush2.bf16.msra.mxu0 0
  %2950 = vmatprep.subr.bf16.mxu0 0
  %2951 = vmatpush2.bf16.msra.mxu0 0
  %2952 = vmatprep.subr.bf16.mxu0 0
  %2953 = vmatpush2.bf16.msra.mxu0 0
  %2954 = vmatprep.subr.bf16.mxu0 0
  %2955 = vmatpush2.bf16.msra.mxu0 0
  %2956 = vmatprep.subr.bf16.mxu0 0
  %2957 = vmatpush2.bf16.msra.mxu0 0
  %2958 = vmatprep.subr.bf16.mxu0 0
  %2959 = vmatpush2.bf16.msra.mxu0 0
  %2960 = vmatprep.subr.bf16.mxu0 0
  %2961 = vmatpush2.bf16.msra.mxu0 0
  %2962 = vmatprep.subr.bf16.mxu0 0
  %2963 = vmatpush2.bf16.msra.mxu0 0
  %2964 = vmatprep.mubr.bf16.mxu0 0
  %2965 = vmatmul.mubr.bf16.gmra.mxu0 %v2909
  %v2966 = vpop.f32.mrf.mxu0
  %v2967 = vadd.f32 %v2794, %v2966
  %v2968 = vpop.f32.mrf.mxu0
  %v2969 = vpop.f32.mrf.mxu0
  %v2970 = vadd.f32 %v2797, %v2969
  %v2971 = vpop.f32.mrf.mxu0
  %2972 = vmatprep.mubr.bf16.mxu0 0
  %2973 = vmatmul.mubr.bf16.gmra.mxu0 %v2912
  %v2974 = vpop.f32.mrf.mxu0
  %v2975 = vadd.f32 %v2802, %v2974
  %v2976 = vpop.f32.mrf.mxu0
  %v2977 = vpop.f32.mrf.mxu0
  %v2978 = vadd.f32 %v2805, %v2977
  %v2979 = vpop.f32.mrf.mxu0
  %2980 = vmatprep.mubr.bf16.mxu0 0
  %2981 = vmatmul.mubr.bf16.gmra.mxu0 %v2915
  %v2982 = vpop.f32.mrf.mxu0
  %v2983 = vadd.f32 %v2810, %v2982
  %v2984 = vpop.f32.mrf.mxu0
  %v2985 = vpop.f32.mrf.mxu0
  %v2986 = vadd.f32 %v2813, %v2985
  %v2987 = vpop.f32.mrf.mxu0
  %2988 = vmatprep.mubr.bf16.mxu0 0
  %2989 = vmatmul.mubr.bf16.gmra.mxu0 %v2918
  %v2990 = vpop.f32.mrf.mxu0
  %v2991 = vadd.f32 %v2818, %v2990
  %v2992 = vpop.f32.mrf.mxu0
  %v2993 = vpop.f32.mrf.mxu0
  %v2994 = vadd.f32 %v2821, %v2993
  %v2995 = vpop.f32.mrf.mxu0
  %2996 = vmatprep.mubr.bf16.mxu0 0
  %2997 = vmatmul.mubr.bf16.gmra.mxu0 %v2921
  %v2998 = vpop.f32.mrf.mxu0
  %v2999 = vadd.f32 %v2826, %v2998
  %v3000 = vpop.f32.mrf.mxu0
  %v3001 = vpop.f32.mrf.mxu0
  %v3002 = vadd.f32 %v2829, %v3001
  %v3003 = vpop.f32.mrf.mxu0
  %3004 = vmatprep.mubr.bf16.mxu0 0
  %3005 = vmatmul.mubr.bf16.gmra.mxu0 %v2924
  %v3006 = vpop.f32.mrf.mxu0
  %v3007 = vadd.f32 %v2834, %v3006
  %v3008 = vpop.f32.mrf.mxu0
  %v3009 = vpop.f32.mrf.mxu0
  %v3010 = vadd.f32 %v2837, %v3009
  %v3011 = vpop.f32.mrf.mxu0
  %3012 = vmatprep.mubr.bf16.mxu0 0
  %3013 = vmatmul.mubr.bf16.gmra.mxu0 %v2927
  %v3014 = vpop.f32.mrf.mxu0
  %v3015 = vadd.f32 %v2842, %v3014
  %v3016 = vpop.f32.mrf.mxu0
  %v3017 = vpop.f32.mrf.mxu0
  %v3018 = vadd.f32 %v2845, %v3017
  %v3019 = vpop.f32.mrf.mxu0
  %3020 = vmatprep.mubr.bf16.mxu0 0
  %3021 = vmatmul.mubr.bf16.gmra.mxu0 %v2930
  %v3022 = vpop.f32.mrf.mxu0
  %v3023 = vadd.f32 %v2850, %v3022
  %v3024 = vpop.f32.mrf.mxu0
  %v3025 = vpop.f32.mrf.mxu0
  %v3026 = vadd.f32 %v2853, %v3025
  %v3027 = vpop.f32.mrf.mxu0
  %3028 = vdwg.mxu0
  %v3029 = vld [vmem:[%s10] sm:$0x1]
  %v3031 = vlaneseq
  %v3032 = vshrl.u32 %v3031, 7
  %v3033 = vsub.s32 0, %v3032
  %v3034 = vrot.slane %v3029, %v3033
  %v3036 = vadd.f32 %v2967, %v3034
  %v3037 = vadd.f32 %v2970, %v3034
  %v3038 = vadd.f32 %v2975, %v3034
  %v3039 = vadd.f32 %v2978, %v3034
  %v3040 = vadd.f32 %v2983, %v3034
  %v3041 = vadd.f32 %v2986, %v3034
  %v3042 = vadd.f32 %v2991, %v3034
  %v3043 = vadd.f32 %v2994, %v3034
  %v3044 = vadd.f32 %v2999, %v3034
  %v3045 = vadd.f32 %v3002, %v3034
  %v3046 = vadd.f32 %v3007, %v3034
  %v3047 = vadd.f32 %v3010, %v3034
  %v3048 = vadd.f32 %v3015, %v3034
  %v3049 = vadd.f32 %v3018, %v3034
  %v3050 = vadd.f32 %v3023, %v3034
  %v3051 = vadd.f32 %v3026, %v3034
  %v3052 = vld [vmem:[%s11] sm:$0xff]
  %v3053 = vld [vmem:[%s11 + $0x8] sm:$0xff]
  %v3054 = vld [vmem:[%s11 + $0x10] sm:$0xff]
  %v3055 = vld [vmem:[%s11 + $0x18] sm:$0xff]
  %v3056 = vld [vmem:[%s11 + $0x20] sm:$0xff]
  %v3057 = vld [vmem:[%s11 + $0x28] sm:$0xff]
  %v3058 = vld [vmem:[%s11 + $0x30] sm:$0xff]
  %v3059 = vld [vmem:[%s11 + $0x38] sm:$0xff]
  %v3060 = vld [vmem:[%s11 + $0x40] sm:$0xff]
  %v3061 = vld [vmem:[%s11 + $0x48] sm:$0xff]
  %v3062 = vld [vmem:[%s11 + $0x50] sm:$0xff]
  %v3063 = vld [vmem:[%s11 + $0x58] sm:$0xff]
  %v3064 = vld [vmem:[%s11 + $0x60] sm:$0xff]
  %v3065 = vld [vmem:[%s11 + $0x68] sm:$0xff]
  %v3066 = vld [vmem:[%s11 + $0x70] sm:$0xff]
  %v3067 = vld [vmem:[%s11 + $0x78] sm:$0xff]
  %v3068 = vadd.f32 %v3036, %v3052
  %v3069 = vadd.f32 %v3037, %v3053
  %v3070 = vadd.f32 %v3038, %v3054
  %v3071 = vadd.f32 %v3039, %v3055
  %v3072 = vadd.f32 %v3040, %v3056
  %v3073 = vadd.f32 %v3041, %v3057
  %v3074 = vadd.f32 %v3042, %v3058
  %v3075 = vadd.f32 %v3043, %v3059
  %v3076 = vadd.f32 %v3044, %v3060
  %v3077 = vadd.f32 %v3045, %v3061
  %v3078 = vadd.f32 %v3046, %v3062
  %v3079 = vadd.f32 %v3047, %v3063
  %v3080 = vadd.f32 %v3048, %v3064
  %v3081 = vadd.f32 %v3049, %v3065
  %v3082 = vadd.f32 %v3050, %v3066
  %v3083 = vadd.f32 %v3051, %v3067
  %vm3084 = vcmask 56320
  %3085 = vst.msk [vmem:[%s12] sm:$0xff] %vm3084, %v3068
  %3086 = vst.msk [vmem:[%s12 + $0x8] sm:$0xff] %vm3084, %v3069
  %3087 = vst.msk [vmem:[%s12 + $0x10] sm:$0xff] %vm3084, %v3070
  %3088 = vst.msk [vmem:[%s12 + $0x18] sm:$0xff] %vm3084, %v3071
  %3089 = vst.msk [vmem:[%s12 + $0x20] sm:$0xff] %vm3084, %v3072
  %3090 = vst.msk [vmem:[%s12 + $0x28] sm:$0xff] %vm3084, %v3073
  %3091 = vst.msk [vmem:[%s12 + $0x30] sm:$0xff] %vm3084, %v3074
  %3092 = vst.msk [vmem:[%s12 + $0x38] sm:$0xff] %vm3084, %v3075
  %3093 = vst.msk [vmem:[%s12 + $0x40] sm:$0xff] %vm3084, %v3076
  %3094 = vst.msk [vmem:[%s12 + $0x48] sm:$0xff] %vm3084, %v3077
  %3095 = vst.msk [vmem:[%s12 + $0x50] sm:$0xff] %vm3084, %v3078
  %3096 = vst.msk [vmem:[%s12 + $0x58] sm:$0xff] %vm3084, %v3079
  %3097 = vst.msk [vmem:[%s12 + $0x60] sm:$0xff] %vm3084, %v3080
  %3098 = vst.msk [vmem:[%s12 + $0x68] sm:$0xff] %vm3084, %v3081
  %3099 = vst.msk [vmem:[%s12 + $0x70] sm:$0xff] %vm3084, %v3082
  %3100 = vst.msk [vmem:[%s12 + $0x78] sm:$0xff] %vm3084, %v3083
  // Predicated region
  $region50: #{seq_model_forward.3} parent=0 // pred_check
    _
  $region51: #{seq_model_forward.3} parent=0 // pred_check_branch
    %3102 = sbr.rel (0) target = $region53
  $region52: #{seq_model_forward.3} parent=0 // pred_region
    _
  $region53: #{seq_model_forward.3} parent=0 // pred_fallthru
    _
  // Predicated region
  $region54: #{seq_model_forward.3} parent=0 // pred_check
    _
  $region55: #{seq_model_forward.3} parent=0 // pred_check_branch
    %3104 = sbr.rel (0) target = $region57
  $region56: #{seq_model_forward.3} parent=0 // pred_region
    _
  $region57: #{seq_model_forward.3} parent=0 // pred_fallthru
    _

</llo_original>
